<compile_context>
chip_gen: v6e
topology: v6e:2x2x1
jax: 0.10.0
libtpu: 0.0.40
codegen_flags: <defaults>
</compile_context>

<pallas_src>
import jax
import jax.numpy as jnp
from jax.experimental import pallas as pl
from jax.experimental.pallas import tpu as pltpu

LANES = 128
SUBLANES = 8


def basic_block_kernel(x_ref, w1_ref, w2_ref, b1_ref, b2_ref, out_ref, mid_ref):
  """One batch element: conv3x3 -> BN -> ReLU -> conv3x3 -> BN -> (+x) -> ReLU.

  x_ref   : (H+2, Wpad, Cp) bf16  spatially padded, lane-dense input
                                  (columns >= W+2 and lanes >= C are zero)
  w1_ref  : (9*Cp, Cp)      bf16  conv1 im2col weight slab (BN1 scale folded)
  w2_ref  : (9*Cp, Cp)      bf16  conv2 im2col weight slab (BN2 scale folded)
  b1_ref  : (1, Cp)         f32   folded BN1 bias (padded entries zero)
  b2_ref  : (1, Cp)         f32   folded BN2 bias (padded entries zero)
  out_ref : (H, W, Cp)      f32   lane-dense output (sliced back to C outside)
  mid_ref : (H+2, Wpad, Cp) bf16  scratch: padded conv1 output
  """
  Hp, Wpad, Cp = x_ref.shape
  H, W, _ = out_ref.shape

  def conv3x3(src_ref, w_ref, b_ref):
    # Static 9-step per-tap accumulation on the MXU, f32 accumulator.
    acc = None
    for k in range(9):
      ky, kx = divmod(k, 3)
      tap = src_ref[ky:ky + H, kx:kx + W, :].reshape(H * W, Cp)   # bf16
      part = jnp.dot(tap, w_ref[k * Cp:(k + 1) * Cp, :],
                     preferred_element_type=jnp.float32)
      acc = part if acc is None else acc + part
    return acc + b_ref[...]                                       # (H*W, Cp) f32

  # ---- conv1 (BN1 scale folded) + bias + ReLU ----
  h1 = jnp.maximum(conv3x3(x_ref, w1_ref, b1_ref), 0.0)

  # Zero only the 1-pixel ring of the intermediate; the interior is fully
  # overwritten below and columns >= W+2 are never read by any tap.
  mid_ref[0:1, :, :] = jnp.zeros((1, Wpad, Cp), mid_ref.dtype)
  mid_ref[Hp - 1:Hp, :, :] = jnp.zeros((1, Wpad, Cp), mid_ref.dtype)
  mid_ref[:, 0:1, :] = jnp.zeros((Hp, 1, Cp), mid_ref.dtype)
  mid_ref[:, W + 1:W + 2, :] = jnp.zeros((Hp, 1, Cp), mid_ref.dtype)
  mid_ref[1:H + 1, 1:W + 1, :] = h1.reshape(H, W, Cp).astype(mid_ref.dtype)

  # ---- conv2 (BN2 scale folded) + bias + residual + ReLU ----
  acc2 = conv3x3(mid_ref, w2_ref, b2_ref)
  res = x_ref[1:H + 1, 1:W + 1, :].reshape(H * W, Cp).astype(jnp.float32)
  out = jnp.maximum(acc2 + res, 0.0)
  out_ref[...] = out.reshape(H, W, Cp).astype(out_ref.dtype)


def basic_block_pallas(x_nchw, w1_oihw, w2_oihw, bn1, bn2, eps=1e-5):
  """Wrapper: layout conversion, BN folding, spatial/lane padding (all outside
  the kernel so the kernel sees lane-dense blocks and needs no zero-fill)."""
  N, C, H, W = x_nchw.shape
  Cp = -(-C // LANES) * LANES                 # channels -> full lane width
  Hp = H + 2
  Wpad = -(-(W + 2) // SUBLANES) * SUBLANES   # sublane-aligned padded width

  # NCHW -> NHWC, bf16, 1-pixel spatial pad (+ sublane fill on W) + lane pad.
  x = jnp.transpose(x_nchw, (0, 2, 3, 1)).astype(jnp.bfloat16)
  x = jnp.pad(x, ((0, 0), (1, 1), (1, Wpad - W - 1), (0, Cp - C)))

  def fold_bn(bn):
    gamma, beta, mean, var = bn
    scale = gamma * jax.lax.rsqrt(var + eps)
    bias = beta - mean * scale
    return scale.astype(jnp.float32), bias.astype(jnp.float32)

  s1, b1 = fold_bn(bn1)
  s2, b2 = fold_bn(bn2)

  def prep_w(w_oihw, scale):
    # (Cout, Cin, 3, 3) -> (ky, kx, Cin, Cout), fold BN scale per out-channel,
    # zero-pad Cin/Cout to Cp (INVARIANT: padded columns stay exactly zero),
    # flatten to a (9*Cp, Cp) bf16 im2col weight slab (K ordered (ky, kx, c)).
    w = jnp.transpose(w_oihw, (2, 3, 1, 0)).astype(jnp.float32)
    w = w * scale.reshape(1, 1, 1, C)
    w = jnp.pad(w, ((0, 0), (0, 0), (0, Cp - C), (0, Cp - C)))
    return w.reshape(9 * Cp, Cp).astype(jnp.bfloat16)

  w1 = prep_w(w1_oihw, s1)
  w2 = prep_w(w2_oihw, s2)
  b1p = jnp.pad(b1, (0, Cp - C)).reshape(1, Cp)   # padded entries are zero
  b2p = jnp.pad(b2, (0, Cp - C)).reshape(1, Cp)

  out_p = pl.pallas_call(
      basic_block_kernel,
      out_shape=jax.ShapeDtypeStruct((N, H, W, Cp), jnp.float32),
      grid=(N,),
      in_specs=[
          pl.BlockSpec((None, Hp, Wpad, Cp), lambda n: (n, 0, 0, 0)),
          pl.BlockSpec((9 * Cp, Cp), lambda n: (0, 0)),
          pl.BlockSpec((9 * Cp, Cp), lambda n: (0, 0)),
          pl.BlockSpec((1, Cp), lambda n: (0, 0)),
          pl.BlockSpec((1, Cp), lambda n: (0, 0)),
      ],
      out_specs=pl.BlockSpec((None, H, W, Cp), lambda n: (n, 0, 0, 0)),
      scratch_shapes=[
          pltpu.VMEM((Hp, Wpad, Cp), jnp.bfloat16),   # padded conv1 output
      ],
      compiler_params=pltpu.CompilerParams(
          dimension_semantics=("parallel",),
          vmem_limit_bytes=48 * 1024 * 1024),
  )(x, w1, w2, b1p, b2p)

  # Drop padded lanes, NHWC -> NCHW to match the PyTorch module's output.
  return jnp.transpose(out_p[..., :C], (0, 3, 1, 2))


def basic_block_reference(x_nchw, w1_oihw, w2_oihw, bn1, bn2, eps=1e-5):
  """Pure-JAX f32 reference (same semantics) for the correctness check."""
  C = x_nchw.shape[1]
  x = jnp.transpose(x_nchw, (0, 2, 3, 1)).astype(jnp.float32)
  w1 = jnp.transpose(w1_oihw, (2, 3, 1, 0)).astype(jnp.float32)
  w2 = jnp.transpose(w2_oihw, (2, 3, 1, 0)).astype(jnp.float32)
  dn = jax.lax.conv_dimension_numbers(x.shape, w1.shape, ("NHWC", "HWIO", "NHWC"))

  def bn_apply(y, bn):
    gamma, beta, mean, var = bn
    scale = gamma * jax.lax.rsqrt(var + eps)
    bias = beta - mean * scale
    return y * scale.reshape(1, 1, 1, C) + bias.reshape(1, 1, 1, C)

  y = jax.lax.conv_general_dilated(x, w1, (1, 1), "SAME", dimension_numbers=dn,
                                   precision=jax.lax.Precision.HIGHEST)
  y = jnp.maximum(bn_apply(y, bn1), 0.0)
  z = jax.lax.conv_general_dilated(y, w2, (1, 1), "SAME", dimension_numbers=dn,
                                   precision=jax.lax.Precision.HIGHEST)
  z = bn_apply(z, bn2) + x
  z = jnp.maximum(z, 0.0)
  return jnp.transpose(z, (0, 3, 1, 2))


if __name__ == "__main__":
  # BasicBlock(inplanes=4, planes=4, stride=1, downsample=None)
  N, C, H, W = 2, 4, 16, 16

  key = jax.random.PRNGKey(0)
  kx, kw1, kw2, kg1, kb1, km1, kv1, kg2, kb2, km2, kv2 = jax.random.split(key, 11)

  x = jax.random.normal(kx, (N, C, H, W), jnp.float32)
  w1 = jax.random.normal(kw1, (C, C, 3, 3), jnp.float32) * 0.2
  w2 = jax.random.normal(kw2, (C, C, 3, 3), jnp.float32) * 0.2

  bn1 = (jax.random.uniform(kg1, (C,), minval=0.5, maxval=1.5),   # gamma
         jax.random.normal(kb1, (C,)) * 0.1,                      # beta
         jax.random.normal(km1, (C,)) * 0.1,                      # running_mean
         jax.random.uniform(kv1, (C,), minval=0.5, maxval=1.5))   # running_var
  bn2 = (jax.random.uniform(kg2, (C,), minval=0.5, maxval=1.5),
         jax.random.normal(kb2, (C,)) * 0.1,
         jax.random.normal(km2, (C,)) * 0.1,
         jax.random.uniform(kv2, (C,), minval=0.5, maxval=1.5))

  out = basic_block_pallas(x, w1, w2, bn1, bn2)
  out = jax.block_until_ready(out)

  ref = basic_block_reference(x, w1, w2, bn1, bn2)
  assert out.shape == (N, C, H, W)
  # Tolerance relaxed vs. the f32 HIGHEST reference: the kernel runs the whole
  # data path (input, intermediate, residual, matmuls) in bf16 with f32
  # accumulation.  Expected max abs error a few 1e-2 at these magnitudes.
  max_err = float(jnp.max(jnp.abs(out - ref)))
  assert jnp.allclose(out, ref, atol=1.5e-1, rtol=2e-2), max_err

  print("KERNEL_OK")
</pallas_src>

<mosaic_0001>
module attributes {stable_mosaic.version = 11 : i64} {
  func.func @basic_block_kernel(%arg0: i32, %arg1: memref<1x18x24x128xbf16, #tpu.memory_space<vmem>>, %arg2: memref<1152x128xbf16, #tpu.memory_space<vmem>>, %arg3: memref<1152x128xbf16, #tpu.memory_space<vmem>>, %arg4: memref<1x128xf32, #tpu.memory_space<vmem>>, %arg5: memref<1x128xf32, #tpu.memory_space<vmem>>, %arg6: memref<1x16x16x128xf32, #tpu.memory_space<vmem>>, %arg7: memref<18x24x128xbf16, #tpu.memory_space<vmem>>) attributes {dimension_semantics = [#tpu.dimension_semantics<parallel>], iteration_bounds = array<i64: 2>, scalar_prefetch = 0 : i64, scratch_operands = 1 : i64, tpu.core_type = #tpu.core_type<tc>, window_params = [{transform_indices = @transform_0, window_bounds = array<i64: 1, 18, 24, 128>}, {pipeline_mode = #tpu.pipeline_mode<synchronous>, transform_indices = @transform_1, window_bounds = array<i64: 1152, 128>}, {pipeline_mode = #tpu.pipeline_mode<synchronous>, transform_indices = @transform_2, window_bounds = array<i64: 1152, 128>}, {pipeline_mode = #tpu.pipeline_mode<synchronous>, transform_indices = @transform_3, window_bounds = array<i64: 1, 128>}, {pipeline_mode = #tpu.pipeline_mode<synchronous>, transform_indices = @transform_4, window_bounds = array<i64: 1, 128>}, {transform_indices = @transform_5, window_bounds = array<i64: 1, 16, 16, 128>}]} {
    %c0 = arith.constant 0 : index
    %c0_0 = arith.constant 0 : index
    %c0_1 = arith.constant 0 : index
    %c0_2 = arith.constant 0 : index
    %0 = vector.load %arg1[%c0, %c0_0, %c0_1, %c0_2] : memref<1x18x24x128xbf16, #tpu.memory_space<vmem>>, vector<1x16x16x128xbf16>
    %1 = vector.shape_cast %0 : vector<1x16x16x128xbf16> to vector<16x16x128xbf16>
    %2 = vector.shape_cast %1 : vector<16x16x128xbf16> to vector<256x128xbf16>
    %c0_3 = arith.constant 0 : index
    %c0_4 = arith.constant 0 : index
    %3 = vector.load %arg2[%c0_3, %c0_4] : memref<1152x128xbf16, #tpu.memory_space<vmem>>, vector<128x128xbf16>
    %cst = arith.constant dense<0.000000e+00> : vector<256x128xf32>
    %4 = tpu.matmul %2, %3, %cst {dimension_numbers = #tpu.dot_dimension_numbers<[1], [0], [0], [1], [0, 0, 1, 1], [], []>} : vector<256x128xbf16>, vector<128x128xbf16>, vector<256x128xf32> -> vector<256x128xf32>
    %c0_5 = arith.constant 0 : index
    %c0_6 = arith.constant 0 : index
    %c1 = arith.constant 1 : index
    %c0_7 = arith.constant 0 : index
    %5 = vector.load %arg1[%c0_5, %c0_6, %c1, %c0_7] : memref<1x18x24x128xbf16, #tpu.memory_space<vmem>>, vector<1x16x16x128xbf16>
    %6 = vector.shape_cast %5 : vector<1x16x16x128xbf16> to vector<16x16x128xbf16>
    %7 = vector.shape_cast %6 : vector<16x16x128xbf16> to vector<256x128xbf16>
    %c128 = arith.constant 128 : index
    %c0_8 = arith.constant 0 : index
    %8 = vector.load %arg2[%c128, %c0_8] : memref<1152x128xbf16, #tpu.memory_space<vmem>>, vector<128x128xbf16>
    %cst_9 = arith.constant dense<0.000000e+00> : vector<256x128xf32>
    %9 = tpu.matmul %7, %8, %cst_9 {dimension_numbers = #tpu.dot_dimension_numbers<[1], [0], [0], [1], [0, 0, 1, 1], [], []>} : vector<256x128xbf16>, vector<128x128xbf16>, vector<256x128xf32> -> vector<256x128xf32>
    %10 = arith.addf %4, %9 : vector<256x128xf32>
    %c0_10 = arith.constant 0 : index
    %c0_11 = arith.constant 0 : index
    %c2 = arith.constant 2 : index
    %c0_12 = arith.constant 0 : index
    %11 = vector.load %arg1[%c0_10, %c0_11, %c2, %c0_12] : memref<1x18x24x128xbf16, #tpu.memory_space<vmem>>, vector<1x16x16x128xbf16>
    %12 = vector.shape_cast %11 : vector<1x16x16x128xbf16> to vector<16x16x128xbf16>
    %13 = vector.shape_cast %12 : vector<16x16x128xbf16> to vector<256x128xbf16>
    %c256 = arith.constant 256 : index
    %c0_13 = arith.constant 0 : index
    %14 = vector.load %arg2[%c256, %c0_13] : memref<1152x128xbf16, #tpu.memory_space<vmem>>, vector<128x128xbf16>
    %cst_14 = arith.constant dense<0.000000e+00> : vector<256x128xf32>
    %15 = tpu.matmul %13, %14, %cst_14 {dimension_numbers = #tpu.dot_dimension_numbers<[1], [0], [0], [1], [0, 0, 1, 1], [], []>} : vector<256x128xbf16>, vector<128x128xbf16>, vector<256x128xf32> -> vector<256x128xf32>
    %16 = arith.addf %10, %15 : vector<256x128xf32>
    %c0_15 = arith.constant 0 : index
    %c1_16 = arith.constant 1 : index
    %c0_17 = arith.constant 0 : index
    %c0_18 = arith.constant 0 : index
    %17 = vector.load %arg1[%c0_15, %c1_16, %c0_17, %c0_18] : memref<1x18x24x128xbf16, #tpu.memory_space<vmem>>, vector<1x16x16x128xbf16>
    %18 = vector.shape_cast %17 : vector<1x16x16x128xbf16> to vector<16x16x128xbf16>
    %19 = vector.shape_cast %18 : vector<16x16x128xbf16> to vector<256x128xbf16>
    %c384 = arith.constant 384 : index
    %c0_19 = arith.constant 0 : index
    %20 = vector.load %arg2[%c384, %c0_19] : memref<1152x128xbf16, #tpu.memory_space<vmem>>, vector<128x128xbf16>
    %cst_20 = arith.constant dense<0.000000e+00> : vector<256x128xf32>
    %21 = tpu.matmul %19, %20, %cst_20 {dimension_numbers = #tpu.dot_dimension_numbers<[1], [0], [0], [1], [0, 0, 1, 1], [], []>} : vector<256x128xbf16>, vector<128x128xbf16>, vector<256x128xf32> -> vector<256x128xf32>
    %22 = arith.addf %16, %21 : vector<256x128xf32>
    %c0_21 = arith.constant 0 : index
    %c1_22 = arith.constant 1 : index
    %c1_23 = arith.constant 1 : index
    %c0_24 = arith.constant 0 : index
    %23 = vector.load %arg1[%c0_21, %c1_22, %c1_23, %c0_24] : memref<1x18x24x128xbf16, #tpu.memory_space<vmem>>, vector<1x16x16x128xbf16>
    %24 = vector.shape_cast %23 : vector<1x16x16x128xbf16> to vector<16x16x128xbf16>
    %25 = vector.shape_cast %24 : vector<16x16x128xbf16> to vector<256x128xbf16>
    %c512 = arith.constant 512 : index
    %c0_25 = arith.constant 0 : index
    %26 = vector.load %arg2[%c512, %c0_25] : memref<1152x128xbf16, #tpu.memory_space<vmem>>, vector<128x128xbf16>
    %cst_26 = arith.constant dense<0.000000e+00> : vector<256x128xf32>
    %27 = tpu.matmul %25, %26, %cst_26 {dimension_numbers = #tpu.dot_dimension_numbers<[1], [0], [0], [1], [0, 0, 1, 1], [], []>} : vector<256x128xbf16>, vector<128x128xbf16>, vector<256x128xf32> -> vector<256x128xf32>
    %28 = arith.addf %22, %27 : vector<256x128xf32>
    %c0_27 = arith.constant 0 : index
    %c1_28 = arith.constant 1 : index
    %c2_29 = arith.constant 2 : index
    %c0_30 = arith.constant 0 : index
    %29 = vector.load %arg1[%c0_27, %c1_28, %c2_29, %c0_30] : memref<1x18x24x128xbf16, #tpu.memory_space<vmem>>, vector<1x16x16x128xbf16>
    %30 = vector.shape_cast %29 : vector<1x16x16x128xbf16> to vector<16x16x128xbf16>
    %31 = vector.shape_cast %30 : vector<16x16x128xbf16> to vector<256x128xbf16>
    %c640 = arith.constant 640 : index
    %c0_31 = arith.constant 0 : index
    %32 = vector.load %arg2[%c640, %c0_31] : memref<1152x128xbf16, #tpu.memory_space<vmem>>, vector<128x128xbf16>
    %cst_32 = arith.constant dense<0.000000e+00> : vector<256x128xf32>
    %33 = tpu.matmul %31, %32, %cst_32 {dimension_numbers = #tpu.dot_dimension_numbers<[1], [0], [0], [1], [0, 0, 1, 1], [], []>} : vector<256x128xbf16>, vector<128x128xbf16>, vector<256x128xf32> -> vector<256x128xf32>
    %34 = arith.addf %28, %33 : vector<256x128xf32>
    %c0_33 = arith.constant 0 : index
    %c2_34 = arith.constant 2 : index
    %c0_35 = arith.constant 0 : index
    %c0_36 = arith.constant 0 : index
    %35 = vector.load %arg1[%c0_33, %c2_34, %c0_35, %c0_36] : memref<1x18x24x128xbf16, #tpu.memory_space<vmem>>, vector<1x16x16x128xbf16>
    %36 = vector.shape_cast %35 : vector<1x16x16x128xbf16> to vector<16x16x128xbf16>
    %37 = vector.shape_cast %36 : vector<16x16x128xbf16> to vector<256x128xbf16>
    %c768 = arith.constant 768 : index
    %c0_37 = arith.constant 0 : index
    %38 = vector.load %arg2[%c768, %c0_37] : memref<1152x128xbf16, #tpu.memory_space<vmem>>, vector<128x128xbf16>
    %cst_38 = arith.constant dense<0.000000e+00> : vector<256x128xf32>
    %39 = tpu.matmul %37, %38, %cst_38 {dimension_numbers = #tpu.dot_dimension_numbers<[1], [0], [0], [1], [0, 0, 1, 1], [], []>} : vector<256x128xbf16>, vector<128x128xbf16>, vector<256x128xf32> -> vector<256x128xf32>
    %40 = arith.addf %34, %39 : vector<256x128xf32>
    %c0_39 = arith.constant 0 : index
    %c2_40 = arith.constant 2 : index
    %c1_41 = arith.constant 1 : index
    %c0_42 = arith.constant 0 : index
    %41 = vector.load %arg1[%c0_39, %c2_40, %c1_41, %c0_42] : memref<1x18x24x128xbf16, #tpu.memory_space<vmem>>, vector<1x16x16x128xbf16>
    %42 = vector.shape_cast %41 : vector<1x16x16x128xbf16> to vector<16x16x128xbf16>
    %43 = vector.shape_cast %42 : vector<16x16x128xbf16> to vector<256x128xbf16>
    %c896 = arith.constant 896 : index
    %c0_43 = arith.constant 0 : index
    %44 = vector.load %arg2[%c896, %c0_43] : memref<1152x128xbf16, #tpu.memory_space<vmem>>, vector<128x128xbf16>
    %cst_44 = arith.constant dense<0.000000e+00> : vector<256x128xf32>
    %45 = tpu.matmul %43, %44, %cst_44 {dimension_numbers = #tpu.dot_dimension_numbers<[1], [0], [0], [1], [0, 0, 1, 1], [], []>} : vector<256x128xbf16>, vector<128x128xbf16>, vector<256x128xf32> -> vector<256x128xf32>
    %46 = arith.addf %40, %45 : vector<256x128xf32>
    %c0_45 = arith.constant 0 : index
    %c2_46 = arith.constant 2 : index
    %c2_47 = arith.constant 2 : index
    %c0_48 = arith.constant 0 : index
    %47 = vector.load %arg1[%c0_45, %c2_46, %c2_47, %c0_48] : memref<1x18x24x128xbf16, #tpu.memory_space<vmem>>, vector<1x16x16x128xbf16>
    %48 = vector.shape_cast %47 : vector<1x16x16x128xbf16> to vector<16x16x128xbf16>
    %49 = vector.shape_cast %48 : vector<16x16x128xbf16> to vector<256x128xbf16>
    %c1024 = arith.constant 1024 : index
    %c0_49 = arith.constant 0 : index
    %50 = vector.load %arg2[%c1024, %c0_49] : memref<1152x128xbf16, #tpu.memory_space<vmem>>, vector<128x128xbf16>
    %cst_50 = arith.constant dense<0.000000e+00> : vector<256x128xf32>
    %51 = tpu.matmul %49, %50, %cst_50 {dimension_numbers = #tpu.dot_dimension_numbers<[1], [0], [0], [1], [0, 0, 1, 1], [], []>} : vector<256x128xbf16>, vector<128x128xbf16>, vector<256x128xf32> -> vector<256x128xf32>
    %52 = arith.addf %46, %51 : vector<256x128xf32>
    %c0_51 = arith.constant 0 : index
    %c0_52 = arith.constant 0 : index
    %53 = vector.load %arg4[%c0_51, %c0_52] : memref<1x128xf32, #tpu.memory_space<vmem>>, vector<1x128xf32>
    %54 = vector.broadcast %53 : vector<1x128xf32> to vector<256x128xf32>
    %55 = arith.addf %52, %54 : vector<256x128xf32>
    %cst_53 = arith.constant 0.000000e+00 : f32
    %56 = vector.broadcast %cst_53 : f32 to vector<256x128xf32>
    %57 = arith.maximumf %55, %56 : vector<256x128xf32>
    %cst_54 = arith.constant 0.000000e+00 : bf16
    %58 = vector.broadcast %cst_54 : bf16 to vector<1x24x128xbf16>
    %c0_55 = arith.constant 0 : index
    %c0_56 = arith.constant 0 : index
    %c0_57 = arith.constant 0 : index
    %59 = vector.load %arg7[%c0_55, %c0_56, %c0_57] : memref<18x24x128xbf16, #tpu.memory_space<vmem>>, vector<1x24x128xbf16>
    tpu.vector_store %arg7[%c0_55, %c0_56, %c0_57], %58 {strides = array<i32>} : memref<18x24x128xbf16, #tpu.memory_space<vmem>>, vector<1x24x128xbf16>,
    %cst_58 = arith.constant 0.000000e+00 : bf16
    %60 = vector.broadcast %cst_58 : bf16 to vector<1x24x128xbf16>
    %c17 = arith.constant 17 : index
    %c0_59 = arith.constant 0 : index
    %c0_60 = arith.constant 0 : index
    %61 = vector.load %arg7[%c17, %c0_59, %c0_60] : memref<18x24x128xbf16, #tpu.memory_space<vmem>>, vector<1x24x128xbf16>
    tpu.vector_store %arg7[%c17, %c0_59, %c0_60], %60 {strides = array<i32>} : memref<18x24x128xbf16, #tpu.memory_space<vmem>>, vector<1x24x128xbf16>,
    %cst_61 = arith.constant 0.000000e+00 : bf16
    %62 = vector.broadcast %cst_61 : bf16 to vector<18x1x128xbf16>
    %c0_62 = arith.constant 0 : index
    %c0_63 = arith.constant 0 : index
    %c0_64 = arith.constant 0 : index
    %63 = vector.load %arg7[%c0_62, %c0_63, %c0_64] : memref<18x24x128xbf16, #tpu.memory_space<vmem>>, vector<18x1x128xbf16>
    tpu.vector_store %arg7[%c0_62, %c0_63, %c0_64], %62 {strides = array<i32>} : memref<18x24x128xbf16, #tpu.memory_space<vmem>>, vector<18x1x128xbf16>,
    %cst_65 = arith.constant 0.000000e+00 : bf16
    %64 = vector.broadcast %cst_65 : bf16 to vector<18x1x128xbf16>
    %c0_66 = arith.constant 0 : index
    %c17_67 = arith.constant 17 : index
    %c0_68 = arith.constant 0 : index
    %65 = vector.load %arg7[%c0_66, %c17_67, %c0_68] : memref<18x24x128xbf16, #tpu.memory_space<vmem>>, vector<18x1x128xbf16>
    tpu.vector_store %arg7[%c0_66, %c17_67, %c0_68], %64 {strides = array<i32>} : memref<18x24x128xbf16, #tpu.memory_space<vmem>>, vector<18x1x128xbf16>,
    %66 = vector.shape_cast %57 : vector<256x128xf32> to vector<16x16x128xf32>
    %67 = arith.truncf %66 : vector<16x16x128xf32> to vector<16x16x128xbf16>
    %c1_69 = arith.constant 1 : index
    %c1_70 = arith.constant 1 : index
    %c0_71 = arith.constant 0 : index
    %68 = vector.load %arg7[%c1_69, %c1_70, %c0_71] : memref<18x24x128xbf16, #tpu.memory_space<vmem>>, vector<16x16x128xbf16>
    tpu.vector_store %arg7[%c1_69, %c1_70, %c0_71], %67 {strides = array<i32>} : memref<18x24x128xbf16, #tpu.memory_space<vmem>>, vector<16x16x128xbf16>,
    %c0_72 = arith.constant 0 : index
    %c0_73 = arith.constant 0 : index
    %c0_74 = arith.constant 0 : index
    %69 = vector.load %arg7[%c0_72, %c0_73, %c0_74] : memref<18x24x128xbf16, #tpu.memory_space<vmem>>, vector<16x16x128xbf16>
    %70 = vector.shape_cast %69 : vector<16x16x128xbf16> to vector<256x128xbf16>
    %c0_75 = arith.constant 0 : index
    %c0_76 = arith.constant 0 : index
    %71 = vector.load %arg3[%c0_75, %c0_76] : memref<1152x128xbf16, #tpu.memory_space<vmem>>, vector<128x128xbf16>
    %cst_77 = arith.constant dense<0.000000e+00> : vector<256x128xf32>
    %72 = tpu.matmul %70, %71, %cst_77 {dimension_numbers = #tpu.dot_dimension_numbers<[1], [0], [0], [1], [0, 0, 1, 1], [], []>} : vector<256x128xbf16>, vector<128x128xbf16>, vector<256x128xf32> -> vector<256x128xf32>
    %c0_78 = arith.constant 0 : index
    %c1_79 = arith.constant 1 : index
    %c0_80 = arith.constant 0 : index
    %73 = vector.load %arg7[%c0_78, %c1_79, %c0_80] : memref<18x24x128xbf16, #tpu.memory_space<vmem>>, vector<16x16x128xbf16>
    %74 = vector.shape_cast %73 : vector<16x16x128xbf16> to vector<256x128xbf16>
    %c128_81 = arith.constant 128 : index
    %c0_82 = arith.constant 0 : index
    %75 = vector.load %arg3[%c128_81, %c0_82] : memref<1152x128xbf16, #tpu.memory_space<vmem>>, vector<128x128xbf16>
    %cst_83 = arith.constant dense<0.000000e+00> : vector<256x128xf32>
    %76 = tpu.matmul %74, %75, %cst_83 {dimension_numbers = #tpu.dot_dimension_numbers<[1], [0], [0], [1], [0, 0, 1, 1], [], []>} : vector<256x128xbf16>, vector<128x128xbf16>, vector<256x128xf32> -> vector<256x128xf32>
    %77 = arith.addf %72, %76 : vector<256x128xf32>
    %c0_84 = arith.constant 0 : index
    %c2_85 = arith.constant 2 : index
    %c0_86 = arith.constant 0 : index
    %78 = vector.load %arg7[%c0_84, %c2_85, %c0_86] : memref<18x24x128xbf16, #tpu.memory_space<vmem>>, vector<16x16x128xbf16>
    %79 = vector.shape_cast %78 : vector<16x16x128xbf16> to vector<256x128xbf16>
    %c256_87 = arith.constant 256 : index
    %c0_88 = arith.constant 0 : index
    %80 = vector.load %arg3[%c256_87, %c0_88] : memref<1152x128xbf16, #tpu.memory_space<vmem>>, vector<128x128xbf16>
    %cst_89 = arith.constant dense<0.000000e+00> : vector<256x128xf32>
    %81 = tpu.matmul %79, %80, %cst_89 {dimension_numbers = #tpu.dot_dimension_numbers<[1], [0], [0], [1], [0, 0, 1, 1], [], []>} : vector<256x128xbf16>, vector<128x128xbf16>, vector<256x128xf32> -> vector<256x128xf32>
    %82 = arith.addf %77, %81 : vector<256x128xf32>
    %c1_90 = arith.constant 1 : index
    %c0_91 = arith.constant 0 : index
    %c0_92 = arith.constant 0 : index
    %83 = vector.load %arg7[%c1_90, %c0_91, %c0_92] : memref<18x24x128xbf16, #tpu.memory_space<vmem>>, vector<16x16x128xbf16>
    %84 = vector.shape_cast %83 : vector<16x16x128xbf16> to vector<256x128xbf16>
    %c384_93 = arith.constant 384 : index
    %c0_94 = arith.constant 0 : index
    %85 = vector.load %arg3[%c384_93, %c0_94] : memref<1152x128xbf16, #tpu.memory_space<vmem>>, vector<128x128xbf16>
    %cst_95 = arith.constant dense<0.000000e+00> : vector<256x128xf32>
    %86 = tpu.matmul %84, %85, %cst_95 {dimension_numbers = #tpu.dot_dimension_numbers<[1], [0], [0], [1], [0, 0, 1, 1], [], []>} : vector<256x128xbf16>, vector<128x128xbf16>, vector<256x128xf32> -> vector<256x128xf32>
    %87 = arith.addf %82, %86 : vector<256x128xf32>
    %c1_96 = arith.constant 1 : index
    %c1_97 = arith.constant 1 : index
    %c0_98 = arith.constant 0 : index
    %88 = vector.load %arg7[%c1_96, %c1_97, %c0_98] : memref<18x24x128xbf16, #tpu.memory_space<vmem>>, vector<16x16x128xbf16>
    %89 = vector.shape_cast %88 : vector<16x16x128xbf16> to vector<256x128xbf16>
    %c512_99 = arith.constant 512 : index
    %c0_100 = arith.constant 0 : index
    %90 = vector.load %arg3[%c512_99, %c0_100] : memref<1152x128xbf16, #tpu.memory_space<vmem>>, vector<128x128xbf16>
    %cst_101 = arith.constant dense<0.000000e+00> : vector<256x128xf32>
    %91 = tpu.matmul %89, %90, %cst_101 {dimension_numbers = #tpu.dot_dimension_numbers<[1], [0], [0], [1], [0, 0, 1, 1], [], []>} : vector<256x128xbf16>, vector<128x128xbf16>, vector<256x128xf32> -> vector<256x128xf32>
    %92 = arith.addf %87, %91 : vector<256x128xf32>
    %c1_102 = arith.constant 1 : index
    %c2_103 = arith.constant 2 : index
    %c0_104 = arith.constant 0 : index
    %93 = vector.load %arg7[%c1_102, %c2_103, %c0_104] : memref<18x24x128xbf16, #tpu.memory_space<vmem>>, vector<16x16x128xbf16>
    %94 = vector.shape_cast %93 : vector<16x16x128xbf16> to vector<256x128xbf16>
    %c640_105 = arith.constant 640 : index
    %c0_106 = arith.constant 0 : index
    %95 = vector.load %arg3[%c640_105, %c0_106] : memref<1152x128xbf16, #tpu.memory_space<vmem>>, vector<128x128xbf16>
    %cst_107 = arith.constant dense<0.000000e+00> : vector<256x128xf32>
    %96 = tpu.matmul %94, %95, %cst_107 {dimension_numbers = #tpu.dot_dimension_numbers<[1], [0], [0], [1], [0, 0, 1, 1], [], []>} : vector<256x128xbf16>, vector<128x128xbf16>, vector<256x128xf32> -> vector<256x128xf32>
    %97 = arith.addf %92, %96 : vector<256x128xf32>
    %c2_108 = arith.constant 2 : index
    %c0_109 = arith.constant 0 : index
    %c0_110 = arith.constant 0 : index
    %98 = vector.load %arg7[%c2_108, %c0_109, %c0_110] : memref<18x24x128xbf16, #tpu.memory_space<vmem>>, vector<16x16x128xbf16>
    %99 = vector.shape_cast %98 : vector<16x16x128xbf16> to vector<256x128xbf16>
    %c768_111 = arith.constant 768 : index
    %c0_112 = arith.constant 0 : index
    %100 = vector.load %arg3[%c768_111, %c0_112] : memref<1152x128xbf16, #tpu.memory_space<vmem>>, vector<128x128xbf16>
    %cst_113 = arith.constant dense<0.000000e+00> : vector<256x128xf32>
    %101 = tpu.matmul %99, %100, %cst_113 {dimension_numbers = #tpu.dot_dimension_numbers<[1], [0], [0], [1], [0, 0, 1, 1], [], []>} : vector<256x128xbf16>, vector<128x128xbf16>, vector<256x128xf32> -> vector<256x128xf32>
    %102 = arith.addf %97, %101 : vector<256x128xf32>
    %c2_114 = arith.constant 2 : index
    %c1_115 = arith.constant 1 : index
    %c0_116 = arith.constant 0 : index
    %103 = vector.load %arg7[%c2_114, %c1_115, %c0_116] : memref<18x24x128xbf16, #tpu.memory_space<vmem>>, vector<16x16x128xbf16>
    %104 = vector.shape_cast %103 : vector<16x16x128xbf16> to vector<256x128xbf16>
    %c896_117 = arith.constant 896 : index
    %c0_118 = arith.constant 0 : index
    %105 = vector.load %arg3[%c896_117, %c0_118] : memref<1152x128xbf16, #tpu.memory_space<vmem>>, vector<128x128xbf16>
    %cst_119 = arith.constant dense<0.000000e+00> : vector<256x128xf32>
    %106 = tpu.matmul %104, %105, %cst_119 {dimension_numbers = #tpu.dot_dimension_numbers<[1], [0], [0], [1], [0, 0, 1, 1], [], []>} : vector<256x128xbf16>, vector<128x128xbf16>, vector<256x128xf32> -> vector<256x128xf32>
    %107 = arith.addf %102, %106 : vector<256x128xf32>
    %c2_120 = arith.constant 2 : index
    %c2_121 = arith.constant 2 : index
    %c0_122 = arith.constant 0 : index
    %108 = vector.load %arg7[%c2_120, %c2_121, %c0_122] : memref<18x24x128xbf16, #tpu.memory_space<vmem>>, vector<16x16x128xbf16>
    %109 = vector.shape_cast %108 : vector<16x16x128xbf16> to vector<256x128xbf16>
    %c1024_123 = arith.constant 1024 : index
    %c0_124 = arith.constant 0 : index
    %110 = vector.load %arg3[%c1024_123, %c0_124] : memref<1152x128xbf16, #tpu.memory_space<vmem>>, vector<128x128xbf16>
    %cst_125 = arith.constant dense<0.000000e+00> : vector<256x128xf32>
    %111 = tpu.matmul %109, %110, %cst_125 {dimension_numbers = #tpu.dot_dimension_numbers<[1], [0], [0], [1], [0, 0, 1, 1], [], []>} : vector<256x128xbf16>, vector<128x128xbf16>, vector<256x128xf32> -> vector<256x128xf32>
    %112 = arith.addf %107, %111 : vector<256x128xf32>
    %c0_126 = arith.constant 0 : index
    %c0_127 = arith.constant 0 : index
    %113 = vector.load %arg5[%c0_126, %c0_127] : memref<1x128xf32, #tpu.memory_space<vmem>>, vector<1x128xf32>
    %114 = vector.broadcast %113 : vector<1x128xf32> to vector<256x128xf32>
    %115 = arith.addf %112, %114 : vector<256x128xf32>
    %c0_128 = arith.constant 0 : index
    %c1_129 = arith.constant 1 : index
    %c1_130 = arith.constant 1 : index
    %c0_131 = arith.constant 0 : index
    %116 = vector.load %arg1[%c0_128, %c1_129, %c1_130, %c0_131] : memref<1x18x24x128xbf16, #tpu.memory_space<vmem>>, vector<1x16x16x128xbf16>
    %117 = vector.shape_cast %116 : vector<1x16x16x128xbf16> to vector<16x16x128xbf16>
    %118 = vector.shape_cast %117 : vector<16x16x128xbf16> to vector<256x128xbf16>
    %119 = arith.extf %118 : vector<256x128xbf16> to vector<256x128xf32>
    %120 = arith.addf %115, %119 : vector<256x128xf32>
    %cst_132 = arith.constant 0.000000e+00 : f32
    %121 = vector.broadcast %cst_132 : f32 to vector<256x128xf32>
    %122 = arith.maximumf %120, %121 : vector<256x128xf32>
    %123 = vector.shape_cast %122 : vector<256x128xf32> to vector<16x16x128xf32>
    %c0_133 = arith.constant 0 : index
    %c0_134 = arith.constant 0 : index
    %c0_135 = arith.constant 0 : index
    %c0_136 = arith.constant 0 : index
    %124 = vector.load %arg6[%c0_133, %c0_134, %c0_135, %c0_136] : memref<1x16x16x128xf32, #tpu.memory_space<vmem>>, vector<1x16x16x128xf32>
    %125 = vector.shape_cast %124 : vector<1x16x16x128xf32> to vector<16x16x128xf32>
    %126 = vector.shape_cast %123 : vector<16x16x128xf32> to vector<1x16x16x128xf32>
    tpu.vector_store %arg6[%c0_133, %c0_134, %c0_135, %c0_136], %126 {strides = array<i32>} : memref<1x16x16x128xf32, #tpu.memory_space<vmem>>, vector<1x16x16x128xf32>,
    return
  }
  func.func @transform_0(%arg0: i32) -> (i32, i32, i32, i32) {
    %c0_i32 = arith.constant 0 : i32
    %c0_i32_0 = arith.constant 0 : i32
    %c0_i32_1 = arith.constant 0 : i32
    %c0_i32_2 = arith.constant 0 : i32
    return %arg0, %c0_i32, %c0_i32_0, %c0_i32_1 : i32, i32, i32, i32
  }
  func.func @transform_1(%arg0: i32) -> (i32, i32) {
    %c0_i32 = arith.constant 0 : i32
    %c0_i32_0 = arith.constant 0 : i32
    %c0_i32_1 = arith.constant 0 : i32
    return %c0_i32, %c0_i32_0 : i32, i32
  }
  func.func @transform_2(%arg0: i32) -> (i32, i32) {
    %c0_i32 = arith.constant 0 : i32
    %c0_i32_0 = arith.constant 0 : i32
    %c0_i32_1 = arith.constant 0 : i32
    return %c0_i32, %c0_i32_0 : i32, i32
  }
  func.func @transform_3(%arg0: i32) -> (i32, i32) {
    %c0_i32 = arith.constant 0 : i32
    %c0_i32_0 = arith.constant 0 : i32
    %c0_i32_1 = arith.constant 0 : i32
    return %c0_i32, %c0_i32_0 : i32, i32
  }
  func.func @transform_4(%arg0: i32) -> (i32, i32) {
    %c0_i32 = arith.constant 0 : i32
    %c0_i32_0 = arith.constant 0 : i32
    %c0_i32_1 = arith.constant 0 : i32
    return %c0_i32, %c0_i32_0 : i32, i32
  }
  func.func @transform_5(%arg0: i32) -> (i32, i32, i32, i32) {
    %c0_i32 = arith.constant 0 : i32
    %c0_i32_0 = arith.constant 0 : i32
    %c0_i32_1 = arith.constant 0 : i32
    %c0_i32_2 = arith.constant 0 : i32
    return %arg0, %c0_i32, %c0_i32_0, %c0_i32_1 : i32, i32, i32, i32
  }
}

</mosaic_0001>

<llo_original>
// kernel: tpu_custom_call.1
$region0: #{tpu_custom_call.1}
  #allocation0 [shape = 'u32[]', space=smem, size = 0x4, offset = 0x4, fixed_abs, tag = 'smem constant byte address 0x4 - core index']
  #allocation1 [shape = 'u32[144,128]{1,0:T(1,128)}', space=vmem, size = 0x12000, scoped, tag = 'internal scratch']
  #allocation2 [shape = 'bf16[18,24,128]{2,1,0:T(8,128)(2,1)}', space=vmem, size = 0x1b000, scoped, tag = 'scratch operand']
  %s0 = inlined_call_operand.hbm [shape: bf16[2,18,24,128], index: 0, kind: input, shape index: {}]
  %s1 = inlined_call_operand.hbm [shape: bf16[1152,128], index: 1, kind: input, shape index: {}]
  %s2 = inlined_call_operand.hbm [shape: bf16[1152,128], index: 2, kind: input, shape index: {}]
  %s3 = inlined_call_operand.vmem [shape: f32[1,128], index: 3, kind: input, shape index: {}]
  %s4 = inlined_call_operand.vmem [shape: f32[1,128], index: 4, kind: input, shape index: {}]
  %s5 = inlined_call_operand.hbm [shape: f32[2,16,16,128], index: 5, kind: output, shape index: {}]
  %s6 = sld [smem:[#allocation0]]
  $region65: #{tpu_custom_call.1} parent=0
    _
  %s8 = ssub.s32 1, %s6
  %s9 = scalar_select 0, %s8, %s6
  $region1: #{tpu_custom_call.1} parent=0
    #allocation3 [shape = 'u8[221184]{0}', space=vmem, size = 0x36000, scoped, tag = 'input window, operand 0']
    #allocation4 [shape = 's32[2]{0}', space=sflag, size = 0x8, scoped, tag = 'scoped memory for tpu_custom_call.1']
    #allocation5 [shape = 's32[2]{0}', space=sflag, size = 0x8, scoped, tag = 'scoped memory for tpu_custom_call.1']
    #allocation6 [shape = 'u8[294912]{0}', space=vmem, size = 0x48000, scoped, tag = 'input window, operand 1, single buffered']
    #allocation7 [shape = 's32[1]{0}', space=sflag, size = 0x4, scoped, tag = 'scoped memory for tpu_custom_call.1']
    #allocation8 [shape = 'u8[294912]{0}', space=vmem, size = 0x48000, scoped, tag = 'input window, operand 2, single buffered']
    #allocation9 [shape = 'u8[262144]{0}', space=vmem, size = 0x40000, scoped, tag = 'output window, operand 0']
    %10 = vsyncpa [#allocation4], 0
    %s11 = scalar_lea.sflag [#allocation4], 1
    %12 = vsyncpa %s11, 0
    %13 = vsyncpa [#allocation7], 0
    %14 = vsyncpa [#allocation5], 0
    %s15 = scalar_lea.sflag [#allocation5], 1
    %16 = vsyncpa %s15, 0
    loop: start=0, step=1, limit=4
    $region2: #{tpu_custom_call.1} parent=1 // loop_pre_header
      _
    $region3: #{tpu_custom_call.1} parent=1 // loop_header
      %s18 = sphi 0, %s22
      %p19 = scmp.ge.s32.totalorder %s18, 4
      %s28 = sphi 0, %s30
      %s31 = sphi 0, %s28
      %s32 = sphi 0, %s31
      %s48 = sphi 0, %s32
      %s52 = sphi 0, %s52
      %s54 = sphi 0, %s52
      %s55 = sphi 0, %s54
      %s69 = sphi 0, %s55
      %s73 = sphi 0, %s73
      %s75 = sphi 0, %s73
      %s76 = sphi 0, %s75
      %s90 = sphi 0, %s76
      %s94 = sphi 0, %s94
      %s96 = sphi 0, %s94
      %s97 = sphi 0, %s96
      %s111 = sphi 0, %s97
      %s115 = sphi 0, %s115
      %s117 = sphi 0, %s115
      %s118 = sphi 0, %s117
      %s132 = sphi 0, %s118
      %s138 = sphi 0, %s140
      %s141 = sphi 0, %s138
      %s142 = sphi 0, %s141
      %s158 = sphi 0, %s142
    $region4: #{tpu_custom_call.1} parent=1 // loop_header_branch
      %21 = sbr.rel (%p19) target = $region8
    $region5: #{tpu_custom_call.1} parent=1 // loop_body
      %s23 = ssub.s32 %s18, 1
      %s24 = ssub.s32 %s18, 2
      %s25 = sadd.s32 %s18, 1
      %s26 = ssub.s32 %s18, %s25
      %p27 = scmp.eq.s32.totalorder %s26, 0
      %s29 = sadd.s32 %s28, 1
      %s30 = scalar_select %p27, %s28, %s29
      %p33 = pneg %p27
      %p34 = scmp.eq.s32.totalorder %s18, 1
      %p35 = por %p33, %p34
      %p36 = scmp.ne.s32.totalorder %s28, %s31
      %p37 = scmp.eq.s32.totalorder %s18, 0
      %p38 = por %p36, %p37
      %p39 = scmp.ne.s32.totalorder %s28, %s31
      %p40 = scmp.eq.s32.totalorder %s23, 1
      %p41 = por %p39, %p40
      %p42 = scmp.ne.s32.totalorder %s31, %s32
      %p43 = scmp.eq.s32.totalorder %s23, 0
      %p44 = por %p42, %p43
      %p45 = scmp.ne.s32.totalorder %s31, %s32
      %p46 = scmp.eq.s32.totalorder %s24, 1
      %p47 = por %p45, %p46
      %p49 = scmp.ne.s32.totalorder %s32, %s48
      %p50 = scmp.eq.s32.totalorder %s24, 0
      %p51 = por %p49, %p50
      %s53 = sadd.s32 %s52, 1
      %p56 = scmp.eq.s32.totalorder %s18, 1
      %p57 = scmp.ne.s32.totalorder %s52, %s54
      %p58 = scmp.eq.s32.totalorder %s18, 0
      %p59 = por %p57, %p58
      %p60 = scmp.ne.s32.totalorder %s52, %s54
      %p61 = scmp.eq.s32.totalorder %s23, 1
      %p62 = por %p60, %p61
      %p63 = scmp.ne.s32.totalorder %s54, %s55
      %p64 = scmp.eq.s32.totalorder %s23, 0
      %p65 = por %p63, %p64
      %p66 = scmp.ne.s32.totalorder %s54, %s55
      %p67 = scmp.eq.s32.totalorder %s24, 1
      %p68 = por %p66, %p67
      %p70 = scmp.ne.s32.totalorder %s55, %s69
      %p71 = scmp.eq.s32.totalorder %s24, 0
      %p72 = por %p70, %p71
      %s74 = sadd.s32 %s73, 1
      %p77 = scmp.eq.s32.totalorder %s18, 1
      %p78 = scmp.ne.s32.totalorder %s73, %s75
      %p79 = scmp.eq.s32.totalorder %s18, 0
      %p80 = por %p78, %p79
      %p81 = scmp.ne.s32.totalorder %s73, %s75
      %p82 = scmp.eq.s32.totalorder %s23, 1
      %p83 = por %p81, %p82
      %p84 = scmp.ne.s32.totalorder %s75, %s76
      %p85 = scmp.eq.s32.totalorder %s23, 0
      %p86 = por %p84, %p85
      %p87 = scmp.ne.s32.totalorder %s75, %s76
      %p88 = scmp.eq.s32.totalorder %s24, 1
      %p89 = por %p87, %p88
      %p91 = scmp.ne.s32.totalorder %s76, %s90
      %p92 = scmp.eq.s32.totalorder %s24, 0
      %p93 = por %p91, %p92
      %s95 = sadd.s32 %s94, 1
      %p98 = scmp.eq.s32.totalorder %s18, 1
      %p99 = scmp.ne.s32.totalorder %s94, %s96
      %p100 = scmp.eq.s32.totalorder %s18, 0
      %p101 = por %p99, %p100
      %p102 = scmp.ne.s32.totalorder %s94, %s96
      %p103 = scmp.eq.s32.totalorder %s23, 1
      %p104 = por %p102, %p103
      %p105 = scmp.ne.s32.totalorder %s96, %s97
      %p106 = scmp.eq.s32.totalorder %s23, 0
      %p107 = por %p105, %p106
      %p108 = scmp.ne.s32.totalorder %s96, %s97
      %p109 = scmp.eq.s32.totalorder %s24, 1
      %p110 = por %p108, %p109
      %p112 = scmp.ne.s32.totalorder %s97, %s111
      %p113 = scmp.eq.s32.totalorder %s24, 0
      %p114 = por %p112, %p113
      %s116 = sadd.s32 %s115, 1
      %p119 = scmp.eq.s32.totalorder %s18, 1
      %p120 = scmp.ne.s32.totalorder %s115, %s117
      %p121 = scmp.eq.s32.totalorder %s18, 0
      %p122 = por %p120, %p121
      %p123 = scmp.ne.s32.totalorder %s115, %s117
      %p124 = scmp.eq.s32.totalorder %s23, 1
      %p125 = por %p123, %p124
      %p126 = scmp.ne.s32.totalorder %s117, %s118
      %p127 = scmp.eq.s32.totalorder %s23, 0
      %p128 = por %p126, %p127
      %p129 = scmp.ne.s32.totalorder %s117, %s118
      %p130 = scmp.eq.s32.totalorder %s24, 1
      %p131 = por %p129, %p130
      %p133 = scmp.ne.s32.totalorder %s118, %s132
      %p134 = scmp.eq.s32.totalorder %s24, 0
      %p135 = por %p133, %p134
      %s136 = ssub.s32 %s18, %s25
      %p137 = scmp.eq.s32.totalorder %s136, 0
      %s139 = sadd.s32 %s138, 1
      %s140 = scalar_select %p137, %s138, %s139
      %p143 = pneg %p137
      %p144 = scmp.eq.s32.totalorder %s18, 1
      %p145 = por %p143, %p144
      %p146 = scmp.ne.s32.totalorder %s138, %s141
      %p147 = scmp.eq.s32.totalorder %s18, 0
      %p148 = por %p146, %p147
      %p149 = scmp.ne.s32.totalorder %s138, %s141
      %p150 = scmp.eq.s32.totalorder %s23, 1
      %p151 = por %p149, %p150
      %p152 = scmp.ne.s32.totalorder %s141, %s142
      %p153 = scmp.eq.s32.totalorder %s23, 0
      %p154 = por %p152, %p153
      %p155 = scmp.ne.s32.totalorder %s141, %s142
      %p156 = scmp.eq.s32.totalorder %s24, 1
      %p157 = por %p155, %p156
      %p159 = scmp.ne.s32.totalorder %s142, %s158
      %p160 = scmp.eq.s32.totalorder %s24, 0
      %p161 = por %p159, %p160
      %p162 = scmp.le.s32.totalorder 1, %s18
      %p163 = scmp.lt.s32.totalorder %s18, 3
      %p164 = pnand %p162, %p163
      %p165 = pneg %p164
      // Predicated region
      $region9: #{tpu_custom_call.1} parent=5 // pred_check
        _
      $region10: #{tpu_custom_call.1} parent=5 // pred_check_branch
        %167 = sbr.rel (%p164) target = $region12
      $region11: #{tpu_custom_call.1} parent=5 // pred_region
        %s168 = ssub.s32 %s18, 1
        // Predicated region
        $region13: #{tpu_custom_call.1} parent=11 // pred_check
          %p169 = pneg %p65
        $region14: #{tpu_custom_call.1} parent=11 // pred_check_branch
          %171 = sbr.rel (%p169) target = $region16
        $region15: #{tpu_custom_call.1} parent=11 // pred_region
          %s173 = ssub.s32 9216, 9216
          %174 = vsyncadd [#allocation7], %s173
          %s175 = sshll.u32 [#allocation6], 4
          %s176 = int_to_ptr.vmem [resolvable:$true] %s175
          %181 = dma.hbm_to_vmem [thread:$0]  %s1, 9216, %s176, [#allocation7], 64, 64, 4
        $region16: #{tpu_custom_call.1} parent=11 // pred_fallthru
          _
        // Predicated region
        $region17: #{tpu_custom_call.1} parent=11 // pred_check
          %p182 = pneg %p86
        $region18: #{tpu_custom_call.1} parent=11 // pred_check_branch
          %184 = sbr.rel (%p182) target = $region20
        $region19: #{tpu_custom_call.1} parent=11 // pred_region
          %s186 = ssub.s32 9216, 9216
          %187 = vsyncadd [#allocation7], %s186
          %s188 = sshll.u32 [#allocation8], 4
          %s189 = int_to_ptr.vmem [resolvable:$true] %s188
          %194 = dma.hbm_to_vmem [thread:$0]  %s2, 9216, %s189, [#allocation7], 64, 64, 4
        $region20: #{tpu_custom_call.1} parent=11 // pred_fallthru
          _
        // Predicated region
        $region21: #{tpu_custom_call.1} parent=11 // pred_check
          %p195 = pneg %p107
        $region22: #{tpu_custom_call.1} parent=11 // pred_check_branch
          %197 = sbr.rel (%p195) target = $region24
        $region23: #{tpu_custom_call.1} parent=11 // pred_region
          _
        $region24: #{tpu_custom_call.1} parent=11 // pred_fallthru
          _
        // Predicated region
        $region25: #{tpu_custom_call.1} parent=11 // pred_check
          %p198 = pneg %p128
        $region26: #{tpu_custom_call.1} parent=11 // pred_check_branch
          %200 = sbr.rel (%p198) target = $region28
        $region27: #{tpu_custom_call.1} parent=11 // pred_region
          _
        $region28: #{tpu_custom_call.1} parent=11 // pred_fallthru
          _
      $region12: #{tpu_custom_call.1} parent=5 // pred_fallthru
        _
      %p201 = scmp.lt.s32.totalorder %s18, 2
      // Predicated region
      $region29: #{tpu_custom_call.1} parent=5 // pred_check
        %p202 = pneg %p201
      $region30: #{tpu_custom_call.1} parent=5 // pred_check_branch
        %204 = sbr.rel (%p202) target = $region32
      $region31: #{tpu_custom_call.1} parent=5 // pred_region
        // Predicated region
        $region33: #{tpu_custom_call.1} parent=31 // pred_check
          %p205 = pneg %p38
        $region34: #{tpu_custom_call.1} parent=31 // pred_check_branch
          %207 = sbr.rel (%p205) target = $region36
        $region35: #{tpu_custom_call.1} parent=31 // pred_region
          %s208 = sand.u32 %s28, 1
          %s209 = scalar_lea.sflag [#allocation4], %s208
          %s210 = sand.u32 %s28, 1
          %s211 = smul.addr %s210, 216
          %s212 = scalar_lea.vmem [#allocation3], %s211
          %s214 = ssub.s32 3456, 3456
          %215 = vsyncadd %s209, %s214
          %s216 = smul.addr %s18, 54
          %s217 = smul.addr %s216, 64
          %s218 = scalar_lea.hbm %s0, %s217
          %s219 = sshll.u32 %s212, 4
          %s220 = int_to_ptr.vmem [resolvable:$true] %s219
          %225 = dma.hbm_to_vmem [thread:$0]  %s218, 3456, %s220, %s209, 64, 64, 4
        $region36: #{tpu_custom_call.1} parent=31 // pred_fallthru
          _
      $region32: #{tpu_custom_call.1} parent=5 // pred_fallthru
        _
      %p226 = scmp.le.s32.totalorder 1, %s18
      %p227 = scmp.lt.s32.totalorder %s18, 3
      %p228 = pnand %p226, %p227
      %p229 = pneg %p228
      // Predicated region
      $region37: #{tpu_custom_call.1} parent=5 // pred_check
        _
      $region38: #{tpu_custom_call.1} parent=5 // pred_check_branch
        %231 = sbr.rel (%p228) target = $region40
      $region39: #{tpu_custom_call.1} parent=5 // pred_region
        %s232 = ssub.s32 %s18, 1
        %s233 = sand.u32 %s31, 1
        %s234 = scalar_lea.sflag [#allocation4], %s233
        %s235 = sand.u32 %s31, 1
        %s236 = smul.addr %s235, 216
        %s237 = scalar_lea.vmem [#allocation3], %s236
        // Predicated region
        $region41: #{tpu_custom_call.1} parent=39 // pred_check
          %p238 = pneg %p44
        $region42: #{tpu_custom_call.1} parent=39 // pred_check_branch
          %240 = sbr.rel (%p238) target = $region44
        $region43: #{tpu_custom_call.1} parent=39 // pred_region
          %241 = dma.done %s234, 3456
        $region44: #{tpu_custom_call.1} parent=39 // pred_fallthru
          _
        // Predicated region
        $region45: #{tpu_custom_call.1} parent=39 // pred_check
          %p242 = pneg %p65
        $region46: #{tpu_custom_call.1} parent=39 // pred_check_branch
          %244 = sbr.rel (%p242) target = $region48
        $region47: #{tpu_custom_call.1} parent=39 // pred_region
          %245 = dma.done [#allocation7], 9216
        $region48: #{tpu_custom_call.1} parent=39 // pred_fallthru
          _
        // Predicated region
        $region49: #{tpu_custom_call.1} parent=39 // pred_check
          %p246 = pneg %p86
        $region50: #{tpu_custom_call.1} parent=39 // pred_check_branch
          %248 = sbr.rel (%p246) target = $region52
        $region51: #{tpu_custom_call.1} parent=39 // pred_region
          %249 = dma.done [#allocation7], 9216
        $region52: #{tpu_custom_call.1} parent=39 // pred_fallthru
          _
        %s250 = sand.u32 %s31, 1
        %s251 = scalar_lea.sflag [#allocation4], %s250
        %s252 = sand.u32 %s31, 1
        %s253 = smul.addr %s252, 216
        %s254 = scalar_lea.vmem [#allocation3], %s253
        %p255 = pneg %p44
        %p256 = pneg %p41
        %p257 = pneg %p65
        %p258 = pneg %p62
        %p259 = pneg %p86
        %p260 = pneg %p83
        %p261 = pneg %p107
        %p262 = pneg %p104
        %p263 = pneg %p128
        %p264 = pneg %p125
        %p265 = pneg %p154
        %p266 = pneg %p151
        %s267 = sand.u32 %s141, 1
        %s268 = scalar_lea.sflag [#allocation5], %s267
        %s269 = sand.u32 %s141, 1
        %s270 = smul.addr %s269, 256
        %s271 = scalar_lea.vmem [#allocation9], %s270
        %v273 = vld [vmem:[%s237] sm:$0xf]
        %v274 = vld [vmem:[%s237 + $0x4] sm:$0xf]
        %v275 = vld [vmem:[%s237 + $0xc] sm:$0xf]
        %v276 = vld [vmem:[%s237 + $0x10] sm:$0xf]
        %v277 = vld [vmem:[%s237 + $0x18] sm:$0xf]
        %v278 = vld [vmem:[%s237 + $0x1c] sm:$0xf]
        %v279 = vld [vmem:[%s237 + $0x24] sm:$0xf]
        %v280 = vld [vmem:[%s237 + $0x28] sm:$0xf]
        %v281 = vld [vmem:[%s237 + $0x30] sm:$0xf]
        %v282 = vld [vmem:[%s237 + $0x34] sm:$0xf]
        %v283 = vld [vmem:[%s237 + $0x3c] sm:$0xf]
        %v284 = vld [vmem:[%s237 + $0x40] sm:$0xf]
        %v285 = vld [vmem:[%s237 + $0x48] sm:$0xf]
        %v286 = vld [vmem:[%s237 + $0x4c] sm:$0xf]
        %v287 = vld [vmem:[%s237 + $0x54] sm:$0xf]
        %v288 = vld [vmem:[%s237 + $0x58] sm:$0xf]
        %v289 = vld [vmem:[%s237 + $0x60] sm:$0xf]
        %v290 = vld [vmem:[%s237 + $0x64] sm:$0xf]
        %v291 = vld [vmem:[%s237 + $0x6c] sm:$0xf]
        %v292 = vld [vmem:[%s237 + $0x70] sm:$0xf]
        %v293 = vld [vmem:[%s237 + $0x78] sm:$0xf]
        %v294 = vld [vmem:[%s237 + $0x7c] sm:$0xf]
        %v295 = vld [vmem:[%s237 + $0x84] sm:$0xf]
        %v296 = vld [vmem:[%s237 + $0x88] sm:$0xf]
        %v297 = vld [vmem:[%s237 + $0x90] sm:$0xf]
        %v298 = vld [vmem:[%s237 + $0x94] sm:$0xf]
        %v299 = vld [vmem:[%s237 + $0x9c] sm:$0xf]
        %v300 = vld [vmem:[%s237 + $0xa0] sm:$0xf]
        %v301 = vld [vmem:[%s237 + $0xa8] sm:$0xf]
        %v302 = vld [vmem:[%s237 + $0xac] sm:$0xf]
        %v303 = vld [vmem:[%s237 + $0xb4] sm:$0xf]
        %v304 = vld [vmem:[%s237 + $0xb8] sm:$0xf]
        %v305 = vld [vmem:[#allocation6] sm:$0xf]
        %v306 = vld [vmem:[#allocation6 + $0x4] sm:$0xf]
        %v307 = vld [vmem:[#allocation6 + $0x8] sm:$0xf]
        %v308 = vld [vmem:[#allocation6 + $0xc] sm:$0xf]
        %v309 = vld [vmem:[#allocation6 + $0x10] sm:$0xf]
        %v310 = vld [vmem:[#allocation6 + $0x14] sm:$0xf]
        %v311 = vld [vmem:[#allocation6 + $0x18] sm:$0xf]
        %v312 = vld [vmem:[#allocation6 + $0x1c] sm:$0xf]
        %v313 = vld [vmem:[#allocation6 + $0x20] sm:$0xf]
        %v314 = vld [vmem:[#allocation6 + $0x24] sm:$0xf]
        %v315 = vld [vmem:[#allocation6 + $0x28] sm:$0xf]
        %v316 = vld [vmem:[#allocation6 + $0x2c] sm:$0xf]
        %v317 = vld [vmem:[#allocation6 + $0x30] sm:$0xf]
        %v318 = vld [vmem:[#allocation6 + $0x34] sm:$0xf]
        %v319 = vld [vmem:[#allocation6 + $0x38] sm:$0xf]
        %v320 = vld [vmem:[#allocation6 + $0x3c] sm:$0xf]
        %v321 = vld [vmem:[%s237 + $0x8] sm:$0x1]
        %v322 = vld [vmem:[%s237 + $0x14] sm:$0x1]
        %v323 = vld [vmem:[%s237 + $0x20] sm:$0x1]
        %v324 = vld [vmem:[%s237 + $0x2c] sm:$0x1]
        %v325 = vld [vmem:[%s237 + $0x38] sm:$0x1]
        %v326 = vld [vmem:[%s237 + $0x44] sm:$0x1]
        %v327 = vld [vmem:[%s237 + $0x50] sm:$0x1]
        %v328 = vld [vmem:[%s237 + $0x5c] sm:$0x1]
        %v329 = vld [vmem:[%s237 + $0x68] sm:$0x1]
        %v330 = vld [vmem:[%s237 + $0x74] sm:$0x1]
        %v331 = vld [vmem:[%s237 + $0x80] sm:$0x1]
        %v332 = vld [vmem:[%s237 + $0x8c] sm:$0x1]
        %v333 = vld [vmem:[%s237 + $0x98] sm:$0x1]
        %v334 = vld [vmem:[%s237 + $0xa4] sm:$0x1]
        %v335 = vld [vmem:[%s237 + $0xb0] sm:$0x1]
        %v336 = vld [vmem:[%s237 + $0xbc] sm:$0x1]
        %vm337 = vsmask.f32 3328
        %vm338 = vsmask.f32 7440
        %vm339 = vmor %vm337, %vm338
        %v341 = vshrl.u32 %v273, 16
        %v343 = vrot.slane %v341, 4
        %v344 = vshll.u32 %v273, 16
        %v346 = vrot.slane %v344, 5
        %v347 = vor.u32 %v343, %v346
        %v348 = vrot.slane %v347, 4
        %v350 = vshll.u32 %v274, 16
        %v352 = vrot.slane %v350, 5
        %v353 = vsel %vm339, %v348, %v352
        %v354 = vshrl.u32 %v274, 16
        %v356 = vrot.slane %v354, 4
        %v357 = vor.u32 %v356, %v352
        %v358 = vrot.slane %v357, 4
        %v360 = vshll.u32 %v321, 16
        %v362 = vrot.slane %v360, 5
        %v363 = vsel %vm339, %v358, %v362
        %v365 = vshrl.u32 %v275, 16
        %v367 = vrot.slane %v365, 4
        %v368 = vshll.u32 %v275, 16
        %v370 = vrot.slane %v368, 5
        %v371 = vor.u32 %v367, %v370
        %v372 = vrot.slane %v371, 4
        %v374 = vshll.u32 %v276, 16
        %v376 = vrot.slane %v374, 5
        %v377 = vsel %vm339, %v372, %v376
        %v378 = vshrl.u32 %v276, 16
        %v380 = vrot.slane %v378, 4
        %v381 = vor.u32 %v380, %v376
        %v382 = vrot.slane %v381, 4
        %v384 = vshll.u32 %v322, 16
        %v386 = vrot.slane %v384, 5
        %v387 = vsel %vm339, %v382, %v386
        %v389 = vshrl.u32 %v277, 16
        %v391 = vrot.slane %v389, 4
        %v392 = vshll.u32 %v277, 16
        %v394 = vrot.slane %v392, 5
        %v395 = vor.u32 %v391, %v394
        %v396 = vrot.slane %v395, 4
        %v398 = vshll.u32 %v278, 16
        %v400 = vrot.slane %v398, 5
        %v401 = vsel %vm339, %v396, %v400
        %v402 = vshrl.u32 %v278, 16
        %v404 = vrot.slane %v402, 4
        %v405 = vor.u32 %v404, %v400
        %v406 = vrot.slane %v405, 4
        %v408 = vshll.u32 %v323, 16
        %v410 = vrot.slane %v408, 5
        %v411 = vsel %vm339, %v406, %v410
        %v413 = vshrl.u32 %v279, 16
        %v415 = vrot.slane %v413, 4
        %v416 = vshll.u32 %v279, 16
        %v418 = vrot.slane %v416, 5
        %v419 = vor.u32 %v415, %v418
        %v420 = vrot.slane %v419, 4
        %v422 = vshll.u32 %v280, 16
        %v424 = vrot.slane %v422, 5
        %v425 = vsel %vm339, %v420, %v424
        %v426 = vshrl.u32 %v280, 16
        %v428 = vrot.slane %v426, 4
        %v429 = vor.u32 %v428, %v424
        %v430 = vrot.slane %v429, 4
        %v432 = vshll.u32 %v324, 16
        %v434 = vrot.slane %v432, 5
        %v435 = vsel %vm339, %v430, %v434
        %v437 = vshrl.u32 %v281, 16
        %v439 = vrot.slane %v437, 4
        %v440 = vshll.u32 %v281, 16
        %v442 = vrot.slane %v440, 5
        %v443 = vor.u32 %v439, %v442
        %v444 = vrot.slane %v443, 4
        %v446 = vshll.u32 %v282, 16
        %v448 = vrot.slane %v446, 5
        %v449 = vsel %vm339, %v444, %v448
        %v450 = vshrl.u32 %v282, 16
        %v452 = vrot.slane %v450, 4
        %v453 = vor.u32 %v452, %v448
        %v454 = vrot.slane %v453, 4
        %v456 = vshll.u32 %v325, 16
        %v458 = vrot.slane %v456, 5
        %v459 = vsel %vm339, %v454, %v458
        %v461 = vshrl.u32 %v283, 16
        %v463 = vrot.slane %v461, 4
        %v464 = vshll.u32 %v283, 16
        %v466 = vrot.slane %v464, 5
        %v467 = vor.u32 %v463, %v466
        %v468 = vrot.slane %v467, 4
        %v470 = vshll.u32 %v284, 16
        %v472 = vrot.slane %v470, 5
        %v473 = vsel %vm339, %v468, %v472
        %v474 = vshrl.u32 %v284, 16
        %v476 = vrot.slane %v474, 4
        %v477 = vor.u32 %v476, %v472
        %v478 = vrot.slane %v477, 4
        %v480 = vshll.u32 %v326, 16
        %v482 = vrot.slane %v480, 5
        %v483 = vsel %vm339, %v478, %v482
        %v485 = vshrl.u32 %v285, 16
        %v487 = vrot.slane %v485, 4
        %v488 = vshll.u32 %v285, 16
        %v490 = vrot.slane %v488, 5
        %v491 = vor.u32 %v487, %v490
        %v492 = vrot.slane %v491, 4
        %v494 = vshll.u32 %v286, 16
        %v496 = vrot.slane %v494, 5
        %v497 = vsel %vm339, %v492, %v496
        %v498 = vshrl.u32 %v286, 16
        %v500 = vrot.slane %v498, 4
        %v501 = vor.u32 %v500, %v496
        %v502 = vrot.slane %v501, 4
        %v504 = vshll.u32 %v327, 16
        %v506 = vrot.slane %v504, 5
        %v507 = vsel %vm339, %v502, %v506
        %v509 = vshrl.u32 %v287, 16
        %v511 = vrot.slane %v509, 4
        %v512 = vshll.u32 %v287, 16
        %v514 = vrot.slane %v512, 5
        %v515 = vor.u32 %v511, %v514
        %v516 = vrot.slane %v515, 4
        %v518 = vshll.u32 %v288, 16
        %v520 = vrot.slane %v518, 5
        %v521 = vsel %vm339, %v516, %v520
        %v522 = vshrl.u32 %v288, 16
        %v524 = vrot.slane %v522, 4
        %v525 = vor.u32 %v524, %v520
        %v526 = vrot.slane %v525, 4
        %v528 = vshll.u32 %v328, 16
        %v530 = vrot.slane %v528, 5
        %v531 = vsel %vm339, %v526, %v530
        %v533 = vshrl.u32 %v289, 16
        %v535 = vrot.slane %v533, 4
        %v536 = vshll.u32 %v289, 16
        %v538 = vrot.slane %v536, 5
        %v539 = vor.u32 %v535, %v538
        %v540 = vrot.slane %v539, 4
        %v542 = vshll.u32 %v290, 16
        %v544 = vrot.slane %v542, 5
        %v545 = vsel %vm339, %v540, %v544
        %v546 = vshrl.u32 %v290, 16
        %v548 = vrot.slane %v546, 4
        %v549 = vor.u32 %v548, %v544
        %v550 = vrot.slane %v549, 4
        %v552 = vshll.u32 %v329, 16
        %v554 = vrot.slane %v552, 5
        %v555 = vsel %vm339, %v550, %v554
        %v557 = vshrl.u32 %v291, 16
        %v559 = vrot.slane %v557, 4
        %v560 = vshll.u32 %v291, 16
        %v562 = vrot.slane %v560, 5
        %v563 = vor.u32 %v559, %v562
        %v564 = vrot.slane %v563, 4
        %v566 = vshll.u32 %v292, 16
        %v568 = vrot.slane %v566, 5
        %v569 = vsel %vm339, %v564, %v568
        %v570 = vshrl.u32 %v292, 16
        %v572 = vrot.slane %v570, 4
        %v573 = vor.u32 %v572, %v568
        %v574 = vrot.slane %v573, 4
        %v576 = vshll.u32 %v330, 16
        %v578 = vrot.slane %v576, 5
        %v579 = vsel %vm339, %v574, %v578
        %v581 = vshrl.u32 %v293, 16
        %v583 = vrot.slane %v581, 4
        %v584 = vshll.u32 %v293, 16
        %v586 = vrot.slane %v584, 5
        %v587 = vor.u32 %v583, %v586
        %v588 = vrot.slane %v587, 4
        %v590 = vshll.u32 %v294, 16
        %v592 = vrot.slane %v590, 5
        %v593 = vsel %vm339, %v588, %v592
        %v594 = vshrl.u32 %v294, 16
        %v596 = vrot.slane %v594, 4
        %v597 = vor.u32 %v596, %v592
        %v598 = vrot.slane %v597, 4
        %v600 = vshll.u32 %v331, 16
        %v602 = vrot.slane %v600, 5
        %v603 = vsel %vm339, %v598, %v602
        %v605 = vshrl.u32 %v295, 16
        %v607 = vrot.slane %v605, 4
        %v608 = vshll.u32 %v295, 16
        %v610 = vrot.slane %v608, 5
        %v611 = vor.u32 %v607, %v610
        %v612 = vrot.slane %v611, 4
        %v614 = vshll.u32 %v296, 16
        %v616 = vrot.slane %v614, 5
        %v617 = vsel %vm339, %v612, %v616
        %v618 = vshrl.u32 %v296, 16
        %v620 = vrot.slane %v618, 4
        %v621 = vor.u32 %v620, %v616
        %v622 = vrot.slane %v621, 4
        %v624 = vshll.u32 %v332, 16
        %v626 = vrot.slane %v624, 5
        %v627 = vsel %vm339, %v622, %v626
        %v629 = vshrl.u32 %v297, 16
        %v631 = vrot.slane %v629, 4
        %v632 = vshll.u32 %v297, 16
        %v634 = vrot.slane %v632, 5
        %v635 = vor.u32 %v631, %v634
        %v636 = vrot.slane %v635, 4
        %v638 = vshll.u32 %v298, 16
        %v640 = vrot.slane %v638, 5
        %v641 = vsel %vm339, %v636, %v640
        %v642 = vshrl.u32 %v298, 16
        %v644 = vrot.slane %v642, 4
        %v645 = vor.u32 %v644, %v640
        %v646 = vrot.slane %v645, 4
        %v648 = vshll.u32 %v333, 16
        %v650 = vrot.slane %v648, 5
        %v651 = vsel %vm339, %v646, %v650
        %v653 = vshrl.u32 %v299, 16
        %v655 = vrot.slane %v653, 4
        %v656 = vshll.u32 %v299, 16
        %v658 = vrot.slane %v656, 5
        %v659 = vor.u32 %v655, %v658
        %v660 = vrot.slane %v659, 4
        %v662 = vshll.u32 %v300, 16
        %v664 = vrot.slane %v662, 5
        %v665 = vsel %vm339, %v660, %v664
        %v666 = vshrl.u32 %v300, 16
        %v668 = vrot.slane %v666, 4
        %v669 = vor.u32 %v668, %v664
        %v670 = vrot.slane %v669, 4
        %v672 = vshll.u32 %v334, 16
        %v674 = vrot.slane %v672, 5
        %v675 = vsel %vm339, %v670, %v674
        %v677 = vshrl.u32 %v301, 16
        %v679 = vrot.slane %v677, 4
        %v680 = vshll.u32 %v301, 16
        %v682 = vrot.slane %v680, 5
        %v683 = vor.u32 %v679, %v682
        %v684 = vrot.slane %v683, 4
        %v686 = vshll.u32 %v302, 16
        %v688 = vrot.slane %v686, 5
        %v689 = vsel %vm339, %v684, %v688
        %v690 = vshrl.u32 %v302, 16
        %v692 = vrot.slane %v690, 4
        %v693 = vor.u32 %v692, %v688
        %v694 = vrot.slane %v693, 4
        %v696 = vshll.u32 %v335, 16
        %v698 = vrot.slane %v696, 5
        %v699 = vsel %vm339, %v694, %v698
        %v701 = vshrl.u32 %v303, 16
        %v703 = vrot.slane %v701, 4
        %v704 = vshll.u32 %v303, 16
        %v706 = vrot.slane %v704, 5
        %v707 = vor.u32 %v703, %v706
        %v708 = vrot.slane %v707, 4
        %v710 = vshll.u32 %v304, 16
        %v712 = vrot.slane %v710, 5
        %v713 = vsel %vm339, %v708, %v712
        %v714 = vshrl.u32 %v304, 16
        %v716 = vrot.slane %v714, 4
        %v717 = vor.u32 %v716, %v712
        %v718 = vrot.slane %v717, 4
        %v720 = vshll.u32 %v336, 16
        %v722 = vrot.slane %v720, 5
        %v723 = vsel %vm339, %v718, %v722
        %v724 = vld [vmem:[#allocation6 + $0x40] sm:$0xf]
        %v725 = vld [vmem:[#allocation6 + $0x44] sm:$0xf]
        %v726 = vld [vmem:[#allocation6 + $0x48] sm:$0xf]
        %v727 = vld [vmem:[#allocation6 + $0x4c] sm:$0xf]
        %v728 = vld [vmem:[#allocation6 + $0x50] sm:$0xf]
        %v729 = vld [vmem:[#allocation6 + $0x54] sm:$0xf]
        %v730 = vld [vmem:[#allocation6 + $0x58] sm:$0xf]
        %v731 = vld [vmem:[#allocation6 + $0x5c] sm:$0xf]
        %v732 = vld [vmem:[#allocation6 + $0x60] sm:$0xf]
        %v733 = vld [vmem:[#allocation6 + $0x64] sm:$0xf]
        %v734 = vld [vmem:[#allocation6 + $0x68] sm:$0xf]
        %v735 = vld [vmem:[#allocation6 + $0x6c] sm:$0xf]
        %v736 = vld [vmem:[#allocation6 + $0x70] sm:$0xf]
        %v737 = vld [vmem:[#allocation6 + $0x74] sm:$0xf]
        %v738 = vld [vmem:[#allocation6 + $0x78] sm:$0xf]
        %v739 = vld [vmem:[#allocation6 + $0x7c] sm:$0xf]
        %v740 = vunpack.c.l.b16 %v353
        %v741 = vunpack.c.l.b16 %v363
        %v742 = vunpack.c.l.b16 %v377
        %v743 = vunpack.c.l.b16 %v387
        %v744 = vunpack.c.l.b16 %v401
        %v745 = vunpack.c.l.b16 %v411
        %v746 = vunpack.c.l.b16 %v425
        %v747 = vunpack.c.l.b16 %v435
        %v748 = vunpack.c.l.b16 %v449
        %v749 = vunpack.c.l.b16 %v459
        %v750 = vunpack.c.l.b16 %v473
        %v751 = vunpack.c.l.b16 %v483
        %v752 = vunpack.c.l.b16 %v497
        %v753 = vunpack.c.l.b16 %v507
        %v754 = vunpack.c.l.b16 %v521
        %v755 = vunpack.c.l.b16 %v531
        %v756 = vunpack.c.l.b16 %v545
        %v757 = vunpack.c.l.b16 %v555
        %v758 = vunpack.c.l.b16 %v569
        %v759 = vunpack.c.l.b16 %v579
        %v760 = vunpack.c.l.b16 %v593
        %v761 = vunpack.c.l.b16 %v603
        %v762 = vunpack.c.l.b16 %v617
        %v763 = vunpack.c.l.b16 %v627
        %v764 = vunpack.c.l.b16 %v641
        %v765 = vunpack.c.l.b16 %v651
        %v766 = vunpack.c.l.b16 %v665
        %v767 = vunpack.c.l.b16 %v675
        %v768 = vunpack.c.l.b16 %v689
        %v769 = vunpack.c.l.b16 %v699
        %v770 = vunpack.c.l.b16 %v713
        %v771 = vunpack.c.l.b16 %v723
        %v772 = vpack.c.b16 %v741, %v740
        %v773 = vpack.c.b16 %v743, %v742
        %v774 = vpack.c.b16 %v745, %v744
        %v775 = vpack.c.b16 %v747, %v746
        %v776 = vpack.c.b16 %v749, %v748
        %v777 = vpack.c.b16 %v751, %v750
        %v778 = vpack.c.b16 %v753, %v752
        %v779 = vpack.c.b16 %v755, %v754
        %v780 = vpack.c.b16 %v757, %v756
        %v781 = vpack.c.b16 %v759, %v758
        %v782 = vpack.c.b16 %v761, %v760
        %v783 = vpack.c.b16 %v763, %v762
        %v784 = vpack.c.b16 %v765, %v764
        %v785 = vpack.c.b16 %v767, %v766
        %v786 = vpack.c.b16 %v769, %v768
        %v787 = vpack.c.b16 %v771, %v770
        %v820 = vunpack.c.l.b16 %v724
        %v821 = vunpack.c.l.b16 %v725
        %v822 = vunpack.c.l.b16 %v726
        %v823 = vunpack.c.l.b16 %v727
        %v824 = vunpack.c.l.b16 %v728
        %v825 = vunpack.c.l.b16 %v729
        %v826 = vunpack.c.l.b16 %v730
        %v827 = vunpack.c.l.b16 %v731
        %v828 = vunpack.c.l.b16 %v732
        %v829 = vunpack.c.l.b16 %v733
        %v830 = vunpack.c.l.b16 %v734
        %v831 = vunpack.c.l.b16 %v735
        %v832 = vunpack.c.l.b16 %v736
        %v833 = vunpack.c.l.b16 %v737
        %v834 = vunpack.c.l.b16 %v738
        %v835 = vunpack.c.l.b16 %v739
        %v836 = vpack.c.b16 %v821, %v820
        %v837 = vpack.c.b16 %v823, %v822
        %v838 = vpack.c.b16 %v825, %v824
        %v839 = vpack.c.b16 %v827, %v826
        %v840 = vpack.c.b16 %v829, %v828
        %v841 = vpack.c.b16 %v831, %v830
        %v842 = vpack.c.b16 %v833, %v832
        %v843 = vpack.c.b16 %v835, %v834
        %852 = vmatprep.subr.bf16.mxu0 0
        %853 = vmatpush1.bf16.msra.mxu0 %v843
        %854 = vmatprep.subr.bf16.mxu0 0
        %855 = vmatpush1.bf16.msra.mxu0 %v842
        %856 = vmatprep.subr.bf16.mxu0 0
        %857 = vmatpush1.bf16.msra.mxu0 %v841
        %858 = vmatprep.subr.bf16.mxu0 0
        %859 = vmatpush1.bf16.msra.mxu0 %v840
        %860 = vmatprep.subr.bf16.mxu0 0
        %861 = vmatpush1.bf16.msra.mxu0 %v839
        %862 = vmatprep.subr.bf16.mxu0 0
        %863 = vmatpush1.bf16.msra.mxu0 %v838
        %864 = vmatprep.subr.bf16.mxu0 0
        %865 = vmatpush1.bf16.msra.mxu0 %v837
        %866 = vmatprep.subr.bf16.mxu0 0
        %867 = vmatpush1.bf16.msra.mxu0 %v836
        %868 = vmatprep.subr.bf16.mxu0 0
        %869 = vmatpush2.bf16.msra.mxu0 0
        %870 = vmatprep.subr.bf16.mxu0 0
        %871 = vmatpush2.bf16.msra.mxu0 0
        %872 = vmatprep.subr.bf16.mxu0 0
        %873 = vmatpush2.bf16.msra.mxu0 0
        %874 = vmatprep.subr.bf16.mxu0 0
        %875 = vmatpush2.bf16.msra.mxu0 0
        %876 = vmatprep.subr.bf16.mxu0 0
        %877 = vmatpush2.bf16.msra.mxu0 0
        %878 = vmatprep.subr.bf16.mxu0 0
        %879 = vmatpush2.bf16.msra.mxu0 0
        %880 = vmatprep.subr.bf16.mxu0 0
        %881 = vmatpush2.bf16.msra.mxu0 0
        %882 = vmatprep.subr.bf16.mxu0 0
        %883 = vmatpush2.bf16.msra.mxu0 0
        %884 = vmatprep.mubr.bf16.mxu0 0
        %885 = vmatmul.mubr.bf16.gmra.mxu0 %v772
        %v886 = vpop.f32.mrf.mxu0
        %v887 = vadd.f32 0.0, %v886
        %v888 = vpop.f32.mrf.mxu0
        %v889 = vpop.f32.mrf.mxu0
        %v890 = vadd.f32 0.0, %v889
        %v891 = vpop.f32.mrf.mxu0
        %892 = vmatprep.mubr.bf16.mxu0 0
        %893 = vmatmul.mubr.bf16.gmra.mxu0 %v773
        %v894 = vpop.f32.mrf.mxu0
        %v895 = vadd.f32 0.0, %v894
        %v896 = vpop.f32.mrf.mxu0
        %v897 = vpop.f32.mrf.mxu0
        %v898 = vadd.f32 0.0, %v897
        %v899 = vpop.f32.mrf.mxu0
        %900 = vmatprep.mubr.bf16.mxu0 0
        %901 = vmatmul.mubr.bf16.gmra.mxu0 %v774
        %v902 = vpop.f32.mrf.mxu0
        %v903 = vadd.f32 0.0, %v902
        %v904 = vpop.f32.mrf.mxu0
        %v905 = vpop.f32.mrf.mxu0
        %v906 = vadd.f32 0.0, %v905
        %v907 = vpop.f32.mrf.mxu0
        %908 = vmatprep.mubr.bf16.mxu0 0
        %909 = vmatmul.mubr.bf16.gmra.mxu0 %v775
        %v910 = vpop.f32.mrf.mxu0
        %v911 = vadd.f32 0.0, %v910
        %v912 = vpop.f32.mrf.mxu0
        %v913 = vpop.f32.mrf.mxu0
        %v914 = vadd.f32 0.0, %v913
        %v915 = vpop.f32.mrf.mxu0
        %916 = vmatprep.mubr.bf16.mxu0 0
        %917 = vmatmul.mubr.bf16.gmra.mxu0 %v776
        %v918 = vpop.f32.mrf.mxu0
        %v919 = vadd.f32 0.0, %v918
        %v920 = vpop.f32.mrf.mxu0
        %v921 = vpop.f32.mrf.mxu0
        %v922 = vadd.f32 0.0, %v921
        %v923 = vpop.f32.mrf.mxu0
        %924 = vmatprep.mubr.bf16.mxu0 0
        %925 = vmatmul.mubr.bf16.gmra.mxu0 %v777
        %v926 = vpop.f32.mrf.mxu0
        %v927 = vadd.f32 0.0, %v926
        %v928 = vpop.f32.mrf.mxu0
        %v929 = vpop.f32.mrf.mxu0
        %v930 = vadd.f32 0.0, %v929
        %v931 = vpop.f32.mrf.mxu0
        %932 = vmatprep.mubr.bf16.mxu0 0
        %933 = vmatmul.mubr.bf16.gmra.mxu0 %v778
        %v934 = vpop.f32.mrf.mxu0
        %v935 = vadd.f32 0.0, %v934
        %v936 = vpop.f32.mrf.mxu0
        %v937 = vpop.f32.mrf.mxu0
        %v938 = vadd.f32 0.0, %v937
        %v939 = vpop.f32.mrf.mxu0
        %940 = vmatprep.mubr.bf16.mxu0 0
        %941 = vmatmul.mubr.bf16.gmra.mxu0 %v779
        %v942 = vpop.f32.mrf.mxu0
        %v943 = vadd.f32 0.0, %v942
        %v944 = vpop.f32.mrf.mxu0
        %v945 = vpop.f32.mrf.mxu0
        %v946 = vadd.f32 0.0, %v945
        %v947 = vpop.f32.mrf.mxu0
        %948 = vmatprep.mubr.bf16.mxu0 0
        %949 = vmatmul.mubr.bf16.gmra.mxu0 %v780
        %v950 = vpop.f32.mrf.mxu0
        %v951 = vadd.f32 0.0, %v950
        %v952 = vpop.f32.mrf.mxu0
        %v953 = vpop.f32.mrf.mxu0
        %v954 = vadd.f32 0.0, %v953
        %v955 = vpop.f32.mrf.mxu0
        %956 = vmatprep.mubr.bf16.mxu0 0
        %957 = vmatmul.mubr.bf16.gmra.mxu0 %v781
        %v958 = vpop.f32.mrf.mxu0
        %v959 = vadd.f32 0.0, %v958
        %v960 = vpop.f32.mrf.mxu0
        %v961 = vpop.f32.mrf.mxu0
        %v962 = vadd.f32 0.0, %v961
        %v963 = vpop.f32.mrf.mxu0
        %964 = vmatprep.mubr.bf16.mxu0 0
        %965 = vmatmul.mubr.bf16.gmra.mxu0 %v782
        %v966 = vpop.f32.mrf.mxu0
        %v967 = vadd.f32 0.0, %v966
        %v968 = vpop.f32.mrf.mxu0
        %v969 = vpop.f32.mrf.mxu0
        %v970 = vadd.f32 0.0, %v969
        %v971 = vpop.f32.mrf.mxu0
        %972 = vmatprep.mubr.bf16.mxu0 0
        %973 = vmatmul.mubr.bf16.gmra.mxu0 %v783
        %v974 = vpop.f32.mrf.mxu0
        %v975 = vadd.f32 0.0, %v974
        %v976 = vpop.f32.mrf.mxu0
        %v977 = vpop.f32.mrf.mxu0
        %v978 = vadd.f32 0.0, %v977
        %v979 = vpop.f32.mrf.mxu0
        %980 = vmatprep.mubr.bf16.mxu0 0
        %981 = vmatmul.mubr.bf16.gmra.mxu0 %v784
        %v982 = vpop.f32.mrf.mxu0
        %v983 = vadd.f32 0.0, %v982
        %v984 = vpop.f32.mrf.mxu0
        %v985 = vpop.f32.mrf.mxu0
        %v986 = vadd.f32 0.0, %v985
        %v987 = vpop.f32.mrf.mxu0
        %988 = vmatprep.mubr.bf16.mxu0 0
        %989 = vmatmul.mubr.bf16.gmra.mxu0 %v785
        %v990 = vpop.f32.mrf.mxu0
        %v991 = vadd.f32 0.0, %v990
        %v992 = vpop.f32.mrf.mxu0
        %v993 = vpop.f32.mrf.mxu0
        %v994 = vadd.f32 0.0, %v993
        %v995 = vpop.f32.mrf.mxu0
        %996 = vmatprep.mubr.bf16.mxu0 0
        %997 = vmatmul.mubr.bf16.gmra.mxu0 %v786
        %v998 = vpop.f32.mrf.mxu0
        %v999 = vadd.f32 0.0, %v998
        %v1000 = vpop.f32.mrf.mxu0
        %v1001 = vpop.f32.mrf.mxu0
        %v1002 = vadd.f32 0.0, %v1001
        %v1003 = vpop.f32.mrf.mxu0
        %1004 = vmatprep.mubr.bf16.mxu0 0
        %1005 = vmatmul.mubr.bf16.gmra.mxu0 %v787
        %v1006 = vpop.f32.mrf.mxu0
        %v1007 = vadd.f32 0.0, %v1006
        %v1008 = vpop.f32.mrf.mxu0
        %v1009 = vpop.f32.mrf.mxu0
        %v1010 = vadd.f32 0.0, %v1009
        %v1011 = vpop.f32.mrf.mxu0
        %1012 = vdwg.mxu0
        %v1045 = vunpack.c.l.b16 %v273
        %v1046 = vunpack.c.l.b16 %v274
        %v1047 = vunpack.c.l.b16 %v275
        %v1048 = vunpack.c.l.b16 %v276
        %v1049 = vunpack.c.l.b16 %v277
        %v1050 = vunpack.c.l.b16 %v278
        %v1051 = vunpack.c.l.b16 %v279
        %v1052 = vunpack.c.l.b16 %v280
        %v1053 = vunpack.c.l.b16 %v281
        %v1054 = vunpack.c.l.b16 %v282
        %v1055 = vunpack.c.l.b16 %v283
        %v1056 = vunpack.c.l.b16 %v284
        %v1057 = vunpack.c.l.b16 %v285
        %v1058 = vunpack.c.l.b16 %v286
        %v1059 = vunpack.c.l.b16 %v287
        %v1060 = vunpack.c.l.b16 %v288
        %v1061 = vunpack.c.l.b16 %v289
        %v1062 = vunpack.c.l.b16 %v290
        %v1063 = vunpack.c.l.b16 %v291
        %v1064 = vunpack.c.l.b16 %v292
        %v1065 = vunpack.c.l.b16 %v293
        %v1066 = vunpack.c.l.b16 %v294
        %v1067 = vunpack.c.l.b16 %v295
        %v1068 = vunpack.c.l.b16 %v296
        %v1069 = vunpack.c.l.b16 %v297
        %v1070 = vunpack.c.l.b16 %v298
        %v1071 = vunpack.c.l.b16 %v299
        %v1072 = vunpack.c.l.b16 %v300
        %v1073 = vunpack.c.l.b16 %v301
        %v1074 = vunpack.c.l.b16 %v302
        %v1075 = vunpack.c.l.b16 %v303
        %v1076 = vunpack.c.l.b16 %v304
        %v1077 = vpack.c.b16 %v1046, %v1045
        %v1078 = vpack.c.b16 %v1048, %v1047
        %v1079 = vpack.c.b16 %v1050, %v1049
        %v1080 = vpack.c.b16 %v1052, %v1051
        %v1081 = vpack.c.b16 %v1054, %v1053
        %v1082 = vpack.c.b16 %v1056, %v1055
        %v1083 = vpack.c.b16 %v1058, %v1057
        %v1084 = vpack.c.b16 %v1060, %v1059
        %v1085 = vpack.c.b16 %v1062, %v1061
        %v1086 = vpack.c.b16 %v1064, %v1063
        %v1087 = vpack.c.b16 %v1066, %v1065
        %v1088 = vpack.c.b16 %v1068, %v1067
        %v1089 = vpack.c.b16 %v1070, %v1069
        %v1090 = vpack.c.b16 %v1072, %v1071
        %v1091 = vpack.c.b16 %v1074, %v1073
        %v1092 = vpack.c.b16 %v1076, %v1075
        %v1125 = vunpack.c.l.b16 %v305
        %v1126 = vunpack.c.l.b16 %v306
        %v1127 = vunpack.c.l.b16 %v307
        %v1128 = vunpack.c.l.b16 %v308
        %v1129 = vunpack.c.l.b16 %v309
        %v1130 = vunpack.c.l.b16 %v310
        %v1131 = vunpack.c.l.b16 %v311
        %v1132 = vunpack.c.l.b16 %v312
        %v1133 = vunpack.c.l.b16 %v313
        %v1134 = vunpack.c.l.b16 %v314
        %v1135 = vunpack.c.l.b16 %v315
        %v1136 = vunpack.c.l.b16 %v316
        %v1137 = vunpack.c.l.b16 %v317
        %v1138 = vunpack.c.l.b16 %v318
        %v1139 = vunpack.c.l.b16 %v319
        %v1140 = vunpack.c.l.b16 %v320
        %v1141 = vpack.c.b16 %v1126, %v1125
        %v1142 = vpack.c.b16 %v1128, %v1127
        %v1143 = vpack.c.b16 %v1130, %v1129
        %v1144 = vpack.c.b16 %v1132, %v1131
        %v1145 = vpack.c.b16 %v1134, %v1133
        %v1146 = vpack.c.b16 %v1136, %v1135
        %v1147 = vpack.c.b16 %v1138, %v1137
        %v1148 = vpack.c.b16 %v1140, %v1139
        %1157 = vmatprep.subr.bf16.mxu0 0
        %1158 = vmatpush1.bf16.msra.mxu0 %v1148
        %1159 = vmatprep.subr.bf16.mxu0 0
        %1160 = vmatpush1.bf16.msra.mxu0 %v1147
        %1161 = vmatprep.subr.bf16.mxu0 0
        %1162 = vmatpush1.bf16.msra.mxu0 %v1146
        %1163 = vmatprep.subr.bf16.mxu0 0
        %1164 = vmatpush1.bf16.msra.mxu0 %v1145
        %1165 = vmatprep.subr.bf16.mxu0 0
        %1166 = vmatpush1.bf16.msra.mxu0 %v1144
        %1167 = vmatprep.subr.bf16.mxu0 0
        %1168 = vmatpush1.bf16.msra.mxu0 %v1143
        %1169 = vmatprep.subr.bf16.mxu0 0
        %1170 = vmatpush1.bf16.msra.mxu0 %v1142
        %1171 = vmatprep.subr.bf16.mxu0 0
        %1172 = vmatpush1.bf16.msra.mxu0 %v1141
        %1173 = vmatprep.subr.bf16.mxu0 0
        %1174 = vmatpush2.bf16.msra.mxu0 0
        %1175 = vmatprep.subr.bf16.mxu0 0
        %1176 = vmatpush2.bf16.msra.mxu0 0
        %1177 = vmatprep.subr.bf16.mxu0 0
        %1178 = vmatpush2.bf16.msra.mxu0 0
        %1179 = vmatprep.subr.bf16.mxu0 0
        %1180 = vmatpush2.bf16.msra.mxu0 0
        %1181 = vmatprep.subr.bf16.mxu0 0
        %1182 = vmatpush2.bf16.msra.mxu0 0
        %1183 = vmatprep.subr.bf16.mxu0 0
        %1184 = vmatpush2.bf16.msra.mxu0 0
        %1185 = vmatprep.subr.bf16.mxu0 0
        %1186 = vmatpush2.bf16.msra.mxu0 0
        %1187 = vmatprep.subr.bf16.mxu0 0
        %1188 = vmatpush2.bf16.msra.mxu0 0
        %1189 = vmatprep.mubr.bf16.mxu0 0
        %1190 = vmatmul.mubr.bf16.gmra.mxu0 %v1077
        %v1191 = vpop.f32.mrf.mxu0
        %v1192 = vadd.f32 %v887, %v1191
        %v1193 = vpop.f32.mrf.mxu0
        %v1194 = vpop.f32.mrf.mxu0
        %v1195 = vadd.f32 %v890, %v1194
        %v1196 = vpop.f32.mrf.mxu0
        %1197 = vmatprep.mubr.bf16.mxu0 0
        %1198 = vmatmul.mubr.bf16.gmra.mxu0 %v1078
        %v1199 = vpop.f32.mrf.mxu0
        %v1200 = vadd.f32 %v895, %v1199
        %v1201 = vpop.f32.mrf.mxu0
        %v1202 = vpop.f32.mrf.mxu0
        %v1203 = vadd.f32 %v898, %v1202
        %v1204 = vpop.f32.mrf.mxu0
        %1205 = vmatprep.mubr.bf16.mxu0 0
        %1206 = vmatmul.mubr.bf16.gmra.mxu0 %v1079
        %v1207 = vpop.f32.mrf.mxu0
        %v1208 = vadd.f32 %v903, %v1207
        %v1209 = vpop.f32.mrf.mxu0
        %v1210 = vpop.f32.mrf.mxu0
        %v1211 = vadd.f32 %v906, %v1210
        %v1212 = vpop.f32.mrf.mxu0
        %1213 = vmatprep.mubr.bf16.mxu0 0
        %1214 = vmatmul.mubr.bf16.gmra.mxu0 %v1080
        %v1215 = vpop.f32.mrf.mxu0
        %v1216 = vadd.f32 %v911, %v1215
        %v1217 = vpop.f32.mrf.mxu0
        %v1218 = vpop.f32.mrf.mxu0
        %v1219 = vadd.f32 %v914, %v1218
        %v1220 = vpop.f32.mrf.mxu0
        %1221 = vmatprep.mubr.bf16.mxu0 0
        %1222 = vmatmul.mubr.bf16.gmra.mxu0 %v1081
        %v1223 = vpop.f32.mrf.mxu0
        %v1224 = vadd.f32 %v919, %v1223
        %v1225 = vpop.f32.mrf.mxu0
        %v1226 = vpop.f32.mrf.mxu0
        %v1227 = vadd.f32 %v922, %v1226
        %v1228 = vpop.f32.mrf.mxu0
        %1229 = vmatprep.mubr.bf16.mxu0 0
        %1230 = vmatmul.mubr.bf16.gmra.mxu0 %v1082
        %v1231 = vpop.f32.mrf.mxu0
        %v1232 = vadd.f32 %v927, %v1231
        %v1233 = vpop.f32.mrf.mxu0
        %v1234 = vpop.f32.mrf.mxu0
        %v1235 = vadd.f32 %v930, %v1234
        %v1236 = vpop.f32.mrf.mxu0
        %1237 = vmatprep.mubr.bf16.mxu0 0
        %1238 = vmatmul.mubr.bf16.gmra.mxu0 %v1083
        %v1239 = vpop.f32.mrf.mxu0
        %v1240 = vadd.f32 %v935, %v1239
        %v1241 = vpop.f32.mrf.mxu0
        %v1242 = vpop.f32.mrf.mxu0
        %v1243 = vadd.f32 %v938, %v1242
        %v1244 = vpop.f32.mrf.mxu0
        %1245 = vmatprep.mubr.bf16.mxu0 0
        %1246 = vmatmul.mubr.bf16.gmra.mxu0 %v1084
        %v1247 = vpop.f32.mrf.mxu0
        %v1248 = vadd.f32 %v943, %v1247
        %v1249 = vpop.f32.mrf.mxu0
        %v1250 = vpop.f32.mrf.mxu0
        %v1251 = vadd.f32 %v946, %v1250
        %v1252 = vpop.f32.mrf.mxu0
        %1253 = vmatprep.mubr.bf16.mxu0 0
        %1254 = vmatmul.mubr.bf16.gmra.mxu0 %v1085
        %v1255 = vpop.f32.mrf.mxu0
        %v1256 = vadd.f32 %v951, %v1255
        %v1257 = vpop.f32.mrf.mxu0
        %v1258 = vpop.f32.mrf.mxu0
        %v1259 = vadd.f32 %v954, %v1258
        %v1260 = vpop.f32.mrf.mxu0
        %1261 = vmatprep.mubr.bf16.mxu0 0
        %1262 = vmatmul.mubr.bf16.gmra.mxu0 %v1086
        %v1263 = vpop.f32.mrf.mxu0
        %v1264 = vadd.f32 %v959, %v1263
        %v1265 = vpop.f32.mrf.mxu0
        %v1266 = vpop.f32.mrf.mxu0
        %v1267 = vadd.f32 %v962, %v1266
        %v1268 = vpop.f32.mrf.mxu0
        %1269 = vmatprep.mubr.bf16.mxu0 0
        %1270 = vmatmul.mubr.bf16.gmra.mxu0 %v1087
        %v1271 = vpop.f32.mrf.mxu0
        %v1272 = vadd.f32 %v967, %v1271
        %v1273 = vpop.f32.mrf.mxu0
        %v1274 = vpop.f32.mrf.mxu0
        %v1275 = vadd.f32 %v970, %v1274
        %v1276 = vpop.f32.mrf.mxu0
        %1277 = vmatprep.mubr.bf16.mxu0 0
        %1278 = vmatmul.mubr.bf16.gmra.mxu0 %v1088
        %v1279 = vpop.f32.mrf.mxu0
        %v1280 = vadd.f32 %v975, %v1279
        %v1281 = vpop.f32.mrf.mxu0
        %v1282 = vpop.f32.mrf.mxu0
        %v1283 = vadd.f32 %v978, %v1282
        %v1284 = vpop.f32.mrf.mxu0
        %1285 = vmatprep.mubr.bf16.mxu0 0
        %1286 = vmatmul.mubr.bf16.gmra.mxu0 %v1089
        %v1287 = vpop.f32.mrf.mxu0
        %v1288 = vadd.f32 %v983, %v1287
        %v1289 = vpop.f32.mrf.mxu0
        %v1290 = vpop.f32.mrf.mxu0
        %v1291 = vadd.f32 %v986, %v1290
        %v1292 = vpop.f32.mrf.mxu0
        %1293 = vmatprep.mubr.bf16.mxu0 0
        %1294 = vmatmul.mubr.bf16.gmra.mxu0 %v1090
        %v1295 = vpop.f32.mrf.mxu0
        %v1296 = vadd.f32 %v991, %v1295
        %v1297 = vpop.f32.mrf.mxu0
        %v1298 = vpop.f32.mrf.mxu0
        %v1299 = vadd.f32 %v994, %v1298
        %v1300 = vpop.f32.mrf.mxu0
        %1301 = vmatprep.mubr.bf16.mxu0 0
        %1302 = vmatmul.mubr.bf16.gmra.mxu0 %v1091
        %v1303 = vpop.f32.mrf.mxu0
        %v1304 = vadd.f32 %v999, %v1303
        %v1305 = vpop.f32.mrf.mxu0
        %v1306 = vpop.f32.mrf.mxu0
        %v1307 = vadd.f32 %v1002, %v1306
        %v1308 = vpop.f32.mrf.mxu0
        %1309 = vmatprep.mubr.bf16.mxu0 0
        %1310 = vmatmul.mubr.bf16.gmra.mxu0 %v1092
        %v1311 = vpop.f32.mrf.mxu0
        %v1312 = vadd.f32 %v1007, %v1311
        %v1313 = vpop.f32.mrf.mxu0
        %v1314 = vpop.f32.mrf.mxu0
        %v1315 = vadd.f32 %v1010, %v1314
        %v1316 = vpop.f32.mrf.mxu0
        %1317 = vdwg.mxu0
        %v1318 = vld [vmem:[%s237] sm:$0xe]
        %v1319 = vld [vmem:[%s237 + $0xc] sm:$0xe]
        %v1320 = vld [vmem:[%s237 + $0x18] sm:$0xe]
        %v1321 = vld [vmem:[%s237 + $0x24] sm:$0xe]
        %v1322 = vld [vmem:[%s237 + $0x30] sm:$0xe]
        %v1323 = vld [vmem:[%s237 + $0x3c] sm:$0xe]
        %v1324 = vld [vmem:[%s237 + $0x48] sm:$0xe]
        %v1325 = vld [vmem:[%s237 + $0x54] sm:$0xe]
        %v1326 = vld [vmem:[%s237 + $0x60] sm:$0xe]
        %v1327 = vld [vmem:[%s237 + $0x6c] sm:$0xe]
        %v1328 = vld [vmem:[%s237 + $0x78] sm:$0xe]
        %v1329 = vld [vmem:[%s237 + $0x84] sm:$0xe]
        %v1330 = vld [vmem:[%s237 + $0x90] sm:$0xe]
        %v1331 = vld [vmem:[%s237 + $0x9c] sm:$0xe]
        %v1332 = vld [vmem:[%s237 + $0xa8] sm:$0xe]
        %v1333 = vld [vmem:[%s237 + $0xb4] sm:$0xe]
        %vm1366 = vcmask 1042432
        %vm1367 = vcmask 1046532
        %vm1368 = vmor %vm1366, %vm1367
        %v1369 = vrot.slane %v1318, 5
        %v1370 = vrot.slane %v1369, 4
        %v1371 = vrot.slane %v274, 5
        %v1372 = vsel %vm1368, %v1370, %v1371
        %v1373 = vrot.slane %v1371, 4
        %v1374 = vrot.slane %v321, 5
        %v1375 = vsel %vm1368, %v1373, %v1374
        %v1376 = vrot.slane %v1319, 5
        %v1377 = vrot.slane %v1376, 4
        %v1378 = vrot.slane %v276, 5
        %v1379 = vsel %vm1368, %v1377, %v1378
        %v1380 = vrot.slane %v1378, 4
        %v1381 = vrot.slane %v322, 5
        %v1382 = vsel %vm1368, %v1380, %v1381
        %v1383 = vrot.slane %v1320, 5
        %v1384 = vrot.slane %v1383, 4
        %v1385 = vrot.slane %v278, 5
        %v1386 = vsel %vm1368, %v1384, %v1385
        %v1387 = vrot.slane %v1385, 4
        %v1388 = vrot.slane %v323, 5
        %v1389 = vsel %vm1368, %v1387, %v1388
        %v1390 = vrot.slane %v1321, 5
        %v1391 = vrot.slane %v1390, 4
        %v1392 = vrot.slane %v280, 5
        %v1393 = vsel %vm1368, %v1391, %v1392
        %v1394 = vrot.slane %v1392, 4
        %v1395 = vrot.slane %v324, 5
        %v1396 = vsel %vm1368, %v1394, %v1395
        %v1397 = vrot.slane %v1322, 5
        %v1398 = vrot.slane %v1397, 4
        %v1399 = vrot.slane %v282, 5
        %v1400 = vsel %vm1368, %v1398, %v1399
        %v1401 = vrot.slane %v1399, 4
        %v1402 = vrot.slane %v325, 5
        %v1403 = vsel %vm1368, %v1401, %v1402
        %v1404 = vrot.slane %v1323, 5
        %v1405 = vrot.slane %v1404, 4
        %v1406 = vrot.slane %v284, 5
        %v1407 = vsel %vm1368, %v1405, %v1406
        %v1408 = vrot.slane %v1406, 4
        %v1409 = vrot.slane %v326, 5
        %v1410 = vsel %vm1368, %v1408, %v1409
        %v1411 = vrot.slane %v1324, 5
        %v1412 = vrot.slane %v1411, 4
        %v1413 = vrot.slane %v286, 5
        %v1414 = vsel %vm1368, %v1412, %v1413
        %v1415 = vrot.slane %v1413, 4
        %v1416 = vrot.slane %v327, 5
        %v1417 = vsel %vm1368, %v1415, %v1416
        %v1418 = vrot.slane %v1325, 5
        %v1419 = vrot.slane %v1418, 4
        %v1420 = vrot.slane %v288, 5
        %v1421 = vsel %vm1368, %v1419, %v1420
        %v1422 = vrot.slane %v1420, 4
        %v1423 = vrot.slane %v328, 5
        %v1424 = vsel %vm1368, %v1422, %v1423
        %v1425 = vrot.slane %v1326, 5
        %v1426 = vrot.slane %v1425, 4
        %v1427 = vrot.slane %v290, 5
        %v1428 = vsel %vm1368, %v1426, %v1427
        %v1429 = vrot.slane %v1427, 4
        %v1430 = vrot.slane %v329, 5
        %v1431 = vsel %vm1368, %v1429, %v1430
        %v1432 = vrot.slane %v1327, 5
        %v1433 = vrot.slane %v1432, 4
        %v1434 = vrot.slane %v292, 5
        %v1435 = vsel %vm1368, %v1433, %v1434
        %v1436 = vrot.slane %v1434, 4
        %v1437 = vrot.slane %v330, 5
        %v1438 = vsel %vm1368, %v1436, %v1437
        %v1439 = vrot.slane %v1328, 5
        %v1440 = vrot.slane %v1439, 4
        %v1441 = vrot.slane %v294, 5
        %v1442 = vsel %vm1368, %v1440, %v1441
        %v1443 = vrot.slane %v1441, 4
        %v1444 = vrot.slane %v331, 5
        %v1445 = vsel %vm1368, %v1443, %v1444
        %v1446 = vrot.slane %v1329, 5
        %v1447 = vrot.slane %v1446, 4
        %v1448 = vrot.slane %v296, 5
        %v1449 = vsel %vm1368, %v1447, %v1448
        %v1450 = vrot.slane %v1448, 4
        %v1451 = vrot.slane %v332, 5
        %v1452 = vsel %vm1368, %v1450, %v1451
        %v1453 = vrot.slane %v1330, 5
        %v1454 = vrot.slane %v1453, 4
        %v1455 = vrot.slane %v298, 5
        %v1456 = vsel %vm1368, %v1454, %v1455
        %v1457 = vrot.slane %v1455, 4
        %v1458 = vrot.slane %v333, 5
        %v1459 = vsel %vm1368, %v1457, %v1458
        %v1460 = vrot.slane %v1331, 5
        %v1461 = vrot.slane %v1460, 4
        %v1462 = vrot.slane %v300, 5
        %v1463 = vsel %vm1368, %v1461, %v1462
        %v1464 = vrot.slane %v1462, 4
        %v1465 = vrot.slane %v334, 5
        %v1466 = vsel %vm1368, %v1464, %v1465
        %v1467 = vrot.slane %v1332, 5
        %v1468 = vrot.slane %v1467, 4
        %v1469 = vrot.slane %v302, 5
        %v1470 = vsel %vm1368, %v1468, %v1469
        %v1471 = vrot.slane %v1469, 4
        %v1472 = vrot.slane %v335, 5
        %v1473 = vsel %vm1368, %v1471, %v1472
        %v1474 = vrot.slane %v1333, 5
        %v1475 = vrot.slane %v1474, 4
        %v1476 = vrot.slane %v304, 5
        %v1477 = vsel %vm1368, %v1475, %v1476
        %v1478 = vrot.slane %v1476, 4
        %v1479 = vrot.slane %v336, 5
        %v1480 = vsel %vm1368, %v1478, %v1479
        %v1481 = vld [vmem:[#allocation6 + $0x80] sm:$0xf]
        %v1482 = vld [vmem:[#allocation6 + $0x84] sm:$0xf]
        %v1483 = vld [vmem:[#allocation6 + $0x88] sm:$0xf]
        %v1484 = vld [vmem:[#allocation6 + $0x8c] sm:$0xf]
        %v1485 = vld [vmem:[#allocation6 + $0x90] sm:$0xf]
        %v1486 = vld [vmem:[#allocation6 + $0x94] sm:$0xf]
        %v1487 = vld [vmem:[#allocation6 + $0x98] sm:$0xf]
        %v1488 = vld [vmem:[#allocation6 + $0x9c] sm:$0xf]
        %v1489 = vld [vmem:[#allocation6 + $0xa0] sm:$0xf]
        %v1490 = vld [vmem:[#allocation6 + $0xa4] sm:$0xf]
        %v1491 = vld [vmem:[#allocation6 + $0xa8] sm:$0xf]
        %v1492 = vld [vmem:[#allocation6 + $0xac] sm:$0xf]
        %v1493 = vld [vmem:[#allocation6 + $0xb0] sm:$0xf]
        %v1494 = vld [vmem:[#allocation6 + $0xb4] sm:$0xf]
        %v1495 = vld [vmem:[#allocation6 + $0xb8] sm:$0xf]
        %v1496 = vld [vmem:[#allocation6 + $0xbc] sm:$0xf]
        %v1497 = vunpack.c.l.b16 %v1372
        %v1498 = vunpack.c.l.b16 %v1375
        %v1499 = vunpack.c.l.b16 %v1379
        %v1500 = vunpack.c.l.b16 %v1382
        %v1501 = vunpack.c.l.b16 %v1386
        %v1502 = vunpack.c.l.b16 %v1389
        %v1503 = vunpack.c.l.b16 %v1393
        %v1504 = vunpack.c.l.b16 %v1396
        %v1505 = vunpack.c.l.b16 %v1400
        %v1506 = vunpack.c.l.b16 %v1403
        %v1507 = vunpack.c.l.b16 %v1407
        %v1508 = vunpack.c.l.b16 %v1410
        %v1509 = vunpack.c.l.b16 %v1414
        %v1510 = vunpack.c.l.b16 %v1417
        %v1511 = vunpack.c.l.b16 %v1421
        %v1512 = vunpack.c.l.b16 %v1424
        %v1513 = vunpack.c.l.b16 %v1428
        %v1514 = vunpack.c.l.b16 %v1431
        %v1515 = vunpack.c.l.b16 %v1435
        %v1516 = vunpack.c.l.b16 %v1438
        %v1517 = vunpack.c.l.b16 %v1442
        %v1518 = vunpack.c.l.b16 %v1445
        %v1519 = vunpack.c.l.b16 %v1449
        %v1520 = vunpack.c.l.b16 %v1452
        %v1521 = vunpack.c.l.b16 %v1456
        %v1522 = vunpack.c.l.b16 %v1459
        %v1523 = vunpack.c.l.b16 %v1463
        %v1524 = vunpack.c.l.b16 %v1466
        %v1525 = vunpack.c.l.b16 %v1470
        %v1526 = vunpack.c.l.b16 %v1473
        %v1527 = vunpack.c.l.b16 %v1477
        %v1528 = vunpack.c.l.b16 %v1480
        %v1529 = vpack.c.b16 %v1498, %v1497
        %v1530 = vpack.c.b16 %v1500, %v1499
        %v1531 = vpack.c.b16 %v1502, %v1501
        %v1532 = vpack.c.b16 %v1504, %v1503
        %v1533 = vpack.c.b16 %v1506, %v1505
        %v1534 = vpack.c.b16 %v1508, %v1507
        %v1535 = vpack.c.b16 %v1510, %v1509
        %v1536 = vpack.c.b16 %v1512, %v1511
        %v1537 = vpack.c.b16 %v1514, %v1513
        %v1538 = vpack.c.b16 %v1516, %v1515
        %v1539 = vpack.c.b16 %v1518, %v1517
        %v1540 = vpack.c.b16 %v1520, %v1519
        %v1541 = vpack.c.b16 %v1522, %v1521
        %v1542 = vpack.c.b16 %v1524, %v1523
        %v1543 = vpack.c.b16 %v1526, %v1525
        %v1544 = vpack.c.b16 %v1528, %v1527
        %v1577 = vunpack.c.l.b16 %v1481
        %v1578 = vunpack.c.l.b16 %v1482
        %v1579 = vunpack.c.l.b16 %v1483
        %v1580 = vunpack.c.l.b16 %v1484
        %v1581 = vunpack.c.l.b16 %v1485
        %v1582 = vunpack.c.l.b16 %v1486
        %v1583 = vunpack.c.l.b16 %v1487
        %v1584 = vunpack.c.l.b16 %v1488
        %v1585 = vunpack.c.l.b16 %v1489
        %v1586 = vunpack.c.l.b16 %v1490
        %v1587 = vunpack.c.l.b16 %v1491
        %v1588 = vunpack.c.l.b16 %v1492
        %v1589 = vunpack.c.l.b16 %v1493
        %v1590 = vunpack.c.l.b16 %v1494
        %v1591 = vunpack.c.l.b16 %v1495
        %v1592 = vunpack.c.l.b16 %v1496
        %v1593 = vpack.c.b16 %v1578, %v1577
        %v1594 = vpack.c.b16 %v1580, %v1579
        %v1595 = vpack.c.b16 %v1582, %v1581
        %v1596 = vpack.c.b16 %v1584, %v1583
        %v1597 = vpack.c.b16 %v1586, %v1585
        %v1598 = vpack.c.b16 %v1588, %v1587
        %v1599 = vpack.c.b16 %v1590, %v1589
        %v1600 = vpack.c.b16 %v1592, %v1591
        %1609 = vmatprep.subr.bf16.mxu0 0
        %1610 = vmatpush1.bf16.msra.mxu0 %v1600
        %1611 = vmatprep.subr.bf16.mxu0 0
        %1612 = vmatpush1.bf16.msra.mxu0 %v1599
        %1613 = vmatprep.subr.bf16.mxu0 0
        %1614 = vmatpush1.bf16.msra.mxu0 %v1598
        %1615 = vmatprep.subr.bf16.mxu0 0
        %1616 = vmatpush1.bf16.msra.mxu0 %v1597
        %1617 = vmatprep.subr.bf16.mxu0 0
        %1618 = vmatpush1.bf16.msra.mxu0 %v1596
        %1619 = vmatprep.subr.bf16.mxu0 0
        %1620 = vmatpush1.bf16.msra.mxu0 %v1595
        %1621 = vmatprep.subr.bf16.mxu0 0
        %1622 = vmatpush1.bf16.msra.mxu0 %v1594
        %1623 = vmatprep.subr.bf16.mxu0 0
        %1624 = vmatpush1.bf16.msra.mxu0 %v1593
        %1625 = vmatprep.subr.bf16.mxu0 0
        %1626 = vmatpush2.bf16.msra.mxu0 0
        %1627 = vmatprep.subr.bf16.mxu0 0
        %1628 = vmatpush2.bf16.msra.mxu0 0
        %1629 = vmatprep.subr.bf16.mxu0 0
        %1630 = vmatpush2.bf16.msra.mxu0 0
        %1631 = vmatprep.subr.bf16.mxu0 0
        %1632 = vmatpush2.bf16.msra.mxu0 0
        %1633 = vmatprep.subr.bf16.mxu0 0
        %1634 = vmatpush2.bf16.msra.mxu0 0
        %1635 = vmatprep.subr.bf16.mxu0 0
        %1636 = vmatpush2.bf16.msra.mxu0 0
        %1637 = vmatprep.subr.bf16.mxu0 0
        %1638 = vmatpush2.bf16.msra.mxu0 0
        %1639 = vmatprep.subr.bf16.mxu0 0
        %1640 = vmatpush2.bf16.msra.mxu0 0
        %1641 = vmatprep.mubr.bf16.mxu0 0
        %1642 = vmatmul.mubr.bf16.gmra.mxu0 %v1529
        %v1643 = vpop.f32.mrf.mxu0
        %v1644 = vadd.f32 0.0, %v1643
        %v1645 = vpop.f32.mrf.mxu0
        %v1646 = vpop.f32.mrf.mxu0
        %v1647 = vadd.f32 0.0, %v1646
        %v1648 = vpop.f32.mrf.mxu0
        %1649 = vmatprep.mubr.bf16.mxu0 0
        %1650 = vmatmul.mubr.bf16.gmra.mxu0 %v1530
        %v1651 = vpop.f32.mrf.mxu0
        %v1652 = vadd.f32 0.0, %v1651
        %v1653 = vpop.f32.mrf.mxu0
        %v1654 = vpop.f32.mrf.mxu0
        %v1655 = vadd.f32 0.0, %v1654
        %v1656 = vpop.f32.mrf.mxu0
        %1657 = vmatprep.mubr.bf16.mxu0 0
        %1658 = vmatmul.mubr.bf16.gmra.mxu0 %v1531
        %v1659 = vpop.f32.mrf.mxu0
        %v1660 = vadd.f32 0.0, %v1659
        %v1661 = vpop.f32.mrf.mxu0
        %v1662 = vpop.f32.mrf.mxu0
        %v1663 = vadd.f32 0.0, %v1662
        %v1664 = vpop.f32.mrf.mxu0
        %1665 = vmatprep.mubr.bf16.mxu0 0
        %1666 = vmatmul.mubr.bf16.gmra.mxu0 %v1532
        %v1667 = vpop.f32.mrf.mxu0
        %v1668 = vadd.f32 0.0, %v1667
        %v1669 = vpop.f32.mrf.mxu0
        %v1670 = vpop.f32.mrf.mxu0
        %v1671 = vadd.f32 0.0, %v1670
        %v1672 = vpop.f32.mrf.mxu0
        %1673 = vmatprep.mubr.bf16.mxu0 0
        %1674 = vmatmul.mubr.bf16.gmra.mxu0 %v1533
        %v1675 = vpop.f32.mrf.mxu0
        %v1676 = vadd.f32 0.0, %v1675
        %v1677 = vpop.f32.mrf.mxu0
        %v1678 = vpop.f32.mrf.mxu0
        %v1679 = vadd.f32 0.0, %v1678
        %v1680 = vpop.f32.mrf.mxu0
        %1681 = vmatprep.mubr.bf16.mxu0 0
        %1682 = vmatmul.mubr.bf16.gmra.mxu0 %v1534
        %v1683 = vpop.f32.mrf.mxu0
        %v1684 = vadd.f32 0.0, %v1683
        %v1685 = vpop.f32.mrf.mxu0
        %v1686 = vpop.f32.mrf.mxu0
        %v1687 = vadd.f32 0.0, %v1686
        %v1688 = vpop.f32.mrf.mxu0
        %1689 = vmatprep.mubr.bf16.mxu0 0
        %1690 = vmatmul.mubr.bf16.gmra.mxu0 %v1535
        %v1691 = vpop.f32.mrf.mxu0
        %v1692 = vadd.f32 0.0, %v1691
        %v1693 = vpop.f32.mrf.mxu0
        %v1694 = vpop.f32.mrf.mxu0
        %v1695 = vadd.f32 0.0, %v1694
        %v1696 = vpop.f32.mrf.mxu0
        %1697 = vmatprep.mubr.bf16.mxu0 0
        %1698 = vmatmul.mubr.bf16.gmra.mxu0 %v1536
        %v1699 = vpop.f32.mrf.mxu0
        %v1700 = vadd.f32 0.0, %v1699
        %v1701 = vpop.f32.mrf.mxu0
        %v1702 = vpop.f32.mrf.mxu0
        %v1703 = vadd.f32 0.0, %v1702
        %v1704 = vpop.f32.mrf.mxu0
        %1705 = vmatprep.mubr.bf16.mxu0 0
        %1706 = vmatmul.mubr.bf16.gmra.mxu0 %v1537
        %v1707 = vpop.f32.mrf.mxu0
        %v1708 = vadd.f32 0.0, %v1707
        %v1709 = vpop.f32.mrf.mxu0
        %v1710 = vpop.f32.mrf.mxu0
        %v1711 = vadd.f32 0.0, %v1710
        %v1712 = vpop.f32.mrf.mxu0
        %1713 = vmatprep.mubr.bf16.mxu0 0
        %1714 = vmatmul.mubr.bf16.gmra.mxu0 %v1538
        %v1715 = vpop.f32.mrf.mxu0
        %v1716 = vadd.f32 0.0, %v1715
        %v1717 = vpop.f32.mrf.mxu0
        %v1718 = vpop.f32.mrf.mxu0
        %v1719 = vadd.f32 0.0, %v1718
        %v1720 = vpop.f32.mrf.mxu0
        %1721 = vmatprep.mubr.bf16.mxu0 0
        %1722 = vmatmul.mubr.bf16.gmra.mxu0 %v1539
        %v1723 = vpop.f32.mrf.mxu0
        %v1724 = vadd.f32 0.0, %v1723
        %v1725 = vpop.f32.mrf.mxu0
        %v1726 = vpop.f32.mrf.mxu0
        %v1727 = vadd.f32 0.0, %v1726
        %v1728 = vpop.f32.mrf.mxu0
        %1729 = vmatprep.mubr.bf16.mxu0 0
        %1730 = vmatmul.mubr.bf16.gmra.mxu0 %v1540
        %v1731 = vpop.f32.mrf.mxu0
        %v1732 = vadd.f32 0.0, %v1731
        %v1733 = vpop.f32.mrf.mxu0
        %v1734 = vpop.f32.mrf.mxu0
        %v1735 = vadd.f32 0.0, %v1734
        %v1736 = vpop.f32.mrf.mxu0
        %1737 = vmatprep.mubr.bf16.mxu0 0
        %1738 = vmatmul.mubr.bf16.gmra.mxu0 %v1541
        %v1739 = vpop.f32.mrf.mxu0
        %v1740 = vadd.f32 0.0, %v1739
        %v1741 = vpop.f32.mrf.mxu0
        %v1742 = vpop.f32.mrf.mxu0
        %v1743 = vadd.f32 0.0, %v1742
        %v1744 = vpop.f32.mrf.mxu0
        %1745 = vmatprep.mubr.bf16.mxu0 0
        %1746 = vmatmul.mubr.bf16.gmra.mxu0 %v1542
        %v1747 = vpop.f32.mrf.mxu0
        %v1748 = vadd.f32 0.0, %v1747
        %v1749 = vpop.f32.mrf.mxu0
        %v1750 = vpop.f32.mrf.mxu0
        %v1751 = vadd.f32 0.0, %v1750
        %v1752 = vpop.f32.mrf.mxu0
        %1753 = vmatprep.mubr.bf16.mxu0 0
        %1754 = vmatmul.mubr.bf16.gmra.mxu0 %v1543
        %v1755 = vpop.f32.mrf.mxu0
        %v1756 = vadd.f32 0.0, %v1755
        %v1757 = vpop.f32.mrf.mxu0
        %v1758 = vpop.f32.mrf.mxu0
        %v1759 = vadd.f32 0.0, %v1758
        %v1760 = vpop.f32.mrf.mxu0
        %1761 = vmatprep.mubr.bf16.mxu0 0
        %1762 = vmatmul.mubr.bf16.gmra.mxu0 %v1544
        %v1763 = vpop.f32.mrf.mxu0
        %v1764 = vadd.f32 0.0, %v1763
        %v1765 = vpop.f32.mrf.mxu0
        %v1766 = vpop.f32.mrf.mxu0
        %v1767 = vadd.f32 0.0, %v1766
        %v1768 = vpop.f32.mrf.mxu0
        %1769 = vdwg.mxu0
        %v1770 = vadd.f32 %v1192, %v1644
        %v1771 = vadd.f32 %v1195, %v1647
        %v1772 = vadd.f32 %v1200, %v1652
        %v1773 = vadd.f32 %v1203, %v1655
        %v1774 = vadd.f32 %v1208, %v1660
        %v1775 = vadd.f32 %v1211, %v1663
        %v1776 = vadd.f32 %v1216, %v1668
        %v1777 = vadd.f32 %v1219, %v1671
        %v1778 = vadd.f32 %v1224, %v1676
        %v1779 = vadd.f32 %v1227, %v1679
        %v1780 = vadd.f32 %v1232, %v1684
        %v1781 = vadd.f32 %v1235, %v1687
        %v1782 = vadd.f32 %v1240, %v1692
        %v1783 = vadd.f32 %v1243, %v1695
        %v1784 = vadd.f32 %v1248, %v1700
        %v1785 = vadd.f32 %v1251, %v1703
        %v1786 = vadd.f32 %v1256, %v1708
        %v1787 = vadd.f32 %v1259, %v1711
        %v1788 = vadd.f32 %v1264, %v1716
        %v1789 = vadd.f32 %v1267, %v1719
        %v1790 = vadd.f32 %v1272, %v1724
        %v1791 = vadd.f32 %v1275, %v1727
        %v1792 = vadd.f32 %v1280, %v1732
        %v1793 = vadd.f32 %v1283, %v1735
        %v1794 = vadd.f32 %v1288, %v1740
        %v1795 = vadd.f32 %v1291, %v1743
        %v1796 = vadd.f32 %v1296, %v1748
        %v1797 = vadd.f32 %v1299, %v1751
        %v1798 = vadd.f32 %v1304, %v1756
        %v1799 = vadd.f32 %v1307, %v1759
        %v1800 = vadd.f32 %v1312, %v1764
        %v1801 = vadd.f32 %v1315, %v1767
        %s1802 = scalar_lea.vmem %s237, 12 [#allocation3]
        %v1803 = vld [vmem:[%s1802] sm:$0xf]
        %v1804 = vld [vmem:[%s1802 + $0x4] sm:$0xf]
        %v1805 = vld [vmem:[%s1802 + $0xc] sm:$0xf]
        %v1806 = vld [vmem:[%s1802 + $0x10] sm:$0xf]
        %v1807 = vld [vmem:[%s1802 + $0x18] sm:$0xf]
        %v1808 = vld [vmem:[%s1802 + $0x1c] sm:$0xf]
        %v1809 = vld [vmem:[%s1802 + $0x24] sm:$0xf]
        %v1810 = vld [vmem:[%s1802 + $0x28] sm:$0xf]
        %v1811 = vld [vmem:[%s1802 + $0x30] sm:$0xf]
        %v1812 = vld [vmem:[%s1802 + $0x34] sm:$0xf]
        %v1813 = vld [vmem:[%s1802 + $0x3c] sm:$0xf]
        %v1814 = vld [vmem:[%s1802 + $0x40] sm:$0xf]
        %v1815 = vld [vmem:[%s1802 + $0x48] sm:$0xf]
        %v1816 = vld [vmem:[%s1802 + $0x4c] sm:$0xf]
        %v1817 = vld [vmem:[%s1802 + $0x54] sm:$0xf]
        %v1818 = vld [vmem:[%s1802 + $0x58] sm:$0xf]
        %v1819 = vld [vmem:[%s1802 + $0x60] sm:$0xf]
        %v1820 = vld [vmem:[%s1802 + $0x64] sm:$0xf]
        %v1821 = vld [vmem:[%s1802 + $0x6c] sm:$0xf]
        %v1822 = vld [vmem:[%s1802 + $0x70] sm:$0xf]
        %v1823 = vld [vmem:[%s1802 + $0x78] sm:$0xf]
        %v1824 = vld [vmem:[%s1802 + $0x7c] sm:$0xf]
        %v1825 = vld [vmem:[%s1802 + $0x84] sm:$0xf]
        %v1826 = vld [vmem:[%s1802 + $0x88] sm:$0xf]
        %v1827 = vld [vmem:[%s1802 + $0x90] sm:$0xf]
        %v1828 = vld [vmem:[%s1802 + $0x94] sm:$0xf]
        %v1829 = vld [vmem:[%s1802 + $0x9c] sm:$0xf]
        %v1830 = vld [vmem:[%s1802 + $0xa0] sm:$0xf]
        %v1831 = vld [vmem:[%s1802 + $0xa8] sm:$0xf]
        %v1832 = vld [vmem:[%s1802 + $0xac] sm:$0xf]
        %v1833 = vld [vmem:[%s1802 + $0xb4] sm:$0xf]
        %v1834 = vld [vmem:[%s1802 + $0xb8] sm:$0xf]
        %v1835 = vld [vmem:[#allocation6 + $0xc0] sm:$0xf]
        %v1836 = vld [vmem:[#allocation6 + $0xc4] sm:$0xf]
        %v1837 = vld [vmem:[#allocation6 + $0xc8] sm:$0xf]
        %v1838 = vld [vmem:[#allocation6 + $0xcc] sm:$0xf]
        %v1839 = vld [vmem:[#allocation6 + $0xd0] sm:$0xf]
        %v1840 = vld [vmem:[#allocation6 + $0xd4] sm:$0xf]
        %v1841 = vld [vmem:[#allocation6 + $0xd8] sm:$0xf]
        %v1842 = vld [vmem:[#allocation6 + $0xdc] sm:$0xf]
        %v1843 = vld [vmem:[#allocation6 + $0xe0] sm:$0xf]
        %v1844 = vld [vmem:[#allocation6 + $0xe4] sm:$0xf]
        %v1845 = vld [vmem:[#allocation6 + $0xe8] sm:$0xf]
        %v1846 = vld [vmem:[#allocation6 + $0xec] sm:$0xf]
        %v1847 = vld [vmem:[#allocation6 + $0xf0] sm:$0xf]
        %v1848 = vld [vmem:[#allocation6 + $0xf4] sm:$0xf]
        %v1849 = vld [vmem:[#allocation6 + $0xf8] sm:$0xf]
        %v1850 = vld [vmem:[#allocation6 + $0xfc] sm:$0xf]
        %v1883 = vunpack.c.l.b16 %v1803
        %v1884 = vunpack.c.l.b16 %v1804
        %v1885 = vunpack.c.l.b16 %v1805
        %v1886 = vunpack.c.l.b16 %v1806
        %v1887 = vunpack.c.l.b16 %v1807
        %v1888 = vunpack.c.l.b16 %v1808
        %v1889 = vunpack.c.l.b16 %v1809
        %v1890 = vunpack.c.l.b16 %v1810
        %v1891 = vunpack.c.l.b16 %v1811
        %v1892 = vunpack.c.l.b16 %v1812
        %v1893 = vunpack.c.l.b16 %v1813
        %v1894 = vunpack.c.l.b16 %v1814
        %v1895 = vunpack.c.l.b16 %v1815
        %v1896 = vunpack.c.l.b16 %v1816
        %v1897 = vunpack.c.l.b16 %v1817
        %v1898 = vunpack.c.l.b16 %v1818
        %v1899 = vunpack.c.l.b16 %v1819
        %v1900 = vunpack.c.l.b16 %v1820
        %v1901 = vunpack.c.l.b16 %v1821
        %v1902 = vunpack.c.l.b16 %v1822
        %v1903 = vunpack.c.l.b16 %v1823
        %v1904 = vunpack.c.l.b16 %v1824
        %v1905 = vunpack.c.l.b16 %v1825
        %v1906 = vunpack.c.l.b16 %v1826
        %v1907 = vunpack.c.l.b16 %v1827
        %v1908 = vunpack.c.l.b16 %v1828
        %v1909 = vunpack.c.l.b16 %v1829
        %v1910 = vunpack.c.l.b16 %v1830
        %v1911 = vunpack.c.l.b16 %v1831
        %v1912 = vunpack.c.l.b16 %v1832
        %v1913 = vunpack.c.l.b16 %v1833
        %v1914 = vunpack.c.l.b16 %v1834
        %v1915 = vpack.c.b16 %v1884, %v1883
        %v1916 = vpack.c.b16 %v1886, %v1885
        %v1917 = vpack.c.b16 %v1888, %v1887
        %v1918 = vpack.c.b16 %v1890, %v1889
        %v1919 = vpack.c.b16 %v1892, %v1891
        %v1920 = vpack.c.b16 %v1894, %v1893
        %v1921 = vpack.c.b16 %v1896, %v1895
        %v1922 = vpack.c.b16 %v1898, %v1897
        %v1923 = vpack.c.b16 %v1900, %v1899
        %v1924 = vpack.c.b16 %v1902, %v1901
        %v1925 = vpack.c.b16 %v1904, %v1903
        %v1926 = vpack.c.b16 %v1906, %v1905
        %v1927 = vpack.c.b16 %v1908, %v1907
        %v1928 = vpack.c.b16 %v1910, %v1909
        %v1929 = vpack.c.b16 %v1912, %v1911
        %v1930 = vpack.c.b16 %v1914, %v1913
        %v1963 = vunpack.c.l.b16 %v1835
        %v1964 = vunpack.c.l.b16 %v1836
        %v1965 = vunpack.c.l.b16 %v1837
        %v1966 = vunpack.c.l.b16 %v1838
        %v1967 = vunpack.c.l.b16 %v1839
        %v1968 = vunpack.c.l.b16 %v1840
        %v1969 = vunpack.c.l.b16 %v1841
        %v1970 = vunpack.c.l.b16 %v1842
        %v1971 = vunpack.c.l.b16 %v1843
        %v1972 = vunpack.c.l.b16 %v1844
        %v1973 = vunpack.c.l.b16 %v1845
        %v1974 = vunpack.c.l.b16 %v1846
        %v1975 = vunpack.c.l.b16 %v1847
        %v1976 = vunpack.c.l.b16 %v1848
        %v1977 = vunpack.c.l.b16 %v1849
        %v1978 = vunpack.c.l.b16 %v1850
        %v1979 = vpack.c.b16 %v1964, %v1963
        %v1980 = vpack.c.b16 %v1966, %v1965
        %v1981 = vpack.c.b16 %v1968, %v1967
        %v1982 = vpack.c.b16 %v1970, %v1969
        %v1983 = vpack.c.b16 %v1972, %v1971
        %v1984 = vpack.c.b16 %v1974, %v1973
        %v1985 = vpack.c.b16 %v1976, %v1975
        %v1986 = vpack.c.b16 %v1978, %v1977
        %1995 = vmatprep.subr.bf16.mxu0 0
        %1996 = vmatpush1.bf16.msra.mxu0 %v1986
        %1997 = vmatprep.subr.bf16.mxu0 0
        %1998 = vmatpush1.bf16.msra.mxu0 %v1985
        %1999 = vmatprep.subr.bf16.mxu0 0
        %2000 = vmatpush1.bf16.msra.mxu0 %v1984
        %2001 = vmatprep.subr.bf16.mxu0 0
        %2002 = vmatpush1.bf16.msra.mxu0 %v1983
        %2003 = vmatprep.subr.bf16.mxu0 0
        %2004 = vmatpush1.bf16.msra.mxu0 %v1982
        %2005 = vmatprep.subr.bf16.mxu0 0
        %2006 = vmatpush1.bf16.msra.mxu0 %v1981
        %2007 = vmatprep.subr.bf16.mxu0 0
        %2008 = vmatpush1.bf16.msra.mxu0 %v1980
        %2009 = vmatprep.subr.bf16.mxu0 0
        %2010 = vmatpush1.bf16.msra.mxu0 %v1979
        %2011 = vmatprep.subr.bf16.mxu0 0
        %2012 = vmatpush2.bf16.msra.mxu0 0
        %2013 = vmatprep.subr.bf16.mxu0 0
        %2014 = vmatpush2.bf16.msra.mxu0 0
        %2015 = vmatprep.subr.bf16.mxu0 0
        %2016 = vmatpush2.bf16.msra.mxu0 0
        %2017 = vmatprep.subr.bf16.mxu0 0
        %2018 = vmatpush2.bf16.msra.mxu0 0
        %2019 = vmatprep.subr.bf16.mxu0 0
        %2020 = vmatpush2.bf16.msra.mxu0 0
        %2021 = vmatprep.subr.bf16.mxu0 0
        %2022 = vmatpush2.bf16.msra.mxu0 0
        %2023 = vmatprep.subr.bf16.mxu0 0
        %2024 = vmatpush2.bf16.msra.mxu0 0
        %2025 = vmatprep.subr.bf16.mxu0 0
        %2026 = vmatpush2.bf16.msra.mxu0 0
        %2027 = vmatprep.mubr.bf16.mxu0 0
        %2028 = vmatmul.mubr.bf16.gmra.mxu0 %v1915
        %v2029 = vpop.f32.mrf.mxu0
        %v2030 = vadd.f32 0.0, %v2029
        %v2031 = vpop.f32.mrf.mxu0
        %v2032 = vpop.f32.mrf.mxu0
        %v2033 = vadd.f32 0.0, %v2032
        %v2034 = vpop.f32.mrf.mxu0
        %2035 = vmatprep.mubr.bf16.mxu0 0
        %2036 = vmatmul.mubr.bf16.gmra.mxu0 %v1916
        %v2037 = vpop.f32.mrf.mxu0
        %v2038 = vadd.f32 0.0, %v2037
        %v2039 = vpop.f32.mrf.mxu0
        %v2040 = vpop.f32.mrf.mxu0
        %v2041 = vadd.f32 0.0, %v2040
        %v2042 = vpop.f32.mrf.mxu0
        %2043 = vmatprep.mubr.bf16.mxu0 0
        %2044 = vmatmul.mubr.bf16.gmra.mxu0 %v1917
        %v2045 = vpop.f32.mrf.mxu0
        %v2046 = vadd.f32 0.0, %v2045
        %v2047 = vpop.f32.mrf.mxu0
        %v2048 = vpop.f32.mrf.mxu0
        %v2049 = vadd.f32 0.0, %v2048
        %v2050 = vpop.f32.mrf.mxu0
        %2051 = vmatprep.mubr.bf16.mxu0 0
        %2052 = vmatmul.mubr.bf16.gmra.mxu0 %v1918
        %v2053 = vpop.f32.mrf.mxu0
        %v2054 = vadd.f32 0.0, %v2053
        %v2055 = vpop.f32.mrf.mxu0
        %v2056 = vpop.f32.mrf.mxu0
        %v2057 = vadd.f32 0.0, %v2056
        %v2058 = vpop.f32.mrf.mxu0
        %2059 = vmatprep.mubr.bf16.mxu0 0
        %2060 = vmatmul.mubr.bf16.gmra.mxu0 %v1919
        %v2061 = vpop.f32.mrf.mxu0
        %v2062 = vadd.f32 0.0, %v2061
        %v2063 = vpop.f32.mrf.mxu0
        %v2064 = vpop.f32.mrf.mxu0
        %v2065 = vadd.f32 0.0, %v2064
        %v2066 = vpop.f32.mrf.mxu0
        %2067 = vmatprep.mubr.bf16.mxu0 0
        %2068 = vmatmul.mubr.bf16.gmra.mxu0 %v1920
        %v2069 = vpop.f32.mrf.mxu0
        %v2070 = vadd.f32 0.0, %v2069
        %v2071 = vpop.f32.mrf.mxu0
        %v2072 = vpop.f32.mrf.mxu0
        %v2073 = vadd.f32 0.0, %v2072
        %v2074 = vpop.f32.mrf.mxu0
        %2075 = vmatprep.mubr.bf16.mxu0 0
        %2076 = vmatmul.mubr.bf16.gmra.mxu0 %v1921
        %v2077 = vpop.f32.mrf.mxu0
        %v2078 = vadd.f32 0.0, %v2077
        %v2079 = vpop.f32.mrf.mxu0
        %v2080 = vpop.f32.mrf.mxu0
        %v2081 = vadd.f32 0.0, %v2080
        %v2082 = vpop.f32.mrf.mxu0
        %2083 = vmatprep.mubr.bf16.mxu0 0
        %2084 = vmatmul.mubr.bf16.gmra.mxu0 %v1922
        %v2085 = vpop.f32.mrf.mxu0
        %v2086 = vadd.f32 0.0, %v2085
        %v2087 = vpop.f32.mrf.mxu0
        %v2088 = vpop.f32.mrf.mxu0
        %v2089 = vadd.f32 0.0, %v2088
        %v2090 = vpop.f32.mrf.mxu0
        %2091 = vmatprep.mubr.bf16.mxu0 0
        %2092 = vmatmul.mubr.bf16.gmra.mxu0 %v1923
        %v2093 = vpop.f32.mrf.mxu0
        %v2094 = vadd.f32 0.0, %v2093
        %v2095 = vpop.f32.mrf.mxu0
        %v2096 = vpop.f32.mrf.mxu0
        %v2097 = vadd.f32 0.0, %v2096
        %v2098 = vpop.f32.mrf.mxu0
        %2099 = vmatprep.mubr.bf16.mxu0 0
        %2100 = vmatmul.mubr.bf16.gmra.mxu0 %v1924
        %v2101 = vpop.f32.mrf.mxu0
        %v2102 = vadd.f32 0.0, %v2101
        %v2103 = vpop.f32.mrf.mxu0
        %v2104 = vpop.f32.mrf.mxu0
        %v2105 = vadd.f32 0.0, %v2104
        %v2106 = vpop.f32.mrf.mxu0
        %2107 = vmatprep.mubr.bf16.mxu0 0
        %2108 = vmatmul.mubr.bf16.gmra.mxu0 %v1925
        %v2109 = vpop.f32.mrf.mxu0
        %v2110 = vadd.f32 0.0, %v2109
        %v2111 = vpop.f32.mrf.mxu0
        %v2112 = vpop.f32.mrf.mxu0
        %v2113 = vadd.f32 0.0, %v2112
        %v2114 = vpop.f32.mrf.mxu0
        %2115 = vmatprep.mubr.bf16.mxu0 0
        %2116 = vmatmul.mubr.bf16.gmra.mxu0 %v1926
        %v2117 = vpop.f32.mrf.mxu0
        %v2118 = vadd.f32 0.0, %v2117
        %v2119 = vpop.f32.mrf.mxu0
        %v2120 = vpop.f32.mrf.mxu0
        %v2121 = vadd.f32 0.0, %v2120
        %v2122 = vpop.f32.mrf.mxu0
        %2123 = vmatprep.mubr.bf16.mxu0 0
        %2124 = vmatmul.mubr.bf16.gmra.mxu0 %v1927
        %v2125 = vpop.f32.mrf.mxu0
        %v2126 = vadd.f32 0.0, %v2125
        %v2127 = vpop.f32.mrf.mxu0
        %v2128 = vpop.f32.mrf.mxu0
        %v2129 = vadd.f32 0.0, %v2128
        %v2130 = vpop.f32.mrf.mxu0
        %2131 = vmatprep.mubr.bf16.mxu0 0
        %2132 = vmatmul.mubr.bf16.gmra.mxu0 %v1928
        %v2133 = vpop.f32.mrf.mxu0
        %v2134 = vadd.f32 0.0, %v2133
        %v2135 = vpop.f32.mrf.mxu0
        %v2136 = vpop.f32.mrf.mxu0
        %v2137 = vadd.f32 0.0, %v2136
        %v2138 = vpop.f32.mrf.mxu0
        %2139 = vmatprep.mubr.bf16.mxu0 0
        %2140 = vmatmul.mubr.bf16.gmra.mxu0 %v1929
        %v2141 = vpop.f32.mrf.mxu0
        %v2142 = vadd.f32 0.0, %v2141
        %v2143 = vpop.f32.mrf.mxu0
        %v2144 = vpop.f32.mrf.mxu0
        %v2145 = vadd.f32 0.0, %v2144
        %v2146 = vpop.f32.mrf.mxu0
        %2147 = vmatprep.mubr.bf16.mxu0 0
        %2148 = vmatmul.mubr.bf16.gmra.mxu0 %v1930
        %v2149 = vpop.f32.mrf.mxu0
        %v2150 = vadd.f32 0.0, %v2149
        %v2151 = vpop.f32.mrf.mxu0
        %v2152 = vpop.f32.mrf.mxu0
        %v2153 = vadd.f32 0.0, %v2152
        %v2154 = vpop.f32.mrf.mxu0
        %2155 = vdwg.mxu0
        %v2156 = vadd.f32 %v1770, %v2030
        %v2157 = vadd.f32 %v1771, %v2033
        %v2158 = vadd.f32 %v1772, %v2038
        %v2159 = vadd.f32 %v1773, %v2041
        %v2160 = vadd.f32 %v1774, %v2046
        %v2161 = vadd.f32 %v1775, %v2049
        %v2162 = vadd.f32 %v1776, %v2054
        %v2163 = vadd.f32 %v1777, %v2057
        %v2164 = vadd.f32 %v1778, %v2062
        %v2165 = vadd.f32 %v1779, %v2065
        %v2166 = vadd.f32 %v1780, %v2070
        %v2167 = vadd.f32 %v1781, %v2073
        %v2168 = vadd.f32 %v1782, %v2078
        %v2169 = vadd.f32 %v1783, %v2081
        %v2170 = vadd.f32 %v1784, %v2086
        %v2171 = vadd.f32 %v1785, %v2089
        %v2172 = vadd.f32 %v1786, %v2094
        %v2173 = vadd.f32 %v1787, %v2097
        %v2174 = vadd.f32 %v1788, %v2102
        %v2175 = vadd.f32 %v1789, %v2105
        %v2176 = vadd.f32 %v1790, %v2110
        %v2177 = vadd.f32 %v1791, %v2113
        %v2178 = vadd.f32 %v1792, %v2118
        %v2179 = vadd.f32 %v1793, %v2121
        %v2180 = vadd.f32 %v1794, %v2126
        %v2181 = vadd.f32 %v1795, %v2129
        %v2182 = vadd.f32 %v1796, %v2134
        %v2183 = vadd.f32 %v1797, %v2137
        %v2184 = vadd.f32 %v1798, %v2142
        %v2185 = vadd.f32 %v1799, %v2145
        %v2186 = vadd.f32 %v1800, %v2150
        %v2187 = vadd.f32 %v1801, %v2153
        %v2188 = vld [vmem:[%s1802] sm:$0xf]
        %v2189 = vld [vmem:[%s1802 + $0x4] sm:$0xf]
        %v2190 = vld [vmem:[%s1802 + $0x8] sm:$0x1]
        %v2191 = vld [vmem:[%s1802 + $0xc] sm:$0xf]
        %v2192 = vld [vmem:[%s1802 + $0x10] sm:$0xf]
        %v2193 = vld [vmem:[%s1802 + $0x14] sm:$0x1]
        %v2194 = vld [vmem:[%s1802 + $0x18] sm:$0xf]
        %v2195 = vld [vmem:[%s1802 + $0x1c] sm:$0xf]
        %v2196 = vld [vmem:[%s1802 + $0x20] sm:$0x1]
        %v2197 = vld [vmem:[%s1802 + $0x24] sm:$0xf]
        %v2198 = vld [vmem:[%s1802 + $0x28] sm:$0xf]
        %v2199 = vld [vmem:[%s1802 + $0x2c] sm:$0x1]
        %v2200 = vld [vmem:[%s1802 + $0x30] sm:$0xf]
        %v2201 = vld [vmem:[%s1802 + $0x34] sm:$0xf]
        %v2202 = vld [vmem:[%s1802 + $0x38] sm:$0x1]
        %v2203 = vld [vmem:[%s1802 + $0x3c] sm:$0xf]
        %v2204 = vld [vmem:[%s1802 + $0x40] sm:$0xf]
        %v2205 = vld [vmem:[%s1802 + $0x44] sm:$0x1]
        %v2206 = vld [vmem:[%s1802 + $0x48] sm:$0xf]
        %v2207 = vld [vmem:[%s1802 + $0x4c] sm:$0xf]
        %v2208 = vld [vmem:[%s1802 + $0x50] sm:$0x1]
        %v2209 = vld [vmem:[%s1802 + $0x54] sm:$0xf]
        %v2210 = vld [vmem:[%s1802 + $0x58] sm:$0xf]
        %v2211 = vld [vmem:[%s1802 + $0x5c] sm:$0x1]
        %v2212 = vld [vmem:[%s1802 + $0x60] sm:$0xf]
        %v2213 = vld [vmem:[%s1802 + $0x64] sm:$0xf]
        %v2214 = vld [vmem:[%s1802 + $0x68] sm:$0x1]
        %v2215 = vld [vmem:[%s1802 + $0x6c] sm:$0xf]
        %v2216 = vld [vmem:[%s1802 + $0x70] sm:$0xf]
        %v2217 = vld [vmem:[%s1802 + $0x74] sm:$0x1]
        %v2218 = vld [vmem:[%s1802 + $0x78] sm:$0xf]
        %v2219 = vld [vmem:[%s1802 + $0x7c] sm:$0xf]
        %v2220 = vld [vmem:[%s1802 + $0x80] sm:$0x1]
        %v2221 = vld [vmem:[%s1802 + $0x84] sm:$0xf]
        %v2222 = vld [vmem:[%s1802 + $0x88] sm:$0xf]
        %v2223 = vld [vmem:[%s1802 + $0x8c] sm:$0x1]
        %v2224 = vld [vmem:[%s1802 + $0x90] sm:$0xf]
        %v2225 = vld [vmem:[%s1802 + $0x94] sm:$0xf]
        %v2226 = vld [vmem:[%s1802 + $0x98] sm:$0x1]
        %v2227 = vld [vmem:[%s1802 + $0x9c] sm:$0xf]
        %v2228 = vld [vmem:[%s1802 + $0xa0] sm:$0xf]
        %v2229 = vld [vmem:[%s1802 + $0xa4] sm:$0x1]
        %v2230 = vld [vmem:[%s1802 + $0xa8] sm:$0xf]
        %v2231 = vld [vmem:[%s1802 + $0xac] sm:$0xf]
        %v2232 = vld [vmem:[%s1802 + $0xb0] sm:$0x1]
        %v2233 = vld [vmem:[%s1802 + $0xb4] sm:$0xf]
        %v2234 = vld [vmem:[%s1802 + $0xb8] sm:$0xf]
        %v2235 = vld [vmem:[%s1802 + $0xbc] sm:$0x1]
        %v2237 = vshrl.u32 %v2188, 16
        %v2239 = vrot.slane %v2237, 4
        %v2240 = vshll.u32 %v2188, 16
        %v2242 = vrot.slane %v2240, 5
        %v2243 = vor.u32 %v2239, %v2242
        %v2244 = vrot.slane %v2243, 4
        %v2246 = vshll.u32 %v2189, 16
        %v2248 = vrot.slane %v2246, 5
        %v2249 = vsel %vm339, %v2244, %v2248
        %v2250 = vshrl.u32 %v2189, 16
        %v2252 = vrot.slane %v2250, 4
        %v2253 = vor.u32 %v2252, %v2248
        %v2254 = vrot.slane %v2253, 4
        %v2256 = vshll.u32 %v2190, 16
        %v2258 = vrot.slane %v2256, 5
        %v2259 = vsel %vm339, %v2254, %v2258
        %v2261 = vshrl.u32 %v2191, 16
        %v2263 = vrot.slane %v2261, 4
        %v2264 = vshll.u32 %v2191, 16
        %v2266 = vrot.slane %v2264, 5
        %v2267 = vor.u32 %v2263, %v2266
        %v2268 = vrot.slane %v2267, 4
        %v2270 = vshll.u32 %v2192, 16
        %v2272 = vrot.slane %v2270, 5
        %v2273 = vsel %vm339, %v2268, %v2272
        %v2274 = vshrl.u32 %v2192, 16
        %v2276 = vrot.slane %v2274, 4
        %v2277 = vor.u32 %v2276, %v2272
        %v2278 = vrot.slane %v2277, 4
        %v2280 = vshll.u32 %v2193, 16
        %v2282 = vrot.slane %v2280, 5
        %v2283 = vsel %vm339, %v2278, %v2282
        %v2285 = vshrl.u32 %v2194, 16
        %v2287 = vrot.slane %v2285, 4
        %v2288 = vshll.u32 %v2194, 16
        %v2290 = vrot.slane %v2288, 5
        %v2291 = vor.u32 %v2287, %v2290
        %v2292 = vrot.slane %v2291, 4
        %v2294 = vshll.u32 %v2195, 16
        %v2296 = vrot.slane %v2294, 5
        %v2297 = vsel %vm339, %v2292, %v2296
        %v2298 = vshrl.u32 %v2195, 16
        %v2300 = vrot.slane %v2298, 4
        %v2301 = vor.u32 %v2300, %v2296
        %v2302 = vrot.slane %v2301, 4
        %v2304 = vshll.u32 %v2196, 16
        %v2306 = vrot.slane %v2304, 5
        %v2307 = vsel %vm339, %v2302, %v2306
        %v2309 = vshrl.u32 %v2197, 16
        %v2311 = vrot.slane %v2309, 4
        %v2312 = vshll.u32 %v2197, 16
        %v2314 = vrot.slane %v2312, 5
        %v2315 = vor.u32 %v2311, %v2314
        %v2316 = vrot.slane %v2315, 4
        %v2318 = vshll.u32 %v2198, 16
        %v2320 = vrot.slane %v2318, 5
        %v2321 = vsel %vm339, %v2316, %v2320
        %v2322 = vshrl.u32 %v2198, 16
        %v2324 = vrot.slane %v2322, 4
        %v2325 = vor.u32 %v2324, %v2320
        %v2326 = vrot.slane %v2325, 4
        %v2328 = vshll.u32 %v2199, 16
        %v2330 = vrot.slane %v2328, 5
        %v2331 = vsel %vm339, %v2326, %v2330
        %v2333 = vshrl.u32 %v2200, 16
        %v2335 = vrot.slane %v2333, 4
        %v2336 = vshll.u32 %v2200, 16
        %v2338 = vrot.slane %v2336, 5
        %v2339 = vor.u32 %v2335, %v2338
        %v2340 = vrot.slane %v2339, 4
        %v2342 = vshll.u32 %v2201, 16
        %v2344 = vrot.slane %v2342, 5
        %v2345 = vsel %vm339, %v2340, %v2344
        %v2346 = vshrl.u32 %v2201, 16
        %v2348 = vrot.slane %v2346, 4
        %v2349 = vor.u32 %v2348, %v2344
        %v2350 = vrot.slane %v2349, 4
        %v2352 = vshll.u32 %v2202, 16
        %v2354 = vrot.slane %v2352, 5
        %v2355 = vsel %vm339, %v2350, %v2354
        %v2357 = vshrl.u32 %v2203, 16
        %v2359 = vrot.slane %v2357, 4
        %v2360 = vshll.u32 %v2203, 16
        %v2362 = vrot.slane %v2360, 5
        %v2363 = vor.u32 %v2359, %v2362
        %v2364 = vrot.slane %v2363, 4
        %v2366 = vshll.u32 %v2204, 16
        %v2368 = vrot.slane %v2366, 5
        %v2369 = vsel %vm339, %v2364, %v2368
        %v2370 = vshrl.u32 %v2204, 16
        %v2372 = vrot.slane %v2370, 4
        %v2373 = vor.u32 %v2372, %v2368
        %v2374 = vrot.slane %v2373, 4
        %v2376 = vshll.u32 %v2205, 16
        %v2378 = vrot.slane %v2376, 5
        %v2379 = vsel %vm339, %v2374, %v2378
        %v2381 = vshrl.u32 %v2206, 16
        %v2383 = vrot.slane %v2381, 4
        %v2384 = vshll.u32 %v2206, 16
        %v2386 = vrot.slane %v2384, 5
        %v2387 = vor.u32 %v2383, %v2386
        %v2388 = vrot.slane %v2387, 4
        %v2390 = vshll.u32 %v2207, 16
        %v2392 = vrot.slane %v2390, 5
        %v2393 = vsel %vm339, %v2388, %v2392
        %v2394 = vshrl.u32 %v2207, 16
        %v2396 = vrot.slane %v2394, 4
        %v2397 = vor.u32 %v2396, %v2392
        %v2398 = vrot.slane %v2397, 4
        %v2400 = vshll.u32 %v2208, 16
        %v2402 = vrot.slane %v2400, 5
        %v2403 = vsel %vm339, %v2398, %v2402
        %v2405 = vshrl.u32 %v2209, 16
        %v2407 = vrot.slane %v2405, 4
        %v2408 = vshll.u32 %v2209, 16
        %v2410 = vrot.slane %v2408, 5
        %v2411 = vor.u32 %v2407, %v2410
        %v2412 = vrot.slane %v2411, 4
        %v2414 = vshll.u32 %v2210, 16
        %v2416 = vrot.slane %v2414, 5
        %v2417 = vsel %vm339, %v2412, %v2416
        %v2418 = vshrl.u32 %v2210, 16
        %v2420 = vrot.slane %v2418, 4
        %v2421 = vor.u32 %v2420, %v2416
        %v2422 = vrot.slane %v2421, 4
        %v2424 = vshll.u32 %v2211, 16
        %v2426 = vrot.slane %v2424, 5
        %v2427 = vsel %vm339, %v2422, %v2426
        %v2429 = vshrl.u32 %v2212, 16
        %v2431 = vrot.slane %v2429, 4
        %v2432 = vshll.u32 %v2212, 16
        %v2434 = vrot.slane %v2432, 5
        %v2435 = vor.u32 %v2431, %v2434
        %v2436 = vrot.slane %v2435, 4
        %v2438 = vshll.u32 %v2213, 16
        %v2440 = vrot.slane %v2438, 5
        %v2441 = vsel %vm339, %v2436, %v2440
        %v2442 = vshrl.u32 %v2213, 16
        %v2444 = vrot.slane %v2442, 4
        %v2445 = vor.u32 %v2444, %v2440
        %v2446 = vrot.slane %v2445, 4
        %v2448 = vshll.u32 %v2214, 16
        %v2450 = vrot.slane %v2448, 5
        %v2451 = vsel %vm339, %v2446, %v2450
        %v2453 = vshrl.u32 %v2215, 16
        %v2455 = vrot.slane %v2453, 4
        %v2456 = vshll.u32 %v2215, 16
        %v2458 = vrot.slane %v2456, 5
        %v2459 = vor.u32 %v2455, %v2458
        %v2460 = vrot.slane %v2459, 4
        %v2462 = vshll.u32 %v2216, 16
        %v2464 = vrot.slane %v2462, 5
        %v2465 = vsel %vm339, %v2460, %v2464
        %v2466 = vshrl.u32 %v2216, 16
        %v2468 = vrot.slane %v2466, 4
        %v2469 = vor.u32 %v2468, %v2464
        %v2470 = vrot.slane %v2469, 4
        %v2472 = vshll.u32 %v2217, 16
        %v2474 = vrot.slane %v2472, 5
        %v2475 = vsel %vm339, %v2470, %v2474
        %v2477 = vshrl.u32 %v2218, 16
        %v2479 = vrot.slane %v2477, 4
        %v2480 = vshll.u32 %v2218, 16
        %v2482 = vrot.slane %v2480, 5
        %v2483 = vor.u32 %v2479, %v2482
        %v2484 = vrot.slane %v2483, 4
        %v2486 = vshll.u32 %v2219, 16
        %v2488 = vrot.slane %v2486, 5
        %v2489 = vsel %vm339, %v2484, %v2488
        %v2490 = vshrl.u32 %v2219, 16
        %v2492 = vrot.slane %v2490, 4
        %v2493 = vor.u32 %v2492, %v2488
        %v2494 = vrot.slane %v2493, 4
        %v2496 = vshll.u32 %v2220, 16
        %v2498 = vrot.slane %v2496, 5
        %v2499 = vsel %vm339, %v2494, %v2498
        %v2501 = vshrl.u32 %v2221, 16
        %v2503 = vrot.slane %v2501, 4
        %v2504 = vshll.u32 %v2221, 16
        %v2506 = vrot.slane %v2504, 5
        %v2507 = vor.u32 %v2503, %v2506
        %v2508 = vrot.slane %v2507, 4
        %v2510 = vshll.u32 %v2222, 16
        %v2512 = vrot.slane %v2510, 5
        %v2513 = vsel %vm339, %v2508, %v2512
        %v2514 = vshrl.u32 %v2222, 16
        %v2516 = vrot.slane %v2514, 4
        %v2517 = vor.u32 %v2516, %v2512
        %v2518 = vrot.slane %v2517, 4
        %v2520 = vshll.u32 %v2223, 16
        %v2522 = vrot.slane %v2520, 5
        %v2523 = vsel %vm339, %v2518, %v2522
        %v2525 = vshrl.u32 %v2224, 16
        %v2527 = vrot.slane %v2525, 4
        %v2528 = vshll.u32 %v2224, 16
        %v2530 = vrot.slane %v2528, 5
        %v2531 = vor.u32 %v2527, %v2530
        %v2532 = vrot.slane %v2531, 4
        %v2534 = vshll.u32 %v2225, 16
        %v2536 = vrot.slane %v2534, 5
        %v2537 = vsel %vm339, %v2532, %v2536
        %v2538 = vshrl.u32 %v2225, 16
        %v2540 = vrot.slane %v2538, 4
        %v2541 = vor.u32 %v2540, %v2536
        %v2542 = vrot.slane %v2541, 4
        %v2544 = vshll.u32 %v2226, 16
        %v2546 = vrot.slane %v2544, 5
        %v2547 = vsel %vm339, %v2542, %v2546
        %v2549 = vshrl.u32 %v2227, 16
        %v2551 = vrot.slane %v2549, 4
        %v2552 = vshll.u32 %v2227, 16
        %v2554 = vrot.slane %v2552, 5
        %v2555 = vor.u32 %v2551, %v2554
        %v2556 = vrot.slane %v2555, 4
        %v2558 = vshll.u32 %v2228, 16
        %v2560 = vrot.slane %v2558, 5
        %v2561 = vsel %vm339, %v2556, %v2560
        %v2562 = vshrl.u32 %v2228, 16
        %v2564 = vrot.slane %v2562, 4
        %v2565 = vor.u32 %v2564, %v2560
        %v2566 = vrot.slane %v2565, 4
        %v2568 = vshll.u32 %v2229, 16
        %v2570 = vrot.slane %v2568, 5
        %v2571 = vsel %vm339, %v2566, %v2570
        %v2573 = vshrl.u32 %v2230, 16
        %v2575 = vrot.slane %v2573, 4
        %v2576 = vshll.u32 %v2230, 16
        %v2578 = vrot.slane %v2576, 5
        %v2579 = vor.u32 %v2575, %v2578
        %v2580 = vrot.slane %v2579, 4
        %v2582 = vshll.u32 %v2231, 16
        %v2584 = vrot.slane %v2582, 5
        %v2585 = vsel %vm339, %v2580, %v2584
        %v2586 = vshrl.u32 %v2231, 16
        %v2588 = vrot.slane %v2586, 4
        %v2589 = vor.u32 %v2588, %v2584
        %v2590 = vrot.slane %v2589, 4
        %v2592 = vshll.u32 %v2232, 16
        %v2594 = vrot.slane %v2592, 5
        %v2595 = vsel %vm339, %v2590, %v2594
        %v2597 = vshrl.u32 %v2233, 16
        %v2599 = vrot.slane %v2597, 4
        %v2600 = vshll.u32 %v2233, 16
        %v2602 = vrot.slane %v2600, 5
        %v2603 = vor.u32 %v2599, %v2602
        %v2604 = vrot.slane %v2603, 4
        %v2606 = vshll.u32 %v2234, 16
        %v2608 = vrot.slane %v2606, 5
        %v2609 = vsel %vm339, %v2604, %v2608
        %v2610 = vshrl.u32 %v2234, 16
        %v2612 = vrot.slane %v2610, 4
        %v2613 = vor.u32 %v2612, %v2608
        %v2614 = vrot.slane %v2613, 4
        %v2616 = vshll.u32 %v2235, 16
        %v2618 = vrot.slane %v2616, 5
        %v2619 = vsel %vm339, %v2614, %v2618
        %v2620 = vld [vmem:[#allocation6 + $0x100] sm:$0xf]
        %v2621 = vld [vmem:[#allocation6 + $0x104] sm:$0xf]
        %v2622 = vld [vmem:[#allocation6 + $0x108] sm:$0xf]
        %v2623 = vld [vmem:[#allocation6 + $0x10c] sm:$0xf]
        %v2624 = vld [vmem:[#allocation6 + $0x110] sm:$0xf]
        %v2625 = vld [vmem:[#allocation6 + $0x114] sm:$0xf]
        %v2626 = vld [vmem:[#allocation6 + $0x118] sm:$0xf]
        %v2627 = vld [vmem:[#allocation6 + $0x11c] sm:$0xf]
        %v2628 = vld [vmem:[#allocation6 + $0x120] sm:$0xf]
        %v2629 = vld [vmem:[#allocation6 + $0x124] sm:$0xf]
        %v2630 = vld [vmem:[#allocation6 + $0x128] sm:$0xf]
        %v2631 = vld [vmem:[#allocation6 + $0x12c] sm:$0xf]
        %v2632 = vld [vmem:[#allocation6 + $0x130] sm:$0xf]
        %v2633 = vld [vmem:[#allocation6 + $0x134] sm:$0xf]
        %v2634 = vld [vmem:[#allocation6 + $0x138] sm:$0xf]
        %v2635 = vld [vmem:[#allocation6 + $0x13c] sm:$0xf]
        %v2636 = vunpack.c.l.b16 %v2249
        %v2637 = vunpack.c.l.b16 %v2259
        %v2638 = vunpack.c.l.b16 %v2273
        %v2639 = vunpack.c.l.b16 %v2283
        %v2640 = vunpack.c.l.b16 %v2297
        %v2641 = vunpack.c.l.b16 %v2307
        %v2642 = vunpack.c.l.b16 %v2321
        %v2643 = vunpack.c.l.b16 %v2331
        %v2644 = vunpack.c.l.b16 %v2345
        %v2645 = vunpack.c.l.b16 %v2355
        %v2646 = vunpack.c.l.b16 %v2369
        %v2647 = vunpack.c.l.b16 %v2379
        %v2648 = vunpack.c.l.b16 %v2393
        %v2649 = vunpack.c.l.b16 %v2403
        %v2650 = vunpack.c.l.b16 %v2417
        %v2651 = vunpack.c.l.b16 %v2427
        %v2652 = vunpack.c.l.b16 %v2441
        %v2653 = vunpack.c.l.b16 %v2451
        %v2654 = vunpack.c.l.b16 %v2465
        %v2655 = vunpack.c.l.b16 %v2475
        %v2656 = vunpack.c.l.b16 %v2489
        %v2657 = vunpack.c.l.b16 %v2499
        %v2658 = vunpack.c.l.b16 %v2513
        %v2659 = vunpack.c.l.b16 %v2523
        %v2660 = vunpack.c.l.b16 %v2537
        %v2661 = vunpack.c.l.b16 %v2547
        %v2662 = vunpack.c.l.b16 %v2561
        %v2663 = vunpack.c.l.b16 %v2571
        %v2664 = vunpack.c.l.b16 %v2585
        %v2665 = vunpack.c.l.b16 %v2595
        %v2666 = vunpack.c.l.b16 %v2609
        %v2667 = vunpack.c.l.b16 %v2619
        %v2668 = vpack.c.b16 %v2637, %v2636
        %v2669 = vpack.c.b16 %v2639, %v2638
        %v2670 = vpack.c.b16 %v2641, %v2640
        %v2671 = vpack.c.b16 %v2643, %v2642
        %v2672 = vpack.c.b16 %v2645, %v2644
        %v2673 = vpack.c.b16 %v2647, %v2646
        %v2674 = vpack.c.b16 %v2649, %v2648
        %v2675 = vpack.c.b16 %v2651, %v2650
        %v2676 = vpack.c.b16 %v2653, %v2652
        %v2677 = vpack.c.b16 %v2655, %v2654
        %v2678 = vpack.c.b16 %v2657, %v2656
        %v2679 = vpack.c.b16 %v2659, %v2658
        %v2680 = vpack.c.b16 %v2661, %v2660
        %v2681 = vpack.c.b16 %v2663, %v2662
        %v2682 = vpack.c.b16 %v2665, %v2664
        %v2683 = vpack.c.b16 %v2667, %v2666
        %v2716 = vunpack.c.l.b16 %v2620
        %v2717 = vunpack.c.l.b16 %v2621
        %v2718 = vunpack.c.l.b16 %v2622
        %v2719 = vunpack.c.l.b16 %v2623
        %v2720 = vunpack.c.l.b16 %v2624
        %v2721 = vunpack.c.l.b16 %v2625
        %v2722 = vunpack.c.l.b16 %v2626
        %v2723 = vunpack.c.l.b16 %v2627
        %v2724 = vunpack.c.l.b16 %v2628
        %v2725 = vunpack.c.l.b16 %v2629
        %v2726 = vunpack.c.l.b16 %v2630
        %v2727 = vunpack.c.l.b16 %v2631
        %v2728 = vunpack.c.l.b16 %v2632
        %v2729 = vunpack.c.l.b16 %v2633
        %v2730 = vunpack.c.l.b16 %v2634
        %v2731 = vunpack.c.l.b16 %v2635
        %v2732 = vpack.c.b16 %v2717, %v2716
        %v2733 = vpack.c.b16 %v2719, %v2718
        %v2734 = vpack.c.b16 %v2721, %v2720
        %v2735 = vpack.c.b16 %v2723, %v2722
        %v2736 = vpack.c.b16 %v2725, %v2724
        %v2737 = vpack.c.b16 %v2727, %v2726
        %v2738 = vpack.c.b16 %v2729, %v2728
        %v2739 = vpack.c.b16 %v2731, %v2730
        %2748 = vmatprep.subr.bf16.mxu0 0
        %2749 = vmatpush1.bf16.msra.mxu0 %v2739
        %2750 = vmatprep.subr.bf16.mxu0 0
        %2751 = vmatpush1.bf16.msra.mxu0 %v2738
        %2752 = vmatprep.subr.bf16.mxu0 0
        %2753 = vmatpush1.bf16.msra.mxu0 %v2737
        %2754 = vmatprep.subr.bf16.mxu0 0
        %2755 = vmatpush1.bf16.msra.mxu0 %v2736
        %2756 = vmatprep.subr.bf16.mxu0 0
        %2757 = vmatpush1.bf16.msra.mxu0 %v2735
        %2758 = vmatprep.subr.bf16.mxu0 0
        %2759 = vmatpush1.bf16.msra.mxu0 %v2734
        %2760 = vmatprep.subr.bf16.mxu0 0
        %2761 = vmatpush1.bf16.msra.mxu0 %v2733
        %2762 = vmatprep.subr.bf16.mxu0 0
        %2763 = vmatpush1.bf16.msra.mxu0 %v2732
        %2764 = vmatprep.subr.bf16.mxu0 0
        %2765 = vmatpush2.bf16.msra.mxu0 0
        %2766 = vmatprep.subr.bf16.mxu0 0
        %2767 = vmatpush2.bf16.msra.mxu0 0
        %2768 = vmatprep.subr.bf16.mxu0 0
        %2769 = vmatpush2.bf16.msra.mxu0 0
        %2770 = vmatprep.subr.bf16.mxu0 0
        %2771 = vmatpush2.bf16.msra.mxu0 0
        %2772 = vmatprep.subr.bf16.mxu0 0
        %2773 = vmatpush2.bf16.msra.mxu0 0
        %2774 = vmatprep.subr.bf16.mxu0 0
        %2775 = vmatpush2.bf16.msra.mxu0 0
        %2776 = vmatprep.subr.bf16.mxu0 0
        %2777 = vmatpush2.bf16.msra.mxu0 0
        %2778 = vmatprep.subr.bf16.mxu0 0
        %2779 = vmatpush2.bf16.msra.mxu0 0
        %2780 = vmatprep.mubr.bf16.mxu0 0
        %2781 = vmatmul.mubr.bf16.gmra.mxu0 %v2668
        %v2782 = vpop.f32.mrf.mxu0
        %v2783 = vadd.f32 0.0, %v2782
        %v2784 = vpop.f32.mrf.mxu0
        %v2785 = vpop.f32.mrf.mxu0
        %v2786 = vadd.f32 0.0, %v2785
        %v2787 = vpop.f32.mrf.mxu0
        %2788 = vmatprep.mubr.bf16.mxu0 0
        %2789 = vmatmul.mubr.bf16.gmra.mxu0 %v2669
        %v2790 = vpop.f32.mrf.mxu0
        %v2791 = vadd.f32 0.0, %v2790
        %v2792 = vpop.f32.mrf.mxu0
        %v2793 = vpop.f32.mrf.mxu0
        %v2794 = vadd.f32 0.0, %v2793
        %v2795 = vpop.f32.mrf.mxu0
        %2796 = vmatprep.mubr.bf16.mxu0 0
        %2797 = vmatmul.mubr.bf16.gmra.mxu0 %v2670
        %v2798 = vpop.f32.mrf.mxu0
        %v2799 = vadd.f32 0.0, %v2798
        %v2800 = vpop.f32.mrf.mxu0
        %v2801 = vpop.f32.mrf.mxu0
        %v2802 = vadd.f32 0.0, %v2801
        %v2803 = vpop.f32.mrf.mxu0
        %2804 = vmatprep.mubr.bf16.mxu0 0
        %2805 = vmatmul.mubr.bf16.gmra.mxu0 %v2671
        %v2806 = vpop.f32.mrf.mxu0
        %v2807 = vadd.f32 0.0, %v2806
        %v2808 = vpop.f32.mrf.mxu0
        %v2809 = vpop.f32.mrf.mxu0
        %v2810 = vadd.f32 0.0, %v2809
        %v2811 = vpop.f32.mrf.mxu0
        %2812 = vmatprep.mubr.bf16.mxu0 0
        %2813 = vmatmul.mubr.bf16.gmra.mxu0 %v2672
        %v2814 = vpop.f32.mrf.mxu0
        %v2815 = vadd.f32 0.0, %v2814
        %v2816 = vpop.f32.mrf.mxu0
        %v2817 = vpop.f32.mrf.mxu0
        %v2818 = vadd.f32 0.0, %v2817
        %v2819 = vpop.f32.mrf.mxu0
        %2820 = vmatprep.mubr.bf16.mxu0 0
        %2821 = vmatmul.mubr.bf16.gmra.mxu0 %v2673
        %v2822 = vpop.f32.mrf.mxu0
        %v2823 = vadd.f32 0.0, %v2822
        %v2824 = vpop.f32.mrf.mxu0
        %v2825 = vpop.f32.mrf.mxu0
        %v2826 = vadd.f32 0.0, %v2825
        %v2827 = vpop.f32.mrf.mxu0
        %2828 = vmatprep.mubr.bf16.mxu0 0
        %2829 = vmatmul.mubr.bf16.gmra.mxu0 %v2674
        %v2830 = vpop.f32.mrf.mxu0
        %v2831 = vadd.f32 0.0, %v2830
        %v2832 = vpop.f32.mrf.mxu0
        %v2833 = vpop.f32.mrf.mxu0
        %v2834 = vadd.f32 0.0, %v2833
        %v2835 = vpop.f32.mrf.mxu0
        %2836 = vmatprep.mubr.bf16.mxu0 0
        %2837 = vmatmul.mubr.bf16.gmra.mxu0 %v2675
        %v2838 = vpop.f32.mrf.mxu0
        %v2839 = vadd.f32 0.0, %v2838
        %v2840 = vpop.f32.mrf.mxu0
        %v2841 = vpop.f32.mrf.mxu0
        %v2842 = vadd.f32 0.0, %v2841
        %v2843 = vpop.f32.mrf.mxu0
        %2844 = vmatprep.mubr.bf16.mxu0 0
        %2845 = vmatmul.mubr.bf16.gmra.mxu0 %v2676
        %v2846 = vpop.f32.mrf.mxu0
        %v2847 = vadd.f32 0.0, %v2846
        %v2848 = vpop.f32.mrf.mxu0
        %v2849 = vpop.f32.mrf.mxu0
        %v2850 = vadd.f32 0.0, %v2849
        %v2851 = vpop.f32.mrf.mxu0
        %2852 = vmatprep.mubr.bf16.mxu0 0
        %2853 = vmatmul.mubr.bf16.gmra.mxu0 %v2677
        %v2854 = vpop.f32.mrf.mxu0
        %v2855 = vadd.f32 0.0, %v2854
        %v2856 = vpop.f32.mrf.mxu0
        %v2857 = vpop.f32.mrf.mxu0
        %v2858 = vadd.f32 0.0, %v2857
        %v2859 = vpop.f32.mrf.mxu0
        %2860 = vmatprep.mubr.bf16.mxu0 0
        %2861 = vmatmul.mubr.bf16.gmra.mxu0 %v2678
        %v2862 = vpop.f32.mrf.mxu0
        %v2863 = vadd.f32 0.0, %v2862
        %v2864 = vpop.f32.mrf.mxu0
        %v2865 = vpop.f32.mrf.mxu0
        %v2866 = vadd.f32 0.0, %v2865
        %v2867 = vpop.f32.mrf.mxu0
        %2868 = vmatprep.mubr.bf16.mxu0 0
        %2869 = vmatmul.mubr.bf16.gmra.mxu0 %v2679
        %v2870 = vpop.f32.mrf.mxu0
        %v2871 = vadd.f32 0.0, %v2870
        %v2872 = vpop.f32.mrf.mxu0
        %v2873 = vpop.f32.mrf.mxu0
        %v2874 = vadd.f32 0.0, %v2873
        %v2875 = vpop.f32.mrf.mxu0
        %2876 = vmatprep.mubr.bf16.mxu0 0
        %2877 = vmatmul.mubr.bf16.gmra.mxu0 %v2680
        %v2878 = vpop.f32.mrf.mxu0
        %v2879 = vadd.f32 0.0, %v2878
        %v2880 = vpop.f32.mrf.mxu0
        %v2881 = vpop.f32.mrf.mxu0
        %v2882 = vadd.f32 0.0, %v2881
        %v2883 = vpop.f32.mrf.mxu0
        %2884 = vmatprep.mubr.bf16.mxu0 0
        %2885 = vmatmul.mubr.bf16.gmra.mxu0 %v2681
        %v2886 = vpop.f32.mrf.mxu0
        %v2887 = vadd.f32 0.0, %v2886
        %v2888 = vpop.f32.mrf.mxu0
        %v2889 = vpop.f32.mrf.mxu0
        %v2890 = vadd.f32 0.0, %v2889
        %v2891 = vpop.f32.mrf.mxu0
        %2892 = vmatprep.mubr.bf16.mxu0 0
        %2893 = vmatmul.mubr.bf16.gmra.mxu0 %v2682
        %v2894 = vpop.f32.mrf.mxu0
        %v2895 = vadd.f32 0.0, %v2894
        %v2896 = vpop.f32.mrf.mxu0
        %v2897 = vpop.f32.mrf.mxu0
        %v2898 = vadd.f32 0.0, %v2897
        %v2899 = vpop.f32.mrf.mxu0
        %2900 = vmatprep.mubr.bf16.mxu0 0
        %2901 = vmatmul.mubr.bf16.gmra.mxu0 %v2683
        %v2902 = vpop.f32.mrf.mxu0
        %v2903 = vadd.f32 0.0, %v2902
        %v2904 = vpop.f32.mrf.mxu0
        %v2905 = vpop.f32.mrf.mxu0
        %v2906 = vadd.f32 0.0, %v2905
        %v2907 = vpop.f32.mrf.mxu0
        %2908 = vdwg.mxu0
        %v2909 = vadd.f32 %v2156, %v2783
        %v2910 = vadd.f32 %v2157, %v2786
        %v2911 = vadd.f32 %v2158, %v2791
        %v2912 = vadd.f32 %v2159, %v2794
        %v2913 = vadd.f32 %v2160, %v2799
        %v2914 = vadd.f32 %v2161, %v2802
        %v2915 = vadd.f32 %v2162, %v2807
        %v2916 = vadd.f32 %v2163, %v2810
        %v2917 = vadd.f32 %v2164, %v2815
        %v2918 = vadd.f32 %v2165, %v2818
        %v2919 = vadd.f32 %v2166, %v2823
        %v2920 = vadd.f32 %v2167, %v2826
        %v2921 = vadd.f32 %v2168, %v2831
        %v2922 = vadd.f32 %v2169, %v2834
        %v2923 = vadd.f32 %v2170, %v2839
        %v2924 = vadd.f32 %v2171, %v2842
        %v2925 = vadd.f32 %v2172, %v2847
        %v2926 = vadd.f32 %v2173, %v2850
        %v2927 = vadd.f32 %v2174, %v2855
        %v2928 = vadd.f32 %v2175, %v2858
        %v2929 = vadd.f32 %v2176, %v2863
        %v2930 = vadd.f32 %v2177, %v2866
        %v2931 = vadd.f32 %v2178, %v2871
        %v2932 = vadd.f32 %v2179, %v2874
        %v2933 = vadd.f32 %v2180, %v2879
        %v2934 = vadd.f32 %v2181, %v2882
        %v2935 = vadd.f32 %v2182, %v2887
        %v2936 = vadd.f32 %v2183, %v2890
        %v2937 = vadd.f32 %v2184, %v2895
        %v2938 = vadd.f32 %v2185, %v2898
        %v2939 = vadd.f32 %v2186, %v2903
        %v2940 = vadd.f32 %v2187, %v2906
        %v2941 = vld [vmem:[%s1802] sm:$0xe]
        %v2942 = vld [vmem:[%s1802 + $0xc] sm:$0xe]
        %v2943 = vld [vmem:[%s1802 + $0x18] sm:$0xe]
        %v2944 = vld [vmem:[%s1802 + $0x24] sm:$0xe]
        %v2945 = vld [vmem:[%s1802 + $0x30] sm:$0xe]
        %v2946 = vld [vmem:[%s1802 + $0x3c] sm:$0xe]
        %v2947 = vld [vmem:[%s1802 + $0x48] sm:$0xe]
        %v2948 = vld [vmem:[%s1802 + $0x54] sm:$0xe]
        %v2949 = vld [vmem:[%s1802 + $0x60] sm:$0xe]
        %v2950 = vld [vmem:[%s1802 + $0x6c] sm:$0xe]
        %v2951 = vld [vmem:[%s1802 + $0x78] sm:$0xe]
        %v2952 = vld [vmem:[%s1802 + $0x84] sm:$0xe]
        %v2953 = vld [vmem:[%s1802 + $0x90] sm:$0xe]
        %v2954 = vld [vmem:[%s1802 + $0x9c] sm:$0xe]
        %v2955 = vld [vmem:[%s1802 + $0xa8] sm:$0xe]
        %v2956 = vld [vmem:[%s1802 + $0xb4] sm:$0xe]
        %v3005 = vrot.slane %v2941, 5
        %v3006 = vrot.slane %v3005, 4
        %v3007 = vrot.slane %v2189, 5
        %v3008 = vsel %vm1368, %v3006, %v3007
        %v3009 = vrot.slane %v3007, 4
        %v3010 = vrot.slane %v2190, 5
        %v3011 = vsel %vm1368, %v3009, %v3010
        %v3012 = vrot.slane %v2942, 5
        %v3013 = vrot.slane %v3012, 4
        %v3014 = vrot.slane %v2192, 5
        %v3015 = vsel %vm1368, %v3013, %v3014
        %v3016 = vrot.slane %v3014, 4
        %v3017 = vrot.slane %v2193, 5
        %v3018 = vsel %vm1368, %v3016, %v3017
        %v3019 = vrot.slane %v2943, 5
        %v3020 = vrot.slane %v3019, 4
        %v3021 = vrot.slane %v2195, 5
        %v3022 = vsel %vm1368, %v3020, %v3021
        %v3023 = vrot.slane %v3021, 4
        %v3024 = vrot.slane %v2196, 5
        %v3025 = vsel %vm1368, %v3023, %v3024
        %v3026 = vrot.slane %v2944, 5
        %v3027 = vrot.slane %v3026, 4
        %v3028 = vrot.slane %v2198, 5
        %v3029 = vsel %vm1368, %v3027, %v3028
        %v3030 = vrot.slane %v3028, 4
        %v3031 = vrot.slane %v2199, 5
        %v3032 = vsel %vm1368, %v3030, %v3031
        %v3033 = vrot.slane %v2945, 5
        %v3034 = vrot.slane %v3033, 4
        %v3035 = vrot.slane %v2201, 5
        %v3036 = vsel %vm1368, %v3034, %v3035
        %v3037 = vrot.slane %v3035, 4
        %v3038 = vrot.slane %v2202, 5
        %v3039 = vsel %vm1368, %v3037, %v3038
        %v3040 = vrot.slane %v2946, 5
        %v3041 = vrot.slane %v3040, 4
        %v3042 = vrot.slane %v2204, 5
        %v3043 = vsel %vm1368, %v3041, %v3042
        %v3044 = vrot.slane %v3042, 4
        %v3045 = vrot.slane %v2205, 5
        %v3046 = vsel %vm1368, %v3044, %v3045
        %v3047 = vrot.slane %v2947, 5
        %v3048 = vrot.slane %v3047, 4
        %v3049 = vrot.slane %v2207, 5
        %v3050 = vsel %vm1368, %v3048, %v3049
        %v3051 = vrot.slane %v3049, 4
        %v3052 = vrot.slane %v2208, 5
        %v3053 = vsel %vm1368, %v3051, %v3052
        %v3054 = vrot.slane %v2948, 5
        %v3055 = vrot.slane %v3054, 4
        %v3056 = vrot.slane %v2210, 5
        %v3057 = vsel %vm1368, %v3055, %v3056
        %v3058 = vrot.slane %v3056, 4
        %v3059 = vrot.slane %v2211, 5
        %v3060 = vsel %vm1368, %v3058, %v3059
        %v3061 = vrot.slane %v2949, 5
        %v3062 = vrot.slane %v3061, 4
        %v3063 = vrot.slane %v2213, 5
        %v3064 = vsel %vm1368, %v3062, %v3063
        %v3065 = vrot.slane %v3063, 4
        %v3066 = vrot.slane %v2214, 5
        %v3067 = vsel %vm1368, %v3065, %v3066
        %v3068 = vrot.slane %v2950, 5
        %v3069 = vrot.slane %v3068, 4
        %v3070 = vrot.slane %v2216, 5
        %v3071 = vsel %vm1368, %v3069, %v3070
        %v3072 = vrot.slane %v3070, 4
        %v3073 = vrot.slane %v2217, 5
        %v3074 = vsel %vm1368, %v3072, %v3073
        %v3075 = vrot.slane %v2951, 5
        %v3076 = vrot.slane %v3075, 4
        %v3077 = vrot.slane %v2219, 5
        %v3078 = vsel %vm1368, %v3076, %v3077
        %v3079 = vrot.slane %v3077, 4
        %v3080 = vrot.slane %v2220, 5
        %v3081 = vsel %vm1368, %v3079, %v3080
        %v3082 = vrot.slane %v2952, 5
        %v3083 = vrot.slane %v3082, 4
        %v3084 = vrot.slane %v2222, 5
        %v3085 = vsel %vm1368, %v3083, %v3084
        %v3086 = vrot.slane %v3084, 4
        %v3087 = vrot.slane %v2223, 5
        %v3088 = vsel %vm1368, %v3086, %v3087
        %v3089 = vrot.slane %v2953, 5
        %v3090 = vrot.slane %v3089, 4
        %v3091 = vrot.slane %v2225, 5
        %v3092 = vsel %vm1368, %v3090, %v3091
        %v3093 = vrot.slane %v3091, 4
        %v3094 = vrot.slane %v2226, 5
        %v3095 = vsel %vm1368, %v3093, %v3094
        %v3096 = vrot.slane %v2954, 5
        %v3097 = vrot.slane %v3096, 4
        %v3098 = vrot.slane %v2228, 5
        %v3099 = vsel %vm1368, %v3097, %v3098
        %v3100 = vrot.slane %v3098, 4
        %v3101 = vrot.slane %v2229, 5
        %v3102 = vsel %vm1368, %v3100, %v3101
        %v3103 = vrot.slane %v2955, 5
        %v3104 = vrot.slane %v3103, 4
        %v3105 = vrot.slane %v2231, 5
        %v3106 = vsel %vm1368, %v3104, %v3105
        %v3107 = vrot.slane %v3105, 4
        %v3108 = vrot.slane %v2232, 5
        %v3109 = vsel %vm1368, %v3107, %v3108
        %v3110 = vrot.slane %v2956, 5
        %v3111 = vrot.slane %v3110, 4
        %v3112 = vrot.slane %v2234, 5
        %v3113 = vsel %vm1368, %v3111, %v3112
        %v3114 = vrot.slane %v3112, 4
        %v3115 = vrot.slane %v2235, 5
        %v3116 = vsel %vm1368, %v3114, %v3115
        %v3117 = vld [vmem:[#allocation6 + $0x140] sm:$0xf]
        %v3118 = vld [vmem:[#allocation6 + $0x144] sm:$0xf]
        %v3119 = vld [vmem:[#allocation6 + $0x148] sm:$0xf]
        %v3120 = vld [vmem:[#allocation6 + $0x14c] sm:$0xf]
        %v3121 = vld [vmem:[#allocation6 + $0x150] sm:$0xf]
        %v3122 = vld [vmem:[#allocation6 + $0x154] sm:$0xf]
        %v3123 = vld [vmem:[#allocation6 + $0x158] sm:$0xf]
        %v3124 = vld [vmem:[#allocation6 + $0x15c] sm:$0xf]
        %v3125 = vld [vmem:[#allocation6 + $0x160] sm:$0xf]
        %v3126 = vld [vmem:[#allocation6 + $0x164] sm:$0xf]
        %v3127 = vld [vmem:[#allocation6 + $0x168] sm:$0xf]
        %v3128 = vld [vmem:[#allocation6 + $0x16c] sm:$0xf]
        %v3129 = vld [vmem:[#allocation6 + $0x170] sm:$0xf]
        %v3130 = vld [vmem:[#allocation6 + $0x174] sm:$0xf]
        %v3131 = vld [vmem:[#allocation6 + $0x178] sm:$0xf]
        %v3132 = vld [vmem:[#allocation6 + $0x17c] sm:$0xf]
        %v3133 = vunpack.c.l.b16 %v3008
        %v3134 = vunpack.c.l.b16 %v3011
        %v3135 = vunpack.c.l.b16 %v3015
        %v3136 = vunpack.c.l.b16 %v3018
        %v3137 = vunpack.c.l.b16 %v3022
        %v3138 = vunpack.c.l.b16 %v3025
        %v3139 = vunpack.c.l.b16 %v3029
        %v3140 = vunpack.c.l.b16 %v3032
        %v3141 = vunpack.c.l.b16 %v3036
        %v3142 = vunpack.c.l.b16 %v3039
        %v3143 = vunpack.c.l.b16 %v3043
        %v3144 = vunpack.c.l.b16 %v3046
        %v3145 = vunpack.c.l.b16 %v3050
        %v3146 = vunpack.c.l.b16 %v3053
        %v3147 = vunpack.c.l.b16 %v3057
        %v3148 = vunpack.c.l.b16 %v3060
        %v3149 = vunpack.c.l.b16 %v3064
        %v3150 = vunpack.c.l.b16 %v3067
        %v3151 = vunpack.c.l.b16 %v3071
        %v3152 = vunpack.c.l.b16 %v3074
        %v3153 = vunpack.c.l.b16 %v3078
        %v3154 = vunpack.c.l.b16 %v3081
        %v3155 = vunpack.c.l.b16 %v3085
        %v3156 = vunpack.c.l.b16 %v3088
        %v3157 = vunpack.c.l.b16 %v3092
        %v3158 = vunpack.c.l.b16 %v3095
        %v3159 = vunpack.c.l.b16 %v3099
        %v3160 = vunpack.c.l.b16 %v3102
        %v3161 = vunpack.c.l.b16 %v3106
        %v3162 = vunpack.c.l.b16 %v3109
        %v3163 = vunpack.c.l.b16 %v3113
        %v3164 = vunpack.c.l.b16 %v3116
        %v3165 = vpack.c.b16 %v3134, %v3133
        %v3166 = vpack.c.b16 %v3136, %v3135
        %v3167 = vpack.c.b16 %v3138, %v3137
        %v3168 = vpack.c.b16 %v3140, %v3139
        %v3169 = vpack.c.b16 %v3142, %v3141
        %v3170 = vpack.c.b16 %v3144, %v3143
        %v3171 = vpack.c.b16 %v3146, %v3145
        %v3172 = vpack.c.b16 %v3148, %v3147
        %v3173 = vpack.c.b16 %v3150, %v3149
        %v3174 = vpack.c.b16 %v3152, %v3151
        %v3175 = vpack.c.b16 %v3154, %v3153
        %v3176 = vpack.c.b16 %v3156, %v3155
        %v3177 = vpack.c.b16 %v3158, %v3157
        %v3178 = vpack.c.b16 %v3160, %v3159
        %v3179 = vpack.c.b16 %v3162, %v3161
        %v3180 = vpack.c.b16 %v3164, %v3163
        %v3213 = vunpack.c.l.b16 %v3117
        %v3214 = vunpack.c.l.b16 %v3118
        %v3215 = vunpack.c.l.b16 %v3119
        %v3216 = vunpack.c.l.b16 %v3120
        %v3217 = vunpack.c.l.b16 %v3121
        %v3218 = vunpack.c.l.b16 %v3122
        %v3219 = vunpack.c.l.b16 %v3123
        %v3220 = vunpack.c.l.b16 %v3124
        %v3221 = vunpack.c.l.b16 %v3125
        %v3222 = vunpack.c.l.b16 %v3126
        %v3223 = vunpack.c.l.b16 %v3127
        %v3224 = vunpack.c.l.b16 %v3128
        %v3225 = vunpack.c.l.b16 %v3129
        %v3226 = vunpack.c.l.b16 %v3130
        %v3227 = vunpack.c.l.b16 %v3131
        %v3228 = vunpack.c.l.b16 %v3132
        %v3229 = vpack.c.b16 %v3214, %v3213
        %v3230 = vpack.c.b16 %v3216, %v3215
        %v3231 = vpack.c.b16 %v3218, %v3217
        %v3232 = vpack.c.b16 %v3220, %v3219
        %v3233 = vpack.c.b16 %v3222, %v3221
        %v3234 = vpack.c.b16 %v3224, %v3223
        %v3235 = vpack.c.b16 %v3226, %v3225
        %v3236 = vpack.c.b16 %v3228, %v3227
        %3245 = vmatprep.subr.bf16.mxu0 0
        %3246 = vmatpush1.bf16.msra.mxu0 %v3236
        %3247 = vmatprep.subr.bf16.mxu0 0
        %3248 = vmatpush1.bf16.msra.mxu0 %v3235
        %3249 = vmatprep.subr.bf16.mxu0 0
        %3250 = vmatpush1.bf16.msra.mxu0 %v3234
        %3251 = vmatprep.subr.bf16.mxu0 0
        %3252 = vmatpush1.bf16.msra.mxu0 %v3233
        %3253 = vmatprep.subr.bf16.mxu0 0
        %3254 = vmatpush1.bf16.msra.mxu0 %v3232
        %3255 = vmatprep.subr.bf16.mxu0 0
        %3256 = vmatpush1.bf16.msra.mxu0 %v3231
        %3257 = vmatprep.subr.bf16.mxu0 0
        %3258 = vmatpush1.bf16.msra.mxu0 %v3230
        %3259 = vmatprep.subr.bf16.mxu0 0
        %3260 = vmatpush1.bf16.msra.mxu0 %v3229
        %3261 = vmatprep.subr.bf16.mxu0 0
        %3262 = vmatpush2.bf16.msra.mxu0 0
        %3263 = vmatprep.subr.bf16.mxu0 0
        %3264 = vmatpush2.bf16.msra.mxu0 0
        %3265 = vmatprep.subr.bf16.mxu0 0
        %3266 = vmatpush2.bf16.msra.mxu0 0
        %3267 = vmatprep.subr.bf16.mxu0 0
        %3268 = vmatpush2.bf16.msra.mxu0 0
        %3269 = vmatprep.subr.bf16.mxu0 0
        %3270 = vmatpush2.bf16.msra.mxu0 0
        %3271 = vmatprep.subr.bf16.mxu0 0
        %3272 = vmatpush2.bf16.msra.mxu0 0
        %3273 = vmatprep.subr.bf16.mxu0 0
        %3274 = vmatpush2.bf16.msra.mxu0 0
        %3275 = vmatprep.subr.bf16.mxu0 0
        %3276 = vmatpush2.bf16.msra.mxu0 0
        %3277 = vmatprep.mubr.bf16.mxu0 0
        %3278 = vmatmul.mubr.bf16.gmra.mxu0 %v3165
        %v3279 = vpop.f32.mrf.mxu0
        %v3280 = vadd.f32 0.0, %v3279
        %v3281 = vpop.f32.mrf.mxu0
        %v3282 = vpop.f32.mrf.mxu0
        %v3283 = vadd.f32 0.0, %v3282
        %v3284 = vpop.f32.mrf.mxu0
        %3285 = vmatprep.mubr.bf16.mxu0 0
        %3286 = vmatmul.mubr.bf16.gmra.mxu0 %v3166
        %v3287 = vpop.f32.mrf.mxu0
        %v3288 = vadd.f32 0.0, %v3287
        %v3289 = vpop.f32.mrf.mxu0
        %v3290 = vpop.f32.mrf.mxu0
        %v3291 = vadd.f32 0.0, %v3290
        %v3292 = vpop.f32.mrf.mxu0
        %3293 = vmatprep.mubr.bf16.mxu0 0
        %3294 = vmatmul.mubr.bf16.gmra.mxu0 %v3167
        %v3295 = vpop.f32.mrf.mxu0
        %v3296 = vadd.f32 0.0, %v3295
        %v3297 = vpop.f32.mrf.mxu0
        %v3298 = vpop.f32.mrf.mxu0
        %v3299 = vadd.f32 0.0, %v3298
        %v3300 = vpop.f32.mrf.mxu0
        %3301 = vmatprep.mubr.bf16.mxu0 0
        %3302 = vmatmul.mubr.bf16.gmra.mxu0 %v3168
        %v3303 = vpop.f32.mrf.mxu0
        %v3304 = vadd.f32 0.0, %v3303
        %v3305 = vpop.f32.mrf.mxu0
        %v3306 = vpop.f32.mrf.mxu0
        %v3307 = vadd.f32 0.0, %v3306
        %v3308 = vpop.f32.mrf.mxu0
        %3309 = vmatprep.mubr.bf16.mxu0 0
        %3310 = vmatmul.mubr.bf16.gmra.mxu0 %v3169
        %v3311 = vpop.f32.mrf.mxu0
        %v3312 = vadd.f32 0.0, %v3311
        %v3313 = vpop.f32.mrf.mxu0
        %v3314 = vpop.f32.mrf.mxu0
        %v3315 = vadd.f32 0.0, %v3314
        %v3316 = vpop.f32.mrf.mxu0
        %3317 = vmatprep.mubr.bf16.mxu0 0
        %3318 = vmatmul.mubr.bf16.gmra.mxu0 %v3170
        %v3319 = vpop.f32.mrf.mxu0
        %v3320 = vadd.f32 0.0, %v3319
        %v3321 = vpop.f32.mrf.mxu0
        %v3322 = vpop.f32.mrf.mxu0
        %v3323 = vadd.f32 0.0, %v3322
        %v3324 = vpop.f32.mrf.mxu0
        %3325 = vmatprep.mubr.bf16.mxu0 0
        %3326 = vmatmul.mubr.bf16.gmra.mxu0 %v3171
        %v3327 = vpop.f32.mrf.mxu0
        %v3328 = vadd.f32 0.0, %v3327
        %v3329 = vpop.f32.mrf.mxu0
        %v3330 = vpop.f32.mrf.mxu0
        %v3331 = vadd.f32 0.0, %v3330
        %v3332 = vpop.f32.mrf.mxu0
        %3333 = vmatprep.mubr.bf16.mxu0 0
        %3334 = vmatmul.mubr.bf16.gmra.mxu0 %v3172
        %v3335 = vpop.f32.mrf.mxu0
        %v3336 = vadd.f32 0.0, %v3335
        %v3337 = vpop.f32.mrf.mxu0
        %v3338 = vpop.f32.mrf.mxu0
        %v3339 = vadd.f32 0.0, %v3338
        %v3340 = vpop.f32.mrf.mxu0
        %3341 = vmatprep.mubr.bf16.mxu0 0
        %3342 = vmatmul.mubr.bf16.gmra.mxu0 %v3173
        %v3343 = vpop.f32.mrf.mxu0
        %v3344 = vadd.f32 0.0, %v3343
        %v3345 = vpop.f32.mrf.mxu0
        %v3346 = vpop.f32.mrf.mxu0
        %v3347 = vadd.f32 0.0, %v3346
        %v3348 = vpop.f32.mrf.mxu0
        %3349 = vmatprep.mubr.bf16.mxu0 0
        %3350 = vmatmul.mubr.bf16.gmra.mxu0 %v3174
        %v3351 = vpop.f32.mrf.mxu0
        %v3352 = vadd.f32 0.0, %v3351
        %v3353 = vpop.f32.mrf.mxu0
        %v3354 = vpop.f32.mrf.mxu0
        %v3355 = vadd.f32 0.0, %v3354
        %v3356 = vpop.f32.mrf.mxu0
        %3357 = vmatprep.mubr.bf16.mxu0 0
        %3358 = vmatmul.mubr.bf16.gmra.mxu0 %v3175
        %v3359 = vpop.f32.mrf.mxu0
        %v3360 = vadd.f32 0.0, %v3359
        %v3361 = vpop.f32.mrf.mxu0
        %v3362 = vpop.f32.mrf.mxu0
        %v3363 = vadd.f32 0.0, %v3362
        %v3364 = vpop.f32.mrf.mxu0
        %3365 = vmatprep.mubr.bf16.mxu0 0
        %3366 = vmatmul.mubr.bf16.gmra.mxu0 %v3176
        %v3367 = vpop.f32.mrf.mxu0
        %v3368 = vadd.f32 0.0, %v3367
        %v3369 = vpop.f32.mrf.mxu0
        %v3370 = vpop.f32.mrf.mxu0
        %v3371 = vadd.f32 0.0, %v3370
        %v3372 = vpop.f32.mrf.mxu0
        %3373 = vmatprep.mubr.bf16.mxu0 0
        %3374 = vmatmul.mubr.bf16.gmra.mxu0 %v3177
        %v3375 = vpop.f32.mrf.mxu0
        %v3376 = vadd.f32 0.0, %v3375
        %v3377 = vpop.f32.mrf.mxu0
        %v3378 = vpop.f32.mrf.mxu0
        %v3379 = vadd.f32 0.0, %v3378
        %v3380 = vpop.f32.mrf.mxu0
        %3381 = vmatprep.mubr.bf16.mxu0 0
        %3382 = vmatmul.mubr.bf16.gmra.mxu0 %v3178
        %v3383 = vpop.f32.mrf.mxu0
        %v3384 = vadd.f32 0.0, %v3383
        %v3385 = vpop.f32.mrf.mxu0
        %v3386 = vpop.f32.mrf.mxu0
        %v3387 = vadd.f32 0.0, %v3386
        %v3388 = vpop.f32.mrf.mxu0
        %3389 = vmatprep.mubr.bf16.mxu0 0
        %3390 = vmatmul.mubr.bf16.gmra.mxu0 %v3179
        %v3391 = vpop.f32.mrf.mxu0
        %v3392 = vadd.f32 0.0, %v3391
        %v3393 = vpop.f32.mrf.mxu0
        %v3394 = vpop.f32.mrf.mxu0
        %v3395 = vadd.f32 0.0, %v3394
        %v3396 = vpop.f32.mrf.mxu0
        %3397 = vmatprep.mubr.bf16.mxu0 0
        %3398 = vmatmul.mubr.bf16.gmra.mxu0 %v3180
        %v3399 = vpop.f32.mrf.mxu0
        %v3400 = vadd.f32 0.0, %v3399
        %v3401 = vpop.f32.mrf.mxu0
        %v3402 = vpop.f32.mrf.mxu0
        %v3403 = vadd.f32 0.0, %v3402
        %v3404 = vpop.f32.mrf.mxu0
        %3405 = vdwg.mxu0
        %v3406 = vadd.f32 %v2909, %v3280
        %v3407 = vadd.f32 %v2910, %v3283
        %v3408 = vadd.f32 %v2911, %v3288
        %v3409 = vadd.f32 %v2912, %v3291
        %v3410 = vadd.f32 %v2913, %v3296
        %v3411 = vadd.f32 %v2914, %v3299
        %v3412 = vadd.f32 %v2915, %v3304
        %v3413 = vadd.f32 %v2916, %v3307
        %v3414 = vadd.f32 %v2917, %v3312
        %v3415 = vadd.f32 %v2918, %v3315
        %v3416 = vadd.f32 %v2919, %v3320
        %v3417 = vadd.f32 %v2920, %v3323
        %v3418 = vadd.f32 %v2921, %v3328
        %v3419 = vadd.f32 %v2922, %v3331
        %v3420 = vadd.f32 %v2923, %v3336
        %v3421 = vadd.f32 %v2924, %v3339
        %v3422 = vadd.f32 %v2925, %v3344
        %v3423 = vadd.f32 %v2926, %v3347
        %v3424 = vadd.f32 %v2927, %v3352
        %v3425 = vadd.f32 %v2928, %v3355
        %v3426 = vadd.f32 %v2929, %v3360
        %v3427 = vadd.f32 %v2930, %v3363
        %v3428 = vadd.f32 %v2931, %v3368
        %v3429 = vadd.f32 %v2932, %v3371
        %v3430 = vadd.f32 %v2933, %v3376
        %v3431 = vadd.f32 %v2934, %v3379
        %v3432 = vadd.f32 %v2935, %v3384
        %v3433 = vadd.f32 %v2936, %v3387
        %v3434 = vadd.f32 %v2937, %v3392
        %v3435 = vadd.f32 %v2938, %v3395
        %v3436 = vadd.f32 %v2939, %v3400
        %v3437 = vadd.f32 %v2940, %v3403
        %s3438 = scalar_lea.vmem %s237, 24 [#allocation3]
        %v3439 = vld [vmem:[%s3438] sm:$0xf]
        %v3440 = vld [vmem:[%s3438 + $0x4] sm:$0xf]
        %v3441 = vld [vmem:[%s3438 + $0xc] sm:$0xf]
        %v3442 = vld [vmem:[%s3438 + $0x10] sm:$0xf]
        %v3443 = vld [vmem:[%s3438 + $0x18] sm:$0xf]
        %v3444 = vld [vmem:[%s3438 + $0x1c] sm:$0xf]
        %v3445 = vld [vmem:[%s3438 + $0x24] sm:$0xf]
        %v3446 = vld [vmem:[%s3438 + $0x28] sm:$0xf]
        %v3447 = vld [vmem:[%s3438 + $0x30] sm:$0xf]
        %v3448 = vld [vmem:[%s3438 + $0x34] sm:$0xf]
        %v3449 = vld [vmem:[%s3438 + $0x3c] sm:$0xf]
        %v3450 = vld [vmem:[%s3438 + $0x40] sm:$0xf]
        %v3451 = vld [vmem:[%s3438 + $0x48] sm:$0xf]
        %v3452 = vld [vmem:[%s3438 + $0x4c] sm:$0xf]
        %v3453 = vld [vmem:[%s3438 + $0x54] sm:$0xf]
        %v3454 = vld [vmem:[%s3438 + $0x58] sm:$0xf]
        %v3455 = vld [vmem:[%s3438 + $0x60] sm:$0xf]
        %v3456 = vld [vmem:[%s3438 + $0x64] sm:$0xf]
        %v3457 = vld [vmem:[%s3438 + $0x6c] sm:$0xf]
        %v3458 = vld [vmem:[%s3438 + $0x70] sm:$0xf]
        %v3459 = vld [vmem:[%s3438 + $0x78] sm:$0xf]
        %v3460 = vld [vmem:[%s3438 + $0x7c] sm:$0xf]
        %v3461 = vld [vmem:[%s3438 + $0x84] sm:$0xf]
        %v3462 = vld [vmem:[%s3438 + $0x88] sm:$0xf]
        %v3463 = vld [vmem:[%s3438 + $0x90] sm:$0xf]
        %v3464 = vld [vmem:[%s3438 + $0x94] sm:$0xf]
        %v3465 = vld [vmem:[%s3438 + $0x9c] sm:$0xf]
        %v3466 = vld [vmem:[%s3438 + $0xa0] sm:$0xf]
        %v3467 = vld [vmem:[%s3438 + $0xa8] sm:$0xf]
        %v3468 = vld [vmem:[%s3438 + $0xac] sm:$0xf]
        %v3469 = vld [vmem:[%s3438 + $0xb4] sm:$0xf]
        %v3470 = vld [vmem:[%s3438 + $0xb8] sm:$0xf]
        %v3471 = vld [vmem:[#allocation6 + $0x180] sm:$0xf]
        %v3472 = vld [vmem:[#allocation6 + $0x184] sm:$0xf]
        %v3473 = vld [vmem:[#allocation6 + $0x188] sm:$0xf]
        %v3474 = vld [vmem:[#allocation6 + $0x18c] sm:$0xf]
        %v3475 = vld [vmem:[#allocation6 + $0x190] sm:$0xf]
        %v3476 = vld [vmem:[#allocation6 + $0x194] sm:$0xf]
        %v3477 = vld [vmem:[#allocation6 + $0x198] sm:$0xf]
        %v3478 = vld [vmem:[#allocation6 + $0x19c] sm:$0xf]
        %v3479 = vld [vmem:[#allocation6 + $0x1a0] sm:$0xf]
        %v3480 = vld [vmem:[#allocation6 + $0x1a4] sm:$0xf]
        %v3481 = vld [vmem:[#allocation6 + $0x1a8] sm:$0xf]
        %v3482 = vld [vmem:[#allocation6 + $0x1ac] sm:$0xf]
        %v3483 = vld [vmem:[#allocation6 + $0x1b0] sm:$0xf]
        %v3484 = vld [vmem:[#allocation6 + $0x1b4] sm:$0xf]
        %v3485 = vld [vmem:[#allocation6 + $0x1b8] sm:$0xf]
        %v3486 = vld [vmem:[#allocation6 + $0x1bc] sm:$0xf]
        %v3519 = vunpack.c.l.b16 %v3439
        %v3520 = vunpack.c.l.b16 %v3440
        %v3521 = vunpack.c.l.b16 %v3441
        %v3522 = vunpack.c.l.b16 %v3442
        %v3523 = vunpack.c.l.b16 %v3443
        %v3524 = vunpack.c.l.b16 %v3444
        %v3525 = vunpack.c.l.b16 %v3445
        %v3526 = vunpack.c.l.b16 %v3446
        %v3527 = vunpack.c.l.b16 %v3447
        %v3528 = vunpack.c.l.b16 %v3448
        %v3529 = vunpack.c.l.b16 %v3449
        %v3530 = vunpack.c.l.b16 %v3450
        %v3531 = vunpack.c.l.b16 %v3451
        %v3532 = vunpack.c.l.b16 %v3452
        %v3533 = vunpack.c.l.b16 %v3453
        %v3534 = vunpack.c.l.b16 %v3454
        %v3535 = vunpack.c.l.b16 %v3455
        %v3536 = vunpack.c.l.b16 %v3456
        %v3537 = vunpack.c.l.b16 %v3457
        %v3538 = vunpack.c.l.b16 %v3458
        %v3539 = vunpack.c.l.b16 %v3459
        %v3540 = vunpack.c.l.b16 %v3460
        %v3541 = vunpack.c.l.b16 %v3461
        %v3542 = vunpack.c.l.b16 %v3462
        %v3543 = vunpack.c.l.b16 %v3463
        %v3544 = vunpack.c.l.b16 %v3464
        %v3545 = vunpack.c.l.b16 %v3465
        %v3546 = vunpack.c.l.b16 %v3466
        %v3547 = vunpack.c.l.b16 %v3467
        %v3548 = vunpack.c.l.b16 %v3468
        %v3549 = vunpack.c.l.b16 %v3469
        %v3550 = vunpack.c.l.b16 %v3470
        %v3551 = vpack.c.b16 %v3520, %v3519
        %v3552 = vpack.c.b16 %v3522, %v3521
        %v3553 = vpack.c.b16 %v3524, %v3523
        %v3554 = vpack.c.b16 %v3526, %v3525
        %v3555 = vpack.c.b16 %v3528, %v3527
        %v3556 = vpack.c.b16 %v3530, %v3529
        %v3557 = vpack.c.b16 %v3532, %v3531
        %v3558 = vpack.c.b16 %v3534, %v3533
        %v3559 = vpack.c.b16 %v3536, %v3535
        %v3560 = vpack.c.b16 %v3538, %v3537
        %v3561 = vpack.c.b16 %v3540, %v3539
        %v3562 = vpack.c.b16 %v3542, %v3541
        %v3563 = vpack.c.b16 %v3544, %v3543
        %v3564 = vpack.c.b16 %v3546, %v3545
        %v3565 = vpack.c.b16 %v3548, %v3547
        %v3566 = vpack.c.b16 %v3550, %v3549
        %v3599 = vunpack.c.l.b16 %v3471
        %v3600 = vunpack.c.l.b16 %v3472
        %v3601 = vunpack.c.l.b16 %v3473
        %v3602 = vunpack.c.l.b16 %v3474
        %v3603 = vunpack.c.l.b16 %v3475
        %v3604 = vunpack.c.l.b16 %v3476
        %v3605 = vunpack.c.l.b16 %v3477
        %v3606 = vunpack.c.l.b16 %v3478
        %v3607 = vunpack.c.l.b16 %v3479
        %v3608 = vunpack.c.l.b16 %v3480
        %v3609 = vunpack.c.l.b16 %v3481
        %v3610 = vunpack.c.l.b16 %v3482
        %v3611 = vunpack.c.l.b16 %v3483
        %v3612 = vunpack.c.l.b16 %v3484
        %v3613 = vunpack.c.l.b16 %v3485
        %v3614 = vunpack.c.l.b16 %v3486
        %v3615 = vpack.c.b16 %v3600, %v3599
        %v3616 = vpack.c.b16 %v3602, %v3601
        %v3617 = vpack.c.b16 %v3604, %v3603
        %v3618 = vpack.c.b16 %v3606, %v3605
        %v3619 = vpack.c.b16 %v3608, %v3607
        %v3620 = vpack.c.b16 %v3610, %v3609
        %v3621 = vpack.c.b16 %v3612, %v3611
        %v3622 = vpack.c.b16 %v3614, %v3613
        %3631 = vmatprep.subr.bf16.mxu0 0
        %3632 = vmatpush1.bf16.msra.mxu0 %v3622
        %3633 = vmatprep.subr.bf16.mxu0 0
        %3634 = vmatpush1.bf16.msra.mxu0 %v3621
        %3635 = vmatprep.subr.bf16.mxu0 0
        %3636 = vmatpush1.bf16.msra.mxu0 %v3620
        %3637 = vmatprep.subr.bf16.mxu0 0
        %3638 = vmatpush1.bf16.msra.mxu0 %v3619
        %3639 = vmatprep.subr.bf16.mxu0 0
        %3640 = vmatpush1.bf16.msra.mxu0 %v3618
        %3641 = vmatprep.subr.bf16.mxu0 0
        %3642 = vmatpush1.bf16.msra.mxu0 %v3617
        %3643 = vmatprep.subr.bf16.mxu0 0
        %3644 = vmatpush1.bf16.msra.mxu0 %v3616
        %3645 = vmatprep.subr.bf16.mxu0 0
        %3646 = vmatpush1.bf16.msra.mxu0 %v3615
        %3647 = vmatprep.subr.bf16.mxu0 0
        %3648 = vmatpush2.bf16.msra.mxu0 0
        %3649 = vmatprep.subr.bf16.mxu0 0
        %3650 = vmatpush2.bf16.msra.mxu0 0
        %3651 = vmatprep.subr.bf16.mxu0 0
        %3652 = vmatpush2.bf16.msra.mxu0 0
        %3653 = vmatprep.subr.bf16.mxu0 0
        %3654 = vmatpush2.bf16.msra.mxu0 0
        %3655 = vmatprep.subr.bf16.mxu0 0
        %3656 = vmatpush2.bf16.msra.mxu0 0
        %3657 = vmatprep.subr.bf16.mxu0 0
        %3658 = vmatpush2.bf16.msra.mxu0 0
        %3659 = vmatprep.subr.bf16.mxu0 0
        %3660 = vmatpush2.bf16.msra.mxu0 0
        %3661 = vmatprep.subr.bf16.mxu0 0
        %3662 = vmatpush2.bf16.msra.mxu0 0
        %3663 = vmatprep.mubr.bf16.mxu0 0
        %3664 = vmatmul.mubr.bf16.gmra.mxu0 %v3551
        %v3665 = vpop.f32.mrf.mxu0
        %v3666 = vadd.f32 0.0, %v3665
        %v3667 = vpop.f32.mrf.mxu0
        %v3668 = vpop.f32.mrf.mxu0
        %v3669 = vadd.f32 0.0, %v3668
        %v3670 = vpop.f32.mrf.mxu0
        %3671 = vmatprep.mubr.bf16.mxu0 0
        %3672 = vmatmul.mubr.bf16.gmra.mxu0 %v3552
        %v3673 = vpop.f32.mrf.mxu0
        %v3674 = vadd.f32 0.0, %v3673
        %v3675 = vpop.f32.mrf.mxu0
        %v3676 = vpop.f32.mrf.mxu0
        %v3677 = vadd.f32 0.0, %v3676
        %v3678 = vpop.f32.mrf.mxu0
        %3679 = vmatprep.mubr.bf16.mxu0 0
        %3680 = vmatmul.mubr.bf16.gmra.mxu0 %v3553
        %v3681 = vpop.f32.mrf.mxu0
        %v3682 = vadd.f32 0.0, %v3681
        %v3683 = vpop.f32.mrf.mxu0
        %v3684 = vpop.f32.mrf.mxu0
        %v3685 = vadd.f32 0.0, %v3684
        %v3686 = vpop.f32.mrf.mxu0
        %3687 = vmatprep.mubr.bf16.mxu0 0
        %3688 = vmatmul.mubr.bf16.gmra.mxu0 %v3554
        %v3689 = vpop.f32.mrf.mxu0
        %v3690 = vadd.f32 0.0, %v3689
        %v3691 = vpop.f32.mrf.mxu0
        %v3692 = vpop.f32.mrf.mxu0
        %v3693 = vadd.f32 0.0, %v3692
        %v3694 = vpop.f32.mrf.mxu0
        %3695 = vmatprep.mubr.bf16.mxu0 0
        %3696 = vmatmul.mubr.bf16.gmra.mxu0 %v3555
        %v3697 = vpop.f32.mrf.mxu0
        %v3698 = vadd.f32 0.0, %v3697
        %v3699 = vpop.f32.mrf.mxu0
        %v3700 = vpop.f32.mrf.mxu0
        %v3701 = vadd.f32 0.0, %v3700
        %v3702 = vpop.f32.mrf.mxu0
        %3703 = vmatprep.mubr.bf16.mxu0 0
        %3704 = vmatmul.mubr.bf16.gmra.mxu0 %v3556
        %v3705 = vpop.f32.mrf.mxu0
        %v3706 = vadd.f32 0.0, %v3705
        %v3707 = vpop.f32.mrf.mxu0
        %v3708 = vpop.f32.mrf.mxu0
        %v3709 = vadd.f32 0.0, %v3708
        %v3710 = vpop.f32.mrf.mxu0
        %3711 = vmatprep.mubr.bf16.mxu0 0
        %3712 = vmatmul.mubr.bf16.gmra.mxu0 %v3557
        %v3713 = vpop.f32.mrf.mxu0
        %v3714 = vadd.f32 0.0, %v3713
        %v3715 = vpop.f32.mrf.mxu0
        %v3716 = vpop.f32.mrf.mxu0
        %v3717 = vadd.f32 0.0, %v3716
        %v3718 = vpop.f32.mrf.mxu0
        %3719 = vmatprep.mubr.bf16.mxu0 0
        %3720 = vmatmul.mubr.bf16.gmra.mxu0 %v3558
        %v3721 = vpop.f32.mrf.mxu0
        %v3722 = vadd.f32 0.0, %v3721
        %v3723 = vpop.f32.mrf.mxu0
        %v3724 = vpop.f32.mrf.mxu0
        %v3725 = vadd.f32 0.0, %v3724
        %v3726 = vpop.f32.mrf.mxu0
        %3727 = vmatprep.mubr.bf16.mxu0 0
        %3728 = vmatmul.mubr.bf16.gmra.mxu0 %v3559
        %v3729 = vpop.f32.mrf.mxu0
        %v3730 = vadd.f32 0.0, %v3729
        %v3731 = vpop.f32.mrf.mxu0
        %v3732 = vpop.f32.mrf.mxu0
        %v3733 = vadd.f32 0.0, %v3732
        %v3734 = vpop.f32.mrf.mxu0
        %3735 = vmatprep.mubr.bf16.mxu0 0
        %3736 = vmatmul.mubr.bf16.gmra.mxu0 %v3560
        %v3737 = vpop.f32.mrf.mxu0
        %v3738 = vadd.f32 0.0, %v3737
        %v3739 = vpop.f32.mrf.mxu0
        %v3740 = vpop.f32.mrf.mxu0
        %v3741 = vadd.f32 0.0, %v3740
        %v3742 = vpop.f32.mrf.mxu0
        %3743 = vmatprep.mubr.bf16.mxu0 0
        %3744 = vmatmul.mubr.bf16.gmra.mxu0 %v3561
        %v3745 = vpop.f32.mrf.mxu0
        %v3746 = vadd.f32 0.0, %v3745
        %v3747 = vpop.f32.mrf.mxu0
        %v3748 = vpop.f32.mrf.mxu0
        %v3749 = vadd.f32 0.0, %v3748
        %v3750 = vpop.f32.mrf.mxu0
        %3751 = vmatprep.mubr.bf16.mxu0 0
        %3752 = vmatmul.mubr.bf16.gmra.mxu0 %v3562
        %v3753 = vpop.f32.mrf.mxu0
        %v3754 = vadd.f32 0.0, %v3753
        %v3755 = vpop.f32.mrf.mxu0
        %v3756 = vpop.f32.mrf.mxu0
        %v3757 = vadd.f32 0.0, %v3756
        %v3758 = vpop.f32.mrf.mxu0
        %3759 = vmatprep.mubr.bf16.mxu0 0
        %3760 = vmatmul.mubr.bf16.gmra.mxu0 %v3563
        %v3761 = vpop.f32.mrf.mxu0
        %v3762 = vadd.f32 0.0, %v3761
        %v3763 = vpop.f32.mrf.mxu0
        %v3764 = vpop.f32.mrf.mxu0
        %v3765 = vadd.f32 0.0, %v3764
        %v3766 = vpop.f32.mrf.mxu0
        %3767 = vmatprep.mubr.bf16.mxu0 0
        %3768 = vmatmul.mubr.bf16.gmra.mxu0 %v3564
        %v3769 = vpop.f32.mrf.mxu0
        %v3770 = vadd.f32 0.0, %v3769
        %v3771 = vpop.f32.mrf.mxu0
        %v3772 = vpop.f32.mrf.mxu0
        %v3773 = vadd.f32 0.0, %v3772
        %v3774 = vpop.f32.mrf.mxu0
        %3775 = vmatprep.mubr.bf16.mxu0 0
        %3776 = vmatmul.mubr.bf16.gmra.mxu0 %v3565
        %v3777 = vpop.f32.mrf.mxu0
        %v3778 = vadd.f32 0.0, %v3777
        %v3779 = vpop.f32.mrf.mxu0
        %v3780 = vpop.f32.mrf.mxu0
        %v3781 = vadd.f32 0.0, %v3780
        %v3782 = vpop.f32.mrf.mxu0
        %3783 = vmatprep.mubr.bf16.mxu0 0
        %3784 = vmatmul.mubr.bf16.gmra.mxu0 %v3566
        %v3785 = vpop.f32.mrf.mxu0
        %v3786 = vadd.f32 0.0, %v3785
        %v3787 = vpop.f32.mrf.mxu0
        %v3788 = vpop.f32.mrf.mxu0
        %v3789 = vadd.f32 0.0, %v3788
        %v3790 = vpop.f32.mrf.mxu0
        %3791 = vdwg.mxu0
        %v3792 = vadd.f32 %v3406, %v3666
        %v3793 = vadd.f32 %v3407, %v3669
        %v3794 = vadd.f32 %v3408, %v3674
        %v3795 = vadd.f32 %v3409, %v3677
        %v3796 = vadd.f32 %v3410, %v3682
        %v3797 = vadd.f32 %v3411, %v3685
        %v3798 = vadd.f32 %v3412, %v3690
        %v3799 = vadd.f32 %v3413, %v3693
        %v3800 = vadd.f32 %v3414, %v3698
        %v3801 = vadd.f32 %v3415, %v3701
        %v3802 = vadd.f32 %v3416, %v3706
        %v3803 = vadd.f32 %v3417, %v3709
        %v3804 = vadd.f32 %v3418, %v3714
        %v3805 = vadd.f32 %v3419, %v3717
        %v3806 = vadd.f32 %v3420, %v3722
        %v3807 = vadd.f32 %v3421, %v3725
        %v3808 = vadd.f32 %v3422, %v3730
        %v3809 = vadd.f32 %v3423, %v3733
        %v3810 = vadd.f32 %v3424, %v3738
        %v3811 = vadd.f32 %v3425, %v3741
        %v3812 = vadd.f32 %v3426, %v3746
        %v3813 = vadd.f32 %v3427, %v3749
        %v3814 = vadd.f32 %v3428, %v3754
        %v3815 = vadd.f32 %v3429, %v3757
        %v3816 = vadd.f32 %v3430, %v3762
        %v3817 = vadd.f32 %v3431, %v3765
        %v3818 = vadd.f32 %v3432, %v3770
        %v3819 = vadd.f32 %v3433, %v3773
        %v3820 = vadd.f32 %v3434, %v3778
        %v3821 = vadd.f32 %v3435, %v3781
        %v3822 = vadd.f32 %v3436, %v3786
        %v3823 = vadd.f32 %v3437, %v3789
        %v3824 = vld [vmem:[%s3438] sm:$0xf]
        %v3825 = vld [vmem:[%s3438 + $0x4] sm:$0xf]
        %v3826 = vld [vmem:[%s3438 + $0x8] sm:$0x1]
        %v3827 = vld [vmem:[%s3438 + $0xc] sm:$0xf]
        %v3828 = vld [vmem:[%s3438 + $0x10] sm:$0xf]
        %v3829 = vld [vmem:[%s3438 + $0x14] sm:$0x1]
        %v3830 = vld [vmem:[%s3438 + $0x18] sm:$0xf]
        %v3831 = vld [vmem:[%s3438 + $0x1c] sm:$0xf]
        %v3832 = vld [vmem:[%s3438 + $0x20] sm:$0x1]
        %v3833 = vld [vmem:[%s3438 + $0x24] sm:$0xf]
        %v3834 = vld [vmem:[%s3438 + $0x28] sm:$0xf]
        %v3835 = vld [vmem:[%s3438 + $0x2c] sm:$0x1]
        %v3836 = vld [vmem:[%s3438 + $0x30] sm:$0xf]
        %v3837 = vld [vmem:[%s3438 + $0x34] sm:$0xf]
        %v3838 = vld [vmem:[%s3438 + $0x38] sm:$0x1]
        %v3839 = vld [vmem:[%s3438 + $0x3c] sm:$0xf]
        %v3840 = vld [vmem:[%s3438 + $0x40] sm:$0xf]
        %v3841 = vld [vmem:[%s3438 + $0x44] sm:$0x1]
        %v3842 = vld [vmem:[%s3438 + $0x48] sm:$0xf]
        %v3843 = vld [vmem:[%s3438 + $0x4c] sm:$0xf]
        %v3844 = vld [vmem:[%s3438 + $0x50] sm:$0x1]
        %v3845 = vld [vmem:[%s3438 + $0x54] sm:$0xf]
        %v3846 = vld [vmem:[%s3438 + $0x58] sm:$0xf]
        %v3847 = vld [vmem:[%s3438 + $0x5c] sm:$0x1]
        %v3848 = vld [vmem:[%s3438 + $0x60] sm:$0xf]
        %v3849 = vld [vmem:[%s3438 + $0x64] sm:$0xf]
        %v3850 = vld [vmem:[%s3438 + $0x68] sm:$0x1]
        %v3851 = vld [vmem:[%s3438 + $0x6c] sm:$0xf]
        %v3852 = vld [vmem:[%s3438 + $0x70] sm:$0xf]
        %v3853 = vld [vmem:[%s3438 + $0x74] sm:$0x1]
        %v3854 = vld [vmem:[%s3438 + $0x78] sm:$0xf]
        %v3855 = vld [vmem:[%s3438 + $0x7c] sm:$0xf]
        %v3856 = vld [vmem:[%s3438 + $0x80] sm:$0x1]
        %v3857 = vld [vmem:[%s3438 + $0x84] sm:$0xf]
        %v3858 = vld [vmem:[%s3438 + $0x88] sm:$0xf]
        %v3859 = vld [vmem:[%s3438 + $0x8c] sm:$0x1]
        %v3860 = vld [vmem:[%s3438 + $0x90] sm:$0xf]
        %v3861 = vld [vmem:[%s3438 + $0x94] sm:$0xf]
        %v3862 = vld [vmem:[%s3438 + $0x98] sm:$0x1]
        %v3863 = vld [vmem:[%s3438 + $0x9c] sm:$0xf]
        %v3864 = vld [vmem:[%s3438 + $0xa0] sm:$0xf]
        %v3865 = vld [vmem:[%s3438 + $0xa4] sm:$0x1]
        %v3866 = vld [vmem:[%s3438 + $0xa8] sm:$0xf]
        %v3867 = vld [vmem:[%s3438 + $0xac] sm:$0xf]
        %v3868 = vld [vmem:[%s3438 + $0xb0] sm:$0x1]
        %v3869 = vld [vmem:[%s3438 + $0xb4] sm:$0xf]
        %v3870 = vld [vmem:[%s3438 + $0xb8] sm:$0xf]
        %v3871 = vld [vmem:[%s3438 + $0xbc] sm:$0x1]
        %v3873 = vshrl.u32 %v3824, 16
        %v3875 = vrot.slane %v3873, 4
        %v3876 = vshll.u32 %v3824, 16
        %v3878 = vrot.slane %v3876, 5
        %v3879 = vor.u32 %v3875, %v3878
        %v3880 = vrot.slane %v3879, 4
        %v3882 = vshll.u32 %v3825, 16
        %v3884 = vrot.slane %v3882, 5
        %v3885 = vsel %vm339, %v3880, %v3884
        %v3886 = vshrl.u32 %v3825, 16
        %v3888 = vrot.slane %v3886, 4
        %v3889 = vor.u32 %v3888, %v3884
        %v3890 = vrot.slane %v3889, 4
        %v3892 = vshll.u32 %v3826, 16
        %v3894 = vrot.slane %v3892, 5
        %v3895 = vsel %vm339, %v3890, %v3894
        %v3897 = vshrl.u32 %v3827, 16
        %v3899 = vrot.slane %v3897, 4
        %v3900 = vshll.u32 %v3827, 16
        %v3902 = vrot.slane %v3900, 5
        %v3903 = vor.u32 %v3899, %v3902
        %v3904 = vrot.slane %v3903, 4
        %v3906 = vshll.u32 %v3828, 16
        %v3908 = vrot.slane %v3906, 5
        %v3909 = vsel %vm339, %v3904, %v3908
        %v3910 = vshrl.u32 %v3828, 16
        %v3912 = vrot.slane %v3910, 4
        %v3913 = vor.u32 %v3912, %v3908
        %v3914 = vrot.slane %v3913, 4
        %v3916 = vshll.u32 %v3829, 16
        %v3918 = vrot.slane %v3916, 5
        %v3919 = vsel %vm339, %v3914, %v3918
        %v3921 = vshrl.u32 %v3830, 16
        %v3923 = vrot.slane %v3921, 4
        %v3924 = vshll.u32 %v3830, 16
        %v3926 = vrot.slane %v3924, 5
        %v3927 = vor.u32 %v3923, %v3926
        %v3928 = vrot.slane %v3927, 4
        %v3930 = vshll.u32 %v3831, 16
        %v3932 = vrot.slane %v3930, 5
        %v3933 = vsel %vm339, %v3928, %v3932
        %v3934 = vshrl.u32 %v3831, 16
        %v3936 = vrot.slane %v3934, 4
        %v3937 = vor.u32 %v3936, %v3932
        %v3938 = vrot.slane %v3937, 4
        %v3940 = vshll.u32 %v3832, 16
        %v3942 = vrot.slane %v3940, 5
        %v3943 = vsel %vm339, %v3938, %v3942
        %v3945 = vshrl.u32 %v3833, 16
        %v3947 = vrot.slane %v3945, 4
        %v3948 = vshll.u32 %v3833, 16
        %v3950 = vrot.slane %v3948, 5
        %v3951 = vor.u32 %v3947, %v3950
        %v3952 = vrot.slane %v3951, 4
        %v3954 = vshll.u32 %v3834, 16
        %v3956 = vrot.slane %v3954, 5
        %v3957 = vsel %vm339, %v3952, %v3956
        %v3958 = vshrl.u32 %v3834, 16
        %v3960 = vrot.slane %v3958, 4
        %v3961 = vor.u32 %v3960, %v3956
        %v3962 = vrot.slane %v3961, 4
        %v3964 = vshll.u32 %v3835, 16
        %v3966 = vrot.slane %v3964, 5
        %v3967 = vsel %vm339, %v3962, %v3966
        %v3969 = vshrl.u32 %v3836, 16
        %v3971 = vrot.slane %v3969, 4
        %v3972 = vshll.u32 %v3836, 16
        %v3974 = vrot.slane %v3972, 5
        %v3975 = vor.u32 %v3971, %v3974
        %v3976 = vrot.slane %v3975, 4
        %v3978 = vshll.u32 %v3837, 16
        %v3980 = vrot.slane %v3978, 5
        %v3981 = vsel %vm339, %v3976, %v3980
        %v3982 = vshrl.u32 %v3837, 16
        %v3984 = vrot.slane %v3982, 4
        %v3985 = vor.u32 %v3984, %v3980
        %v3986 = vrot.slane %v3985, 4
        %v3988 = vshll.u32 %v3838, 16
        %v3990 = vrot.slane %v3988, 5
        %v3991 = vsel %vm339, %v3986, %v3990
        %v3993 = vshrl.u32 %v3839, 16
        %v3995 = vrot.slane %v3993, 4
        %v3996 = vshll.u32 %v3839, 16
        %v3998 = vrot.slane %v3996, 5
        %v3999 = vor.u32 %v3995, %v3998
        %v4000 = vrot.slane %v3999, 4
        %v4002 = vshll.u32 %v3840, 16
        %v4004 = vrot.slane %v4002, 5
        %v4005 = vsel %vm339, %v4000, %v4004
        %v4006 = vshrl.u32 %v3840, 16
        %v4008 = vrot.slane %v4006, 4
        %v4009 = vor.u32 %v4008, %v4004
        %v4010 = vrot.slane %v4009, 4
        %v4012 = vshll.u32 %v3841, 16
        %v4014 = vrot.slane %v4012, 5
        %v4015 = vsel %vm339, %v4010, %v4014
        %v4017 = vshrl.u32 %v3842, 16
        %v4019 = vrot.slane %v4017, 4
        %v4020 = vshll.u32 %v3842, 16
        %v4022 = vrot.slane %v4020, 5
        %v4023 = vor.u32 %v4019, %v4022
        %v4024 = vrot.slane %v4023, 4
        %v4026 = vshll.u32 %v3843, 16
        %v4028 = vrot.slane %v4026, 5
        %v4029 = vsel %vm339, %v4024, %v4028
        %v4030 = vshrl.u32 %v3843, 16
        %v4032 = vrot.slane %v4030, 4
        %v4033 = vor.u32 %v4032, %v4028
        %v4034 = vrot.slane %v4033, 4
        %v4036 = vshll.u32 %v3844, 16
        %v4038 = vrot.slane %v4036, 5
        %v4039 = vsel %vm339, %v4034, %v4038
        %v4041 = vshrl.u32 %v3845, 16
        %v4043 = vrot.slane %v4041, 4
        %v4044 = vshll.u32 %v3845, 16
        %v4046 = vrot.slane %v4044, 5
        %v4047 = vor.u32 %v4043, %v4046
        %v4048 = vrot.slane %v4047, 4
        %v4050 = vshll.u32 %v3846, 16
        %v4052 = vrot.slane %v4050, 5
        %v4053 = vsel %vm339, %v4048, %v4052
        %v4054 = vshrl.u32 %v3846, 16
        %v4056 = vrot.slane %v4054, 4
        %v4057 = vor.u32 %v4056, %v4052
        %v4058 = vrot.slane %v4057, 4
        %v4060 = vshll.u32 %v3847, 16
        %v4062 = vrot.slane %v4060, 5
        %v4063 = vsel %vm339, %v4058, %v4062
        %v4065 = vshrl.u32 %v3848, 16
        %v4067 = vrot.slane %v4065, 4
        %v4068 = vshll.u32 %v3848, 16
        %v4070 = vrot.slane %v4068, 5
        %v4071 = vor.u32 %v4067, %v4070
        %v4072 = vrot.slane %v4071, 4
        %v4074 = vshll.u32 %v3849, 16
        %v4076 = vrot.slane %v4074, 5
        %v4077 = vsel %vm339, %v4072, %v4076
        %v4078 = vshrl.u32 %v3849, 16
        %v4080 = vrot.slane %v4078, 4
        %v4081 = vor.u32 %v4080, %v4076
        %v4082 = vrot.slane %v4081, 4
        %v4084 = vshll.u32 %v3850, 16
        %v4086 = vrot.slane %v4084, 5
        %v4087 = vsel %vm339, %v4082, %v4086
        %v4089 = vshrl.u32 %v3851, 16
        %v4091 = vrot.slane %v4089, 4
        %v4092 = vshll.u32 %v3851, 16
        %v4094 = vrot.slane %v4092, 5
        %v4095 = vor.u32 %v4091, %v4094
        %v4096 = vrot.slane %v4095, 4
        %v4098 = vshll.u32 %v3852, 16
        %v4100 = vrot.slane %v4098, 5
        %v4101 = vsel %vm339, %v4096, %v4100
        %v4102 = vshrl.u32 %v3852, 16
        %v4104 = vrot.slane %v4102, 4
        %v4105 = vor.u32 %v4104, %v4100
        %v4106 = vrot.slane %v4105, 4
        %v4108 = vshll.u32 %v3853, 16
        %v4110 = vrot.slane %v4108, 5
        %v4111 = vsel %vm339, %v4106, %v4110
        %v4113 = vshrl.u32 %v3854, 16
        %v4115 = vrot.slane %v4113, 4
        %v4116 = vshll.u32 %v3854, 16
        %v4118 = vrot.slane %v4116, 5
        %v4119 = vor.u32 %v4115, %v4118
        %v4120 = vrot.slane %v4119, 4
        %v4122 = vshll.u32 %v3855, 16
        %v4124 = vrot.slane %v4122, 5
        %v4125 = vsel %vm339, %v4120, %v4124
        %v4126 = vshrl.u32 %v3855, 16
        %v4128 = vrot.slane %v4126, 4
        %v4129 = vor.u32 %v4128, %v4124
        %v4130 = vrot.slane %v4129, 4
        %v4132 = vshll.u32 %v3856, 16
        %v4134 = vrot.slane %v4132, 5
        %v4135 = vsel %vm339, %v4130, %v4134
        %v4137 = vshrl.u32 %v3857, 16
        %v4139 = vrot.slane %v4137, 4
        %v4140 = vshll.u32 %v3857, 16
        %v4142 = vrot.slane %v4140, 5
        %v4143 = vor.u32 %v4139, %v4142
        %v4144 = vrot.slane %v4143, 4
        %v4146 = vshll.u32 %v3858, 16
        %v4148 = vrot.slane %v4146, 5
        %v4149 = vsel %vm339, %v4144, %v4148
        %v4150 = vshrl.u32 %v3858, 16
        %v4152 = vrot.slane %v4150, 4
        %v4153 = vor.u32 %v4152, %v4148
        %v4154 = vrot.slane %v4153, 4
        %v4156 = vshll.u32 %v3859, 16
        %v4158 = vrot.slane %v4156, 5
        %v4159 = vsel %vm339, %v4154, %v4158
        %v4161 = vshrl.u32 %v3860, 16
        %v4163 = vrot.slane %v4161, 4
        %v4164 = vshll.u32 %v3860, 16
        %v4166 = vrot.slane %v4164, 5
        %v4167 = vor.u32 %v4163, %v4166
        %v4168 = vrot.slane %v4167, 4
        %v4170 = vshll.u32 %v3861, 16
        %v4172 = vrot.slane %v4170, 5
        %v4173 = vsel %vm339, %v4168, %v4172
        %v4174 = vshrl.u32 %v3861, 16
        %v4176 = vrot.slane %v4174, 4
        %v4177 = vor.u32 %v4176, %v4172
        %v4178 = vrot.slane %v4177, 4
        %v4180 = vshll.u32 %v3862, 16
        %v4182 = vrot.slane %v4180, 5
        %v4183 = vsel %vm339, %v4178, %v4182
        %v4185 = vshrl.u32 %v3863, 16
        %v4187 = vrot.slane %v4185, 4
        %v4188 = vshll.u32 %v3863, 16
        %v4190 = vrot.slane %v4188, 5
        %v4191 = vor.u32 %v4187, %v4190
        %v4192 = vrot.slane %v4191, 4
        %v4194 = vshll.u32 %v3864, 16
        %v4196 = vrot.slane %v4194, 5
        %v4197 = vsel %vm339, %v4192, %v4196
        %v4198 = vshrl.u32 %v3864, 16
        %v4200 = vrot.slane %v4198, 4
        %v4201 = vor.u32 %v4200, %v4196
        %v4202 = vrot.slane %v4201, 4
        %v4204 = vshll.u32 %v3865, 16
        %v4206 = vrot.slane %v4204, 5
        %v4207 = vsel %vm339, %v4202, %v4206
        %v4209 = vshrl.u32 %v3866, 16
        %v4211 = vrot.slane %v4209, 4
        %v4212 = vshll.u32 %v3866, 16
        %v4214 = vrot.slane %v4212, 5
        %v4215 = vor.u32 %v4211, %v4214
        %v4216 = vrot.slane %v4215, 4
        %v4218 = vshll.u32 %v3867, 16
        %v4220 = vrot.slane %v4218, 5
        %v4221 = vsel %vm339, %v4216, %v4220
        %v4222 = vshrl.u32 %v3867, 16
        %v4224 = vrot.slane %v4222, 4
        %v4225 = vor.u32 %v4224, %v4220
        %v4226 = vrot.slane %v4225, 4
        %v4228 = vshll.u32 %v3868, 16
        %v4230 = vrot.slane %v4228, 5
        %v4231 = vsel %vm339, %v4226, %v4230
        %v4233 = vshrl.u32 %v3869, 16
        %v4235 = vrot.slane %v4233, 4
        %v4236 = vshll.u32 %v3869, 16
        %v4238 = vrot.slane %v4236, 5
        %v4239 = vor.u32 %v4235, %v4238
        %v4240 = vrot.slane %v4239, 4
        %v4242 = vshll.u32 %v3870, 16
        %v4244 = vrot.slane %v4242, 5
        %v4245 = vsel %vm339, %v4240, %v4244
        %v4246 = vshrl.u32 %v3870, 16
        %v4248 = vrot.slane %v4246, 4
        %v4249 = vor.u32 %v4248, %v4244
        %v4250 = vrot.slane %v4249, 4
        %v4252 = vshll.u32 %v3871, 16
        %v4254 = vrot.slane %v4252, 5
        %v4255 = vsel %vm339, %v4250, %v4254
        %v4256 = vld [vmem:[#allocation6 + $0x1c0] sm:$0xf]
        %v4257 = vld [vmem:[#allocation6 + $0x1c4] sm:$0xf]
        %v4258 = vld [vmem:[#allocation6 + $0x1c8] sm:$0xf]
        %v4259 = vld [vmem:[#allocation6 + $0x1cc] sm:$0xf]
        %v4260 = vld [vmem:[#allocation6 + $0x1d0] sm:$0xf]
        %v4261 = vld [vmem:[#allocation6 + $0x1d4] sm:$0xf]
        %v4262 = vld [vmem:[#allocation6 + $0x1d8] sm:$0xf]
        %v4263 = vld [vmem:[#allocation6 + $0x1dc] sm:$0xf]
        %v4264 = vld [vmem:[#allocation6 + $0x1e0] sm:$0xf]
        %v4265 = vld [vmem:[#allocation6 + $0x1e4] sm:$0xf]
        %v4266 = vld [vmem:[#allocation6 + $0x1e8] sm:$0xf]
        %v4267 = vld [vmem:[#allocation6 + $0x1ec] sm:$0xf]
        %v4268 = vld [vmem:[#allocation6 + $0x1f0] sm:$0xf]
        %v4269 = vld [vmem:[#allocation6 + $0x1f4] sm:$0xf]
        %v4270 = vld [vmem:[#allocation6 + $0x1f8] sm:$0xf]
        %v4271 = vld [vmem:[#allocation6 + $0x1fc] sm:$0xf]
        %v4272 = vunpack.c.l.b16 %v3885
        %v4273 = vunpack.c.l.b16 %v3895
        %v4274 = vunpack.c.l.b16 %v3909
        %v4275 = vunpack.c.l.b16 %v3919
        %v4276 = vunpack.c.l.b16 %v3933
        %v4277 = vunpack.c.l.b16 %v3943
        %v4278 = vunpack.c.l.b16 %v3957
        %v4279 = vunpack.c.l.b16 %v3967
        %v4280 = vunpack.c.l.b16 %v3981
        %v4281 = vunpack.c.l.b16 %v3991
        %v4282 = vunpack.c.l.b16 %v4005
        %v4283 = vunpack.c.l.b16 %v4015
        %v4284 = vunpack.c.l.b16 %v4029
        %v4285 = vunpack.c.l.b16 %v4039
        %v4286 = vunpack.c.l.b16 %v4053
        %v4287 = vunpack.c.l.b16 %v4063
        %v4288 = vunpack.c.l.b16 %v4077
        %v4289 = vunpack.c.l.b16 %v4087
        %v4290 = vunpack.c.l.b16 %v4101
        %v4291 = vunpack.c.l.b16 %v4111
        %v4292 = vunpack.c.l.b16 %v4125
        %v4293 = vunpack.c.l.b16 %v4135
        %v4294 = vunpack.c.l.b16 %v4149
        %v4295 = vunpack.c.l.b16 %v4159
        %v4296 = vunpack.c.l.b16 %v4173
        %v4297 = vunpack.c.l.b16 %v4183
        %v4298 = vunpack.c.l.b16 %v4197
        %v4299 = vunpack.c.l.b16 %v4207
        %v4300 = vunpack.c.l.b16 %v4221
        %v4301 = vunpack.c.l.b16 %v4231
        %v4302 = vunpack.c.l.b16 %v4245
        %v4303 = vunpack.c.l.b16 %v4255
        %v4304 = vpack.c.b16 %v4273, %v4272
        %v4305 = vpack.c.b16 %v4275, %v4274
        %v4306 = vpack.c.b16 %v4277, %v4276
        %v4307 = vpack.c.b16 %v4279, %v4278
        %v4308 = vpack.c.b16 %v4281, %v4280
        %v4309 = vpack.c.b16 %v4283, %v4282
        %v4310 = vpack.c.b16 %v4285, %v4284
        %v4311 = vpack.c.b16 %v4287, %v4286
        %v4312 = vpack.c.b16 %v4289, %v4288
        %v4313 = vpack.c.b16 %v4291, %v4290
        %v4314 = vpack.c.b16 %v4293, %v4292
        %v4315 = vpack.c.b16 %v4295, %v4294
        %v4316 = vpack.c.b16 %v4297, %v4296
        %v4317 = vpack.c.b16 %v4299, %v4298
        %v4318 = vpack.c.b16 %v4301, %v4300
        %v4319 = vpack.c.b16 %v4303, %v4302
        %v4352 = vunpack.c.l.b16 %v4256
        %v4353 = vunpack.c.l.b16 %v4257
        %v4354 = vunpack.c.l.b16 %v4258
        %v4355 = vunpack.c.l.b16 %v4259
        %v4356 = vunpack.c.l.b16 %v4260
        %v4357 = vunpack.c.l.b16 %v4261
        %v4358 = vunpack.c.l.b16 %v4262
        %v4359 = vunpack.c.l.b16 %v4263
        %v4360 = vunpack.c.l.b16 %v4264
        %v4361 = vunpack.c.l.b16 %v4265
        %v4362 = vunpack.c.l.b16 %v4266
        %v4363 = vunpack.c.l.b16 %v4267
        %v4364 = vunpack.c.l.b16 %v4268
        %v4365 = vunpack.c.l.b16 %v4269
        %v4366 = vunpack.c.l.b16 %v4270
        %v4367 = vunpack.c.l.b16 %v4271
        %v4368 = vpack.c.b16 %v4353, %v4352
        %v4369 = vpack.c.b16 %v4355, %v4354
        %v4370 = vpack.c.b16 %v4357, %v4356
        %v4371 = vpack.c.b16 %v4359, %v4358
        %v4372 = vpack.c.b16 %v4361, %v4360
        %v4373 = vpack.c.b16 %v4363, %v4362
        %v4374 = vpack.c.b16 %v4365, %v4364
        %v4375 = vpack.c.b16 %v4367, %v4366
        %4384 = vmatprep.subr.bf16.mxu0 0
        %4385 = vmatpush1.bf16.msra.mxu0 %v4375
        %4386 = vmatprep.subr.bf16.mxu0 0
        %4387 = vmatpush1.bf16.msra.mxu0 %v4374
        %4388 = vmatprep.subr.bf16.mxu0 0
        %4389 = vmatpush1.bf16.msra.mxu0 %v4373
        %4390 = vmatprep.subr.bf16.mxu0 0
        %4391 = vmatpush1.bf16.msra.mxu0 %v4372
        %4392 = vmatprep.subr.bf16.mxu0 0
        %4393 = vmatpush1.bf16.msra.mxu0 %v4371
        %4394 = vmatprep.subr.bf16.mxu0 0
        %4395 = vmatpush1.bf16.msra.mxu0 %v4370
        %4396 = vmatprep.subr.bf16.mxu0 0
        %4397 = vmatpush1.bf16.msra.mxu0 %v4369
        %4398 = vmatprep.subr.bf16.mxu0 0
        %4399 = vmatpush1.bf16.msra.mxu0 %v4368
        %4400 = vmatprep.subr.bf16.mxu0 0
        %4401 = vmatpush2.bf16.msra.mxu0 0
        %4402 = vmatprep.subr.bf16.mxu0 0
        %4403 = vmatpush2.bf16.msra.mxu0 0
        %4404 = vmatprep.subr.bf16.mxu0 0
        %4405 = vmatpush2.bf16.msra.mxu0 0
        %4406 = vmatprep.subr.bf16.mxu0 0
        %4407 = vmatpush2.bf16.msra.mxu0 0
        %4408 = vmatprep.subr.bf16.mxu0 0
        %4409 = vmatpush2.bf16.msra.mxu0 0
        %4410 = vmatprep.subr.bf16.mxu0 0
        %4411 = vmatpush2.bf16.msra.mxu0 0
        %4412 = vmatprep.subr.bf16.mxu0 0
        %4413 = vmatpush2.bf16.msra.mxu0 0
        %4414 = vmatprep.subr.bf16.mxu0 0
        %4415 = vmatpush2.bf16.msra.mxu0 0
        %4416 = vmatprep.mubr.bf16.mxu0 0
        %4417 = vmatmul.mubr.bf16.gmra.mxu0 %v4304
        %v4418 = vpop.f32.mrf.mxu0
        %v4419 = vadd.f32 0.0, %v4418
        %v4420 = vpop.f32.mrf.mxu0
        %v4421 = vpop.f32.mrf.mxu0
        %v4422 = vadd.f32 0.0, %v4421
        %v4423 = vpop.f32.mrf.mxu0
        %4424 = vmatprep.mubr.bf16.mxu0 0
        %4425 = vmatmul.mubr.bf16.gmra.mxu0 %v4305
        %v4426 = vpop.f32.mrf.mxu0
        %v4427 = vadd.f32 0.0, %v4426
        %v4428 = vpop.f32.mrf.mxu0
        %v4429 = vpop.f32.mrf.mxu0
        %v4430 = vadd.f32 0.0, %v4429
        %v4431 = vpop.f32.mrf.mxu0
        %4432 = vmatprep.mubr.bf16.mxu0 0
        %4433 = vmatmul.mubr.bf16.gmra.mxu0 %v4306
        %v4434 = vpop.f32.mrf.mxu0
        %v4435 = vadd.f32 0.0, %v4434
        %v4436 = vpop.f32.mrf.mxu0
        %v4437 = vpop.f32.mrf.mxu0
        %v4438 = vadd.f32 0.0, %v4437
        %v4439 = vpop.f32.mrf.mxu0
        %4440 = vmatprep.mubr.bf16.mxu0 0
        %4441 = vmatmul.mubr.bf16.gmra.mxu0 %v4307
        %v4442 = vpop.f32.mrf.mxu0
        %v4443 = vadd.f32 0.0, %v4442
        %v4444 = vpop.f32.mrf.mxu0
        %v4445 = vpop.f32.mrf.mxu0
        %v4446 = vadd.f32 0.0, %v4445
        %v4447 = vpop.f32.mrf.mxu0
        %4448 = vmatprep.mubr.bf16.mxu0 0
        %4449 = vmatmul.mubr.bf16.gmra.mxu0 %v4308
        %v4450 = vpop.f32.mrf.mxu0
        %v4451 = vadd.f32 0.0, %v4450
        %v4452 = vpop.f32.mrf.mxu0
        %v4453 = vpop.f32.mrf.mxu0
        %v4454 = vadd.f32 0.0, %v4453
        %v4455 = vpop.f32.mrf.mxu0
        %4456 = vmatprep.mubr.bf16.mxu0 0
        %4457 = vmatmul.mubr.bf16.gmra.mxu0 %v4309
        %v4458 = vpop.f32.mrf.mxu0
        %v4459 = vadd.f32 0.0, %v4458
        %v4460 = vpop.f32.mrf.mxu0
        %v4461 = vpop.f32.mrf.mxu0
        %v4462 = vadd.f32 0.0, %v4461
        %v4463 = vpop.f32.mrf.mxu0
        %4464 = vmatprep.mubr.bf16.mxu0 0
        %4465 = vmatmul.mubr.bf16.gmra.mxu0 %v4310
        %v4466 = vpop.f32.mrf.mxu0
        %v4467 = vadd.f32 0.0, %v4466
        %v4468 = vpop.f32.mrf.mxu0
        %v4469 = vpop.f32.mrf.mxu0
        %v4470 = vadd.f32 0.0, %v4469
        %v4471 = vpop.f32.mrf.mxu0
        %4472 = vmatprep.mubr.bf16.mxu0 0
        %4473 = vmatmul.mubr.bf16.gmra.mxu0 %v4311
        %v4474 = vpop.f32.mrf.mxu0
        %v4475 = vadd.f32 0.0, %v4474
        %v4476 = vpop.f32.mrf.mxu0
        %v4477 = vpop.f32.mrf.mxu0
        %v4478 = vadd.f32 0.0, %v4477
        %v4479 = vpop.f32.mrf.mxu0
        %4480 = vmatprep.mubr.bf16.mxu0 0
        %4481 = vmatmul.mubr.bf16.gmra.mxu0 %v4312
        %v4482 = vpop.f32.mrf.mxu0
        %v4483 = vadd.f32 0.0, %v4482
        %v4484 = vpop.f32.mrf.mxu0
        %v4485 = vpop.f32.mrf.mxu0
        %v4486 = vadd.f32 0.0, %v4485
        %v4487 = vpop.f32.mrf.mxu0
        %4488 = vmatprep.mubr.bf16.mxu0 0
        %4489 = vmatmul.mubr.bf16.gmra.mxu0 %v4313
        %v4490 = vpop.f32.mrf.mxu0
        %v4491 = vadd.f32 0.0, %v4490
        %v4492 = vpop.f32.mrf.mxu0
        %v4493 = vpop.f32.mrf.mxu0
        %v4494 = vadd.f32 0.0, %v4493
        %v4495 = vpop.f32.mrf.mxu0
        %4496 = vmatprep.mubr.bf16.mxu0 0
        %4497 = vmatmul.mubr.bf16.gmra.mxu0 %v4314
        %v4498 = vpop.f32.mrf.mxu0
        %v4499 = vadd.f32 0.0, %v4498
        %v4500 = vpop.f32.mrf.mxu0
        %v4501 = vpop.f32.mrf.mxu0
        %v4502 = vadd.f32 0.0, %v4501
        %v4503 = vpop.f32.mrf.mxu0
        %4504 = vmatprep.mubr.bf16.mxu0 0
        %4505 = vmatmul.mubr.bf16.gmra.mxu0 %v4315
        %v4506 = vpop.f32.mrf.mxu0
        %v4507 = vadd.f32 0.0, %v4506
        %v4508 = vpop.f32.mrf.mxu0
        %v4509 = vpop.f32.mrf.mxu0
        %v4510 = vadd.f32 0.0, %v4509
        %v4511 = vpop.f32.mrf.mxu0
        %4512 = vmatprep.mubr.bf16.mxu0 0
        %4513 = vmatmul.mubr.bf16.gmra.mxu0 %v4316
        %v4514 = vpop.f32.mrf.mxu0
        %v4515 = vadd.f32 0.0, %v4514
        %v4516 = vpop.f32.mrf.mxu0
        %v4517 = vpop.f32.mrf.mxu0
        %v4518 = vadd.f32 0.0, %v4517
        %v4519 = vpop.f32.mrf.mxu0
        %4520 = vmatprep.mubr.bf16.mxu0 0
        %4521 = vmatmul.mubr.bf16.gmra.mxu0 %v4317
        %v4522 = vpop.f32.mrf.mxu0
        %v4523 = vadd.f32 0.0, %v4522
        %v4524 = vpop.f32.mrf.mxu0
        %v4525 = vpop.f32.mrf.mxu0
        %v4526 = vadd.f32 0.0, %v4525
        %v4527 = vpop.f32.mrf.mxu0
        %4528 = vmatprep.mubr.bf16.mxu0 0
        %4529 = vmatmul.mubr.bf16.gmra.mxu0 %v4318
        %v4530 = vpop.f32.mrf.mxu0
        %v4531 = vadd.f32 0.0, %v4530
        %v4532 = vpop.f32.mrf.mxu0
        %v4533 = vpop.f32.mrf.mxu0
        %v4534 = vadd.f32 0.0, %v4533
        %v4535 = vpop.f32.mrf.mxu0
        %4536 = vmatprep.mubr.bf16.mxu0 0
        %4537 = vmatmul.mubr.bf16.gmra.mxu0 %v4319
        %v4538 = vpop.f32.mrf.mxu0
        %v4539 = vadd.f32 0.0, %v4538
        %v4540 = vpop.f32.mrf.mxu0
        %v4541 = vpop.f32.mrf.mxu0
        %v4542 = vadd.f32 0.0, %v4541
        %v4543 = vpop.f32.mrf.mxu0
        %4544 = vdwg.mxu0
        %v4545 = vadd.f32 %v3792, %v4419
        %v4546 = vadd.f32 %v3793, %v4422
        %v4547 = vadd.f32 %v3794, %v4427
        %v4548 = vadd.f32 %v3795, %v4430
        %v4549 = vadd.f32 %v3796, %v4435
        %v4550 = vadd.f32 %v3797, %v4438
        %v4551 = vadd.f32 %v3798, %v4443
        %v4552 = vadd.f32 %v3799, %v4446
        %v4553 = vadd.f32 %v3800, %v4451
        %v4554 = vadd.f32 %v3801, %v4454
        %v4555 = vadd.f32 %v3802, %v4459
        %v4556 = vadd.f32 %v3803, %v4462
        %v4557 = vadd.f32 %v3804, %v4467
        %v4558 = vadd.f32 %v3805, %v4470
        %v4559 = vadd.f32 %v3806, %v4475
        %v4560 = vadd.f32 %v3807, %v4478
        %v4561 = vadd.f32 %v3808, %v4483
        %v4562 = vadd.f32 %v3809, %v4486
        %v4563 = vadd.f32 %v3810, %v4491
        %v4564 = vadd.f32 %v3811, %v4494
        %v4565 = vadd.f32 %v3812, %v4499
        %v4566 = vadd.f32 %v3813, %v4502
        %v4567 = vadd.f32 %v3814, %v4507
        %v4568 = vadd.f32 %v3815, %v4510
        %v4569 = vadd.f32 %v3816, %v4515
        %v4570 = vadd.f32 %v3817, %v4518
        %v4571 = vadd.f32 %v3818, %v4523
        %v4572 = vadd.f32 %v3819, %v4526
        %v4573 = vadd.f32 %v3820, %v4531
        %v4574 = vadd.f32 %v3821, %v4534
        %v4575 = vadd.f32 %v3822, %v4539
        %v4576 = vadd.f32 %v3823, %v4542
        %v4577 = vld [vmem:[%s3438] sm:$0xe]
        %v4578 = vld [vmem:[%s3438 + $0xc] sm:$0xe]
        %v4579 = vld [vmem:[%s3438 + $0x18] sm:$0xe]
        %v4580 = vld [vmem:[%s3438 + $0x24] sm:$0xe]
        %v4581 = vld [vmem:[%s3438 + $0x30] sm:$0xe]
        %v4582 = vld [vmem:[%s3438 + $0x3c] sm:$0xe]
        %v4583 = vld [vmem:[%s3438 + $0x48] sm:$0xe]
        %v4584 = vld [vmem:[%s3438 + $0x54] sm:$0xe]
        %v4585 = vld [vmem:[%s3438 + $0x60] sm:$0xe]
        %v4586 = vld [vmem:[%s3438 + $0x6c] sm:$0xe]
        %v4587 = vld [vmem:[%s3438 + $0x78] sm:$0xe]
        %v4588 = vld [vmem:[%s3438 + $0x84] sm:$0xe]
        %v4589 = vld [vmem:[%s3438 + $0x90] sm:$0xe]
        %v4590 = vld [vmem:[%s3438 + $0x9c] sm:$0xe]
        %v4591 = vld [vmem:[%s3438 + $0xa8] sm:$0xe]
        %v4592 = vld [vmem:[%s3438 + $0xb4] sm:$0xe]
        %v4641 = vrot.slane %v4577, 5
        %v4642 = vrot.slane %v4641, 4
        %v4643 = vrot.slane %v3825, 5
        %v4644 = vsel %vm1368, %v4642, %v4643
        %v4645 = vrot.slane %v4643, 4
        %v4646 = vrot.slane %v3826, 5
        %v4647 = vsel %vm1368, %v4645, %v4646
        %v4648 = vrot.slane %v4578, 5
        %v4649 = vrot.slane %v4648, 4
        %v4650 = vrot.slane %v3828, 5
        %v4651 = vsel %vm1368, %v4649, %v4650
        %v4652 = vrot.slane %v4650, 4
        %v4653 = vrot.slane %v3829, 5
        %v4654 = vsel %vm1368, %v4652, %v4653
        %v4655 = vrot.slane %v4579, 5
        %v4656 = vrot.slane %v4655, 4
        %v4657 = vrot.slane %v3831, 5
        %v4658 = vsel %vm1368, %v4656, %v4657
        %v4659 = vrot.slane %v4657, 4
        %v4660 = vrot.slane %v3832, 5
        %v4661 = vsel %vm1368, %v4659, %v4660
        %v4662 = vrot.slane %v4580, 5
        %v4663 = vrot.slane %v4662, 4
        %v4664 = vrot.slane %v3834, 5
        %v4665 = vsel %vm1368, %v4663, %v4664
        %v4666 = vrot.slane %v4664, 4
        %v4667 = vrot.slane %v3835, 5
        %v4668 = vsel %vm1368, %v4666, %v4667
        %v4669 = vrot.slane %v4581, 5
        %v4670 = vrot.slane %v4669, 4
        %v4671 = vrot.slane %v3837, 5
        %v4672 = vsel %vm1368, %v4670, %v4671
        %v4673 = vrot.slane %v4671, 4
        %v4674 = vrot.slane %v3838, 5
        %v4675 = vsel %vm1368, %v4673, %v4674
        %v4676 = vrot.slane %v4582, 5
        %v4677 = vrot.slane %v4676, 4
        %v4678 = vrot.slane %v3840, 5
        %v4679 = vsel %vm1368, %v4677, %v4678
        %v4680 = vrot.slane %v4678, 4
        %v4681 = vrot.slane %v3841, 5
        %v4682 = vsel %vm1368, %v4680, %v4681
        %v4683 = vrot.slane %v4583, 5
        %v4684 = vrot.slane %v4683, 4
        %v4685 = vrot.slane %v3843, 5
        %v4686 = vsel %vm1368, %v4684, %v4685
        %v4687 = vrot.slane %v4685, 4
        %v4688 = vrot.slane %v3844, 5
        %v4689 = vsel %vm1368, %v4687, %v4688
        %v4690 = vrot.slane %v4584, 5
        %v4691 = vrot.slane %v4690, 4
        %v4692 = vrot.slane %v3846, 5
        %v4693 = vsel %vm1368, %v4691, %v4692
        %v4694 = vrot.slane %v4692, 4
        %v4695 = vrot.slane %v3847, 5
        %v4696 = vsel %vm1368, %v4694, %v4695
        %v4697 = vrot.slane %v4585, 5
        %v4698 = vrot.slane %v4697, 4
        %v4699 = vrot.slane %v3849, 5
        %v4700 = vsel %vm1368, %v4698, %v4699
        %v4701 = vrot.slane %v4699, 4
        %v4702 = vrot.slane %v3850, 5
        %v4703 = vsel %vm1368, %v4701, %v4702
        %v4704 = vrot.slane %v4586, 5
        %v4705 = vrot.slane %v4704, 4
        %v4706 = vrot.slane %v3852, 5
        %v4707 = vsel %vm1368, %v4705, %v4706
        %v4708 = vrot.slane %v4706, 4
        %v4709 = vrot.slane %v3853, 5
        %v4710 = vsel %vm1368, %v4708, %v4709
        %v4711 = vrot.slane %v4587, 5
        %v4712 = vrot.slane %v4711, 4
        %v4713 = vrot.slane %v3855, 5
        %v4714 = vsel %vm1368, %v4712, %v4713
        %v4715 = vrot.slane %v4713, 4
        %v4716 = vrot.slane %v3856, 5
        %v4717 = vsel %vm1368, %v4715, %v4716
        %v4718 = vrot.slane %v4588, 5
        %v4719 = vrot.slane %v4718, 4
        %v4720 = vrot.slane %v3858, 5
        %v4721 = vsel %vm1368, %v4719, %v4720
        %v4722 = vrot.slane %v4720, 4
        %v4723 = vrot.slane %v3859, 5
        %v4724 = vsel %vm1368, %v4722, %v4723
        %v4725 = vrot.slane %v4589, 5
        %v4726 = vrot.slane %v4725, 4
        %v4727 = vrot.slane %v3861, 5
        %v4728 = vsel %vm1368, %v4726, %v4727
        %v4729 = vrot.slane %v4727, 4
        %v4730 = vrot.slane %v3862, 5
        %v4731 = vsel %vm1368, %v4729, %v4730
        %v4732 = vrot.slane %v4590, 5
        %v4733 = vrot.slane %v4732, 4
        %v4734 = vrot.slane %v3864, 5
        %v4735 = vsel %vm1368, %v4733, %v4734
        %v4736 = vrot.slane %v4734, 4
        %v4737 = vrot.slane %v3865, 5
        %v4738 = vsel %vm1368, %v4736, %v4737
        %v4739 = vrot.slane %v4591, 5
        %v4740 = vrot.slane %v4739, 4
        %v4741 = vrot.slane %v3867, 5
        %v4742 = vsel %vm1368, %v4740, %v4741
        %v4743 = vrot.slane %v4741, 4
        %v4744 = vrot.slane %v3868, 5
        %v4745 = vsel %vm1368, %v4743, %v4744
        %v4746 = vrot.slane %v4592, 5
        %v4747 = vrot.slane %v4746, 4
        %v4748 = vrot.slane %v3870, 5
        %v4749 = vsel %vm1368, %v4747, %v4748
        %v4750 = vrot.slane %v4748, 4
        %v4751 = vrot.slane %v3871, 5
        %v4752 = vsel %vm1368, %v4750, %v4751
        %v4753 = vld [vmem:[#allocation6 + $0x200] sm:$0xf]
        %v4754 = vld [vmem:[#allocation6 + $0x204] sm:$0xf]
        %v4755 = vld [vmem:[#allocation6 + $0x208] sm:$0xf]
        %v4756 = vld [vmem:[#allocation6 + $0x20c] sm:$0xf]
        %v4757 = vld [vmem:[#allocation6 + $0x210] sm:$0xf]
        %v4758 = vld [vmem:[#allocation6 + $0x214] sm:$0xf]
        %v4759 = vld [vmem:[#allocation6 + $0x218] sm:$0xf]
        %v4760 = vld [vmem:[#allocation6 + $0x21c] sm:$0xf]
        %v4761 = vld [vmem:[#allocation6 + $0x220] sm:$0xf]
        %v4762 = vld [vmem:[#allocation6 + $0x224] sm:$0xf]
        %v4763 = vld [vmem:[#allocation6 + $0x228] sm:$0xf]
        %v4764 = vld [vmem:[#allocation6 + $0x22c] sm:$0xf]
        %v4765 = vld [vmem:[#allocation6 + $0x230] sm:$0xf]
        %v4766 = vld [vmem:[#allocation6 + $0x234] sm:$0xf]
        %v4767 = vld [vmem:[#allocation6 + $0x238] sm:$0xf]
        %v4768 = vld [vmem:[#allocation6 + $0x23c] sm:$0xf]
        %v4769 = vunpack.c.l.b16 %v4644
        %v4770 = vunpack.c.l.b16 %v4647
        %v4771 = vunpack.c.l.b16 %v4651
        %v4772 = vunpack.c.l.b16 %v4654
        %v4773 = vunpack.c.l.b16 %v4658
        %v4774 = vunpack.c.l.b16 %v4661
        %v4775 = vunpack.c.l.b16 %v4665
        %v4776 = vunpack.c.l.b16 %v4668
        %v4777 = vunpack.c.l.b16 %v4672
        %v4778 = vunpack.c.l.b16 %v4675
        %v4779 = vunpack.c.l.b16 %v4679
        %v4780 = vunpack.c.l.b16 %v4682
        %v4781 = vunpack.c.l.b16 %v4686
        %v4782 = vunpack.c.l.b16 %v4689
        %v4783 = vunpack.c.l.b16 %v4693
        %v4784 = vunpack.c.l.b16 %v4696
        %v4785 = vunpack.c.l.b16 %v4700
        %v4786 = vunpack.c.l.b16 %v4703
        %v4787 = vunpack.c.l.b16 %v4707
        %v4788 = vunpack.c.l.b16 %v4710
        %v4789 = vunpack.c.l.b16 %v4714
        %v4790 = vunpack.c.l.b16 %v4717
        %v4791 = vunpack.c.l.b16 %v4721
        %v4792 = vunpack.c.l.b16 %v4724
        %v4793 = vunpack.c.l.b16 %v4728
        %v4794 = vunpack.c.l.b16 %v4731
        %v4795 = vunpack.c.l.b16 %v4735
        %v4796 = vunpack.c.l.b16 %v4738
        %v4797 = vunpack.c.l.b16 %v4742
        %v4798 = vunpack.c.l.b16 %v4745
        %v4799 = vunpack.c.l.b16 %v4749
        %v4800 = vunpack.c.l.b16 %v4752
        %v4801 = vpack.c.b16 %v4770, %v4769
        %v4802 = vpack.c.b16 %v4772, %v4771
        %v4803 = vpack.c.b16 %v4774, %v4773
        %v4804 = vpack.c.b16 %v4776, %v4775
        %v4805 = vpack.c.b16 %v4778, %v4777
        %v4806 = vpack.c.b16 %v4780, %v4779
        %v4807 = vpack.c.b16 %v4782, %v4781
        %v4808 = vpack.c.b16 %v4784, %v4783
        %v4809 = vpack.c.b16 %v4786, %v4785
        %v4810 = vpack.c.b16 %v4788, %v4787
        %v4811 = vpack.c.b16 %v4790, %v4789
        %v4812 = vpack.c.b16 %v4792, %v4791
        %v4813 = vpack.c.b16 %v4794, %v4793
        %v4814 = vpack.c.b16 %v4796, %v4795
        %v4815 = vpack.c.b16 %v4798, %v4797
        %v4816 = vpack.c.b16 %v4800, %v4799
        %v4849 = vunpack.c.l.b16 %v4753
        %v4850 = vunpack.c.l.b16 %v4754
        %v4851 = vunpack.c.l.b16 %v4755
        %v4852 = vunpack.c.l.b16 %v4756
        %v4853 = vunpack.c.l.b16 %v4757
        %v4854 = vunpack.c.l.b16 %v4758
        %v4855 = vunpack.c.l.b16 %v4759
        %v4856 = vunpack.c.l.b16 %v4760
        %v4857 = vunpack.c.l.b16 %v4761
        %v4858 = vunpack.c.l.b16 %v4762
        %v4859 = vunpack.c.l.b16 %v4763
        %v4860 = vunpack.c.l.b16 %v4764
        %v4861 = vunpack.c.l.b16 %v4765
        %v4862 = vunpack.c.l.b16 %v4766
        %v4863 = vunpack.c.l.b16 %v4767
        %v4864 = vunpack.c.l.b16 %v4768
        %v4865 = vpack.c.b16 %v4850, %v4849
        %v4866 = vpack.c.b16 %v4852, %v4851
        %v4867 = vpack.c.b16 %v4854, %v4853
        %v4868 = vpack.c.b16 %v4856, %v4855
        %v4869 = vpack.c.b16 %v4858, %v4857
        %v4870 = vpack.c.b16 %v4860, %v4859
        %v4871 = vpack.c.b16 %v4862, %v4861
        %v4872 = vpack.c.b16 %v4864, %v4863
        %4881 = vmatprep.subr.bf16.mxu0 0
        %4882 = vmatpush1.bf16.msra.mxu0 %v4872
        %4883 = vmatprep.subr.bf16.mxu0 0
        %4884 = vmatpush1.bf16.msra.mxu0 %v4871
        %4885 = vmatprep.subr.bf16.mxu0 0
        %4886 = vmatpush1.bf16.msra.mxu0 %v4870
        %4887 = vmatprep.subr.bf16.mxu0 0
        %4888 = vmatpush1.bf16.msra.mxu0 %v4869
        %4889 = vmatprep.subr.bf16.mxu0 0
        %4890 = vmatpush1.bf16.msra.mxu0 %v4868
        %4891 = vmatprep.subr.bf16.mxu0 0
        %4892 = vmatpush1.bf16.msra.mxu0 %v4867
        %4893 = vmatprep.subr.bf16.mxu0 0
        %4894 = vmatpush1.bf16.msra.mxu0 %v4866
        %4895 = vmatprep.subr.bf16.mxu0 0
        %4896 = vmatpush1.bf16.msra.mxu0 %v4865
        %4897 = vmatprep.subr.bf16.mxu0 0
        %4898 = vmatpush2.bf16.msra.mxu0 0
        %4899 = vmatprep.subr.bf16.mxu0 0
        %4900 = vmatpush2.bf16.msra.mxu0 0
        %4901 = vmatprep.subr.bf16.mxu0 0
        %4902 = vmatpush2.bf16.msra.mxu0 0
        %4903 = vmatprep.subr.bf16.mxu0 0
        %4904 = vmatpush2.bf16.msra.mxu0 0
        %4905 = vmatprep.subr.bf16.mxu0 0
        %4906 = vmatpush2.bf16.msra.mxu0 0
        %4907 = vmatprep.subr.bf16.mxu0 0
        %4908 = vmatpush2.bf16.msra.mxu0 0
        %4909 = vmatprep.subr.bf16.mxu0 0
        %4910 = vmatpush2.bf16.msra.mxu0 0
        %4911 = vmatprep.subr.bf16.mxu0 0
        %4912 = vmatpush2.bf16.msra.mxu0 0
        %4913 = vmatprep.mubr.bf16.mxu0 0
        %4914 = vmatmul.mubr.bf16.gmra.mxu0 %v4801
        %v4915 = vpop.f32.mrf.mxu0
        %v4916 = vadd.f32 0.0, %v4915
        %v4917 = vpop.f32.mrf.mxu0
        %v4918 = vpop.f32.mrf.mxu0
        %v4919 = vadd.f32 0.0, %v4918
        %v4920 = vpop.f32.mrf.mxu0
        %4921 = vmatprep.mubr.bf16.mxu0 0
        %4922 = vmatmul.mubr.bf16.gmra.mxu0 %v4802
        %v4923 = vpop.f32.mrf.mxu0
        %v4924 = vadd.f32 0.0, %v4923
        %v4925 = vpop.f32.mrf.mxu0
        %v4926 = vpop.f32.mrf.mxu0
        %v4927 = vadd.f32 0.0, %v4926
        %v4928 = vpop.f32.mrf.mxu0
        %4929 = vmatprep.mubr.bf16.mxu0 0
        %4930 = vmatmul.mubr.bf16.gmra.mxu0 %v4803
        %v4931 = vpop.f32.mrf.mxu0
        %v4932 = vadd.f32 0.0, %v4931
        %v4933 = vpop.f32.mrf.mxu0
        %v4934 = vpop.f32.mrf.mxu0
        %v4935 = vadd.f32 0.0, %v4934
        %v4936 = vpop.f32.mrf.mxu0
        %4937 = vmatprep.mubr.bf16.mxu0 0
        %4938 = vmatmul.mubr.bf16.gmra.mxu0 %v4804
        %v4939 = vpop.f32.mrf.mxu0
        %v4940 = vadd.f32 0.0, %v4939
        %v4941 = vpop.f32.mrf.mxu0
        %v4942 = vpop.f32.mrf.mxu0
        %v4943 = vadd.f32 0.0, %v4942
        %v4944 = vpop.f32.mrf.mxu0
        %4945 = vmatprep.mubr.bf16.mxu0 0
        %4946 = vmatmul.mubr.bf16.gmra.mxu0 %v4805
        %v4947 = vpop.f32.mrf.mxu0
        %v4948 = vadd.f32 0.0, %v4947
        %v4949 = vpop.f32.mrf.mxu0
        %v4950 = vpop.f32.mrf.mxu0
        %v4951 = vadd.f32 0.0, %v4950
        %v4952 = vpop.f32.mrf.mxu0
        %4953 = vmatprep.mubr.bf16.mxu0 0
        %4954 = vmatmul.mubr.bf16.gmra.mxu0 %v4806
        %v4955 = vpop.f32.mrf.mxu0
        %v4956 = vadd.f32 0.0, %v4955
        %v4957 = vpop.f32.mrf.mxu0
        %v4958 = vpop.f32.mrf.mxu0
        %v4959 = vadd.f32 0.0, %v4958
        %v4960 = vpop.f32.mrf.mxu0
        %4961 = vmatprep.mubr.bf16.mxu0 0
        %4962 = vmatmul.mubr.bf16.gmra.mxu0 %v4807
        %v4963 = vpop.f32.mrf.mxu0
        %v4964 = vadd.f32 0.0, %v4963
        %v4965 = vpop.f32.mrf.mxu0
        %v4966 = vpop.f32.mrf.mxu0
        %v4967 = vadd.f32 0.0, %v4966
        %v4968 = vpop.f32.mrf.mxu0
        %4969 = vmatprep.mubr.bf16.mxu0 0
        %4970 = vmatmul.mubr.bf16.gmra.mxu0 %v4808
        %v4971 = vpop.f32.mrf.mxu0
        %v4972 = vadd.f32 0.0, %v4971
        %v4973 = vpop.f32.mrf.mxu0
        %v4974 = vpop.f32.mrf.mxu0
        %v4975 = vadd.f32 0.0, %v4974
        %v4976 = vpop.f32.mrf.mxu0
        %4977 = vmatprep.mubr.bf16.mxu0 0
        %4978 = vmatmul.mubr.bf16.gmra.mxu0 %v4809
        %v4979 = vpop.f32.mrf.mxu0
        %v4980 = vadd.f32 0.0, %v4979
        %v4981 = vpop.f32.mrf.mxu0
        %v4982 = vpop.f32.mrf.mxu0
        %v4983 = vadd.f32 0.0, %v4982
        %v4984 = vpop.f32.mrf.mxu0
        %4985 = vmatprep.mubr.bf16.mxu0 0
        %4986 = vmatmul.mubr.bf16.gmra.mxu0 %v4810
        %v4987 = vpop.f32.mrf.mxu0
        %v4988 = vadd.f32 0.0, %v4987
        %v4989 = vpop.f32.mrf.mxu0
        %v4990 = vpop.f32.mrf.mxu0
        %v4991 = vadd.f32 0.0, %v4990
        %v4992 = vpop.f32.mrf.mxu0
        %4993 = vmatprep.mubr.bf16.mxu0 0
        %4994 = vmatmul.mubr.bf16.gmra.mxu0 %v4811
        %v4995 = vpop.f32.mrf.mxu0
        %v4996 = vadd.f32 0.0, %v4995
        %v4997 = vpop.f32.mrf.mxu0
        %v4998 = vpop.f32.mrf.mxu0
        %v4999 = vadd.f32 0.0, %v4998
        %v5000 = vpop.f32.mrf.mxu0
        %5001 = vmatprep.mubr.bf16.mxu0 0
        %5002 = vmatmul.mubr.bf16.gmra.mxu0 %v4812
        %v5003 = vpop.f32.mrf.mxu0
        %v5004 = vadd.f32 0.0, %v5003
        %v5005 = vpop.f32.mrf.mxu0
        %v5006 = vpop.f32.mrf.mxu0
        %v5007 = vadd.f32 0.0, %v5006
        %v5008 = vpop.f32.mrf.mxu0
        %5009 = vmatprep.mubr.bf16.mxu0 0
        %5010 = vmatmul.mubr.bf16.gmra.mxu0 %v4813
        %v5011 = vpop.f32.mrf.mxu0
        %v5012 = vadd.f32 0.0, %v5011
        %v5013 = vpop.f32.mrf.mxu0
        %v5014 = vpop.f32.mrf.mxu0
        %v5015 = vadd.f32 0.0, %v5014
        %v5016 = vpop.f32.mrf.mxu0
        %5017 = vmatprep.mubr.bf16.mxu0 0
        %5018 = vmatmul.mubr.bf16.gmra.mxu0 %v4814
        %v5019 = vpop.f32.mrf.mxu0
        %v5020 = vadd.f32 0.0, %v5019
        %v5021 = vpop.f32.mrf.mxu0
        %v5022 = vpop.f32.mrf.mxu0
        %v5023 = vadd.f32 0.0, %v5022
        %v5024 = vpop.f32.mrf.mxu0
        %5025 = vmatprep.mubr.bf16.mxu0 0
        %5026 = vmatmul.mubr.bf16.gmra.mxu0 %v4815
        %v5027 = vpop.f32.mrf.mxu0
        %v5028 = vadd.f32 0.0, %v5027
        %v5029 = vpop.f32.mrf.mxu0
        %v5030 = vpop.f32.mrf.mxu0
        %v5031 = vadd.f32 0.0, %v5030
        %v5032 = vpop.f32.mrf.mxu0
        %5033 = vmatprep.mubr.bf16.mxu0 0
        %5034 = vmatmul.mubr.bf16.gmra.mxu0 %v4816
        %v5035 = vpop.f32.mrf.mxu0
        %v5036 = vadd.f32 0.0, %v5035
        %v5037 = vpop.f32.mrf.mxu0
        %v5038 = vpop.f32.mrf.mxu0
        %v5039 = vadd.f32 0.0, %v5038
        %v5040 = vpop.f32.mrf.mxu0
        %5041 = vdwg.mxu0
        %v5042 = vadd.f32 %v4545, %v4916
        %v5043 = vadd.f32 %v4546, %v4919
        %v5044 = vadd.f32 %v4547, %v4924
        %v5045 = vadd.f32 %v4548, %v4927
        %v5046 = vadd.f32 %v4549, %v4932
        %v5047 = vadd.f32 %v4550, %v4935
        %v5048 = vadd.f32 %v4551, %v4940
        %v5049 = vadd.f32 %v4552, %v4943
        %v5050 = vadd.f32 %v4553, %v4948
        %v5051 = vadd.f32 %v4554, %v4951
        %v5052 = vadd.f32 %v4555, %v4956
        %v5053 = vadd.f32 %v4556, %v4959
        %v5054 = vadd.f32 %v4557, %v4964
        %v5055 = vadd.f32 %v4558, %v4967
        %v5056 = vadd.f32 %v4559, %v4972
        %v5057 = vadd.f32 %v4560, %v4975
        %v5058 = vadd.f32 %v4561, %v4980
        %v5059 = vadd.f32 %v4562, %v4983
        %v5060 = vadd.f32 %v4563, %v4988
        %v5061 = vadd.f32 %v4564, %v4991
        %v5062 = vadd.f32 %v4565, %v4996
        %v5063 = vadd.f32 %v4566, %v4999
        %v5064 = vadd.f32 %v4567, %v5004
        %v5065 = vadd.f32 %v4568, %v5007
        %v5066 = vadd.f32 %v4569, %v5012
        %v5067 = vadd.f32 %v4570, %v5015
        %v5068 = vadd.f32 %v4571, %v5020
        %v5069 = vadd.f32 %v4572, %v5023
        %v5070 = vadd.f32 %v4573, %v5028
        %v5071 = vadd.f32 %v4574, %v5031
        %v5072 = vadd.f32 %v4575, %v5036
        %v5073 = vadd.f32 %v4576, %v5039
        %v5074 = vld [vmem:[%s3] sm:$0x1]
        %v5076 = vlaneseq
        %v5077 = vshrl.u32 %v5076, 7
        %v5078 = vsub.s32 0, %v5077
        %v5079 = vrot.slane %v5074, %v5078
        %v5081 = vadd.f32 %v5042, %v5079
        %v5082 = vadd.f32 %v5043, %v5079
        %v5083 = vadd.f32 %v5044, %v5079
        %v5084 = vadd.f32 %v5045, %v5079
        %v5085 = vadd.f32 %v5046, %v5079
        %v5086 = vadd.f32 %v5047, %v5079
        %v5087 = vadd.f32 %v5048, %v5079
        %v5088 = vadd.f32 %v5049, %v5079
        %v5089 = vadd.f32 %v5050, %v5079
        %v5090 = vadd.f32 %v5051, %v5079
        %v5091 = vadd.f32 %v5052, %v5079
        %v5092 = vadd.f32 %v5053, %v5079
        %v5093 = vadd.f32 %v5054, %v5079
        %v5094 = vadd.f32 %v5055, %v5079
        %v5095 = vadd.f32 %v5056, %v5079
        %v5096 = vadd.f32 %v5057, %v5079
        %v5097 = vadd.f32 %v5058, %v5079
        %v5098 = vadd.f32 %v5059, %v5079
        %v5099 = vadd.f32 %v5060, %v5079
        %v5100 = vadd.f32 %v5061, %v5079
        %v5101 = vadd.f32 %v5062, %v5079
        %v5102 = vadd.f32 %v5063, %v5079
        %v5103 = vadd.f32 %v5064, %v5079
        %v5104 = vadd.f32 %v5065, %v5079
        %v5105 = vadd.f32 %v5066, %v5079
        %v5106 = vadd.f32 %v5067, %v5079
        %v5107 = vadd.f32 %v5068, %v5079
        %v5108 = vadd.f32 %v5069, %v5079
        %v5109 = vadd.f32 %v5070, %v5079
        %v5110 = vadd.f32 %v5071, %v5079
        %v5111 = vadd.f32 %v5072, %v5079
        %v5112 = vadd.f32 %v5073, %v5079
        %v5113 = vmax.f32 %v5081, 0.0
        %v5114 = vmax.f32 %v5082, 0.0
        %v5115 = vmax.f32 %v5083, 0.0
        %v5116 = vmax.f32 %v5084, 0.0
        %v5117 = vmax.f32 %v5085, 0.0
        %v5118 = vmax.f32 %v5086, 0.0
        %v5119 = vmax.f32 %v5087, 0.0
        %v5120 = vmax.f32 %v5088, 0.0
        %v5121 = vmax.f32 %v5089, 0.0
        %v5122 = vmax.f32 %v5090, 0.0
        %v5123 = vmax.f32 %v5091, 0.0
        %v5124 = vmax.f32 %v5092, 0.0
        %v5125 = vmax.f32 %v5093, 0.0
        %v5126 = vmax.f32 %v5094, 0.0
        %v5127 = vmax.f32 %v5095, 0.0
        %v5128 = vmax.f32 %v5096, 0.0
        %v5129 = vmax.f32 %v5097, 0.0
        %v5130 = vmax.f32 %v5098, 0.0
        %v5131 = vmax.f32 %v5099, 0.0
        %v5132 = vmax.f32 %v5100, 0.0
        %v5133 = vmax.f32 %v5101, 0.0
        %v5134 = vmax.f32 %v5102, 0.0
        %v5135 = vmax.f32 %v5103, 0.0
        %v5136 = vmax.f32 %v5104, 0.0
        %v5137 = vmax.f32 %v5105, 0.0
        %v5138 = vmax.f32 %v5106, 0.0
        %v5139 = vmax.f32 %v5107, 0.0
        %v5140 = vmax.f32 %v5108, 0.0
        %v5141 = vmax.f32 %v5109, 0.0
        %v5142 = vmax.f32 %v5110, 0.0
        %v5143 = vmax.f32 %v5111, 0.0
        %v5144 = vmax.f32 %v5112, 0.0
        %5145 = vst [vmem:[#allocation2] sm:$0xf] 0
        %5146 = vst [vmem:[#allocation2 + $0x4] sm:$0xf] 0
        %5147 = vst [vmem:[#allocation2 + $0x8] sm:$0xf] 0
        %s5148 = scalar_lea.vmem [#allocation2], 204
        %5149 = vst [vmem:[%s5148] sm:$0xf] 0
        %5150 = vst [vmem:[%s5148 + $0x4] sm:$0xf] 0
        %5151 = vst [vmem:[%s5148 + $0x8] sm:$0xf] 0
        %vm5152 = vcmask 1040384
        %vm5153 = vsmask.f32 256
        %vm5154 = vmand %vm5152, %vm5153
        %v5155 = vld [vmem:[#allocation2] sm:$0x1]
        %v5156 = vsel %vm5154, 0, %v5155
        %5157 = vst [vmem:[#allocation2] sm:$0x1] %v5156
        %v5158 = vld [vmem:[#allocation2 + $0xc] sm:$0x1]
        %v5159 = vsel %vm5154, 0, %v5158
        %5160 = vst [vmem:[#allocation2 + $0xc] sm:$0x1] %v5159
        %v5161 = vld [vmem:[#allocation2 + $0x18] sm:$0x1]
        %v5162 = vsel %vm5154, 0, %v5161
        %5163 = vst [vmem:[#allocation2 + $0x18] sm:$0x1] %v5162
        %v5164 = vld [vmem:[#allocation2 + $0x24] sm:$0x1]
        %v5165 = vsel %vm5154, 0, %v5164
        %5166 = vst [vmem:[#allocation2 + $0x24] sm:$0x1] %v5165
        %v5167 = vld [vmem:[#allocation2 + $0x30] sm:$0x1]
        %v5168 = vsel %vm5154, 0, %v5167
        %5169 = vst [vmem:[#allocation2 + $0x30] sm:$0x1] %v5168
        %v5170 = vld [vmem:[#allocation2 + $0x3c] sm:$0x1]
        %v5171 = vsel %vm5154, 0, %v5170
        %5172 = vst [vmem:[#allocation2 + $0x3c] sm:$0x1] %v5171
        %v5173 = vld [vmem:[#allocation2 + $0x48] sm:$0x1]
        %v5174 = vsel %vm5154, 0, %v5173
        %5175 = vst [vmem:[#allocation2 + $0x48] sm:$0x1] %v5174
        %v5176 = vld [vmem:[#allocation2 + $0x54] sm:$0x1]
        %v5177 = vsel %vm5154, 0, %v5176
        %5178 = vst [vmem:[#allocation2 + $0x54] sm:$0x1] %v5177
        %v5179 = vld [vmem:[#allocation2 + $0x60] sm:$0x1]
        %v5180 = vsel %vm5154, 0, %v5179
        %5181 = vst [vmem:[#allocation2 + $0x60] sm:$0x1] %v5180
        %v5182 = vld [vmem:[#allocation2 + $0x6c] sm:$0x1]
        %v5183 = vsel %vm5154, 0, %v5182
        %5184 = vst [vmem:[#allocation2 + $0x6c] sm:$0x1] %v5183
        %v5185 = vld [vmem:[#allocation2 + $0x78] sm:$0x1]
        %v5186 = vsel %vm5154, 0, %v5185
        %5187 = vst [vmem:[#allocation2 + $0x78] sm:$0x1] %v5186
        %v5188 = vld [vmem:[#allocation2 + $0x84] sm:$0x1]
        %v5189 = vsel %vm5154, 0, %v5188
        %5190 = vst [vmem:[#allocation2 + $0x84] sm:$0x1] %v5189
        %v5191 = vld [vmem:[#allocation2 + $0x90] sm:$0x1]
        %v5192 = vsel %vm5154, 0, %v5191
        %5193 = vst [vmem:[#allocation2 + $0x90] sm:$0x1] %v5192
        %v5194 = vld [vmem:[#allocation2 + $0x9c] sm:$0x1]
        %v5195 = vsel %vm5154, 0, %v5194
        %5196 = vst [vmem:[#allocation2 + $0x9c] sm:$0x1] %v5195
        %v5197 = vld [vmem:[#allocation2 + $0xa8] sm:$0x1]
        %v5198 = vsel %vm5154, 0, %v5197
        %5199 = vst [vmem:[#allocation2 + $0xa8] sm:$0x1] %v5198
        %v5200 = vld [vmem:[#allocation2 + $0xb4] sm:$0x1]
        %v5201 = vsel %vm5154, 0, %v5200
        %5202 = vst [vmem:[#allocation2 + $0xb4] sm:$0x1] %v5201
        %v5203 = vld [vmem:[#allocation2 + $0xc0] sm:$0x1]
        %v5204 = vsel %vm5154, 0, %v5203
        %5205 = vst [vmem:[#allocation2 + $0xc0] sm:$0x1] %v5204
        %v5206 = vld [vmem:[#allocation2 + $0xcc] sm:$0x1]
        %v5207 = vsel %vm5154, 0, %v5206
        %5208 = vst [vmem:[#allocation2 + $0xcc] sm:$0x1] %v5207
        %vm5209 = vsmask.f32 7938
        %vm5210 = vmand %vm5152, %vm5209
        %v5211 = vld [vmem:[#allocation2 + $0x8] sm:$0x1]
        %v5212 = vsel %vm5210, 0, %v5211
        %5213 = vst [vmem:[#allocation2 + $0x8] sm:$0x1] %v5212
        %v5214 = vld [vmem:[#allocation2 + $0x14] sm:$0x1]
        %v5215 = vsel %vm5210, 0, %v5214
        %5216 = vst [vmem:[#allocation2 + $0x14] sm:$0x1] %v5215
        %v5217 = vld [vmem:[#allocation2 + $0x20] sm:$0x1]
        %v5218 = vsel %vm5210, 0, %v5217
        %5219 = vst [vmem:[#allocation2 + $0x20] sm:$0x1] %v5218
        %v5220 = vld [vmem:[#allocation2 + $0x2c] sm:$0x1]
        %v5221 = vsel %vm5210, 0, %v5220
        %5222 = vst [vmem:[#allocation2 + $0x2c] sm:$0x1] %v5221
        %v5223 = vld [vmem:[#allocation2 + $0x38] sm:$0x1]
        %v5224 = vsel %vm5210, 0, %v5223
        %5225 = vst [vmem:[#allocation2 + $0x38] sm:$0x1] %v5224
        %v5226 = vld [vmem:[#allocation2 + $0x44] sm:$0x1]
        %v5227 = vsel %vm5210, 0, %v5226
        %5228 = vst [vmem:[#allocation2 + $0x44] sm:$0x1] %v5227
        %v5229 = vld [vmem:[#allocation2 + $0x50] sm:$0x1]
        %v5230 = vsel %vm5210, 0, %v5229
        %5231 = vst [vmem:[#allocation2 + $0x50] sm:$0x1] %v5230
        %v5232 = vld [vmem:[#allocation2 + $0x5c] sm:$0x1]
        %v5233 = vsel %vm5210, 0, %v5232
        %5234 = vst [vmem:[#allocation2 + $0x5c] sm:$0x1] %v5233
        %v5235 = vld [vmem:[#allocation2 + $0x68] sm:$0x1]
        %v5236 = vsel %vm5210, 0, %v5235
        %5237 = vst [vmem:[#allocation2 + $0x68] sm:$0x1] %v5236
        %v5238 = vld [vmem:[#allocation2 + $0x74] sm:$0x1]
        %v5239 = vsel %vm5210, 0, %v5238
        %5240 = vst [vmem:[#allocation2 + $0x74] sm:$0x1] %v5239
        %v5241 = vld [vmem:[#allocation2 + $0x80] sm:$0x1]
        %v5242 = vsel %vm5210, 0, %v5241
        %5243 = vst [vmem:[#allocation2 + $0x80] sm:$0x1] %v5242
        %v5244 = vld [vmem:[#allocation2 + $0x8c] sm:$0x1]
        %v5245 = vsel %vm5210, 0, %v5244
        %5246 = vst [vmem:[#allocation2 + $0x8c] sm:$0x1] %v5245
        %v5247 = vld [vmem:[#allocation2 + $0x98] sm:$0x1]
        %v5248 = vsel %vm5210, 0, %v5247
        %5249 = vst [vmem:[#allocation2 + $0x98] sm:$0x1] %v5248
        %v5250 = vld [vmem:[#allocation2 + $0xa4] sm:$0x1]
        %v5251 = vsel %vm5210, 0, %v5250
        %5252 = vst [vmem:[#allocation2 + $0xa4] sm:$0x1] %v5251
        %v5253 = vld [vmem:[#allocation2 + $0xb0] sm:$0x1]
        %v5254 = vsel %vm5210, 0, %v5253
        %5255 = vst [vmem:[#allocation2 + $0xb0] sm:$0x1] %v5254
        %v5256 = vld [vmem:[#allocation2 + $0xbc] sm:$0x1]
        %v5257 = vsel %vm5210, 0, %v5256
        %5258 = vst [vmem:[#allocation2 + $0xbc] sm:$0x1] %v5257
        %v5259 = vld [vmem:[#allocation2 + $0xc8] sm:$0x1]
        %v5260 = vsel %vm5210, 0, %v5259
        %5261 = vst [vmem:[#allocation2 + $0xc8] sm:$0x1] %v5260
        %v5262 = vld [vmem:[#allocation2 + $0xd4] sm:$0x1]
        %v5263 = vsel %vm5210, 0, %v5262
        %5264 = vst [vmem:[#allocation2 + $0xd4] sm:$0x1] %v5263
        %v5265 = vpack.c.bf16 %v5114, %v5113
        %v5266 = vpack.c.bf16 %v5116, %v5115
        %v5267 = vpack.c.bf16 %v5118, %v5117
        %v5268 = vpack.c.bf16 %v5120, %v5119
        %v5269 = vpack.c.bf16 %v5122, %v5121
        %v5270 = vpack.c.bf16 %v5124, %v5123
        %v5271 = vpack.c.bf16 %v5126, %v5125
        %v5272 = vpack.c.bf16 %v5128, %v5127
        %v5273 = vpack.c.bf16 %v5130, %v5129
        %v5274 = vpack.c.bf16 %v5132, %v5131
        %v5275 = vpack.c.bf16 %v5134, %v5133
        %v5276 = vpack.c.bf16 %v5136, %v5135
        %v5277 = vpack.c.bf16 %v5138, %v5137
        %v5278 = vpack.c.bf16 %v5140, %v5139
        %v5279 = vpack.c.bf16 %v5142, %v5141
        %v5280 = vpack.c.bf16 %v5144, %v5143
        %v5297 = vunpack.c.l.b16 %v5265
        %v5298 = vunpack.c.h.b16 %v5265
        %v5299 = vunpack.c.l.b16 %v5266
        %v5300 = vunpack.c.h.b16 %v5266
        %v5301 = vunpack.c.l.b16 %v5267
        %v5302 = vunpack.c.h.b16 %v5267
        %v5303 = vunpack.c.l.b16 %v5268
        %v5304 = vunpack.c.h.b16 %v5268
        %v5305 = vunpack.c.l.b16 %v5269
        %v5306 = vunpack.c.h.b16 %v5269
        %v5307 = vunpack.c.l.b16 %v5270
        %v5308 = vunpack.c.h.b16 %v5270
        %v5309 = vunpack.c.l.b16 %v5271
        %v5310 = vunpack.c.h.b16 %v5271
        %v5311 = vunpack.c.l.b16 %v5272
        %v5312 = vunpack.c.h.b16 %v5272
        %v5313 = vunpack.c.l.b16 %v5273
        %v5314 = vunpack.c.h.b16 %v5273
        %v5315 = vunpack.c.l.b16 %v5274
        %v5316 = vunpack.c.h.b16 %v5274
        %v5317 = vunpack.c.l.b16 %v5275
        %v5318 = vunpack.c.h.b16 %v5275
        %v5319 = vunpack.c.l.b16 %v5276
        %v5320 = vunpack.c.h.b16 %v5276
        %v5321 = vunpack.c.l.b16 %v5277
        %v5322 = vunpack.c.h.b16 %v5277
        %v5323 = vunpack.c.l.b16 %v5278
        %v5324 = vunpack.c.h.b16 %v5278
        %v5325 = vunpack.c.l.b16 %v5279
        %v5326 = vunpack.c.h.b16 %v5279
        %v5327 = vunpack.c.l.b16 %v5280
        %v5328 = vunpack.c.h.b16 %v5280
        %v5329 = vpack.c.b16 %v5297, %v5297
        %v5330 = vpack.c.b16 %v5298, %v5298
        %v5331 = vpack.c.b16 %v5299, %v5299
        %v5332 = vpack.c.b16 %v5300, %v5300
        %v5333 = vpack.c.b16 %v5301, %v5301
        %v5334 = vpack.c.b16 %v5302, %v5302
        %v5335 = vpack.c.b16 %v5303, %v5303
        %v5336 = vpack.c.b16 %v5304, %v5304
        %v5337 = vpack.c.b16 %v5305, %v5305
        %v5338 = vpack.c.b16 %v5306, %v5306
        %v5339 = vpack.c.b16 %v5307, %v5307
        %v5340 = vpack.c.b16 %v5308, %v5308
        %v5341 = vpack.c.b16 %v5309, %v5309
        %v5342 = vpack.c.b16 %v5310, %v5310
        %v5343 = vpack.c.b16 %v5311, %v5311
        %v5344 = vpack.c.b16 %v5312, %v5312
        %v5345 = vpack.c.b16 %v5313, %v5313
        %v5346 = vpack.c.b16 %v5314, %v5314
        %v5347 = vpack.c.b16 %v5315, %v5315
        %v5348 = vpack.c.b16 %v5316, %v5316
        %v5349 = vpack.c.b16 %v5317, %v5317
        %v5350 = vpack.c.b16 %v5318, %v5318
        %v5351 = vpack.c.b16 %v5319, %v5319
        %v5352 = vpack.c.b16 %v5320, %v5320
        %v5353 = vpack.c.b16 %v5321, %v5321
        %v5354 = vpack.c.b16 %v5322, %v5322
        %v5355 = vpack.c.b16 %v5323, %v5323
        %v5356 = vpack.c.b16 %v5324, %v5324
        %v5357 = vpack.c.b16 %v5325, %v5325
        %v5358 = vpack.c.b16 %v5326, %v5326
        %v5359 = vpack.c.b16 %v5327, %v5327
        %v5360 = vpack.c.b16 %v5328, %v5328
        %vm5361 = vsmask.f32 4368
        %vm5362 = vmor %vm5153, %vm5361
        %v5364 = vshrl.u32 %v5329, 16
        %v5366 = vrot.slane %v5364, 7
        %v5367 = vshll.u32 %v5329, 16
        %v5369 = vor.u32 %v5366, %v5367
        %v5370 = vrot.slane %v5366, 4
        %v5372 = vshrl.u32 %v5330, 16
        %v5374 = vrot.slane %v5372, 7
        %v5375 = vshll.u32 %v5330, 16
        %v5377 = vor.u32 %v5374, %v5375
        %v5378 = vsel %vm5362, %v5370, %v5377
        %v5379 = vrot.slane %v5374, 4
        %v5381 = vshrl.u32 %v5331, 16
        %v5383 = vrot.slane %v5381, 7
        %v5384 = vshll.u32 %v5331, 16
        %v5386 = vor.u32 %v5383, %v5384
        %v5387 = vrot.slane %v5383, 4
        %v5389 = vshrl.u32 %v5332, 16
        %v5391 = vrot.slane %v5389, 7
        %v5392 = vshll.u32 %v5332, 16
        %v5394 = vor.u32 %v5391, %v5392
        %v5395 = vsel %vm5362, %v5387, %v5394
        %v5396 = vrot.slane %v5391, 4
        %v5398 = vshrl.u32 %v5333, 16
        %v5400 = vrot.slane %v5398, 7
        %v5401 = vshll.u32 %v5333, 16
        %v5403 = vor.u32 %v5400, %v5401
        %v5404 = vrot.slane %v5400, 4
        %v5406 = vshrl.u32 %v5334, 16
        %v5408 = vrot.slane %v5406, 7
        %v5409 = vshll.u32 %v5334, 16
        %v5411 = vor.u32 %v5408, %v5409
        %v5412 = vsel %vm5362, %v5404, %v5411
        %v5413 = vrot.slane %v5408, 4
        %v5415 = vshrl.u32 %v5335, 16
        %v5417 = vrot.slane %v5415, 7
        %v5418 = vshll.u32 %v5335, 16
        %v5420 = vor.u32 %v5417, %v5418
        %v5421 = vrot.slane %v5417, 4
        %v5423 = vshrl.u32 %v5336, 16
        %v5425 = vrot.slane %v5423, 7
        %v5426 = vshll.u32 %v5336, 16
        %v5428 = vor.u32 %v5425, %v5426
        %v5429 = vsel %vm5362, %v5421, %v5428
        %v5430 = vrot.slane %v5425, 4
        %v5432 = vshrl.u32 %v5337, 16
        %v5434 = vrot.slane %v5432, 7
        %v5435 = vshll.u32 %v5337, 16
        %v5437 = vor.u32 %v5434, %v5435
        %v5438 = vrot.slane %v5434, 4
        %v5440 = vshrl.u32 %v5338, 16
        %v5442 = vrot.slane %v5440, 7
        %v5443 = vshll.u32 %v5338, 16
        %v5445 = vor.u32 %v5442, %v5443
        %v5446 = vsel %vm5362, %v5438, %v5445
        %v5447 = vrot.slane %v5442, 4
        %v5449 = vshrl.u32 %v5339, 16
        %v5451 = vrot.slane %v5449, 7
        %v5452 = vshll.u32 %v5339, 16
        %v5454 = vor.u32 %v5451, %v5452
        %v5455 = vrot.slane %v5451, 4
        %v5457 = vshrl.u32 %v5340, 16
        %v5459 = vrot.slane %v5457, 7
        %v5460 = vshll.u32 %v5340, 16
        %v5462 = vor.u32 %v5459, %v5460
        %v5463 = vsel %vm5362, %v5455, %v5462
        %v5464 = vrot.slane %v5459, 4
        %v5466 = vshrl.u32 %v5341, 16
        %v5468 = vrot.slane %v5466, 7
        %v5469 = vshll.u32 %v5341, 16
        %v5471 = vor.u32 %v5468, %v5469
        %v5472 = vrot.slane %v5468, 4
        %v5474 = vshrl.u32 %v5342, 16
        %v5476 = vrot.slane %v5474, 7
        %v5477 = vshll.u32 %v5342, 16
        %v5479 = vor.u32 %v5476, %v5477
        %v5480 = vsel %vm5362, %v5472, %v5479
        %v5481 = vrot.slane %v5476, 4
        %v5483 = vshrl.u32 %v5343, 16
        %v5485 = vrot.slane %v5483, 7
        %v5486 = vshll.u32 %v5343, 16
        %v5488 = vor.u32 %v5485, %v5486
        %v5489 = vrot.slane %v5485, 4
        %v5491 = vshrl.u32 %v5344, 16
        %v5493 = vrot.slane %v5491, 7
        %v5494 = vshll.u32 %v5344, 16
        %v5496 = vor.u32 %v5493, %v5494
        %v5497 = vsel %vm5362, %v5489, %v5496
        %v5498 = vrot.slane %v5493, 4
        %v5500 = vshrl.u32 %v5345, 16
        %v5502 = vrot.slane %v5500, 7
        %v5503 = vshll.u32 %v5345, 16
        %v5505 = vor.u32 %v5502, %v5503
        %v5506 = vrot.slane %v5502, 4
        %v5508 = vshrl.u32 %v5346, 16
        %v5510 = vrot.slane %v5508, 7
        %v5511 = vshll.u32 %v5346, 16
        %v5513 = vor.u32 %v5510, %v5511
        %v5514 = vsel %vm5362, %v5506, %v5513
        %v5515 = vrot.slane %v5510, 4
        %v5517 = vshrl.u32 %v5347, 16
        %v5519 = vrot.slane %v5517, 7
        %v5520 = vshll.u32 %v5347, 16
        %v5522 = vor.u32 %v5519, %v5520
        %v5523 = vrot.slane %v5519, 4
        %v5525 = vshrl.u32 %v5348, 16
        %v5527 = vrot.slane %v5525, 7
        %v5528 = vshll.u32 %v5348, 16
        %v5530 = vor.u32 %v5527, %v5528
        %v5531 = vsel %vm5362, %v5523, %v5530
        %v5532 = vrot.slane %v5527, 4
        %v5534 = vshrl.u32 %v5349, 16
        %v5536 = vrot.slane %v5534, 7
        %v5537 = vshll.u32 %v5349, 16
        %v5539 = vor.u32 %v5536, %v5537
        %v5540 = vrot.slane %v5536, 4
        %v5542 = vshrl.u32 %v5350, 16
        %v5544 = vrot.slane %v5542, 7
        %v5545 = vshll.u32 %v5350, 16
        %v5547 = vor.u32 %v5544, %v5545
        %v5548 = vsel %vm5362, %v5540, %v5547
        %v5549 = vrot.slane %v5544, 4
        %v5551 = vshrl.u32 %v5351, 16
        %v5553 = vrot.slane %v5551, 7
        %v5554 = vshll.u32 %v5351, 16
        %v5556 = vor.u32 %v5553, %v5554
        %v5557 = vrot.slane %v5553, 4
        %v5559 = vshrl.u32 %v5352, 16
        %v5561 = vrot.slane %v5559, 7
        %v5562 = vshll.u32 %v5352, 16
        %v5564 = vor.u32 %v5561, %v5562
        %v5565 = vsel %vm5362, %v5557, %v5564
        %v5566 = vrot.slane %v5561, 4
        %v5568 = vshrl.u32 %v5353, 16
        %v5570 = vrot.slane %v5568, 7
        %v5571 = vshll.u32 %v5353, 16
        %v5573 = vor.u32 %v5570, %v5571
        %v5574 = vrot.slane %v5570, 4
        %v5576 = vshrl.u32 %v5354, 16
        %v5578 = vrot.slane %v5576, 7
        %v5579 = vshll.u32 %v5354, 16
        %v5581 = vor.u32 %v5578, %v5579
        %v5582 = vsel %vm5362, %v5574, %v5581
        %v5583 = vrot.slane %v5578, 4
        %v5585 = vshrl.u32 %v5355, 16
        %v5587 = vrot.slane %v5585, 7
        %v5588 = vshll.u32 %v5355, 16
        %v5590 = vor.u32 %v5587, %v5588
        %v5591 = vrot.slane %v5587, 4
        %v5593 = vshrl.u32 %v5356, 16
        %v5595 = vrot.slane %v5593, 7
        %v5596 = vshll.u32 %v5356, 16
        %v5598 = vor.u32 %v5595, %v5596
        %v5599 = vsel %vm5362, %v5591, %v5598
        %v5600 = vrot.slane %v5595, 4
        %v5602 = vshrl.u32 %v5357, 16
        %v5604 = vrot.slane %v5602, 7
        %v5605 = vshll.u32 %v5357, 16
        %v5607 = vor.u32 %v5604, %v5605
        %v5608 = vrot.slane %v5604, 4
        %v5610 = vshrl.u32 %v5358, 16
        %v5612 = vrot.slane %v5610, 7
        %v5613 = vshll.u32 %v5358, 16
        %v5615 = vor.u32 %v5612, %v5613
        %v5616 = vsel %vm5362, %v5608, %v5615
        %v5617 = vrot.slane %v5612, 4
        %v5619 = vshrl.u32 %v5359, 16
        %v5621 = vrot.slane %v5619, 7
        %v5622 = vshll.u32 %v5359, 16
        %v5624 = vor.u32 %v5621, %v5622
        %v5625 = vrot.slane %v5621, 4
        %v5627 = vshrl.u32 %v5360, 16
        %v5629 = vrot.slane %v5627, 7
        %v5630 = vshll.u32 %v5360, 16
        %v5632 = vor.u32 %v5629, %v5630
        %v5633 = vsel %vm5362, %v5625, %v5632
        %v5634 = vrot.slane %v5629, 4
        %s5683 = scalar_lea.vmem [#allocation2], 12
        %vm5684 = vcmask 1043456
        %vm5685 = vmand %vm5684, %vm5209
        %v5686 = vld [vmem:[%s5683] sm:$0xf]
        %v5687 = vsel %vm5685, %v5369, %v5686
        %5688 = vst [vmem:[%s5683] sm:$0xf] %v5687
        %5689 = vst [vmem:[%s5683 + $0x4] sm:$0xf] %v5378
        %v5690 = vld [vmem:[%s5683 + $0x8] sm:$0x1]
        %v5691 = vsel %vm5154, %v5379, %v5690
        %5692 = vst [vmem:[%s5683 + $0x8] sm:$0x1] %v5691
        %v5693 = vld [vmem:[%s5683 + $0xc] sm:$0xf]
        %v5694 = vsel %vm5685, %v5386, %v5693
        %5695 = vst [vmem:[%s5683 + $0xc] sm:$0xf] %v5694
        %5696 = vst [vmem:[%s5683 + $0x10] sm:$0xf] %v5395
        %v5697 = vld [vmem:[%s5683 + $0x14] sm:$0x1]
        %v5698 = vsel %vm5154, %v5396, %v5697
        %5699 = vst [vmem:[%s5683 + $0x14] sm:$0x1] %v5698
        %v5700 = vld [vmem:[%s5683 + $0x18] sm:$0xf]
        %v5701 = vsel %vm5685, %v5403, %v5700
        %5702 = vst [vmem:[%s5683 + $0x18] sm:$0xf] %v5701
        %5703 = vst [vmem:[%s5683 + $0x1c] sm:$0xf] %v5412
        %v5704 = vld [vmem:[%s5683 + $0x20] sm:$0x1]
        %v5705 = vsel %vm5154, %v5413, %v5704
        %5706 = vst [vmem:[%s5683 + $0x20] sm:$0x1] %v5705
        %v5707 = vld [vmem:[%s5683 + $0x24] sm:$0xf]
        %v5708 = vsel %vm5685, %v5420, %v5707
        %5709 = vst [vmem:[%s5683 + $0x24] sm:$0xf] %v5708
        %5710 = vst [vmem:[%s5683 + $0x28] sm:$0xf] %v5429
        %v5711 = vld [vmem:[%s5683 + $0x2c] sm:$0x1]
        %v5712 = vsel %vm5154, %v5430, %v5711
        %5713 = vst [vmem:[%s5683 + $0x2c] sm:$0x1] %v5712
        %v5714 = vld [vmem:[%s5683 + $0x30] sm:$0xf]
        %v5715 = vsel %vm5685, %v5437, %v5714
        %5716 = vst [vmem:[%s5683 + $0x30] sm:$0xf] %v5715
        %5717 = vst [vmem:[%s5683 + $0x34] sm:$0xf] %v5446
        %v5718 = vld [vmem:[%s5683 + $0x38] sm:$0x1]
        %v5719 = vsel %vm5154, %v5447, %v5718
        %5720 = vst [vmem:[%s5683 + $0x38] sm:$0x1] %v5719
        %v5721 = vld [vmem:[%s5683 + $0x3c] sm:$0xf]
        %v5722 = vsel %vm5685, %v5454, %v5721
        %5723 = vst [vmem:[%s5683 + $0x3c] sm:$0xf] %v5722
        %5724 = vst [vmem:[%s5683 + $0x40] sm:$0xf] %v5463
        %v5725 = vld [vmem:[%s5683 + $0x44] sm:$0x1]
        %v5726 = vsel %vm5154, %v5464, %v5725
        %5727 = vst [vmem:[%s5683 + $0x44] sm:$0x1] %v5726
        %v5728 = vld [vmem:[%s5683 + $0x48] sm:$0xf]
        %v5729 = vsel %vm5685, %v5471, %v5728
        %5730 = vst [vmem:[%s5683 + $0x48] sm:$0xf] %v5729
        %5731 = vst [vmem:[%s5683 + $0x4c] sm:$0xf] %v5480
        %v5732 = vld [vmem:[%s5683 + $0x50] sm:$0x1]
        %v5733 = vsel %vm5154, %v5481, %v5732
        %5734 = vst [vmem:[%s5683 + $0x50] sm:$0x1] %v5733
        %v5735 = vld [vmem:[%s5683 + $0x54] sm:$0xf]
        %v5736 = vsel %vm5685, %v5488, %v5735
        %5737 = vst [vmem:[%s5683 + $0x54] sm:$0xf] %v5736
        %5738 = vst [vmem:[%s5683 + $0x58] sm:$0xf] %v5497
        %v5739 = vld [vmem:[%s5683 + $0x5c] sm:$0x1]
        %v5740 = vsel %vm5154, %v5498, %v5739
        %5741 = vst [vmem:[%s5683 + $0x5c] sm:$0x1] %v5740
        %v5742 = vld [vmem:[%s5683 + $0x60] sm:$0xf]
        %v5743 = vsel %vm5685, %v5505, %v5742
        %5744 = vst [vmem:[%s5683 + $0x60] sm:$0xf] %v5743
        %5745 = vst [vmem:[%s5683 + $0x64] sm:$0xf] %v5514
        %v5746 = vld [vmem:[%s5683 + $0x68] sm:$0x1]
        %v5747 = vsel %vm5154, %v5515, %v5746
        %5748 = vst [vmem:[%s5683 + $0x68] sm:$0x1] %v5747
        %v5749 = vld [vmem:[%s5683 + $0x6c] sm:$0xf]
        %v5750 = vsel %vm5685, %v5522, %v5749
        %5751 = vst [vmem:[%s5683 + $0x6c] sm:$0xf] %v5750
        %5752 = vst [vmem:[%s5683 + $0x70] sm:$0xf] %v5531
        %v5753 = vld [vmem:[%s5683 + $0x74] sm:$0x1]
        %v5754 = vsel %vm5154, %v5532, %v5753
        %5755 = vst [vmem:[%s5683 + $0x74] sm:$0x1] %v5754
        %v5756 = vld [vmem:[%s5683 + $0x78] sm:$0xf]
        %v5757 = vsel %vm5685, %v5539, %v5756
        %5758 = vst [vmem:[%s5683 + $0x78] sm:$0xf] %v5757
        %5759 = vst [vmem:[%s5683 + $0x7c] sm:$0xf] %v5548
        %v5760 = vld [vmem:[%s5683 + $0x80] sm:$0x1]
        %v5761 = vsel %vm5154, %v5549, %v5760
        %5762 = vst [vmem:[%s5683 + $0x80] sm:$0x1] %v5761
        %v5763 = vld [vmem:[%s5683 + $0x84] sm:$0xf]
        %v5764 = vsel %vm5685, %v5556, %v5763
        %5765 = vst [vmem:[%s5683 + $0x84] sm:$0xf] %v5764
        %5766 = vst [vmem:[%s5683 + $0x88] sm:$0xf] %v5565
        %v5767 = vld [vmem:[%s5683 + $0x8c] sm:$0x1]
        %v5768 = vsel %vm5154, %v5566, %v5767
        %5769 = vst [vmem:[%s5683 + $0x8c] sm:$0x1] %v5768
        %v5770 = vld [vmem:[%s5683 + $0x90] sm:$0xf]
        %v5771 = vsel %vm5685, %v5573, %v5770
        %5772 = vst [vmem:[%s5683 + $0x90] sm:$0xf] %v5771
        %5773 = vst [vmem:[%s5683 + $0x94] sm:$0xf] %v5582
        %v5774 = vld [vmem:[%s5683 + $0x98] sm:$0x1]
        %v5775 = vsel %vm5154, %v5583, %v5774
        %5776 = vst [vmem:[%s5683 + $0x98] sm:$0x1] %v5775
        %v5777 = vld [vmem:[%s5683 + $0x9c] sm:$0xf]
        %v5778 = vsel %vm5685, %v5590, %v5777
        %5779 = vst [vmem:[%s5683 + $0x9c] sm:$0xf] %v5778
        %5780 = vst [vmem:[%s5683 + $0xa0] sm:$0xf] %v5599
        %v5781 = vld [vmem:[%s5683 + $0xa4] sm:$0x1]
        %v5782 = vsel %vm5154, %v5600, %v5781
        %5783 = vst [vmem:[%s5683 + $0xa4] sm:$0x1] %v5782
        %v5784 = vld [vmem:[%s5683 + $0xa8] sm:$0xf]
        %v5785 = vsel %vm5685, %v5607, %v5784
        %5786 = vst [vmem:[%s5683 + $0xa8] sm:$0xf] %v5785
        %5787 = vst [vmem:[%s5683 + $0xac] sm:$0xf] %v5616
        %v5788 = vld [vmem:[%s5683 + $0xb0] sm:$0x1]
        %v5789 = vsel %vm5154, %v5617, %v5788
        %5790 = vst [vmem:[%s5683 + $0xb0] sm:$0x1] %v5789
        %v5791 = vld [vmem:[%s5683 + $0xb4] sm:$0xf]
        %v5792 = vsel %vm5685, %v5624, %v5791
        %5793 = vst [vmem:[%s5683 + $0xb4] sm:$0xf] %v5792
        %5794 = vst [vmem:[%s5683 + $0xb8] sm:$0xf] %v5633
        %v5795 = vld [vmem:[%s5683 + $0xbc] sm:$0x1]
        %v5796 = vsel %vm5154, %v5634, %v5795
        %5797 = vst [vmem:[%s5683 + $0xbc] sm:$0x1] %v5796
        %v5798 = vld [vmem:[#allocation2] sm:$0xf]
        %v5799 = vld [vmem:[#allocation2 + $0x4] sm:$0xf]
        %v5800 = vld [vmem:[#allocation2 + $0xc] sm:$0xf]
        %v5801 = vld [vmem:[#allocation2 + $0x10] sm:$0xf]
        %v5802 = vld [vmem:[#allocation2 + $0x18] sm:$0xf]
        %v5803 = vld [vmem:[#allocation2 + $0x1c] sm:$0xf]
        %v5804 = vld [vmem:[#allocation2 + $0x24] sm:$0xf]
        %v5805 = vld [vmem:[#allocation2 + $0x28] sm:$0xf]
        %v5806 = vld [vmem:[#allocation2 + $0x30] sm:$0xf]
        %v5807 = vld [vmem:[#allocation2 + $0x34] sm:$0xf]
        %v5808 = vld [vmem:[#allocation2 + $0x3c] sm:$0xf]
        %v5809 = vld [vmem:[#allocation2 + $0x40] sm:$0xf]
        %v5810 = vld [vmem:[#allocation2 + $0x48] sm:$0xf]
        %v5811 = vld [vmem:[#allocation2 + $0x4c] sm:$0xf]
        %v5812 = vld [vmem:[#allocation2 + $0x54] sm:$0xf]
        %v5813 = vld [vmem:[#allocation2 + $0x58] sm:$0xf]
        %v5814 = vld [vmem:[#allocation2 + $0x60] sm:$0xf]
        %v5815 = vld [vmem:[#allocation2 + $0x64] sm:$0xf]
        %v5816 = vld [vmem:[#allocation2 + $0x6c] sm:$0xf]
        %v5817 = vld [vmem:[#allocation2 + $0x70] sm:$0xf]
        %v5818 = vld [vmem:[#allocation2 + $0x78] sm:$0xf]
        %v5819 = vld [vmem:[#allocation2 + $0x7c] sm:$0xf]
        %v5820 = vld [vmem:[#allocation2 + $0x84] sm:$0xf]
        %v5821 = vld [vmem:[#allocation2 + $0x88] sm:$0xf]
        %v5822 = vld [vmem:[#allocation2 + $0x90] sm:$0xf]
        %v5823 = vld [vmem:[#allocation2 + $0x94] sm:$0xf]
        %v5824 = vld [vmem:[#allocation2 + $0x9c] sm:$0xf]
        %v5825 = vld [vmem:[#allocation2 + $0xa0] sm:$0xf]
        %v5826 = vld [vmem:[#allocation2 + $0xa8] sm:$0xf]
        %v5827 = vld [vmem:[#allocation2 + $0xac] sm:$0xf]
        %v5828 = vld [vmem:[#allocation2 + $0xb4] sm:$0xf]
        %v5829 = vld [vmem:[#allocation2 + $0xb8] sm:$0xf]
        %v5830 = vld [vmem:[#allocation8] sm:$0xf]
        %v5831 = vld [vmem:[#allocation8 + $0x4] sm:$0xf]
        %v5832 = vld [vmem:[#allocation8 + $0x8] sm:$0xf]
        %v5833 = vld [vmem:[#allocation8 + $0xc] sm:$0xf]
        %v5834 = vld [vmem:[#allocation8 + $0x10] sm:$0xf]
        %v5835 = vld [vmem:[#allocation8 + $0x14] sm:$0xf]
        %v5836 = vld [vmem:[#allocation8 + $0x18] sm:$0xf]
        %v5837 = vld [vmem:[#allocation8 + $0x1c] sm:$0xf]
        %v5838 = vld [vmem:[#allocation8 + $0x20] sm:$0xf]
        %v5839 = vld [vmem:[#allocation8 + $0x24] sm:$0xf]
        %v5840 = vld [vmem:[#allocation8 + $0x28] sm:$0xf]
        %v5841 = vld [vmem:[#allocation8 + $0x2c] sm:$0xf]
        %v5842 = vld [vmem:[#allocation8 + $0x30] sm:$0xf]
        %v5843 = vld [vmem:[#allocation8 + $0x34] sm:$0xf]
        %v5844 = vld [vmem:[#allocation8 + $0x38] sm:$0xf]
        %v5845 = vld [vmem:[#allocation8 + $0x3c] sm:$0xf]
        %v5846 = vld [vmem:[#allocation2 + $0x8] sm:$0x1]
        %v5847 = vld [vmem:[#allocation2 + $0x14] sm:$0x1]
        %v5848 = vld [vmem:[#allocation2 + $0x20] sm:$0x1]
        %v5849 = vld [vmem:[#allocation2 + $0x2c] sm:$0x1]
        %v5850 = vld [vmem:[#allocation2 + $0x38] sm:$0x1]
        %v5851 = vld [vmem:[#allocation2 + $0x44] sm:$0x1]
        %v5852 = vld [vmem:[#allocation2 + $0x50] sm:$0x1]
        %v5853 = vld [vmem:[#allocation2 + $0x5c] sm:$0x1]
        %v5854 = vld [vmem:[#allocation2 + $0x68] sm:$0x1]
        %v5855 = vld [vmem:[#allocation2 + $0x74] sm:$0x1]
        %v5856 = vld [vmem:[#allocation2 + $0x80] sm:$0x1]
        %v5857 = vld [vmem:[#allocation2 + $0x8c] sm:$0x1]
        %v5858 = vld [vmem:[#allocation2 + $0x98] sm:$0x1]
        %v5859 = vld [vmem:[#allocation2 + $0xa4] sm:$0x1]
        %v5860 = vld [vmem:[#allocation2 + $0xb0] sm:$0x1]
        %v5861 = vld [vmem:[#allocation2 + $0xbc] sm:$0x1]
        %v5863 = vshrl.u32 %v5798, 16
        %v5865 = vrot.slane %v5863, 4
        %v5866 = vshll.u32 %v5798, 16
        %v5868 = vrot.slane %v5866, 5
        %v5869 = vor.u32 %v5865, %v5868
        %v5870 = vrot.slane %v5869, 4
        %v5872 = vshll.u32 %v5799, 16
        %v5874 = vrot.slane %v5872, 5
        %v5875 = vsel %vm339, %v5870, %v5874
        %v5876 = vshrl.u32 %v5799, 16
        %v5878 = vrot.slane %v5876, 4
        %v5879 = vor.u32 %v5878, %v5874
        %v5880 = vrot.slane %v5879, 4
        %v5882 = vshll.u32 %v5846, 16
        %v5884 = vrot.slane %v5882, 5
        %v5885 = vsel %vm339, %v5880, %v5884
        %v5887 = vshrl.u32 %v5800, 16
        %v5889 = vrot.slane %v5887, 4
        %v5890 = vshll.u32 %v5800, 16
        %v5892 = vrot.slane %v5890, 5
        %v5893 = vor.u32 %v5889, %v5892
        %v5894 = vrot.slane %v5893, 4
        %v5896 = vshll.u32 %v5801, 16
        %v5898 = vrot.slane %v5896, 5
        %v5899 = vsel %vm339, %v5894, %v5898
        %v5900 = vshrl.u32 %v5801, 16
        %v5902 = vrot.slane %v5900, 4
        %v5903 = vor.u32 %v5902, %v5898
        %v5904 = vrot.slane %v5903, 4
        %v5906 = vshll.u32 %v5847, 16
        %v5908 = vrot.slane %v5906, 5
        %v5909 = vsel %vm339, %v5904, %v5908
        %v5911 = vshrl.u32 %v5802, 16
        %v5913 = vrot.slane %v5911, 4
        %v5914 = vshll.u32 %v5802, 16
        %v5916 = vrot.slane %v5914, 5
        %v5917 = vor.u32 %v5913, %v5916
        %v5918 = vrot.slane %v5917, 4
        %v5920 = vshll.u32 %v5803, 16
        %v5922 = vrot.slane %v5920, 5
        %v5923 = vsel %vm339, %v5918, %v5922
        %v5924 = vshrl.u32 %v5803, 16
        %v5926 = vrot.slane %v5924, 4
        %v5927 = vor.u32 %v5926, %v5922
        %v5928 = vrot.slane %v5927, 4
        %v5930 = vshll.u32 %v5848, 16
        %v5932 = vrot.slane %v5930, 5
        %v5933 = vsel %vm339, %v5928, %v5932
        %v5935 = vshrl.u32 %v5804, 16
        %v5937 = vrot.slane %v5935, 4
        %v5938 = vshll.u32 %v5804, 16
        %v5940 = vrot.slane %v5938, 5
        %v5941 = vor.u32 %v5937, %v5940
        %v5942 = vrot.slane %v5941, 4
        %v5944 = vshll.u32 %v5805, 16
        %v5946 = vrot.slane %v5944, 5
        %v5947 = vsel %vm339, %v5942, %v5946
        %v5948 = vshrl.u32 %v5805, 16
        %v5950 = vrot.slane %v5948, 4
        %v5951 = vor.u32 %v5950, %v5946
        %v5952 = vrot.slane %v5951, 4
        %v5954 = vshll.u32 %v5849, 16
        %v5956 = vrot.slane %v5954, 5
        %v5957 = vsel %vm339, %v5952, %v5956
        %v5959 = vshrl.u32 %v5806, 16
        %v5961 = vrot.slane %v5959, 4
        %v5962 = vshll.u32 %v5806, 16
        %v5964 = vrot.slane %v5962, 5
        %v5965 = vor.u32 %v5961, %v5964
        %v5966 = vrot.slane %v5965, 4
        %v5968 = vshll.u32 %v5807, 16
        %v5970 = vrot.slane %v5968, 5
        %v5971 = vsel %vm339, %v5966, %v5970
        %v5972 = vshrl.u32 %v5807, 16
        %v5974 = vrot.slane %v5972, 4
        %v5975 = vor.u32 %v5974, %v5970
        %v5976 = vrot.slane %v5975, 4
        %v5978 = vshll.u32 %v5850, 16
        %v5980 = vrot.slane %v5978, 5
        %v5981 = vsel %vm339, %v5976, %v5980
        %v5983 = vshrl.u32 %v5808, 16
        %v5985 = vrot.slane %v5983, 4
        %v5986 = vshll.u32 %v5808, 16
        %v5988 = vrot.slane %v5986, 5
        %v5989 = vor.u32 %v5985, %v5988
        %v5990 = vrot.slane %v5989, 4
        %v5992 = vshll.u32 %v5809, 16
        %v5994 = vrot.slane %v5992, 5
        %v5995 = vsel %vm339, %v5990, %v5994
        %v5996 = vshrl.u32 %v5809, 16
        %v5998 = vrot.slane %v5996, 4
        %v5999 = vor.u32 %v5998, %v5994
        %v6000 = vrot.slane %v5999, 4
        %v6002 = vshll.u32 %v5851, 16
        %v6004 = vrot.slane %v6002, 5
        %v6005 = vsel %vm339, %v6000, %v6004
        %v6007 = vshrl.u32 %v5810, 16
        %v6009 = vrot.slane %v6007, 4
        %v6010 = vshll.u32 %v5810, 16
        %v6012 = vrot.slane %v6010, 5
        %v6013 = vor.u32 %v6009, %v6012
        %v6014 = vrot.slane %v6013, 4
        %v6016 = vshll.u32 %v5811, 16
        %v6018 = vrot.slane %v6016, 5
        %v6019 = vsel %vm339, %v6014, %v6018
        %v6020 = vshrl.u32 %v5811, 16
        %v6022 = vrot.slane %v6020, 4
        %v6023 = vor.u32 %v6022, %v6018
        %v6024 = vrot.slane %v6023, 4
        %v6026 = vshll.u32 %v5852, 16
        %v6028 = vrot.slane %v6026, 5
        %v6029 = vsel %vm339, %v6024, %v6028
        %v6031 = vshrl.u32 %v5812, 16
        %v6033 = vrot.slane %v6031, 4
        %v6034 = vshll.u32 %v5812, 16
        %v6036 = vrot.slane %v6034, 5
        %v6037 = vor.u32 %v6033, %v6036
        %v6038 = vrot.slane %v6037, 4
        %v6040 = vshll.u32 %v5813, 16
        %v6042 = vrot.slane %v6040, 5
        %v6043 = vsel %vm339, %v6038, %v6042
        %v6044 = vshrl.u32 %v5813, 16
        %v6046 = vrot.slane %v6044, 4
        %v6047 = vor.u32 %v6046, %v6042
        %v6048 = vrot.slane %v6047, 4
        %v6050 = vshll.u32 %v5853, 16
        %v6052 = vrot.slane %v6050, 5
        %v6053 = vsel %vm339, %v6048, %v6052
        %v6055 = vshrl.u32 %v5814, 16
        %v6057 = vrot.slane %v6055, 4
        %v6058 = vshll.u32 %v5814, 16
        %v6060 = vrot.slane %v6058, 5
        %v6061 = vor.u32 %v6057, %v6060
        %v6062 = vrot.slane %v6061, 4
        %v6064 = vshll.u32 %v5815, 16
        %v6066 = vrot.slane %v6064, 5
        %v6067 = vsel %vm339, %v6062, %v6066
        %v6068 = vshrl.u32 %v5815, 16
        %v6070 = vrot.slane %v6068, 4
        %v6071 = vor.u32 %v6070, %v6066
        %v6072 = vrot.slane %v6071, 4
        %v6074 = vshll.u32 %v5854, 16
        %v6076 = vrot.slane %v6074, 5
        %v6077 = vsel %vm339, %v6072, %v6076
        %v6079 = vshrl.u32 %v5816, 16
        %v6081 = vrot.slane %v6079, 4
        %v6082 = vshll.u32 %v5816, 16
        %v6084 = vrot.slane %v6082, 5
        %v6085 = vor.u32 %v6081, %v6084
        %v6086 = vrot.slane %v6085, 4
        %v6088 = vshll.u32 %v5817, 16
        %v6090 = vrot.slane %v6088, 5
        %v6091 = vsel %vm339, %v6086, %v6090
        %v6092 = vshrl.u32 %v5817, 16
        %v6094 = vrot.slane %v6092, 4
        %v6095 = vor.u32 %v6094, %v6090
        %v6096 = vrot.slane %v6095, 4
        %v6098 = vshll.u32 %v5855, 16
        %v6100 = vrot.slane %v6098, 5
        %v6101 = vsel %vm339, %v6096, %v6100
        %v6103 = vshrl.u32 %v5818, 16
        %v6105 = vrot.slane %v6103, 4
        %v6106 = vshll.u32 %v5818, 16
        %v6108 = vrot.slane %v6106, 5
        %v6109 = vor.u32 %v6105, %v6108
        %v6110 = vrot.slane %v6109, 4
        %v6112 = vshll.u32 %v5819, 16
        %v6114 = vrot.slane %v6112, 5
        %v6115 = vsel %vm339, %v6110, %v6114
        %v6116 = vshrl.u32 %v5819, 16
        %v6118 = vrot.slane %v6116, 4
        %v6119 = vor.u32 %v6118, %v6114
        %v6120 = vrot.slane %v6119, 4
        %v6122 = vshll.u32 %v5856, 16
        %v6124 = vrot.slane %v6122, 5
        %v6125 = vsel %vm339, %v6120, %v6124
        %v6127 = vshrl.u32 %v5820, 16
        %v6129 = vrot.slane %v6127, 4
        %v6130 = vshll.u32 %v5820, 16
        %v6132 = vrot.slane %v6130, 5
        %v6133 = vor.u32 %v6129, %v6132
        %v6134 = vrot.slane %v6133, 4
        %v6136 = vshll.u32 %v5821, 16
        %v6138 = vrot.slane %v6136, 5
        %v6139 = vsel %vm339, %v6134, %v6138
        %v6140 = vshrl.u32 %v5821, 16
        %v6142 = vrot.slane %v6140, 4
        %v6143 = vor.u32 %v6142, %v6138
        %v6144 = vrot.slane %v6143, 4
        %v6146 = vshll.u32 %v5857, 16
        %v6148 = vrot.slane %v6146, 5
        %v6149 = vsel %vm339, %v6144, %v6148
        %v6151 = vshrl.u32 %v5822, 16
        %v6153 = vrot.slane %v6151, 4
        %v6154 = vshll.u32 %v5822, 16
        %v6156 = vrot.slane %v6154, 5
        %v6157 = vor.u32 %v6153, %v6156
        %v6158 = vrot.slane %v6157, 4
        %v6160 = vshll.u32 %v5823, 16
        %v6162 = vrot.slane %v6160, 5
        %v6163 = vsel %vm339, %v6158, %v6162
        %v6164 = vshrl.u32 %v5823, 16
        %v6166 = vrot.slane %v6164, 4
        %v6167 = vor.u32 %v6166, %v6162
        %v6168 = vrot.slane %v6167, 4
        %v6170 = vshll.u32 %v5858, 16
        %v6172 = vrot.slane %v6170, 5
        %v6173 = vsel %vm339, %v6168, %v6172
        %v6175 = vshrl.u32 %v5824, 16
        %v6177 = vrot.slane %v6175, 4
        %v6178 = vshll.u32 %v5824, 16
        %v6180 = vrot.slane %v6178, 5
        %v6181 = vor.u32 %v6177, %v6180
        %v6182 = vrot.slane %v6181, 4
        %v6184 = vshll.u32 %v5825, 16
        %v6186 = vrot.slane %v6184, 5
        %v6187 = vsel %vm339, %v6182, %v6186
        %v6188 = vshrl.u32 %v5825, 16
        %v6190 = vrot.slane %v6188, 4
        %v6191 = vor.u32 %v6190, %v6186
        %v6192 = vrot.slane %v6191, 4
        %v6194 = vshll.u32 %v5859, 16
        %v6196 = vrot.slane %v6194, 5
        %v6197 = vsel %vm339, %v6192, %v6196
        %v6199 = vshrl.u32 %v5826, 16
        %v6201 = vrot.slane %v6199, 4
        %v6202 = vshll.u32 %v5826, 16
        %v6204 = vrot.slane %v6202, 5
        %v6205 = vor.u32 %v6201, %v6204
        %v6206 = vrot.slane %v6205, 4
        %v6208 = vshll.u32 %v5827, 16
        %v6210 = vrot.slane %v6208, 5
        %v6211 = vsel %vm339, %v6206, %v6210
        %v6212 = vshrl.u32 %v5827, 16
        %v6214 = vrot.slane %v6212, 4
        %v6215 = vor.u32 %v6214, %v6210
        %v6216 = vrot.slane %v6215, 4
        %v6218 = vshll.u32 %v5860, 16
        %v6220 = vrot.slane %v6218, 5
        %v6221 = vsel %vm339, %v6216, %v6220
        %v6223 = vshrl.u32 %v5828, 16
        %v6225 = vrot.slane %v6223, 4
        %v6226 = vshll.u32 %v5828, 16
        %v6228 = vrot.slane %v6226, 5
        %v6229 = vor.u32 %v6225, %v6228
        %v6230 = vrot.slane %v6229, 4
        %v6232 = vshll.u32 %v5829, 16
        %v6234 = vrot.slane %v6232, 5
        %v6235 = vsel %vm339, %v6230, %v6234
        %v6236 = vshrl.u32 %v5829, 16
        %v6238 = vrot.slane %v6236, 4
        %v6239 = vor.u32 %v6238, %v6234
        %v6240 = vrot.slane %v6239, 4
        %v6242 = vshll.u32 %v5861, 16
        %v6244 = vrot.slane %v6242, 5
        %v6245 = vsel %vm339, %v6240, %v6244
        %v6246 = vld [vmem:[#allocation8 + $0x40] sm:$0xf]
        %v6247 = vld [vmem:[#allocation8 + $0x44] sm:$0xf]
        %v6248 = vld [vmem:[#allocation8 + $0x48] sm:$0xf]
        %v6249 = vld [vmem:[#allocation8 + $0x4c] sm:$0xf]
        %v6250 = vld [vmem:[#allocation8 + $0x50] sm:$0xf]
        %v6251 = vld [vmem:[#allocation8 + $0x54] sm:$0xf]
        %v6252 = vld [vmem:[#allocation8 + $0x58] sm:$0xf]
        %v6253 = vld [vmem:[#allocation8 + $0x5c] sm:$0xf]
        %v6254 = vld [vmem:[#allocation8 + $0x60] sm:$0xf]
        %v6255 = vld [vmem:[#allocation8 + $0x64] sm:$0xf]
        %v6256 = vld [vmem:[#allocation8 + $0x68] sm:$0xf]
        %v6257 = vld [vmem:[#allocation8 + $0x6c] sm:$0xf]
        %v6258 = vld [vmem:[#allocation8 + $0x70] sm:$0xf]
        %v6259 = vld [vmem:[#allocation8 + $0x74] sm:$0xf]
        %v6260 = vld [vmem:[#allocation8 + $0x78] sm:$0xf]
        %v6261 = vld [vmem:[#allocation8 + $0x7c] sm:$0xf]
        %v6262 = vunpack.c.l.b16 %v5875
        %v6263 = vunpack.c.l.b16 %v5885
        %v6264 = vunpack.c.l.b16 %v5899
        %v6265 = vunpack.c.l.b16 %v5909
        %v6266 = vunpack.c.l.b16 %v5923
        %v6267 = vunpack.c.l.b16 %v5933
        %v6268 = vunpack.c.l.b16 %v5947
        %v6269 = vunpack.c.l.b16 %v5957
        %v6270 = vunpack.c.l.b16 %v5971
        %v6271 = vunpack.c.l.b16 %v5981
        %v6272 = vunpack.c.l.b16 %v5995
        %v6273 = vunpack.c.l.b16 %v6005
        %v6274 = vunpack.c.l.b16 %v6019
        %v6275 = vunpack.c.l.b16 %v6029
        %v6276 = vunpack.c.l.b16 %v6043
        %v6277 = vunpack.c.l.b16 %v6053
        %v6278 = vunpack.c.l.b16 %v6067
        %v6279 = vunpack.c.l.b16 %v6077
        %v6280 = vunpack.c.l.b16 %v6091
        %v6281 = vunpack.c.l.b16 %v6101
        %v6282 = vunpack.c.l.b16 %v6115
        %v6283 = vunpack.c.l.b16 %v6125
        %v6284 = vunpack.c.l.b16 %v6139
        %v6285 = vunpack.c.l.b16 %v6149
        %v6286 = vunpack.c.l.b16 %v6163
        %v6287 = vunpack.c.l.b16 %v6173
        %v6288 = vunpack.c.l.b16 %v6187
        %v6289 = vunpack.c.l.b16 %v6197
        %v6290 = vunpack.c.l.b16 %v6211
        %v6291 = vunpack.c.l.b16 %v6221
        %v6292 = vunpack.c.l.b16 %v6235
        %v6293 = vunpack.c.l.b16 %v6245
        %v6294 = vpack.c.b16 %v6263, %v6262
        %v6295 = vpack.c.b16 %v6265, %v6264
        %v6296 = vpack.c.b16 %v6267, %v6266
        %v6297 = vpack.c.b16 %v6269, %v6268
        %v6298 = vpack.c.b16 %v6271, %v6270
        %v6299 = vpack.c.b16 %v6273, %v6272
        %v6300 = vpack.c.b16 %v6275, %v6274
        %v6301 = vpack.c.b16 %v6277, %v6276
        %v6302 = vpack.c.b16 %v6279, %v6278
        %v6303 = vpack.c.b16 %v6281, %v6280
        %v6304 = vpack.c.b16 %v6283, %v6282
        %v6305 = vpack.c.b16 %v6285, %v6284
        %v6306 = vpack.c.b16 %v6287, %v6286
        %v6307 = vpack.c.b16 %v6289, %v6288
        %v6308 = vpack.c.b16 %v6291, %v6290
        %v6309 = vpack.c.b16 %v6293, %v6292
        %v6342 = vunpack.c.l.b16 %v6246
        %v6343 = vunpack.c.l.b16 %v6247
        %v6344 = vunpack.c.l.b16 %v6248
        %v6345 = vunpack.c.l.b16 %v6249
        %v6346 = vunpack.c.l.b16 %v6250
        %v6347 = vunpack.c.l.b16 %v6251
        %v6348 = vunpack.c.l.b16 %v6252
        %v6349 = vunpack.c.l.b16 %v6253
        %v6350 = vunpack.c.l.b16 %v6254
        %v6351 = vunpack.c.l.b16 %v6255
        %v6352 = vunpack.c.l.b16 %v6256
        %v6353 = vunpack.c.l.b16 %v6257
        %v6354 = vunpack.c.l.b16 %v6258
        %v6355 = vunpack.c.l.b16 %v6259
        %v6356 = vunpack.c.l.b16 %v6260
        %v6357 = vunpack.c.l.b16 %v6261
        %v6358 = vpack.c.b16 %v6343, %v6342
        %v6359 = vpack.c.b16 %v6345, %v6344
        %v6360 = vpack.c.b16 %v6347, %v6346
        %v6361 = vpack.c.b16 %v6349, %v6348
        %v6362 = vpack.c.b16 %v6351, %v6350
        %v6363 = vpack.c.b16 %v6353, %v6352
        %v6364 = vpack.c.b16 %v6355, %v6354
        %v6365 = vpack.c.b16 %v6357, %v6356
        %6374 = vmatprep.subr.bf16.mxu0 0
        %6375 = vmatpush1.bf16.msra.mxu0 %v6365
        %6376 = vmatprep.subr.bf16.mxu0 0
        %6377 = vmatpush1.bf16.msra.mxu0 %v6364
        %6378 = vmatprep.subr.bf16.mxu0 0
        %6379 = vmatpush1.bf16.msra.mxu0 %v6363
        %6380 = vmatprep.subr.bf16.mxu0 0
        %6381 = vmatpush1.bf16.msra.mxu0 %v6362
        %6382 = vmatprep.subr.bf16.mxu0 0
        %6383 = vmatpush1.bf16.msra.mxu0 %v6361
        %6384 = vmatprep.subr.bf16.mxu0 0
        %6385 = vmatpush1.bf16.msra.mxu0 %v6360
        %6386 = vmatprep.subr.bf16.mxu0 0
        %6387 = vmatpush1.bf16.msra.mxu0 %v6359
        %6388 = vmatprep.subr.bf16.mxu0 0
        %6389 = vmatpush1.bf16.msra.mxu0 %v6358
        %6390 = vmatprep.subr.bf16.mxu0 0
        %6391 = vmatpush2.bf16.msra.mxu0 0
        %6392 = vmatprep.subr.bf16.mxu0 0
        %6393 = vmatpush2.bf16.msra.mxu0 0
        %6394 = vmatprep.subr.bf16.mxu0 0
        %6395 = vmatpush2.bf16.msra.mxu0 0
        %6396 = vmatprep.subr.bf16.mxu0 0
        %6397 = vmatpush2.bf16.msra.mxu0 0
        %6398 = vmatprep.subr.bf16.mxu0 0
        %6399 = vmatpush2.bf16.msra.mxu0 0
        %6400 = vmatprep.subr.bf16.mxu0 0
        %6401 = vmatpush2.bf16.msra.mxu0 0
        %6402 = vmatprep.subr.bf16.mxu0 0
        %6403 = vmatpush2.bf16.msra.mxu0 0
        %6404 = vmatprep.subr.bf16.mxu0 0
        %6405 = vmatpush2.bf16.msra.mxu0 0
        %6406 = vmatprep.mubr.bf16.mxu0 0
        %6407 = vmatmul.mubr.bf16.gmra.mxu0 %v6294
        %v6408 = vpop.f32.mrf.mxu0
        %v6409 = vadd.f32 0.0, %v6408
        %v6410 = vpop.f32.mrf.mxu0
        %v6411 = vpop.f32.mrf.mxu0
        %v6412 = vadd.f32 0.0, %v6411
        %v6413 = vpop.f32.mrf.mxu0
        %6414 = vmatprep.mubr.bf16.mxu0 0
        %6415 = vmatmul.mubr.bf16.gmra.mxu0 %v6295
        %v6416 = vpop.f32.mrf.mxu0
        %v6417 = vadd.f32 0.0, %v6416
        %v6418 = vpop.f32.mrf.mxu0
        %v6419 = vpop.f32.mrf.mxu0
        %v6420 = vadd.f32 0.0, %v6419
        %v6421 = vpop.f32.mrf.mxu0
        %6422 = vmatprep.mubr.bf16.mxu0 0
        %6423 = vmatmul.mubr.bf16.gmra.mxu0 %v6296
        %v6424 = vpop.f32.mrf.mxu0
        %v6425 = vadd.f32 0.0, %v6424
        %v6426 = vpop.f32.mrf.mxu0
        %v6427 = vpop.f32.mrf.mxu0
        %v6428 = vadd.f32 0.0, %v6427
        %v6429 = vpop.f32.mrf.mxu0
        %6430 = vmatprep.mubr.bf16.mxu0 0
        %6431 = vmatmul.mubr.bf16.gmra.mxu0 %v6297
        %v6432 = vpop.f32.mrf.mxu0
        %v6433 = vadd.f32 0.0, %v6432
        %v6434 = vpop.f32.mrf.mxu0
        %v6435 = vpop.f32.mrf.mxu0
        %v6436 = vadd.f32 0.0, %v6435
        %v6437 = vpop.f32.mrf.mxu0
        %6438 = vmatprep.mubr.bf16.mxu0 0
        %6439 = vmatmul.mubr.bf16.gmra.mxu0 %v6298
        %v6440 = vpop.f32.mrf.mxu0
        %v6441 = vadd.f32 0.0, %v6440
        %v6442 = vpop.f32.mrf.mxu0
        %v6443 = vpop.f32.mrf.mxu0
        %v6444 = vadd.f32 0.0, %v6443
        %v6445 = vpop.f32.mrf.mxu0
        %6446 = vmatprep.mubr.bf16.mxu0 0
        %6447 = vmatmul.mubr.bf16.gmra.mxu0 %v6299
        %v6448 = vpop.f32.mrf.mxu0
        %v6449 = vadd.f32 0.0, %v6448
        %v6450 = vpop.f32.mrf.mxu0
        %v6451 = vpop.f32.mrf.mxu0
        %v6452 = vadd.f32 0.0, %v6451
        %v6453 = vpop.f32.mrf.mxu0
        %6454 = vmatprep.mubr.bf16.mxu0 0
        %6455 = vmatmul.mubr.bf16.gmra.mxu0 %v6300
        %v6456 = vpop.f32.mrf.mxu0
        %v6457 = vadd.f32 0.0, %v6456
        %v6458 = vpop.f32.mrf.mxu0
        %v6459 = vpop.f32.mrf.mxu0
        %v6460 = vadd.f32 0.0, %v6459
        %v6461 = vpop.f32.mrf.mxu0
        %6462 = vmatprep.mubr.bf16.mxu0 0
        %6463 = vmatmul.mubr.bf16.gmra.mxu0 %v6301
        %v6464 = vpop.f32.mrf.mxu0
        %v6465 = vadd.f32 0.0, %v6464
        %v6466 = vpop.f32.mrf.mxu0
        %v6467 = vpop.f32.mrf.mxu0
        %v6468 = vadd.f32 0.0, %v6467
        %v6469 = vpop.f32.mrf.mxu0
        %6470 = vmatprep.mubr.bf16.mxu0 0
        %6471 = vmatmul.mubr.bf16.gmra.mxu0 %v6302
        %v6472 = vpop.f32.mrf.mxu0
        %v6473 = vadd.f32 0.0, %v6472
        %v6474 = vpop.f32.mrf.mxu0
        %v6475 = vpop.f32.mrf.mxu0
        %v6476 = vadd.f32 0.0, %v6475
        %v6477 = vpop.f32.mrf.mxu0
        %6478 = vmatprep.mubr.bf16.mxu0 0
        %6479 = vmatmul.mubr.bf16.gmra.mxu0 %v6303
        %v6480 = vpop.f32.mrf.mxu0
        %v6481 = vadd.f32 0.0, %v6480
        %v6482 = vpop.f32.mrf.mxu0
        %v6483 = vpop.f32.mrf.mxu0
        %v6484 = vadd.f32 0.0, %v6483
        %v6485 = vpop.f32.mrf.mxu0
        %6486 = vmatprep.mubr.bf16.mxu0 0
        %6487 = vmatmul.mubr.bf16.gmra.mxu0 %v6304
        %v6488 = vpop.f32.mrf.mxu0
        %v6489 = vadd.f32 0.0, %v6488
        %v6490 = vpop.f32.mrf.mxu0
        %v6491 = vpop.f32.mrf.mxu0
        %v6492 = vadd.f32 0.0, %v6491
        %v6493 = vpop.f32.mrf.mxu0
        %6494 = vmatprep.mubr.bf16.mxu0 0
        %6495 = vmatmul.mubr.bf16.gmra.mxu0 %v6305
        %v6496 = vpop.f32.mrf.mxu0
        %v6497 = vadd.f32 0.0, %v6496
        %v6498 = vpop.f32.mrf.mxu0
        %v6499 = vpop.f32.mrf.mxu0
        %v6500 = vadd.f32 0.0, %v6499
        %v6501 = vpop.f32.mrf.mxu0
        %6502 = vmatprep.mubr.bf16.mxu0 0
        %6503 = vmatmul.mubr.bf16.gmra.mxu0 %v6306
        %v6504 = vpop.f32.mrf.mxu0
        %v6505 = vadd.f32 0.0, %v6504
        %v6506 = vpop.f32.mrf.mxu0
        %v6507 = vpop.f32.mrf.mxu0
        %v6508 = vadd.f32 0.0, %v6507
        %v6509 = vpop.f32.mrf.mxu0
        %6510 = vmatprep.mubr.bf16.mxu0 0
        %6511 = vmatmul.mubr.bf16.gmra.mxu0 %v6307
        %v6512 = vpop.f32.mrf.mxu0
        %v6513 = vadd.f32 0.0, %v6512
        %v6514 = vpop.f32.mrf.mxu0
        %v6515 = vpop.f32.mrf.mxu0
        %v6516 = vadd.f32 0.0, %v6515
        %v6517 = vpop.f32.mrf.mxu0
        %6518 = vmatprep.mubr.bf16.mxu0 0
        %6519 = vmatmul.mubr.bf16.gmra.mxu0 %v6308
        %v6520 = vpop.f32.mrf.mxu0
        %v6521 = vadd.f32 0.0, %v6520
        %v6522 = vpop.f32.mrf.mxu0
        %v6523 = vpop.f32.mrf.mxu0
        %v6524 = vadd.f32 0.0, %v6523
        %v6525 = vpop.f32.mrf.mxu0
        %6526 = vmatprep.mubr.bf16.mxu0 0
        %6527 = vmatmul.mubr.bf16.gmra.mxu0 %v6309
        %v6528 = vpop.f32.mrf.mxu0
        %v6529 = vadd.f32 0.0, %v6528
        %v6530 = vpop.f32.mrf.mxu0
        %v6531 = vpop.f32.mrf.mxu0
        %v6532 = vadd.f32 0.0, %v6531
        %v6533 = vpop.f32.mrf.mxu0
        %6534 = vdwg.mxu0
        %v6567 = vunpack.c.l.b16 %v5798
        %v6568 = vunpack.c.l.b16 %v5799
        %v6569 = vunpack.c.l.b16 %v5800
        %v6570 = vunpack.c.l.b16 %v5801
        %v6571 = vunpack.c.l.b16 %v5802
        %v6572 = vunpack.c.l.b16 %v5803
        %v6573 = vunpack.c.l.b16 %v5804
        %v6574 = vunpack.c.l.b16 %v5805
        %v6575 = vunpack.c.l.b16 %v5806
        %v6576 = vunpack.c.l.b16 %v5807
        %v6577 = vunpack.c.l.b16 %v5808
        %v6578 = vunpack.c.l.b16 %v5809
        %v6579 = vunpack.c.l.b16 %v5810
        %v6580 = vunpack.c.l.b16 %v5811
        %v6581 = vunpack.c.l.b16 %v5812
        %v6582 = vunpack.c.l.b16 %v5813
        %v6583 = vunpack.c.l.b16 %v5814
        %v6584 = vunpack.c.l.b16 %v5815
        %v6585 = vunpack.c.l.b16 %v5816
        %v6586 = vunpack.c.l.b16 %v5817
        %v6587 = vunpack.c.l.b16 %v5818
        %v6588 = vunpack.c.l.b16 %v5819
        %v6589 = vunpack.c.l.b16 %v5820
        %v6590 = vunpack.c.l.b16 %v5821
        %v6591 = vunpack.c.l.b16 %v5822
        %v6592 = vunpack.c.l.b16 %v5823
        %v6593 = vunpack.c.l.b16 %v5824
        %v6594 = vunpack.c.l.b16 %v5825
        %v6595 = vunpack.c.l.b16 %v5826
        %v6596 = vunpack.c.l.b16 %v5827
        %v6597 = vunpack.c.l.b16 %v5828
        %v6598 = vunpack.c.l.b16 %v5829
        %v6599 = vpack.c.b16 %v6568, %v6567
        %v6600 = vpack.c.b16 %v6570, %v6569
        %v6601 = vpack.c.b16 %v6572, %v6571
        %v6602 = vpack.c.b16 %v6574, %v6573
        %v6603 = vpack.c.b16 %v6576, %v6575
        %v6604 = vpack.c.b16 %v6578, %v6577
        %v6605 = vpack.c.b16 %v6580, %v6579
        %v6606 = vpack.c.b16 %v6582, %v6581
        %v6607 = vpack.c.b16 %v6584, %v6583
        %v6608 = vpack.c.b16 %v6586, %v6585
        %v6609 = vpack.c.b16 %v6588, %v6587
        %v6610 = vpack.c.b16 %v6590, %v6589
        %v6611 = vpack.c.b16 %v6592, %v6591
        %v6612 = vpack.c.b16 %v6594, %v6593
        %v6613 = vpack.c.b16 %v6596, %v6595
        %v6614 = vpack.c.b16 %v6598, %v6597
        %v6647 = vunpack.c.l.b16 %v5830
        %v6648 = vunpack.c.l.b16 %v5831
        %v6649 = vunpack.c.l.b16 %v5832
        %v6650 = vunpack.c.l.b16 %v5833
        %v6651 = vunpack.c.l.b16 %v5834
        %v6652 = vunpack.c.l.b16 %v5835
        %v6653 = vunpack.c.l.b16 %v5836
        %v6654 = vunpack.c.l.b16 %v5837
        %v6655 = vunpack.c.l.b16 %v5838
        %v6656 = vunpack.c.l.b16 %v5839
        %v6657 = vunpack.c.l.b16 %v5840
        %v6658 = vunpack.c.l.b16 %v5841
        %v6659 = vunpack.c.l.b16 %v5842
        %v6660 = vunpack.c.l.b16 %v5843
        %v6661 = vunpack.c.l.b16 %v5844
        %v6662 = vunpack.c.l.b16 %v5845
        %v6663 = vpack.c.b16 %v6648, %v6647
        %v6664 = vpack.c.b16 %v6650, %v6649
        %v6665 = vpack.c.b16 %v6652, %v6651
        %v6666 = vpack.c.b16 %v6654, %v6653
        %v6667 = vpack.c.b16 %v6656, %v6655
        %v6668 = vpack.c.b16 %v6658, %v6657
        %v6669 = vpack.c.b16 %v6660, %v6659
        %v6670 = vpack.c.b16 %v6662, %v6661
        %6679 = vmatprep.subr.bf16.mxu0 0
        %6680 = vmatpush1.bf16.msra.mxu0 %v6670
        %6681 = vmatprep.subr.bf16.mxu0 0
        %6682 = vmatpush1.bf16.msra.mxu0 %v6669
        %6683 = vmatprep.subr.bf16.mxu0 0
        %6684 = vmatpush1.bf16.msra.mxu0 %v6668
        %6685 = vmatprep.subr.bf16.mxu0 0
        %6686 = vmatpush1.bf16.msra.mxu0 %v6667
        %6687 = vmatprep.subr.bf16.mxu0 0
        %6688 = vmatpush1.bf16.msra.mxu0 %v6666
        %6689 = vmatprep.subr.bf16.mxu0 0
        %6690 = vmatpush1.bf16.msra.mxu0 %v6665
        %6691 = vmatprep.subr.bf16.mxu0 0
        %6692 = vmatpush1.bf16.msra.mxu0 %v6664
        %6693 = vmatprep.subr.bf16.mxu0 0
        %6694 = vmatpush1.bf16.msra.mxu0 %v6663
        %6695 = vmatprep.subr.bf16.mxu0 0
        %6696 = vmatpush2.bf16.msra.mxu0 0
        %6697 = vmatprep.subr.bf16.mxu0 0
        %6698 = vmatpush2.bf16.msra.mxu0 0
        %6699 = vmatprep.subr.bf16.mxu0 0
        %6700 = vmatpush2.bf16.msra.mxu0 0
        %6701 = vmatprep.subr.bf16.mxu0 0
        %6702 = vmatpush2.bf16.msra.mxu0 0
        %6703 = vmatprep.subr.bf16.mxu0 0
        %6704 = vmatpush2.bf16.msra.mxu0 0
        %6705 = vmatprep.subr.bf16.mxu0 0
        %6706 = vmatpush2.bf16.msra.mxu0 0
        %6707 = vmatprep.subr.bf16.mxu0 0
        %6708 = vmatpush2.bf16.msra.mxu0 0
        %6709 = vmatprep.subr.bf16.mxu0 0
        %6710 = vmatpush2.bf16.msra.mxu0 0
        %6711 = vmatprep.mubr.bf16.mxu0 0
        %6712 = vmatmul.mubr.bf16.gmra.mxu0 %v6599
        %v6713 = vpop.f32.mrf.mxu0
        %v6714 = vadd.f32 %v6409, %v6713
        %v6715 = vpop.f32.mrf.mxu0
        %v6716 = vpop.f32.mrf.mxu0
        %v6717 = vadd.f32 %v6412, %v6716
        %v6718 = vpop.f32.mrf.mxu0
        %6719 = vmatprep.mubr.bf16.mxu0 0
        %6720 = vmatmul.mubr.bf16.gmra.mxu0 %v6600
        %v6721 = vpop.f32.mrf.mxu0
        %v6722 = vadd.f32 %v6417, %v6721
        %v6723 = vpop.f32.mrf.mxu0
        %v6724 = vpop.f32.mrf.mxu0
        %v6725 = vadd.f32 %v6420, %v6724
        %v6726 = vpop.f32.mrf.mxu0
        %6727 = vmatprep.mubr.bf16.mxu0 0
        %6728 = vmatmul.mubr.bf16.gmra.mxu0 %v6601
        %v6729 = vpop.f32.mrf.mxu0
        %v6730 = vadd.f32 %v6425, %v6729
        %v6731 = vpop.f32.mrf.mxu0
        %v6732 = vpop.f32.mrf.mxu0
        %v6733 = vadd.f32 %v6428, %v6732
        %v6734 = vpop.f32.mrf.mxu0
        %6735 = vmatprep.mubr.bf16.mxu0 0
        %6736 = vmatmul.mubr.bf16.gmra.mxu0 %v6602
        %v6737 = vpop.f32.mrf.mxu0
        %v6738 = vadd.f32 %v6433, %v6737
        %v6739 = vpop.f32.mrf.mxu0
        %v6740 = vpop.f32.mrf.mxu0
        %v6741 = vadd.f32 %v6436, %v6740
        %v6742 = vpop.f32.mrf.mxu0
        %6743 = vmatprep.mubr.bf16.mxu0 0
        %6744 = vmatmul.mubr.bf16.gmra.mxu0 %v6603
        %v6745 = vpop.f32.mrf.mxu0
        %v6746 = vadd.f32 %v6441, %v6745
        %v6747 = vpop.f32.mrf.mxu0
        %v6748 = vpop.f32.mrf.mxu0
        %v6749 = vadd.f32 %v6444, %v6748
        %v6750 = vpop.f32.mrf.mxu0
        %6751 = vmatprep.mubr.bf16.mxu0 0
        %6752 = vmatmul.mubr.bf16.gmra.mxu0 %v6604
        %v6753 = vpop.f32.mrf.mxu0
        %v6754 = vadd.f32 %v6449, %v6753
        %v6755 = vpop.f32.mrf.mxu0
        %v6756 = vpop.f32.mrf.mxu0
        %v6757 = vadd.f32 %v6452, %v6756
        %v6758 = vpop.f32.mrf.mxu0
        %6759 = vmatprep.mubr.bf16.mxu0 0
        %6760 = vmatmul.mubr.bf16.gmra.mxu0 %v6605
        %v6761 = vpop.f32.mrf.mxu0
        %v6762 = vadd.f32 %v6457, %v6761
        %v6763 = vpop.f32.mrf.mxu0
        %v6764 = vpop.f32.mrf.mxu0
        %v6765 = vadd.f32 %v6460, %v6764
        %v6766 = vpop.f32.mrf.mxu0
        %6767 = vmatprep.mubr.bf16.mxu0 0
        %6768 = vmatmul.mubr.bf16.gmra.mxu0 %v6606
        %v6769 = vpop.f32.mrf.mxu0
        %v6770 = vadd.f32 %v6465, %v6769
        %v6771 = vpop.f32.mrf.mxu0
        %v6772 = vpop.f32.mrf.mxu0
        %v6773 = vadd.f32 %v6468, %v6772
        %v6774 = vpop.f32.mrf.mxu0
        %6775 = vmatprep.mubr.bf16.mxu0 0
        %6776 = vmatmul.mubr.bf16.gmra.mxu0 %v6607
        %v6777 = vpop.f32.mrf.mxu0
        %v6778 = vadd.f32 %v6473, %v6777
        %v6779 = vpop.f32.mrf.mxu0
        %v6780 = vpop.f32.mrf.mxu0
        %v6781 = vadd.f32 %v6476, %v6780
        %v6782 = vpop.f32.mrf.mxu0
        %6783 = vmatprep.mubr.bf16.mxu0 0
        %6784 = vmatmul.mubr.bf16.gmra.mxu0 %v6608
        %v6785 = vpop.f32.mrf.mxu0
        %v6786 = vadd.f32 %v6481, %v6785
        %v6787 = vpop.f32.mrf.mxu0
        %v6788 = vpop.f32.mrf.mxu0
        %v6789 = vadd.f32 %v6484, %v6788
        %v6790 = vpop.f32.mrf.mxu0
        %6791 = vmatprep.mubr.bf16.mxu0 0
        %6792 = vmatmul.mubr.bf16.gmra.mxu0 %v6609
        %v6793 = vpop.f32.mrf.mxu0
        %v6794 = vadd.f32 %v6489, %v6793
        %v6795 = vpop.f32.mrf.mxu0
        %v6796 = vpop.f32.mrf.mxu0
        %v6797 = vadd.f32 %v6492, %v6796
        %v6798 = vpop.f32.mrf.mxu0
        %6799 = vmatprep.mubr.bf16.mxu0 0
        %6800 = vmatmul.mubr.bf16.gmra.mxu0 %v6610
        %v6801 = vpop.f32.mrf.mxu0
        %v6802 = vadd.f32 %v6497, %v6801
        %v6803 = vpop.f32.mrf.mxu0
        %v6804 = vpop.f32.mrf.mxu0
        %v6805 = vadd.f32 %v6500, %v6804
        %v6806 = vpop.f32.mrf.mxu0
        %6807 = vmatprep.mubr.bf16.mxu0 0
        %6808 = vmatmul.mubr.bf16.gmra.mxu0 %v6611
        %v6809 = vpop.f32.mrf.mxu0
        %v6810 = vadd.f32 %v6505, %v6809
        %v6811 = vpop.f32.mrf.mxu0
        %v6812 = vpop.f32.mrf.mxu0
        %v6813 = vadd.f32 %v6508, %v6812
        %v6814 = vpop.f32.mrf.mxu0
        %6815 = vmatprep.mubr.bf16.mxu0 0
        %6816 = vmatmul.mubr.bf16.gmra.mxu0 %v6612
        %v6817 = vpop.f32.mrf.mxu0
        %v6818 = vadd.f32 %v6513, %v6817
        %v6819 = vpop.f32.mrf.mxu0
        %v6820 = vpop.f32.mrf.mxu0
        %v6821 = vadd.f32 %v6516, %v6820
        %v6822 = vpop.f32.mrf.mxu0
        %6823 = vmatprep.mubr.bf16.mxu0 0
        %6824 = vmatmul.mubr.bf16.gmra.mxu0 %v6613
        %v6825 = vpop.f32.mrf.mxu0
        %v6826 = vadd.f32 %v6521, %v6825
        %v6827 = vpop.f32.mrf.mxu0
        %v6828 = vpop.f32.mrf.mxu0
        %v6829 = vadd.f32 %v6524, %v6828
        %v6830 = vpop.f32.mrf.mxu0
        %6831 = vmatprep.mubr.bf16.mxu0 0
        %6832 = vmatmul.mubr.bf16.gmra.mxu0 %v6614
        %v6833 = vpop.f32.mrf.mxu0
        %v6834 = vadd.f32 %v6529, %v6833
        %v6835 = vpop.f32.mrf.mxu0
        %v6836 = vpop.f32.mrf.mxu0
        %v6837 = vadd.f32 %v6532, %v6836
        %v6838 = vpop.f32.mrf.mxu0
        %6839 = vdwg.mxu0
        %v6840 = vld [vmem:[#allocation2] sm:$0xe]
        %v6841 = vld [vmem:[#allocation2 + $0xc] sm:$0xe]
        %v6842 = vld [vmem:[#allocation2 + $0x18] sm:$0xe]
        %v6843 = vld [vmem:[#allocation2 + $0x24] sm:$0xe]
        %v6844 = vld [vmem:[#allocation2 + $0x30] sm:$0xe]
        %v6845 = vld [vmem:[#allocation2 + $0x3c] sm:$0xe]
        %v6846 = vld [vmem:[#allocation2 + $0x48] sm:$0xe]
        %v6847 = vld [vmem:[#allocation2 + $0x54] sm:$0xe]
        %v6848 = vld [vmem:[#allocation2 + $0x60] sm:$0xe]
        %v6849 = vld [vmem:[#allocation2 + $0x6c] sm:$0xe]
        %v6850 = vld [vmem:[#allocation2 + $0x78] sm:$0xe]
        %v6851 = vld [vmem:[#allocation2 + $0x84] sm:$0xe]
        %v6852 = vld [vmem:[#allocation2 + $0x90] sm:$0xe]
        %v6853 = vld [vmem:[#allocation2 + $0x9c] sm:$0xe]
        %v6854 = vld [vmem:[#allocation2 + $0xa8] sm:$0xe]
        %v6855 = vld [vmem:[#allocation2 + $0xb4] sm:$0xe]
        %v6888 = vrot.slane %v6840, 5
        %v6889 = vrot.slane %v6888, 4
        %v6890 = vrot.slane %v5799, 5
        %v6891 = vsel %vm1368, %v6889, %v6890
        %v6892 = vrot.slane %v6890, 4
        %v6893 = vrot.slane %v5846, 5
        %v6894 = vsel %vm1368, %v6892, %v6893
        %v6895 = vrot.slane %v6841, 5
        %v6896 = vrot.slane %v6895, 4
        %v6897 = vrot.slane %v5801, 5
        %v6898 = vsel %vm1368, %v6896, %v6897
        %v6899 = vrot.slane %v6897, 4
        %v6900 = vrot.slane %v5847, 5
        %v6901 = vsel %vm1368, %v6899, %v6900
        %v6902 = vrot.slane %v6842, 5
        %v6903 = vrot.slane %v6902, 4
        %v6904 = vrot.slane %v5803, 5
        %v6905 = vsel %vm1368, %v6903, %v6904
        %v6906 = vrot.slane %v6904, 4
        %v6907 = vrot.slane %v5848, 5
        %v6908 = vsel %vm1368, %v6906, %v6907
        %v6909 = vrot.slane %v6843, 5
        %v6910 = vrot.slane %v6909, 4
        %v6911 = vrot.slane %v5805, 5
        %v6912 = vsel %vm1368, %v6910, %v6911
        %v6913 = vrot.slane %v6911, 4
        %v6914 = vrot.slane %v5849, 5
        %v6915 = vsel %vm1368, %v6913, %v6914
        %v6916 = vrot.slane %v6844, 5
        %v6917 = vrot.slane %v6916, 4
        %v6918 = vrot.slane %v5807, 5
        %v6919 = vsel %vm1368, %v6917, %v6918
        %v6920 = vrot.slane %v6918, 4
        %v6921 = vrot.slane %v5850, 5
        %v6922 = vsel %vm1368, %v6920, %v6921
        %v6923 = vrot.slane %v6845, 5
        %v6924 = vrot.slane %v6923, 4
        %v6925 = vrot.slane %v5809, 5
        %v6926 = vsel %vm1368, %v6924, %v6925
        %v6927 = vrot.slane %v6925, 4
        %v6928 = vrot.slane %v5851, 5
        %v6929 = vsel %vm1368, %v6927, %v6928
        %v6930 = vrot.slane %v6846, 5
        %v6931 = vrot.slane %v6930, 4
        %v6932 = vrot.slane %v5811, 5
        %v6933 = vsel %vm1368, %v6931, %v6932
        %v6934 = vrot.slane %v6932, 4
        %v6935 = vrot.slane %v5852, 5
        %v6936 = vsel %vm1368, %v6934, %v6935
        %v6937 = vrot.slane %v6847, 5
        %v6938 = vrot.slane %v6937, 4
        %v6939 = vrot.slane %v5813, 5
        %v6940 = vsel %vm1368, %v6938, %v6939
        %v6941 = vrot.slane %v6939, 4
        %v6942 = vrot.slane %v5853, 5
        %v6943 = vsel %vm1368, %v6941, %v6942
        %v6944 = vrot.slane %v6848, 5
        %v6945 = vrot.slane %v6944, 4
        %v6946 = vrot.slane %v5815, 5
        %v6947 = vsel %vm1368, %v6945, %v6946
        %v6948 = vrot.slane %v6946, 4
        %v6949 = vrot.slane %v5854, 5
        %v6950 = vsel %vm1368, %v6948, %v6949
        %v6951 = vrot.slane %v6849, 5
        %v6952 = vrot.slane %v6951, 4
        %v6953 = vrot.slane %v5817, 5
        %v6954 = vsel %vm1368, %v6952, %v6953
        %v6955 = vrot.slane %v6953, 4
        %v6956 = vrot.slane %v5855, 5
        %v6957 = vsel %vm1368, %v6955, %v6956
        %v6958 = vrot.slane %v6850, 5
        %v6959 = vrot.slane %v6958, 4
        %v6960 = vrot.slane %v5819, 5
        %v6961 = vsel %vm1368, %v6959, %v6960
        %v6962 = vrot.slane %v6960, 4
        %v6963 = vrot.slane %v5856, 5
        %v6964 = vsel %vm1368, %v6962, %v6963
        %v6965 = vrot.slane %v6851, 5
        %v6966 = vrot.slane %v6965, 4
        %v6967 = vrot.slane %v5821, 5
        %v6968 = vsel %vm1368, %v6966, %v6967
        %v6969 = vrot.slane %v6967, 4
        %v6970 = vrot.slane %v5857, 5
        %v6971 = vsel %vm1368, %v6969, %v6970
        %v6972 = vrot.slane %v6852, 5
        %v6973 = vrot.slane %v6972, 4
        %v6974 = vrot.slane %v5823, 5
        %v6975 = vsel %vm1368, %v6973, %v6974
        %v6976 = vrot.slane %v6974, 4
        %v6977 = vrot.slane %v5858, 5
        %v6978 = vsel %vm1368, %v6976, %v6977
        %v6979 = vrot.slane %v6853, 5
        %v6980 = vrot.slane %v6979, 4
        %v6981 = vrot.slane %v5825, 5
        %v6982 = vsel %vm1368, %v6980, %v6981
        %v6983 = vrot.slane %v6981, 4
        %v6984 = vrot.slane %v5859, 5
        %v6985 = vsel %vm1368, %v6983, %v6984
        %v6986 = vrot.slane %v6854, 5
        %v6987 = vrot.slane %v6986, 4
        %v6988 = vrot.slane %v5827, 5
        %v6989 = vsel %vm1368, %v6987, %v6988
        %v6990 = vrot.slane %v6988, 4
        %v6991 = vrot.slane %v5860, 5
        %v6992 = vsel %vm1368, %v6990, %v6991
        %v6993 = vrot.slane %v6855, 5
        %v6994 = vrot.slane %v6993, 4
        %v6995 = vrot.slane %v5829, 5
        %v6996 = vsel %vm1368, %v6994, %v6995
        %v6997 = vrot.slane %v6995, 4
        %v6998 = vrot.slane %v5861, 5
        %v6999 = vsel %vm1368, %v6997, %v6998
        %v7000 = vld [vmem:[#allocation8 + $0x80] sm:$0xf]
        %v7001 = vld [vmem:[#allocation8 + $0x84] sm:$0xf]
        %v7002 = vld [vmem:[#allocation8 + $0x88] sm:$0xf]
        %v7003 = vld [vmem:[#allocation8 + $0x8c] sm:$0xf]
        %v7004 = vld [vmem:[#allocation8 + $0x90] sm:$0xf]
        %v7005 = vld [vmem:[#allocation8 + $0x94] sm:$0xf]
        %v7006 = vld [vmem:[#allocation8 + $0x98] sm:$0xf]
        %v7007 = vld [vmem:[#allocation8 + $0x9c] sm:$0xf]
        %v7008 = vld [vmem:[#allocation8 + $0xa0] sm:$0xf]
        %v7009 = vld [vmem:[#allocation8 + $0xa4] sm:$0xf]
        %v7010 = vld [vmem:[#allocation8 + $0xa8] sm:$0xf]
        %v7011 = vld [vmem:[#allocation8 + $0xac] sm:$0xf]
        %v7012 = vld [vmem:[#allocation8 + $0xb0] sm:$0xf]
        %v7013 = vld [vmem:[#allocation8 + $0xb4] sm:$0xf]
        %v7014 = vld [vmem:[#allocation8 + $0xb8] sm:$0xf]
        %v7015 = vld [vmem:[#allocation8 + $0xbc] sm:$0xf]
        %v7016 = vunpack.c.l.b16 %v6891
        %v7017 = vunpack.c.l.b16 %v6894
        %v7018 = vunpack.c.l.b16 %v6898
        %v7019 = vunpack.c.l.b16 %v6901
        %v7020 = vunpack.c.l.b16 %v6905
        %v7021 = vunpack.c.l.b16 %v6908
        %v7022 = vunpack.c.l.b16 %v6912
        %v7023 = vunpack.c.l.b16 %v6915
        %v7024 = vunpack.c.l.b16 %v6919
        %v7025 = vunpack.c.l.b16 %v6922
        %v7026 = vunpack.c.l.b16 %v6926
        %v7027 = vunpack.c.l.b16 %v6929
        %v7028 = vunpack.c.l.b16 %v6933
        %v7029 = vunpack.c.l.b16 %v6936
        %v7030 = vunpack.c.l.b16 %v6940
        %v7031 = vunpack.c.l.b16 %v6943
        %v7032 = vunpack.c.l.b16 %v6947
        %v7033 = vunpack.c.l.b16 %v6950
        %v7034 = vunpack.c.l.b16 %v6954
        %v7035 = vunpack.c.l.b16 %v6957
        %v7036 = vunpack.c.l.b16 %v6961
        %v7037 = vunpack.c.l.b16 %v6964
        %v7038 = vunpack.c.l.b16 %v6968
        %v7039 = vunpack.c.l.b16 %v6971
        %v7040 = vunpack.c.l.b16 %v6975
        %v7041 = vunpack.c.l.b16 %v6978
        %v7042 = vunpack.c.l.b16 %v6982
        %v7043 = vunpack.c.l.b16 %v6985
        %v7044 = vunpack.c.l.b16 %v6989
        %v7045 = vunpack.c.l.b16 %v6992
        %v7046 = vunpack.c.l.b16 %v6996
        %v7047 = vunpack.c.l.b16 %v6999
        %v7048 = vpack.c.b16 %v7017, %v7016
        %v7049 = vpack.c.b16 %v7019, %v7018
        %v7050 = vpack.c.b16 %v7021, %v7020
        %v7051 = vpack.c.b16 %v7023, %v7022
        %v7052 = vpack.c.b16 %v7025, %v7024
        %v7053 = vpack.c.b16 %v7027, %v7026
        %v7054 = vpack.c.b16 %v7029, %v7028
        %v7055 = vpack.c.b16 %v7031, %v7030
        %v7056 = vpack.c.b16 %v7033, %v7032
        %v7057 = vpack.c.b16 %v7035, %v7034
        %v7058 = vpack.c.b16 %v7037, %v7036
        %v7059 = vpack.c.b16 %v7039, %v7038
        %v7060 = vpack.c.b16 %v7041, %v7040
        %v7061 = vpack.c.b16 %v7043, %v7042
        %v7062 = vpack.c.b16 %v7045, %v7044
        %v7063 = vpack.c.b16 %v7047, %v7046
        %v7096 = vunpack.c.l.b16 %v7000
        %v7097 = vunpack.c.l.b16 %v7001
        %v7098 = vunpack.c.l.b16 %v7002
        %v7099 = vunpack.c.l.b16 %v7003
        %v7100 = vunpack.c.l.b16 %v7004
        %v7101 = vunpack.c.l.b16 %v7005
        %v7102 = vunpack.c.l.b16 %v7006
        %v7103 = vunpack.c.l.b16 %v7007
        %v7104 = vunpack.c.l.b16 %v7008
        %v7105 = vunpack.c.l.b16 %v7009
        %v7106 = vunpack.c.l.b16 %v7010
        %v7107 = vunpack.c.l.b16 %v7011
        %v7108 = vunpack.c.l.b16 %v7012
        %v7109 = vunpack.c.l.b16 %v7013
        %v7110 = vunpack.c.l.b16 %v7014
        %v7111 = vunpack.c.l.b16 %v7015
        %v7112 = vpack.c.b16 %v7097, %v7096
        %v7113 = vpack.c.b16 %v7099, %v7098
        %v7114 = vpack.c.b16 %v7101, %v7100
        %v7115 = vpack.c.b16 %v7103, %v7102
        %v7116 = vpack.c.b16 %v7105, %v7104
        %v7117 = vpack.c.b16 %v7107, %v7106
        %v7118 = vpack.c.b16 %v7109, %v7108
        %v7119 = vpack.c.b16 %v7111, %v7110
        %7128 = vmatprep.subr.bf16.mxu0 0
        %7129 = vmatpush1.bf16.msra.mxu0 %v7119
        %7130 = vmatprep.subr.bf16.mxu0 0
        %7131 = vmatpush1.bf16.msra.mxu0 %v7118
        %7132 = vmatprep.subr.bf16.mxu0 0
        %7133 = vmatpush1.bf16.msra.mxu0 %v7117
        %7134 = vmatprep.subr.bf16.mxu0 0
        %7135 = vmatpush1.bf16.msra.mxu0 %v7116
        %7136 = vmatprep.subr.bf16.mxu0 0
        %7137 = vmatpush1.bf16.msra.mxu0 %v7115
        %7138 = vmatprep.subr.bf16.mxu0 0
        %7139 = vmatpush1.bf16.msra.mxu0 %v7114
        %7140 = vmatprep.subr.bf16.mxu0 0
        %7141 = vmatpush1.bf16.msra.mxu0 %v7113
        %7142 = vmatprep.subr.bf16.mxu0 0
        %7143 = vmatpush1.bf16.msra.mxu0 %v7112
        %7144 = vmatprep.subr.bf16.mxu0 0
        %7145 = vmatpush2.bf16.msra.mxu0 0
        %7146 = vmatprep.subr.bf16.mxu0 0
        %7147 = vmatpush2.bf16.msra.mxu0 0
        %7148 = vmatprep.subr.bf16.mxu0 0
        %7149 = vmatpush2.bf16.msra.mxu0 0
        %7150 = vmatprep.subr.bf16.mxu0 0
        %7151 = vmatpush2.bf16.msra.mxu0 0
        %7152 = vmatprep.subr.bf16.mxu0 0
        %7153 = vmatpush2.bf16.msra.mxu0 0
        %7154 = vmatprep.subr.bf16.mxu0 0
        %7155 = vmatpush2.bf16.msra.mxu0 0
        %7156 = vmatprep.subr.bf16.mxu0 0
        %7157 = vmatpush2.bf16.msra.mxu0 0
        %7158 = vmatprep.subr.bf16.mxu0 0
        %7159 = vmatpush2.bf16.msra.mxu0 0
        %7160 = vmatprep.mubr.bf16.mxu0 0
        %7161 = vmatmul.mubr.bf16.gmra.mxu0 %v7048
        %v7162 = vpop.f32.mrf.mxu0
        %v7163 = vadd.f32 0.0, %v7162
        %v7164 = vpop.f32.mrf.mxu0
        %v7165 = vpop.f32.mrf.mxu0
        %v7166 = vadd.f32 0.0, %v7165
        %v7167 = vpop.f32.mrf.mxu0
        %7168 = vmatprep.mubr.bf16.mxu0 0
        %7169 = vmatmul.mubr.bf16.gmra.mxu0 %v7049
        %v7170 = vpop.f32.mrf.mxu0
        %v7171 = vadd.f32 0.0, %v7170
        %v7172 = vpop.f32.mrf.mxu0
        %v7173 = vpop.f32.mrf.mxu0
        %v7174 = vadd.f32 0.0, %v7173
        %v7175 = vpop.f32.mrf.mxu0
        %7176 = vmatprep.mubr.bf16.mxu0 0
        %7177 = vmatmul.mubr.bf16.gmra.mxu0 %v7050
        %v7178 = vpop.f32.mrf.mxu0
        %v7179 = vadd.f32 0.0, %v7178
        %v7180 = vpop.f32.mrf.mxu0
        %v7181 = vpop.f32.mrf.mxu0
        %v7182 = vadd.f32 0.0, %v7181
        %v7183 = vpop.f32.mrf.mxu0
        %7184 = vmatprep.mubr.bf16.mxu0 0
        %7185 = vmatmul.mubr.bf16.gmra.mxu0 %v7051
        %v7186 = vpop.f32.mrf.mxu0
        %v7187 = vadd.f32 0.0, %v7186
        %v7188 = vpop.f32.mrf.mxu0
        %v7189 = vpop.f32.mrf.mxu0
        %v7190 = vadd.f32 0.0, %v7189
        %v7191 = vpop.f32.mrf.mxu0
        %7192 = vmatprep.mubr.bf16.mxu0 0
        %7193 = vmatmul.mubr.bf16.gmra.mxu0 %v7052
        %v7194 = vpop.f32.mrf.mxu0
        %v7195 = vadd.f32 0.0, %v7194
        %v7196 = vpop.f32.mrf.mxu0
        %v7197 = vpop.f32.mrf.mxu0
        %v7198 = vadd.f32 0.0, %v7197
        %v7199 = vpop.f32.mrf.mxu0
        %7200 = vmatprep.mubr.bf16.mxu0 0
        %7201 = vmatmul.mubr.bf16.gmra.mxu0 %v7053
        %v7202 = vpop.f32.mrf.mxu0
        %v7203 = vadd.f32 0.0, %v7202
        %v7204 = vpop.f32.mrf.mxu0
        %v7205 = vpop.f32.mrf.mxu0
        %v7206 = vadd.f32 0.0, %v7205
        %v7207 = vpop.f32.mrf.mxu0
        %7208 = vmatprep.mubr.bf16.mxu0 0
        %7209 = vmatmul.mubr.bf16.gmra.mxu0 %v7054
        %v7210 = vpop.f32.mrf.mxu0
        %v7211 = vadd.f32 0.0, %v7210
        %v7212 = vpop.f32.mrf.mxu0
        %v7213 = vpop.f32.mrf.mxu0
        %v7214 = vadd.f32 0.0, %v7213
        %v7215 = vpop.f32.mrf.mxu0
        %7216 = vmatprep.mubr.bf16.mxu0 0
        %7217 = vmatmul.mubr.bf16.gmra.mxu0 %v7055
        %v7218 = vpop.f32.mrf.mxu0
        %v7219 = vadd.f32 0.0, %v7218
        %v7220 = vpop.f32.mrf.mxu0
        %v7221 = vpop.f32.mrf.mxu0
        %v7222 = vadd.f32 0.0, %v7221
        %v7223 = vpop.f32.mrf.mxu0
        %7224 = vmatprep.mubr.bf16.mxu0 0
        %7225 = vmatmul.mubr.bf16.gmra.mxu0 %v7056
        %v7226 = vpop.f32.mrf.mxu0
        %v7227 = vadd.f32 0.0, %v7226
        %v7228 = vpop.f32.mrf.mxu0
        %v7229 = vpop.f32.mrf.mxu0
        %v7230 = vadd.f32 0.0, %v7229
        %v7231 = vpop.f32.mrf.mxu0
        %7232 = vmatprep.mubr.bf16.mxu0 0
        %7233 = vmatmul.mubr.bf16.gmra.mxu0 %v7057
        %v7234 = vpop.f32.mrf.mxu0
        %v7235 = vadd.f32 0.0, %v7234
        %v7236 = vpop.f32.mrf.mxu0
        %v7237 = vpop.f32.mrf.mxu0
        %v7238 = vadd.f32 0.0, %v7237
        %v7239 = vpop.f32.mrf.mxu0
        %7240 = vmatprep.mubr.bf16.mxu0 0
        %7241 = vmatmul.mubr.bf16.gmra.mxu0 %v7058
        %v7242 = vpop.f32.mrf.mxu0
        %v7243 = vadd.f32 0.0, %v7242
        %v7244 = vpop.f32.mrf.mxu0
        %v7245 = vpop.f32.mrf.mxu0
        %v7246 = vadd.f32 0.0, %v7245
        %v7247 = vpop.f32.mrf.mxu0
        %7248 = vmatprep.mubr.bf16.mxu0 0
        %7249 = vmatmul.mubr.bf16.gmra.mxu0 %v7059
        %v7250 = vpop.f32.mrf.mxu0
        %v7251 = vadd.f32 0.0, %v7250
        %v7252 = vpop.f32.mrf.mxu0
        %v7253 = vpop.f32.mrf.mxu0
        %v7254 = vadd.f32 0.0, %v7253
        %v7255 = vpop.f32.mrf.mxu0
        %7256 = vmatprep.mubr.bf16.mxu0 0
        %7257 = vmatmul.mubr.bf16.gmra.mxu0 %v7060
        %v7258 = vpop.f32.mrf.mxu0
        %v7259 = vadd.f32 0.0, %v7258
        %v7260 = vpop.f32.mrf.mxu0
        %v7261 = vpop.f32.mrf.mxu0
        %v7262 = vadd.f32 0.0, %v7261
        %v7263 = vpop.f32.mrf.mxu0
        %7264 = vmatprep.mubr.bf16.mxu0 0
        %7265 = vmatmul.mubr.bf16.gmra.mxu0 %v7061
        %v7266 = vpop.f32.mrf.mxu0
        %v7267 = vadd.f32 0.0, %v7266
        %v7268 = vpop.f32.mrf.mxu0
        %v7269 = vpop.f32.mrf.mxu0
        %v7270 = vadd.f32 0.0, %v7269
        %v7271 = vpop.f32.mrf.mxu0
        %7272 = vmatprep.mubr.bf16.mxu0 0
        %7273 = vmatmul.mubr.bf16.gmra.mxu0 %v7062
        %v7274 = vpop.f32.mrf.mxu0
        %v7275 = vadd.f32 0.0, %v7274
        %v7276 = vpop.f32.mrf.mxu0
        %v7277 = vpop.f32.mrf.mxu0
        %v7278 = vadd.f32 0.0, %v7277
        %v7279 = vpop.f32.mrf.mxu0
        %7280 = vmatprep.mubr.bf16.mxu0 0
        %7281 = vmatmul.mubr.bf16.gmra.mxu0 %v7063
        %v7282 = vpop.f32.mrf.mxu0
        %v7283 = vadd.f32 0.0, %v7282
        %v7284 = vpop.f32.mrf.mxu0
        %v7285 = vpop.f32.mrf.mxu0
        %v7286 = vadd.f32 0.0, %v7285
        %v7287 = vpop.f32.mrf.mxu0
        %7288 = vdwg.mxu0
        %v7289 = vadd.f32 %v6714, %v7163
        %v7290 = vadd.f32 %v6717, %v7166
        %v7291 = vadd.f32 %v6722, %v7171
        %v7292 = vadd.f32 %v6725, %v7174
        %v7293 = vadd.f32 %v6730, %v7179
        %v7294 = vadd.f32 %v6733, %v7182
        %v7295 = vadd.f32 %v6738, %v7187
        %v7296 = vadd.f32 %v6741, %v7190
        %v7297 = vadd.f32 %v6746, %v7195
        %v7298 = vadd.f32 %v6749, %v7198
        %v7299 = vadd.f32 %v6754, %v7203
        %v7300 = vadd.f32 %v6757, %v7206
        %v7301 = vadd.f32 %v6762, %v7211
        %v7302 = vadd.f32 %v6765, %v7214
        %v7303 = vadd.f32 %v6770, %v7219
        %v7304 = vadd.f32 %v6773, %v7222
        %v7305 = vadd.f32 %v6778, %v7227
        %v7306 = vadd.f32 %v6781, %v7230
        %v7307 = vadd.f32 %v6786, %v7235
        %v7308 = vadd.f32 %v6789, %v7238
        %v7309 = vadd.f32 %v6794, %v7243
        %v7310 = vadd.f32 %v6797, %v7246
        %v7311 = vadd.f32 %v6802, %v7251
        %v7312 = vadd.f32 %v6805, %v7254
        %v7313 = vadd.f32 %v6810, %v7259
        %v7314 = vadd.f32 %v6813, %v7262
        %v7315 = vadd.f32 %v6818, %v7267
        %v7316 = vadd.f32 %v6821, %v7270
        %v7317 = vadd.f32 %v6826, %v7275
        %v7318 = vadd.f32 %v6829, %v7278
        %v7319 = vadd.f32 %v6834, %v7283
        %v7320 = vadd.f32 %v6837, %v7286
        %v7321 = vld [vmem:[%s5683] sm:$0xf]
        %v7322 = vld [vmem:[%s5683 + $0x4] sm:$0xf]
        %v7323 = vld [vmem:[%s5683 + $0xc] sm:$0xf]
        %v7324 = vld [vmem:[%s5683 + $0x10] sm:$0xf]
        %v7325 = vld [vmem:[%s5683 + $0x18] sm:$0xf]
        %v7326 = vld [vmem:[%s5683 + $0x1c] sm:$0xf]
        %v7327 = vld [vmem:[%s5683 + $0x24] sm:$0xf]
        %v7328 = vld [vmem:[%s5683 + $0x28] sm:$0xf]
        %v7329 = vld [vmem:[%s5683 + $0x30] sm:$0xf]
        %v7330 = vld [vmem:[%s5683 + $0x34] sm:$0xf]
        %v7331 = vld [vmem:[%s5683 + $0x3c] sm:$0xf]
        %v7332 = vld [vmem:[%s5683 + $0x40] sm:$0xf]
        %v7333 = vld [vmem:[%s5683 + $0x48] sm:$0xf]
        %v7334 = vld [vmem:[%s5683 + $0x4c] sm:$0xf]
        %v7335 = vld [vmem:[%s5683 + $0x54] sm:$0xf]
        %v7336 = vld [vmem:[%s5683 + $0x58] sm:$0xf]
        %v7337 = vld [vmem:[%s5683 + $0x60] sm:$0xf]
        %v7338 = vld [vmem:[%s5683 + $0x64] sm:$0xf]
        %v7339 = vld [vmem:[%s5683 + $0x6c] sm:$0xf]
        %v7340 = vld [vmem:[%s5683 + $0x70] sm:$0xf]
        %v7341 = vld [vmem:[%s5683 + $0x78] sm:$0xf]
        %v7342 = vld [vmem:[%s5683 + $0x7c] sm:$0xf]
        %v7343 = vld [vmem:[%s5683 + $0x84] sm:$0xf]
        %v7344 = vld [vmem:[%s5683 + $0x88] sm:$0xf]
        %v7345 = vld [vmem:[%s5683 + $0x90] sm:$0xf]
        %v7346 = vld [vmem:[%s5683 + $0x94] sm:$0xf]
        %v7347 = vld [vmem:[%s5683 + $0x9c] sm:$0xf]
        %v7348 = vld [vmem:[%s5683 + $0xa0] sm:$0xf]
        %v7349 = vld [vmem:[%s5683 + $0xa8] sm:$0xf]
        %v7350 = vld [vmem:[%s5683 + $0xac] sm:$0xf]
        %v7351 = vld [vmem:[%s5683 + $0xb4] sm:$0xf]
        %v7352 = vld [vmem:[%s5683 + $0xb8] sm:$0xf]
        %v7353 = vld [vmem:[#allocation8 + $0xc0] sm:$0xf]
        %v7354 = vld [vmem:[#allocation8 + $0xc4] sm:$0xf]
        %v7355 = vld [vmem:[#allocation8 + $0xc8] sm:$0xf]
        %v7356 = vld [vmem:[#allocation8 + $0xcc] sm:$0xf]
        %v7357 = vld [vmem:[#allocation8 + $0xd0] sm:$0xf]
        %v7358 = vld [vmem:[#allocation8 + $0xd4] sm:$0xf]
        %v7359 = vld [vmem:[#allocation8 + $0xd8] sm:$0xf]
        %v7360 = vld [vmem:[#allocation8 + $0xdc] sm:$0xf]
        %v7361 = vld [vmem:[#allocation8 + $0xe0] sm:$0xf]
        %v7362 = vld [vmem:[#allocation8 + $0xe4] sm:$0xf]
        %v7363 = vld [vmem:[#allocation8 + $0xe8] sm:$0xf]
        %v7364 = vld [vmem:[#allocation8 + $0xec] sm:$0xf]
        %v7365 = vld [vmem:[#allocation8 + $0xf0] sm:$0xf]
        %v7366 = vld [vmem:[#allocation8 + $0xf4] sm:$0xf]
        %v7367 = vld [vmem:[#allocation8 + $0xf8] sm:$0xf]
        %v7368 = vld [vmem:[#allocation8 + $0xfc] sm:$0xf]
        %v7401 = vunpack.c.l.b16 %v7321
        %v7402 = vunpack.c.l.b16 %v7322
        %v7403 = vunpack.c.l.b16 %v7323
        %v7404 = vunpack.c.l.b16 %v7324
        %v7405 = vunpack.c.l.b16 %v7325
        %v7406 = vunpack.c.l.b16 %v7326
        %v7407 = vunpack.c.l.b16 %v7327
        %v7408 = vunpack.c.l.b16 %v7328
        %v7409 = vunpack.c.l.b16 %v7329
        %v7410 = vunpack.c.l.b16 %v7330
        %v7411 = vunpack.c.l.b16 %v7331
        %v7412 = vunpack.c.l.b16 %v7332
        %v7413 = vunpack.c.l.b16 %v7333
        %v7414 = vunpack.c.l.b16 %v7334
        %v7415 = vunpack.c.l.b16 %v7335
        %v7416 = vunpack.c.l.b16 %v7336
        %v7417 = vunpack.c.l.b16 %v7337
        %v7418 = vunpack.c.l.b16 %v7338
        %v7419 = vunpack.c.l.b16 %v7339
        %v7420 = vunpack.c.l.b16 %v7340
        %v7421 = vunpack.c.l.b16 %v7341
        %v7422 = vunpack.c.l.b16 %v7342
        %v7423 = vunpack.c.l.b16 %v7343
        %v7424 = vunpack.c.l.b16 %v7344
        %v7425 = vunpack.c.l.b16 %v7345
        %v7426 = vunpack.c.l.b16 %v7346
        %v7427 = vunpack.c.l.b16 %v7347
        %v7428 = vunpack.c.l.b16 %v7348
        %v7429 = vunpack.c.l.b16 %v7349
        %v7430 = vunpack.c.l.b16 %v7350
        %v7431 = vunpack.c.l.b16 %v7351
        %v7432 = vunpack.c.l.b16 %v7352
        %v7433 = vpack.c.b16 %v7402, %v7401
        %v7434 = vpack.c.b16 %v7404, %v7403
        %v7435 = vpack.c.b16 %v7406, %v7405
        %v7436 = vpack.c.b16 %v7408, %v7407
        %v7437 = vpack.c.b16 %v7410, %v7409
        %v7438 = vpack.c.b16 %v7412, %v7411
        %v7439 = vpack.c.b16 %v7414, %v7413
        %v7440 = vpack.c.b16 %v7416, %v7415
        %v7441 = vpack.c.b16 %v7418, %v7417
        %v7442 = vpack.c.b16 %v7420, %v7419
        %v7443 = vpack.c.b16 %v7422, %v7421
        %v7444 = vpack.c.b16 %v7424, %v7423
        %v7445 = vpack.c.b16 %v7426, %v7425
        %v7446 = vpack.c.b16 %v7428, %v7427
        %v7447 = vpack.c.b16 %v7430, %v7429
        %v7448 = vpack.c.b16 %v7432, %v7431
        %v7481 = vunpack.c.l.b16 %v7353
        %v7482 = vunpack.c.l.b16 %v7354
        %v7483 = vunpack.c.l.b16 %v7355
        %v7484 = vunpack.c.l.b16 %v7356
        %v7485 = vunpack.c.l.b16 %v7357
        %v7486 = vunpack.c.l.b16 %v7358
        %v7487 = vunpack.c.l.b16 %v7359
        %v7488 = vunpack.c.l.b16 %v7360
        %v7489 = vunpack.c.l.b16 %v7361
        %v7490 = vunpack.c.l.b16 %v7362
        %v7491 = vunpack.c.l.b16 %v7363
        %v7492 = vunpack.c.l.b16 %v7364
        %v7493 = vunpack.c.l.b16 %v7365
        %v7494 = vunpack.c.l.b16 %v7366
        %v7495 = vunpack.c.l.b16 %v7367
        %v7496 = vunpack.c.l.b16 %v7368
        %v7497 = vpack.c.b16 %v7482, %v7481
        %v7498 = vpack.c.b16 %v7484, %v7483
        %v7499 = vpack.c.b16 %v7486, %v7485
        %v7500 = vpack.c.b16 %v7488, %v7487
        %v7501 = vpack.c.b16 %v7490, %v7489
        %v7502 = vpack.c.b16 %v7492, %v7491
        %v7503 = vpack.c.b16 %v7494, %v7493
        %v7504 = vpack.c.b16 %v7496, %v7495
        %7513 = vmatprep.subr.bf16.mxu0 0
        %7514 = vmatpush1.bf16.msra.mxu0 %v7504
        %7515 = vmatprep.subr.bf16.mxu0 0
        %7516 = vmatpush1.bf16.msra.mxu0 %v7503
        %7517 = vmatprep.subr.bf16.mxu0 0
        %7518 = vmatpush1.bf16.msra.mxu0 %v7502
        %7519 = vmatprep.subr.bf16.mxu0 0
        %7520 = vmatpush1.bf16.msra.mxu0 %v7501
        %7521 = vmatprep.subr.bf16.mxu0 0
        %7522 = vmatpush1.bf16.msra.mxu0 %v7500
        %7523 = vmatprep.subr.bf16.mxu0 0
        %7524 = vmatpush1.bf16.msra.mxu0 %v7499
        %7525 = vmatprep.subr.bf16.mxu0 0
        %7526 = vmatpush1.bf16.msra.mxu0 %v7498
        %7527 = vmatprep.subr.bf16.mxu0 0
        %7528 = vmatpush1.bf16.msra.mxu0 %v7497
        %7529 = vmatprep.subr.bf16.mxu0 0
        %7530 = vmatpush2.bf16.msra.mxu0 0
        %7531 = vmatprep.subr.bf16.mxu0 0
        %7532 = vmatpush2.bf16.msra.mxu0 0
        %7533 = vmatprep.subr.bf16.mxu0 0
        %7534 = vmatpush2.bf16.msra.mxu0 0
        %7535 = vmatprep.subr.bf16.mxu0 0
        %7536 = vmatpush2.bf16.msra.mxu0 0
        %7537 = vmatprep.subr.bf16.mxu0 0
        %7538 = vmatpush2.bf16.msra.mxu0 0
        %7539 = vmatprep.subr.bf16.mxu0 0
        %7540 = vmatpush2.bf16.msra.mxu0 0
        %7541 = vmatprep.subr.bf16.mxu0 0
        %7542 = vmatpush2.bf16.msra.mxu0 0
        %7543 = vmatprep.subr.bf16.mxu0 0
        %7544 = vmatpush2.bf16.msra.mxu0 0
        %7545 = vmatprep.mubr.bf16.mxu0 0
        %7546 = vmatmul.mubr.bf16.gmra.mxu0 %v7433
        %v7547 = vpop.f32.mrf.mxu0
        %v7548 = vadd.f32 0.0, %v7547
        %v7549 = vpop.f32.mrf.mxu0
        %v7550 = vpop.f32.mrf.mxu0
        %v7551 = vadd.f32 0.0, %v7550
        %v7552 = vpop.f32.mrf.mxu0
        %7553 = vmatprep.mubr.bf16.mxu0 0
        %7554 = vmatmul.mubr.bf16.gmra.mxu0 %v7434
        %v7555 = vpop.f32.mrf.mxu0
        %v7556 = vadd.f32 0.0, %v7555
        %v7557 = vpop.f32.mrf.mxu0
        %v7558 = vpop.f32.mrf.mxu0
        %v7559 = vadd.f32 0.0, %v7558
        %v7560 = vpop.f32.mrf.mxu0
        %7561 = vmatprep.mubr.bf16.mxu0 0
        %7562 = vmatmul.mubr.bf16.gmra.mxu0 %v7435
        %v7563 = vpop.f32.mrf.mxu0
        %v7564 = vadd.f32 0.0, %v7563
        %v7565 = vpop.f32.mrf.mxu0
        %v7566 = vpop.f32.mrf.mxu0
        %v7567 = vadd.f32 0.0, %v7566
        %v7568 = vpop.f32.mrf.mxu0
        %7569 = vmatprep.mubr.bf16.mxu0 0
        %7570 = vmatmul.mubr.bf16.gmra.mxu0 %v7436
        %v7571 = vpop.f32.mrf.mxu0
        %v7572 = vadd.f32 0.0, %v7571
        %v7573 = vpop.f32.mrf.mxu0
        %v7574 = vpop.f32.mrf.mxu0
        %v7575 = vadd.f32 0.0, %v7574
        %v7576 = vpop.f32.mrf.mxu0
        %7577 = vmatprep.mubr.bf16.mxu0 0
        %7578 = vmatmul.mubr.bf16.gmra.mxu0 %v7437
        %v7579 = vpop.f32.mrf.mxu0
        %v7580 = vadd.f32 0.0, %v7579
        %v7581 = vpop.f32.mrf.mxu0
        %v7582 = vpop.f32.mrf.mxu0
        %v7583 = vadd.f32 0.0, %v7582
        %v7584 = vpop.f32.mrf.mxu0
        %7585 = vmatprep.mubr.bf16.mxu0 0
        %7586 = vmatmul.mubr.bf16.gmra.mxu0 %v7438
        %v7587 = vpop.f32.mrf.mxu0
        %v7588 = vadd.f32 0.0, %v7587
        %v7589 = vpop.f32.mrf.mxu0
        %v7590 = vpop.f32.mrf.mxu0
        %v7591 = vadd.f32 0.0, %v7590
        %v7592 = vpop.f32.mrf.mxu0
        %7593 = vmatprep.mubr.bf16.mxu0 0
        %7594 = vmatmul.mubr.bf16.gmra.mxu0 %v7439
        %v7595 = vpop.f32.mrf.mxu0
        %v7596 = vadd.f32 0.0, %v7595
        %v7597 = vpop.f32.mrf.mxu0
        %v7598 = vpop.f32.mrf.mxu0
        %v7599 = vadd.f32 0.0, %v7598
        %v7600 = vpop.f32.mrf.mxu0
        %7601 = vmatprep.mubr.bf16.mxu0 0
        %7602 = vmatmul.mubr.bf16.gmra.mxu0 %v7440
        %v7603 = vpop.f32.mrf.mxu0
        %v7604 = vadd.f32 0.0, %v7603
        %v7605 = vpop.f32.mrf.mxu0
        %v7606 = vpop.f32.mrf.mxu0
        %v7607 = vadd.f32 0.0, %v7606
        %v7608 = vpop.f32.mrf.mxu0
        %7609 = vmatprep.mubr.bf16.mxu0 0
        %7610 = vmatmul.mubr.bf16.gmra.mxu0 %v7441
        %v7611 = vpop.f32.mrf.mxu0
        %v7612 = vadd.f32 0.0, %v7611
        %v7613 = vpop.f32.mrf.mxu0
        %v7614 = vpop.f32.mrf.mxu0
        %v7615 = vadd.f32 0.0, %v7614
        %v7616 = vpop.f32.mrf.mxu0
        %7617 = vmatprep.mubr.bf16.mxu0 0
        %7618 = vmatmul.mubr.bf16.gmra.mxu0 %v7442
        %v7619 = vpop.f32.mrf.mxu0
        %v7620 = vadd.f32 0.0, %v7619
        %v7621 = vpop.f32.mrf.mxu0
        %v7622 = vpop.f32.mrf.mxu0
        %v7623 = vadd.f32 0.0, %v7622
        %v7624 = vpop.f32.mrf.mxu0
        %7625 = vmatprep.mubr.bf16.mxu0 0
        %7626 = vmatmul.mubr.bf16.gmra.mxu0 %v7443
        %v7627 = vpop.f32.mrf.mxu0
        %v7628 = vadd.f32 0.0, %v7627
        %v7629 = vpop.f32.mrf.mxu0
        %v7630 = vpop.f32.mrf.mxu0
        %v7631 = vadd.f32 0.0, %v7630
        %v7632 = vpop.f32.mrf.mxu0
        %7633 = vmatprep.mubr.bf16.mxu0 0
        %7634 = vmatmul.mubr.bf16.gmra.mxu0 %v7444
        %v7635 = vpop.f32.mrf.mxu0
        %v7636 = vadd.f32 0.0, %v7635
        %v7637 = vpop.f32.mrf.mxu0
        %v7638 = vpop.f32.mrf.mxu0
        %v7639 = vadd.f32 0.0, %v7638
        %v7640 = vpop.f32.mrf.mxu0
        %7641 = vmatprep.mubr.bf16.mxu0 0
        %7642 = vmatmul.mubr.bf16.gmra.mxu0 %v7445
        %v7643 = vpop.f32.mrf.mxu0
        %v7644 = vadd.f32 0.0, %v7643
        %v7645 = vpop.f32.mrf.mxu0
        %v7646 = vpop.f32.mrf.mxu0
        %v7647 = vadd.f32 0.0, %v7646
        %v7648 = vpop.f32.mrf.mxu0
        %7649 = vmatprep.mubr.bf16.mxu0 0
        %7650 = vmatmul.mubr.bf16.gmra.mxu0 %v7446
        %v7651 = vpop.f32.mrf.mxu0
        %v7652 = vadd.f32 0.0, %v7651
        %v7653 = vpop.f32.mrf.mxu0
        %v7654 = vpop.f32.mrf.mxu0
        %v7655 = vadd.f32 0.0, %v7654
        %v7656 = vpop.f32.mrf.mxu0
        %7657 = vmatprep.mubr.bf16.mxu0 0
        %7658 = vmatmul.mubr.bf16.gmra.mxu0 %v7447
        %v7659 = vpop.f32.mrf.mxu0
        %v7660 = vadd.f32 0.0, %v7659
        %v7661 = vpop.f32.mrf.mxu0
        %v7662 = vpop.f32.mrf.mxu0
        %v7663 = vadd.f32 0.0, %v7662
        %v7664 = vpop.f32.mrf.mxu0
        %7665 = vmatprep.mubr.bf16.mxu0 0
        %7666 = vmatmul.mubr.bf16.gmra.mxu0 %v7448
        %v7667 = vpop.f32.mrf.mxu0
        %v7668 = vadd.f32 0.0, %v7667
        %v7669 = vpop.f32.mrf.mxu0
        %v7670 = vpop.f32.mrf.mxu0
        %v7671 = vadd.f32 0.0, %v7670
        %v7672 = vpop.f32.mrf.mxu0
        %7673 = vdwg.mxu0
        %v7674 = vadd.f32 %v7289, %v7548
        %v7675 = vadd.f32 %v7290, %v7551
        %v7676 = vadd.f32 %v7291, %v7556
        %v7677 = vadd.f32 %v7292, %v7559
        %v7678 = vadd.f32 %v7293, %v7564
        %v7679 = vadd.f32 %v7294, %v7567
        %v7680 = vadd.f32 %v7295, %v7572
        %v7681 = vadd.f32 %v7296, %v7575
        %v7682 = vadd.f32 %v7297, %v7580
        %v7683 = vadd.f32 %v7298, %v7583
        %v7684 = vadd.f32 %v7299, %v7588
        %v7685 = vadd.f32 %v7300, %v7591
        %v7686 = vadd.f32 %v7301, %v7596
        %v7687 = vadd.f32 %v7302, %v7599
        %v7688 = vadd.f32 %v7303, %v7604
        %v7689 = vadd.f32 %v7304, %v7607
        %v7690 = vadd.f32 %v7305, %v7612
        %v7691 = vadd.f32 %v7306, %v7615
        %v7692 = vadd.f32 %v7307, %v7620
        %v7693 = vadd.f32 %v7308, %v7623
        %v7694 = vadd.f32 %v7309, %v7628
        %v7695 = vadd.f32 %v7310, %v7631
        %v7696 = vadd.f32 %v7311, %v7636
        %v7697 = vadd.f32 %v7312, %v7639
        %v7698 = vadd.f32 %v7313, %v7644
        %v7699 = vadd.f32 %v7314, %v7647
        %v7700 = vadd.f32 %v7315, %v7652
        %v7701 = vadd.f32 %v7316, %v7655
        %v7702 = vadd.f32 %v7317, %v7660
        %v7703 = vadd.f32 %v7318, %v7663
        %v7704 = vadd.f32 %v7319, %v7668
        %v7705 = vadd.f32 %v7320, %v7671
        %v7706 = vld [vmem:[%s5683] sm:$0xf]
        %v7707 = vld [vmem:[%s5683 + $0x4] sm:$0xf]
        %v7708 = vld [vmem:[%s5683 + $0x8] sm:$0x1]
        %v7709 = vld [vmem:[%s5683 + $0xc] sm:$0xf]
        %v7710 = vld [vmem:[%s5683 + $0x10] sm:$0xf]
        %v7711 = vld [vmem:[%s5683 + $0x14] sm:$0x1]
        %v7712 = vld [vmem:[%s5683 + $0x18] sm:$0xf]
        %v7713 = vld [vmem:[%s5683 + $0x1c] sm:$0xf]
        %v7714 = vld [vmem:[%s5683 + $0x20] sm:$0x1]
        %v7715 = vld [vmem:[%s5683 + $0x24] sm:$0xf]
        %v7716 = vld [vmem:[%s5683 + $0x28] sm:$0xf]
        %v7717 = vld [vmem:[%s5683 + $0x2c] sm:$0x1]
        %v7718 = vld [vmem:[%s5683 + $0x30] sm:$0xf]
        %v7719 = vld [vmem:[%s5683 + $0x34] sm:$0xf]
        %v7720 = vld [vmem:[%s5683 + $0x38] sm:$0x1]
        %v7721 = vld [vmem:[%s5683 + $0x3c] sm:$0xf]
        %v7722 = vld [vmem:[%s5683 + $0x40] sm:$0xf]
        %v7723 = vld [vmem:[%s5683 + $0x44] sm:$0x1]
        %v7724 = vld [vmem:[%s5683 + $0x48] sm:$0xf]
        %v7725 = vld [vmem:[%s5683 + $0x4c] sm:$0xf]
        %v7726 = vld [vmem:[%s5683 + $0x50] sm:$0x1]
        %v7727 = vld [vmem:[%s5683 + $0x54] sm:$0xf]
        %v7728 = vld [vmem:[%s5683 + $0x58] sm:$0xf]
        %v7729 = vld [vmem:[%s5683 + $0x5c] sm:$0x1]
        %v7730 = vld [vmem:[%s5683 + $0x60] sm:$0xf]
        %v7731 = vld [vmem:[%s5683 + $0x64] sm:$0xf]
        %v7732 = vld [vmem:[%s5683 + $0x68] sm:$0x1]
        %v7733 = vld [vmem:[%s5683 + $0x6c] sm:$0xf]
        %v7734 = vld [vmem:[%s5683 + $0x70] sm:$0xf]
        %v7735 = vld [vmem:[%s5683 + $0x74] sm:$0x1]
        %v7736 = vld [vmem:[%s5683 + $0x78] sm:$0xf]
        %v7737 = vld [vmem:[%s5683 + $0x7c] sm:$0xf]
        %v7738 = vld [vmem:[%s5683 + $0x80] sm:$0x1]
        %v7739 = vld [vmem:[%s5683 + $0x84] sm:$0xf]
        %v7740 = vld [vmem:[%s5683 + $0x88] sm:$0xf]
        %v7741 = vld [vmem:[%s5683 + $0x8c] sm:$0x1]
        %v7742 = vld [vmem:[%s5683 + $0x90] sm:$0xf]
        %v7743 = vld [vmem:[%s5683 + $0x94] sm:$0xf]
        %v7744 = vld [vmem:[%s5683 + $0x98] sm:$0x1]
        %v7745 = vld [vmem:[%s5683 + $0x9c] sm:$0xf]
        %v7746 = vld [vmem:[%s5683 + $0xa0] sm:$0xf]
        %v7747 = vld [vmem:[%s5683 + $0xa4] sm:$0x1]
        %v7748 = vld [vmem:[%s5683 + $0xa8] sm:$0xf]
        %v7749 = vld [vmem:[%s5683 + $0xac] sm:$0xf]
        %v7750 = vld [vmem:[%s5683 + $0xb0] sm:$0x1]
        %v7751 = vld [vmem:[%s5683 + $0xb4] sm:$0xf]
        %v7752 = vld [vmem:[%s5683 + $0xb8] sm:$0xf]
        %v7753 = vld [vmem:[%s5683 + $0xbc] sm:$0x1]
        %v7755 = vshrl.u32 %v7706, 16
        %v7757 = vrot.slane %v7755, 4
        %v7758 = vshll.u32 %v7706, 16
        %v7760 = vrot.slane %v7758, 5
        %v7761 = vor.u32 %v7757, %v7760
        %v7762 = vrot.slane %v7761, 4
        %v7764 = vshll.u32 %v7707, 16
        %v7766 = vrot.slane %v7764, 5
        %v7767 = vsel %vm339, %v7762, %v7766
        %v7768 = vshrl.u32 %v7707, 16
        %v7770 = vrot.slane %v7768, 4
        %v7771 = vor.u32 %v7770, %v7766
        %v7772 = vrot.slane %v7771, 4
        %v7774 = vshll.u32 %v7708, 16
        %v7776 = vrot.slane %v7774, 5
        %v7777 = vsel %vm339, %v7772, %v7776
        %v7779 = vshrl.u32 %v7709, 16
        %v7781 = vrot.slane %v7779, 4
        %v7782 = vshll.u32 %v7709, 16
        %v7784 = vrot.slane %v7782, 5
        %v7785 = vor.u32 %v7781, %v7784
        %v7786 = vrot.slane %v7785, 4
        %v7788 = vshll.u32 %v7710, 16
        %v7790 = vrot.slane %v7788, 5
        %v7791 = vsel %vm339, %v7786, %v7790
        %v7792 = vshrl.u32 %v7710, 16
        %v7794 = vrot.slane %v7792, 4
        %v7795 = vor.u32 %v7794, %v7790
        %v7796 = vrot.slane %v7795, 4
        %v7798 = vshll.u32 %v7711, 16
        %v7800 = vrot.slane %v7798, 5
        %v7801 = vsel %vm339, %v7796, %v7800
        %v7803 = vshrl.u32 %v7712, 16
        %v7805 = vrot.slane %v7803, 4
        %v7806 = vshll.u32 %v7712, 16
        %v7808 = vrot.slane %v7806, 5
        %v7809 = vor.u32 %v7805, %v7808
        %v7810 = vrot.slane %v7809, 4
        %v7812 = vshll.u32 %v7713, 16
        %v7814 = vrot.slane %v7812, 5
        %v7815 = vsel %vm339, %v7810, %v7814
        %v7816 = vshrl.u32 %v7713, 16
        %v7818 = vrot.slane %v7816, 4
        %v7819 = vor.u32 %v7818, %v7814
        %v7820 = vrot.slane %v7819, 4
        %v7822 = vshll.u32 %v7714, 16
        %v7824 = vrot.slane %v7822, 5
        %v7825 = vsel %vm339, %v7820, %v7824
        %v7827 = vshrl.u32 %v7715, 16
        %v7829 = vrot.slane %v7827, 4
        %v7830 = vshll.u32 %v7715, 16
        %v7832 = vrot.slane %v7830, 5
        %v7833 = vor.u32 %v7829, %v7832
        %v7834 = vrot.slane %v7833, 4
        %v7836 = vshll.u32 %v7716, 16
        %v7838 = vrot.slane %v7836, 5
        %v7839 = vsel %vm339, %v7834, %v7838
        %v7840 = vshrl.u32 %v7716, 16
        %v7842 = vrot.slane %v7840, 4
        %v7843 = vor.u32 %v7842, %v7838
        %v7844 = vrot.slane %v7843, 4
        %v7846 = vshll.u32 %v7717, 16
        %v7848 = vrot.slane %v7846, 5
        %v7849 = vsel %vm339, %v7844, %v7848
        %v7851 = vshrl.u32 %v7718, 16
        %v7853 = vrot.slane %v7851, 4
        %v7854 = vshll.u32 %v7718, 16
        %v7856 = vrot.slane %v7854, 5
        %v7857 = vor.u32 %v7853, %v7856
        %v7858 = vrot.slane %v7857, 4
        %v7860 = vshll.u32 %v7719, 16
        %v7862 = vrot.slane %v7860, 5
        %v7863 = vsel %vm339, %v7858, %v7862
        %v7864 = vshrl.u32 %v7719, 16
        %v7866 = vrot.slane %v7864, 4
        %v7867 = vor.u32 %v7866, %v7862
        %v7868 = vrot.slane %v7867, 4
        %v7870 = vshll.u32 %v7720, 16
        %v7872 = vrot.slane %v7870, 5
        %v7873 = vsel %vm339, %v7868, %v7872
        %v7875 = vshrl.u32 %v7721, 16
        %v7877 = vrot.slane %v7875, 4
        %v7878 = vshll.u32 %v7721, 16
        %v7880 = vrot.slane %v7878, 5
        %v7881 = vor.u32 %v7877, %v7880
        %v7882 = vrot.slane %v7881, 4
        %v7884 = vshll.u32 %v7722, 16
        %v7886 = vrot.slane %v7884, 5
        %v7887 = vsel %vm339, %v7882, %v7886
        %v7888 = vshrl.u32 %v7722, 16
        %v7890 = vrot.slane %v7888, 4
        %v7891 = vor.u32 %v7890, %v7886
        %v7892 = vrot.slane %v7891, 4
        %v7894 = vshll.u32 %v7723, 16
        %v7896 = vrot.slane %v7894, 5
        %v7897 = vsel %vm339, %v7892, %v7896
        %v7899 = vshrl.u32 %v7724, 16
        %v7901 = vrot.slane %v7899, 4
        %v7902 = vshll.u32 %v7724, 16
        %v7904 = vrot.slane %v7902, 5
        %v7905 = vor.u32 %v7901, %v7904
        %v7906 = vrot.slane %v7905, 4
        %v7908 = vshll.u32 %v7725, 16
        %v7910 = vrot.slane %v7908, 5
        %v7911 = vsel %vm339, %v7906, %v7910
        %v7912 = vshrl.u32 %v7725, 16
        %v7914 = vrot.slane %v7912, 4
        %v7915 = vor.u32 %v7914, %v7910
        %v7916 = vrot.slane %v7915, 4
        %v7918 = vshll.u32 %v7726, 16
        %v7920 = vrot.slane %v7918, 5
        %v7921 = vsel %vm339, %v7916, %v7920
        %v7923 = vshrl.u32 %v7727, 16
        %v7925 = vrot.slane %v7923, 4
        %v7926 = vshll.u32 %v7727, 16
        %v7928 = vrot.slane %v7926, 5
        %v7929 = vor.u32 %v7925, %v7928
        %v7930 = vrot.slane %v7929, 4
        %v7932 = vshll.u32 %v7728, 16
        %v7934 = vrot.slane %v7932, 5
        %v7935 = vsel %vm339, %v7930, %v7934
        %v7936 = vshrl.u32 %v7728, 16
        %v7938 = vrot.slane %v7936, 4
        %v7939 = vor.u32 %v7938, %v7934
        %v7940 = vrot.slane %v7939, 4
        %v7942 = vshll.u32 %v7729, 16
        %v7944 = vrot.slane %v7942, 5
        %v7945 = vsel %vm339, %v7940, %v7944
        %v7947 = vshrl.u32 %v7730, 16
        %v7949 = vrot.slane %v7947, 4
        %v7950 = vshll.u32 %v7730, 16
        %v7952 = vrot.slane %v7950, 5
        %v7953 = vor.u32 %v7949, %v7952
        %v7954 = vrot.slane %v7953, 4
        %v7956 = vshll.u32 %v7731, 16
        %v7958 = vrot.slane %v7956, 5
        %v7959 = vsel %vm339, %v7954, %v7958
        %v7960 = vshrl.u32 %v7731, 16
        %v7962 = vrot.slane %v7960, 4
        %v7963 = vor.u32 %v7962, %v7958
        %v7964 = vrot.slane %v7963, 4
        %v7966 = vshll.u32 %v7732, 16
        %v7968 = vrot.slane %v7966, 5
        %v7969 = vsel %vm339, %v7964, %v7968
        %v7971 = vshrl.u32 %v7733, 16
        %v7973 = vrot.slane %v7971, 4
        %v7974 = vshll.u32 %v7733, 16
        %v7976 = vrot.slane %v7974, 5
        %v7977 = vor.u32 %v7973, %v7976
        %v7978 = vrot.slane %v7977, 4
        %v7980 = vshll.u32 %v7734, 16
        %v7982 = vrot.slane %v7980, 5
        %v7983 = vsel %vm339, %v7978, %v7982
        %v7984 = vshrl.u32 %v7734, 16
        %v7986 = vrot.slane %v7984, 4
        %v7987 = vor.u32 %v7986, %v7982
        %v7988 = vrot.slane %v7987, 4
        %v7990 = vshll.u32 %v7735, 16
        %v7992 = vrot.slane %v7990, 5
        %v7993 = vsel %vm339, %v7988, %v7992
        %v7995 = vshrl.u32 %v7736, 16
        %v7997 = vrot.slane %v7995, 4
        %v7998 = vshll.u32 %v7736, 16
        %v8000 = vrot.slane %v7998, 5
        %v8001 = vor.u32 %v7997, %v8000
        %v8002 = vrot.slane %v8001, 4
        %v8004 = vshll.u32 %v7737, 16
        %v8006 = vrot.slane %v8004, 5
        %v8007 = vsel %vm339, %v8002, %v8006
        %v8008 = vshrl.u32 %v7737, 16
        %v8010 = vrot.slane %v8008, 4
        %v8011 = vor.u32 %v8010, %v8006
        %v8012 = vrot.slane %v8011, 4
        %v8014 = vshll.u32 %v7738, 16
        %v8016 = vrot.slane %v8014, 5
        %v8017 = vsel %vm339, %v8012, %v8016
        %v8019 = vshrl.u32 %v7739, 16
        %v8021 = vrot.slane %v8019, 4
        %v8022 = vshll.u32 %v7739, 16
        %v8024 = vrot.slane %v8022, 5
        %v8025 = vor.u32 %v8021, %v8024
        %v8026 = vrot.slane %v8025, 4
        %v8028 = vshll.u32 %v7740, 16
        %v8030 = vrot.slane %v8028, 5
        %v8031 = vsel %vm339, %v8026, %v8030
        %v8032 = vshrl.u32 %v7740, 16
        %v8034 = vrot.slane %v8032, 4
        %v8035 = vor.u32 %v8034, %v8030
        %v8036 = vrot.slane %v8035, 4
        %v8038 = vshll.u32 %v7741, 16
        %v8040 = vrot.slane %v8038, 5
        %v8041 = vsel %vm339, %v8036, %v8040
        %v8043 = vshrl.u32 %v7742, 16
        %v8045 = vrot.slane %v8043, 4
        %v8046 = vshll.u32 %v7742, 16
        %v8048 = vrot.slane %v8046, 5
        %v8049 = vor.u32 %v8045, %v8048
        %v8050 = vrot.slane %v8049, 4
        %v8052 = vshll.u32 %v7743, 16
        %v8054 = vrot.slane %v8052, 5
        %v8055 = vsel %vm339, %v8050, %v8054
        %v8056 = vshrl.u32 %v7743, 16
        %v8058 = vrot.slane %v8056, 4
        %v8059 = vor.u32 %v8058, %v8054
        %v8060 = vrot.slane %v8059, 4
        %v8062 = vshll.u32 %v7744, 16
        %v8064 = vrot.slane %v8062, 5
        %v8065 = vsel %vm339, %v8060, %v8064
        %v8067 = vshrl.u32 %v7745, 16
        %v8069 = vrot.slane %v8067, 4
        %v8070 = vshll.u32 %v7745, 16
        %v8072 = vrot.slane %v8070, 5
        %v8073 = vor.u32 %v8069, %v8072
        %v8074 = vrot.slane %v8073, 4
        %v8076 = vshll.u32 %v7746, 16
        %v8078 = vrot.slane %v8076, 5
        %v8079 = vsel %vm339, %v8074, %v8078
        %v8080 = vshrl.u32 %v7746, 16
        %v8082 = vrot.slane %v8080, 4
        %v8083 = vor.u32 %v8082, %v8078
        %v8084 = vrot.slane %v8083, 4
        %v8086 = vshll.u32 %v7747, 16
        %v8088 = vrot.slane %v8086, 5
        %v8089 = vsel %vm339, %v8084, %v8088
        %v8091 = vshrl.u32 %v7748, 16
        %v8093 = vrot.slane %v8091, 4
        %v8094 = vshll.u32 %v7748, 16
        %v8096 = vrot.slane %v8094, 5
        %v8097 = vor.u32 %v8093, %v8096
        %v8098 = vrot.slane %v8097, 4
        %v8100 = vshll.u32 %v7749, 16
        %v8102 = vrot.slane %v8100, 5
        %v8103 = vsel %vm339, %v8098, %v8102
        %v8104 = vshrl.u32 %v7749, 16
        %v8106 = vrot.slane %v8104, 4
        %v8107 = vor.u32 %v8106, %v8102
        %v8108 = vrot.slane %v8107, 4
        %v8110 = vshll.u32 %v7750, 16
        %v8112 = vrot.slane %v8110, 5
        %v8113 = vsel %vm339, %v8108, %v8112
        %v8115 = vshrl.u32 %v7751, 16
        %v8117 = vrot.slane %v8115, 4
        %v8118 = vshll.u32 %v7751, 16
        %v8120 = vrot.slane %v8118, 5
        %v8121 = vor.u32 %v8117, %v8120
        %v8122 = vrot.slane %v8121, 4
        %v8124 = vshll.u32 %v7752, 16
        %v8126 = vrot.slane %v8124, 5
        %v8127 = vsel %vm339, %v8122, %v8126
        %v8128 = vshrl.u32 %v7752, 16
        %v8130 = vrot.slane %v8128, 4
        %v8131 = vor.u32 %v8130, %v8126
        %v8132 = vrot.slane %v8131, 4
        %v8134 = vshll.u32 %v7753, 16
        %v8136 = vrot.slane %v8134, 5
        %v8137 = vsel %vm339, %v8132, %v8136
        %v8138 = vld [vmem:[#allocation8 + $0x100] sm:$0xf]
        %v8139 = vld [vmem:[#allocation8 + $0x104] sm:$0xf]
        %v8140 = vld [vmem:[#allocation8 + $0x108] sm:$0xf]
        %v8141 = vld [vmem:[#allocation8 + $0x10c] sm:$0xf]
        %v8142 = vld [vmem:[#allocation8 + $0x110] sm:$0xf]
        %v8143 = vld [vmem:[#allocation8 + $0x114] sm:$0xf]
        %v8144 = vld [vmem:[#allocation8 + $0x118] sm:$0xf]
        %v8145 = vld [vmem:[#allocation8 + $0x11c] sm:$0xf]
        %v8146 = vld [vmem:[#allocation8 + $0x120] sm:$0xf]
        %v8147 = vld [vmem:[#allocation8 + $0x124] sm:$0xf]
        %v8148 = vld [vmem:[#allocation8 + $0x128] sm:$0xf]
        %v8149 = vld [vmem:[#allocation8 + $0x12c] sm:$0xf]
        %v8150 = vld [vmem:[#allocation8 + $0x130] sm:$0xf]
        %v8151 = vld [vmem:[#allocation8 + $0x134] sm:$0xf]
        %v8152 = vld [vmem:[#allocation8 + $0x138] sm:$0xf]
        %v8153 = vld [vmem:[#allocation8 + $0x13c] sm:$0xf]
        %v8154 = vunpack.c.l.b16 %v7767
        %v8155 = vunpack.c.l.b16 %v7777
        %v8156 = vunpack.c.l.b16 %v7791
        %v8157 = vunpack.c.l.b16 %v7801
        %v8158 = vunpack.c.l.b16 %v7815
        %v8159 = vunpack.c.l.b16 %v7825
        %v8160 = vunpack.c.l.b16 %v7839
        %v8161 = vunpack.c.l.b16 %v7849
        %v8162 = vunpack.c.l.b16 %v7863
        %v8163 = vunpack.c.l.b16 %v7873
        %v8164 = vunpack.c.l.b16 %v7887
        %v8165 = vunpack.c.l.b16 %v7897
        %v8166 = vunpack.c.l.b16 %v7911
        %v8167 = vunpack.c.l.b16 %v7921
        %v8168 = vunpack.c.l.b16 %v7935
        %v8169 = vunpack.c.l.b16 %v7945
        %v8170 = vunpack.c.l.b16 %v7959
        %v8171 = vunpack.c.l.b16 %v7969
        %v8172 = vunpack.c.l.b16 %v7983
        %v8173 = vunpack.c.l.b16 %v7993
        %v8174 = vunpack.c.l.b16 %v8007
        %v8175 = vunpack.c.l.b16 %v8017
        %v8176 = vunpack.c.l.b16 %v8031
        %v8177 = vunpack.c.l.b16 %v8041
        %v8178 = vunpack.c.l.b16 %v8055
        %v8179 = vunpack.c.l.b16 %v8065
        %v8180 = vunpack.c.l.b16 %v8079
        %v8181 = vunpack.c.l.b16 %v8089
        %v8182 = vunpack.c.l.b16 %v8103
        %v8183 = vunpack.c.l.b16 %v8113
        %v8184 = vunpack.c.l.b16 %v8127
        %v8185 = vunpack.c.l.b16 %v8137
        %v8186 = vpack.c.b16 %v8155, %v8154
        %v8187 = vpack.c.b16 %v8157, %v8156
        %v8188 = vpack.c.b16 %v8159, %v8158
        %v8189 = vpack.c.b16 %v8161, %v8160
        %v8190 = vpack.c.b16 %v8163, %v8162
        %v8191 = vpack.c.b16 %v8165, %v8164
        %v8192 = vpack.c.b16 %v8167, %v8166
        %v8193 = vpack.c.b16 %v8169, %v8168
        %v8194 = vpack.c.b16 %v8171, %v8170
        %v8195 = vpack.c.b16 %v8173, %v8172
        %v8196 = vpack.c.b16 %v8175, %v8174
        %v8197 = vpack.c.b16 %v8177, %v8176
        %v8198 = vpack.c.b16 %v8179, %v8178
        %v8199 = vpack.c.b16 %v8181, %v8180
        %v8200 = vpack.c.b16 %v8183, %v8182
        %v8201 = vpack.c.b16 %v8185, %v8184
        %v8234 = vunpack.c.l.b16 %v8138
        %v8235 = vunpack.c.l.b16 %v8139
        %v8236 = vunpack.c.l.b16 %v8140
        %v8237 = vunpack.c.l.b16 %v8141
        %v8238 = vunpack.c.l.b16 %v8142
        %v8239 = vunpack.c.l.b16 %v8143
        %v8240 = vunpack.c.l.b16 %v8144
        %v8241 = vunpack.c.l.b16 %v8145
        %v8242 = vunpack.c.l.b16 %v8146
        %v8243 = vunpack.c.l.b16 %v8147
        %v8244 = vunpack.c.l.b16 %v8148
        %v8245 = vunpack.c.l.b16 %v8149
        %v8246 = vunpack.c.l.b16 %v8150
        %v8247 = vunpack.c.l.b16 %v8151
        %v8248 = vunpack.c.l.b16 %v8152
        %v8249 = vunpack.c.l.b16 %v8153
        %v8250 = vpack.c.b16 %v8235, %v8234
        %v8251 = vpack.c.b16 %v8237, %v8236
        %v8252 = vpack.c.b16 %v8239, %v8238
        %v8253 = vpack.c.b16 %v8241, %v8240
        %v8254 = vpack.c.b16 %v8243, %v8242
        %v8255 = vpack.c.b16 %v8245, %v8244
        %v8256 = vpack.c.b16 %v8247, %v8246
        %v8257 = vpack.c.b16 %v8249, %v8248
        %8266 = vmatprep.subr.bf16.mxu0 0
        %8267 = vmatpush1.bf16.msra.mxu0 %v8257
        %8268 = vmatprep.subr.bf16.mxu0 0
        %8269 = vmatpush1.bf16.msra.mxu0 %v8256
        %8270 = vmatprep.subr.bf16.mxu0 0
        %8271 = vmatpush1.bf16.msra.mxu0 %v8255
        %8272 = vmatprep.subr.bf16.mxu0 0
        %8273 = vmatpush1.bf16.msra.mxu0 %v8254
        %8274 = vmatprep.subr.bf16.mxu0 0
        %8275 = vmatpush1.bf16.msra.mxu0 %v8253
        %8276 = vmatprep.subr.bf16.mxu0 0
        %8277 = vmatpush1.bf16.msra.mxu0 %v8252
        %8278 = vmatprep.subr.bf16.mxu0 0
        %8279 = vmatpush1.bf16.msra.mxu0 %v8251
        %8280 = vmatprep.subr.bf16.mxu0 0
        %8281 = vmatpush1.bf16.msra.mxu0 %v8250
        %8282 = vmatprep.subr.bf16.mxu0 0
        %8283 = vmatpush2.bf16.msra.mxu0 0
        %8284 = vmatprep.subr.bf16.mxu0 0
        %8285 = vmatpush2.bf16.msra.mxu0 0
        %8286 = vmatprep.subr.bf16.mxu0 0
        %8287 = vmatpush2.bf16.msra.mxu0 0
        %8288 = vmatprep.subr.bf16.mxu0 0
        %8289 = vmatpush2.bf16.msra.mxu0 0
        %8290 = vmatprep.subr.bf16.mxu0 0
        %8291 = vmatpush2.bf16.msra.mxu0 0
        %8292 = vmatprep.subr.bf16.mxu0 0
        %8293 = vmatpush2.bf16.msra.mxu0 0
        %8294 = vmatprep.subr.bf16.mxu0 0
        %8295 = vmatpush2.bf16.msra.mxu0 0
        %8296 = vmatprep.subr.bf16.mxu0 0
        %8297 = vmatpush2.bf16.msra.mxu0 0
        %8298 = vmatprep.mubr.bf16.mxu0 0
        %8299 = vmatmul.mubr.bf16.gmra.mxu0 %v8186
        %v8300 = vpop.f32.mrf.mxu0
        %v8301 = vadd.f32 0.0, %v8300
        %v8302 = vpop.f32.mrf.mxu0
        %v8303 = vpop.f32.mrf.mxu0
        %v8304 = vadd.f32 0.0, %v8303
        %v8305 = vpop.f32.mrf.mxu0
        %8306 = vmatprep.mubr.bf16.mxu0 0
        %8307 = vmatmul.mubr.bf16.gmra.mxu0 %v8187
        %v8308 = vpop.f32.mrf.mxu0
        %v8309 = vadd.f32 0.0, %v8308
        %v8310 = vpop.f32.mrf.mxu0
        %v8311 = vpop.f32.mrf.mxu0
        %v8312 = vadd.f32 0.0, %v8311
        %v8313 = vpop.f32.mrf.mxu0
        %8314 = vmatprep.mubr.bf16.mxu0 0
        %8315 = vmatmul.mubr.bf16.gmra.mxu0 %v8188
        %v8316 = vpop.f32.mrf.mxu0
        %v8317 = vadd.f32 0.0, %v8316
        %v8318 = vpop.f32.mrf.mxu0
        %v8319 = vpop.f32.mrf.mxu0
        %v8320 = vadd.f32 0.0, %v8319
        %v8321 = vpop.f32.mrf.mxu0
        %8322 = vmatprep.mubr.bf16.mxu0 0
        %8323 = vmatmul.mubr.bf16.gmra.mxu0 %v8189
        %v8324 = vpop.f32.mrf.mxu0
        %v8325 = vadd.f32 0.0, %v8324
        %v8326 = vpop.f32.mrf.mxu0
        %v8327 = vpop.f32.mrf.mxu0
        %v8328 = vadd.f32 0.0, %v8327
        %v8329 = vpop.f32.mrf.mxu0
        %8330 = vmatprep.mubr.bf16.mxu0 0
        %8331 = vmatmul.mubr.bf16.gmra.mxu0 %v8190
        %v8332 = vpop.f32.mrf.mxu0
        %v8333 = vadd.f32 0.0, %v8332
        %v8334 = vpop.f32.mrf.mxu0
        %v8335 = vpop.f32.mrf.mxu0
        %v8336 = vadd.f32 0.0, %v8335
        %v8337 = vpop.f32.mrf.mxu0
        %8338 = vmatprep.mubr.bf16.mxu0 0
        %8339 = vmatmul.mubr.bf16.gmra.mxu0 %v8191
        %v8340 = vpop.f32.mrf.mxu0
        %v8341 = vadd.f32 0.0, %v8340
        %v8342 = vpop.f32.mrf.mxu0
        %v8343 = vpop.f32.mrf.mxu0
        %v8344 = vadd.f32 0.0, %v8343
        %v8345 = vpop.f32.mrf.mxu0
        %8346 = vmatprep.mubr.bf16.mxu0 0
        %8347 = vmatmul.mubr.bf16.gmra.mxu0 %v8192
        %v8348 = vpop.f32.mrf.mxu0
        %v8349 = vadd.f32 0.0, %v8348
        %v8350 = vpop.f32.mrf.mxu0
        %v8351 = vpop.f32.mrf.mxu0
        %v8352 = vadd.f32 0.0, %v8351
        %v8353 = vpop.f32.mrf.mxu0
        %8354 = vmatprep.mubr.bf16.mxu0 0
        %8355 = vmatmul.mubr.bf16.gmra.mxu0 %v8193
        %v8356 = vpop.f32.mrf.mxu0
        %v8357 = vadd.f32 0.0, %v8356
        %v8358 = vpop.f32.mrf.mxu0
        %v8359 = vpop.f32.mrf.mxu0
        %v8360 = vadd.f32 0.0, %v8359
        %v8361 = vpop.f32.mrf.mxu0
        %8362 = vmatprep.mubr.bf16.mxu0 0
        %8363 = vmatmul.mubr.bf16.gmra.mxu0 %v8194
        %v8364 = vpop.f32.mrf.mxu0
        %v8365 = vadd.f32 0.0, %v8364
        %v8366 = vpop.f32.mrf.mxu0
        %v8367 = vpop.f32.mrf.mxu0
        %v8368 = vadd.f32 0.0, %v8367
        %v8369 = vpop.f32.mrf.mxu0
        %8370 = vmatprep.mubr.bf16.mxu0 0
        %8371 = vmatmul.mubr.bf16.gmra.mxu0 %v8195
        %v8372 = vpop.f32.mrf.mxu0
        %v8373 = vadd.f32 0.0, %v8372
        %v8374 = vpop.f32.mrf.mxu0
        %v8375 = vpop.f32.mrf.mxu0
        %v8376 = vadd.f32 0.0, %v8375
        %v8377 = vpop.f32.mrf.mxu0
        %8378 = vmatprep.mubr.bf16.mxu0 0
        %8379 = vmatmul.mubr.bf16.gmra.mxu0 %v8196
        %v8380 = vpop.f32.mrf.mxu0
        %v8381 = vadd.f32 0.0, %v8380
        %v8382 = vpop.f32.mrf.mxu0
        %v8383 = vpop.f32.mrf.mxu0
        %v8384 = vadd.f32 0.0, %v8383
        %v8385 = vpop.f32.mrf.mxu0
        %8386 = vmatprep.mubr.bf16.mxu0 0
        %8387 = vmatmul.mubr.bf16.gmra.mxu0 %v8197
        %v8388 = vpop.f32.mrf.mxu0
        %v8389 = vadd.f32 0.0, %v8388
        %v8390 = vpop.f32.mrf.mxu0
        %v8391 = vpop.f32.mrf.mxu0
        %v8392 = vadd.f32 0.0, %v8391
        %v8393 = vpop.f32.mrf.mxu0
        %8394 = vmatprep.mubr.bf16.mxu0 0
        %8395 = vmatmul.mubr.bf16.gmra.mxu0 %v8198
        %v8396 = vpop.f32.mrf.mxu0
        %v8397 = vadd.f32 0.0, %v8396
        %v8398 = vpop.f32.mrf.mxu0
        %v8399 = vpop.f32.mrf.mxu0
        %v8400 = vadd.f32 0.0, %v8399
        %v8401 = vpop.f32.mrf.mxu0
        %8402 = vmatprep.mubr.bf16.mxu0 0
        %8403 = vmatmul.mubr.bf16.gmra.mxu0 %v8199
        %v8404 = vpop.f32.mrf.mxu0
        %v8405 = vadd.f32 0.0, %v8404
        %v8406 = vpop.f32.mrf.mxu0
        %v8407 = vpop.f32.mrf.mxu0
        %v8408 = vadd.f32 0.0, %v8407
        %v8409 = vpop.f32.mrf.mxu0
        %8410 = vmatprep.mubr.bf16.mxu0 0
        %8411 = vmatmul.mubr.bf16.gmra.mxu0 %v8200
        %v8412 = vpop.f32.mrf.mxu0
        %v8413 = vadd.f32 0.0, %v8412
        %v8414 = vpop.f32.mrf.mxu0
        %v8415 = vpop.f32.mrf.mxu0
        %v8416 = vadd.f32 0.0, %v8415
        %v8417 = vpop.f32.mrf.mxu0
        %8418 = vmatprep.mubr.bf16.mxu0 0
        %8419 = vmatmul.mubr.bf16.gmra.mxu0 %v8201
        %v8420 = vpop.f32.mrf.mxu0
        %v8421 = vadd.f32 0.0, %v8420
        %v8422 = vpop.f32.mrf.mxu0
        %v8423 = vpop.f32.mrf.mxu0
        %v8424 = vadd.f32 0.0, %v8423
        %v8425 = vpop.f32.mrf.mxu0
        %8426 = vdwg.mxu0
        %v8427 = vadd.f32 %v7674, %v8301
        %v8428 = vadd.f32 %v7675, %v8304
        %v8429 = vadd.f32 %v7676, %v8309
        %v8430 = vadd.f32 %v7677, %v8312
        %v8431 = vadd.f32 %v7678, %v8317
        %v8432 = vadd.f32 %v7679, %v8320
        %v8433 = vadd.f32 %v7680, %v8325
        %v8434 = vadd.f32 %v7681, %v8328
        %v8435 = vadd.f32 %v7682, %v8333
        %v8436 = vadd.f32 %v7683, %v8336
        %v8437 = vadd.f32 %v7684, %v8341
        %v8438 = vadd.f32 %v7685, %v8344
        %v8439 = vadd.f32 %v7686, %v8349
        %v8440 = vadd.f32 %v7687, %v8352
        %v8441 = vadd.f32 %v7688, %v8357
        %v8442 = vadd.f32 %v7689, %v8360
        %v8443 = vadd.f32 %v7690, %v8365
        %v8444 = vadd.f32 %v7691, %v8368
        %v8445 = vadd.f32 %v7692, %v8373
        %v8446 = vadd.f32 %v7693, %v8376
        %v8447 = vadd.f32 %v7694, %v8381
        %v8448 = vadd.f32 %v7695, %v8384
        %v8449 = vadd.f32 %v7696, %v8389
        %v8450 = vadd.f32 %v7697, %v8392
        %v8451 = vadd.f32 %v7698, %v8397
        %v8452 = vadd.f32 %v7699, %v8400
        %v8453 = vadd.f32 %v7700, %v8405
        %v8454 = vadd.f32 %v7701, %v8408
        %v8455 = vadd.f32 %v7702, %v8413
        %v8456 = vadd.f32 %v7703, %v8416
        %v8457 = vadd.f32 %v7704, %v8421
        %v8458 = vadd.f32 %v7705, %v8424
        %v8459 = vld [vmem:[%s5683] sm:$0xe]
        %v8460 = vld [vmem:[%s5683 + $0xc] sm:$0xe]
        %v8461 = vld [vmem:[%s5683 + $0x18] sm:$0xe]
        %v8462 = vld [vmem:[%s5683 + $0x24] sm:$0xe]
        %v8463 = vld [vmem:[%s5683 + $0x30] sm:$0xe]
        %v8464 = vld [vmem:[%s5683 + $0x3c] sm:$0xe]
        %v8465 = vld [vmem:[%s5683 + $0x48] sm:$0xe]
        %v8466 = vld [vmem:[%s5683 + $0x54] sm:$0xe]
        %v8467 = vld [vmem:[%s5683 + $0x60] sm:$0xe]
        %v8468 = vld [vmem:[%s5683 + $0x6c] sm:$0xe]
        %v8469 = vld [vmem:[%s5683 + $0x78] sm:$0xe]
        %v8470 = vld [vmem:[%s5683 + $0x84] sm:$0xe]
        %v8471 = vld [vmem:[%s5683 + $0x90] sm:$0xe]
        %v8472 = vld [vmem:[%s5683 + $0x9c] sm:$0xe]
        %v8473 = vld [vmem:[%s5683 + $0xa8] sm:$0xe]
        %v8474 = vld [vmem:[%s5683 + $0xb4] sm:$0xe]
        %v8523 = vrot.slane %v8459, 5
        %v8524 = vrot.slane %v8523, 4
        %v8525 = vrot.slane %v7707, 5
        %v8526 = vsel %vm1368, %v8524, %v8525
        %v8527 = vrot.slane %v8525, 4
        %v8528 = vrot.slane %v7708, 5
        %v8529 = vsel %vm1368, %v8527, %v8528
        %v8530 = vrot.slane %v8460, 5
        %v8531 = vrot.slane %v8530, 4
        %v8532 = vrot.slane %v7710, 5
        %v8533 = vsel %vm1368, %v8531, %v8532
        %v8534 = vrot.slane %v8532, 4
        %v8535 = vrot.slane %v7711, 5
        %v8536 = vsel %vm1368, %v8534, %v8535
        %v8537 = vrot.slane %v8461, 5
        %v8538 = vrot.slane %v8537, 4
        %v8539 = vrot.slane %v7713, 5
        %v8540 = vsel %vm1368, %v8538, %v8539
        %v8541 = vrot.slane %v8539, 4
        %v8542 = vrot.slane %v7714, 5
        %v8543 = vsel %vm1368, %v8541, %v8542
        %v8544 = vrot.slane %v8462, 5
        %v8545 = vrot.slane %v8544, 4
        %v8546 = vrot.slane %v7716, 5
        %v8547 = vsel %vm1368, %v8545, %v8546
        %v8548 = vrot.slane %v8546, 4
        %v8549 = vrot.slane %v7717, 5
        %v8550 = vsel %vm1368, %v8548, %v8549
        %v8551 = vrot.slane %v8463, 5
        %v8552 = vrot.slane %v8551, 4
        %v8553 = vrot.slane %v7719, 5
        %v8554 = vsel %vm1368, %v8552, %v8553
        %v8555 = vrot.slane %v8553, 4
        %v8556 = vrot.slane %v7720, 5
        %v8557 = vsel %vm1368, %v8555, %v8556
        %v8558 = vrot.slane %v8464, 5
        %v8559 = vrot.slane %v8558, 4
        %v8560 = vrot.slane %v7722, 5
        %v8561 = vsel %vm1368, %v8559, %v8560
        %v8562 = vrot.slane %v8560, 4
        %v8563 = vrot.slane %v7723, 5
        %v8564 = vsel %vm1368, %v8562, %v8563
        %v8565 = vrot.slane %v8465, 5
        %v8566 = vrot.slane %v8565, 4
        %v8567 = vrot.slane %v7725, 5
        %v8568 = vsel %vm1368, %v8566, %v8567
        %v8569 = vrot.slane %v8567, 4
        %v8570 = vrot.slane %v7726, 5
        %v8571 = vsel %vm1368, %v8569, %v8570
        %v8572 = vrot.slane %v8466, 5
        %v8573 = vrot.slane %v8572, 4
        %v8574 = vrot.slane %v7728, 5
        %v8575 = vsel %vm1368, %v8573, %v8574
        %v8576 = vrot.slane %v8574, 4
        %v8577 = vrot.slane %v7729, 5
        %v8578 = vsel %vm1368, %v8576, %v8577
        %v8579 = vrot.slane %v8467, 5
        %v8580 = vrot.slane %v8579, 4
        %v8581 = vrot.slane %v7731, 5
        %v8582 = vsel %vm1368, %v8580, %v8581
        %v8583 = vrot.slane %v8581, 4
        %v8584 = vrot.slane %v7732, 5
        %v8585 = vsel %vm1368, %v8583, %v8584
        %v8586 = vrot.slane %v8468, 5
        %v8587 = vrot.slane %v8586, 4
        %v8588 = vrot.slane %v7734, 5
        %v8589 = vsel %vm1368, %v8587, %v8588
        %v8590 = vrot.slane %v8588, 4
        %v8591 = vrot.slane %v7735, 5
        %v8592 = vsel %vm1368, %v8590, %v8591
        %v8593 = vrot.slane %v8469, 5
        %v8594 = vrot.slane %v8593, 4
        %v8595 = vrot.slane %v7737, 5
        %v8596 = vsel %vm1368, %v8594, %v8595
        %v8597 = vrot.slane %v8595, 4
        %v8598 = vrot.slane %v7738, 5
        %v8599 = vsel %vm1368, %v8597, %v8598
        %v8600 = vrot.slane %v8470, 5
        %v8601 = vrot.slane %v8600, 4
        %v8602 = vrot.slane %v7740, 5
        %v8603 = vsel %vm1368, %v8601, %v8602
        %v8604 = vrot.slane %v8602, 4
        %v8605 = vrot.slane %v7741, 5
        %v8606 = vsel %vm1368, %v8604, %v8605
        %v8607 = vrot.slane %v8471, 5
        %v8608 = vrot.slane %v8607, 4
        %v8609 = vrot.slane %v7743, 5
        %v8610 = vsel %vm1368, %v8608, %v8609
        %v8611 = vrot.slane %v8609, 4
        %v8612 = vrot.slane %v7744, 5
        %v8613 = vsel %vm1368, %v8611, %v8612
        %v8614 = vrot.slane %v8472, 5
        %v8615 = vrot.slane %v8614, 4
        %v8616 = vrot.slane %v7746, 5
        %v8617 = vsel %vm1368, %v8615, %v8616
        %v8618 = vrot.slane %v8616, 4
        %v8619 = vrot.slane %v7747, 5
        %v8620 = vsel %vm1368, %v8618, %v8619
        %v8621 = vrot.slane %v8473, 5
        %v8622 = vrot.slane %v8621, 4
        %v8623 = vrot.slane %v7749, 5
        %v8624 = vsel %vm1368, %v8622, %v8623
        %v8625 = vrot.slane %v8623, 4
        %v8626 = vrot.slane %v7750, 5
        %v8627 = vsel %vm1368, %v8625, %v8626
        %v8628 = vrot.slane %v8474, 5
        %v8629 = vrot.slane %v8628, 4
        %v8630 = vrot.slane %v7752, 5
        %v8631 = vsel %vm1368, %v8629, %v8630
        %v8632 = vrot.slane %v8630, 4
        %v8633 = vrot.slane %v7753, 5
        %v8634 = vsel %vm1368, %v8632, %v8633
        %v8635 = vld [vmem:[#allocation8 + $0x140] sm:$0xf]
        %v8636 = vld [vmem:[#allocation8 + $0x144] sm:$0xf]
        %v8637 = vld [vmem:[#allocation8 + $0x148] sm:$0xf]
        %v8638 = vld [vmem:[#allocation8 + $0x14c] sm:$0xf]
        %v8639 = vld [vmem:[#allocation8 + $0x150] sm:$0xf]
        %v8640 = vld [vmem:[#allocation8 + $0x154] sm:$0xf]
        %v8641 = vld [vmem:[#allocation8 + $0x158] sm:$0xf]
        %v8642 = vld [vmem:[#allocation8 + $0x15c] sm:$0xf]
        %v8643 = vld [vmem:[#allocation8 + $0x160] sm:$0xf]
        %v8644 = vld [vmem:[#allocation8 + $0x164] sm:$0xf]
        %v8645 = vld [vmem:[#allocation8 + $0x168] sm:$0xf]
        %v8646 = vld [vmem:[#allocation8 + $0x16c] sm:$0xf]
        %v8647 = vld [vmem:[#allocation8 + $0x170] sm:$0xf]
        %v8648 = vld [vmem:[#allocation8 + $0x174] sm:$0xf]
        %v8649 = vld [vmem:[#allocation8 + $0x178] sm:$0xf]
        %v8650 = vld [vmem:[#allocation8 + $0x17c] sm:$0xf]
        %v8651 = vunpack.c.l.b16 %v8526
        %v8652 = vunpack.c.l.b16 %v8529
        %v8653 = vunpack.c.l.b16 %v8533
        %v8654 = vunpack.c.l.b16 %v8536
        %v8655 = vunpack.c.l.b16 %v8540
        %v8656 = vunpack.c.l.b16 %v8543
        %v8657 = vunpack.c.l.b16 %v8547
        %v8658 = vunpack.c.l.b16 %v8550
        %v8659 = vunpack.c.l.b16 %v8554
        %v8660 = vunpack.c.l.b16 %v8557
        %v8661 = vunpack.c.l.b16 %v8561
        %v8662 = vunpack.c.l.b16 %v8564
        %v8663 = vunpack.c.l.b16 %v8568
        %v8664 = vunpack.c.l.b16 %v8571
        %v8665 = vunpack.c.l.b16 %v8575
        %v8666 = vunpack.c.l.b16 %v8578
        %v8667 = vunpack.c.l.b16 %v8582
        %v8668 = vunpack.c.l.b16 %v8585
        %v8669 = vunpack.c.l.b16 %v8589
        %v8670 = vunpack.c.l.b16 %v8592
        %v8671 = vunpack.c.l.b16 %v8596
        %v8672 = vunpack.c.l.b16 %v8599
        %v8673 = vunpack.c.l.b16 %v8603
        %v8674 = vunpack.c.l.b16 %v8606
        %v8675 = vunpack.c.l.b16 %v8610
        %v8676 = vunpack.c.l.b16 %v8613
        %v8677 = vunpack.c.l.b16 %v8617
        %v8678 = vunpack.c.l.b16 %v8620
        %v8679 = vunpack.c.l.b16 %v8624
        %v8680 = vunpack.c.l.b16 %v8627
        %v8681 = vunpack.c.l.b16 %v8631
        %v8682 = vunpack.c.l.b16 %v8634
        %v8683 = vpack.c.b16 %v8652, %v8651
        %v8684 = vpack.c.b16 %v8654, %v8653
        %v8685 = vpack.c.b16 %v8656, %v8655
        %v8686 = vpack.c.b16 %v8658, %v8657
        %v8687 = vpack.c.b16 %v8660, %v8659
        %v8688 = vpack.c.b16 %v8662, %v8661
        %v8689 = vpack.c.b16 %v8664, %v8663
        %v8690 = vpack.c.b16 %v8666, %v8665
        %v8691 = vpack.c.b16 %v8668, %v8667
        %v8692 = vpack.c.b16 %v8670, %v8669
        %v8693 = vpack.c.b16 %v8672, %v8671
        %v8694 = vpack.c.b16 %v8674, %v8673
        %v8695 = vpack.c.b16 %v8676, %v8675
        %v8696 = vpack.c.b16 %v8678, %v8677
        %v8697 = vpack.c.b16 %v8680, %v8679
        %v8698 = vpack.c.b16 %v8682, %v8681
        %v8731 = vunpack.c.l.b16 %v8635
        %v8732 = vunpack.c.l.b16 %v8636
        %v8733 = vunpack.c.l.b16 %v8637
        %v8734 = vunpack.c.l.b16 %v8638
        %v8735 = vunpack.c.l.b16 %v8639
        %v8736 = vunpack.c.l.b16 %v8640
        %v8737 = vunpack.c.l.b16 %v8641
        %v8738 = vunpack.c.l.b16 %v8642
        %v8739 = vunpack.c.l.b16 %v8643
        %v8740 = vunpack.c.l.b16 %v8644
        %v8741 = vunpack.c.l.b16 %v8645
        %v8742 = vunpack.c.l.b16 %v8646
        %v8743 = vunpack.c.l.b16 %v8647
        %v8744 = vunpack.c.l.b16 %v8648
        %v8745 = vunpack.c.l.b16 %v8649
        %v8746 = vunpack.c.l.b16 %v8650
        %v8747 = vpack.c.b16 %v8732, %v8731
        %v8748 = vpack.c.b16 %v8734, %v8733
        %v8749 = vpack.c.b16 %v8736, %v8735
        %v8750 = vpack.c.b16 %v8738, %v8737
        %v8751 = vpack.c.b16 %v8740, %v8739
        %v8752 = vpack.c.b16 %v8742, %v8741
        %v8753 = vpack.c.b16 %v8744, %v8743
        %v8754 = vpack.c.b16 %v8746, %v8745
        %8763 = vmatprep.subr.bf16.mxu0 0
        %8764 = vmatpush1.bf16.msra.mxu0 %v8754
        %8765 = vmatprep.subr.bf16.mxu0 0
        %8766 = vmatpush1.bf16.msra.mxu0 %v8753
        %8767 = vmatprep.subr.bf16.mxu0 0
        %8768 = vmatpush1.bf16.msra.mxu0 %v8752
        %8769 = vmatprep.subr.bf16.mxu0 0
        %8770 = vmatpush1.bf16.msra.mxu0 %v8751
        %8771 = vmatprep.subr.bf16.mxu0 0
        %8772 = vmatpush1.bf16.msra.mxu0 %v8750
        %8773 = vmatprep.subr.bf16.mxu0 0
        %8774 = vmatpush1.bf16.msra.mxu0 %v8749
        %8775 = vmatprep.subr.bf16.mxu0 0
        %8776 = vmatpush1.bf16.msra.mxu0 %v8748
        %8777 = vmatprep.subr.bf16.mxu0 0
        %8778 = vmatpush1.bf16.msra.mxu0 %v8747
        %8779 = vmatprep.subr.bf16.mxu0 0
        %8780 = vmatpush2.bf16.msra.mxu0 0
        %8781 = vmatprep.subr.bf16.mxu0 0
        %8782 = vmatpush2.bf16.msra.mxu0 0
        %8783 = vmatprep.subr.bf16.mxu0 0
        %8784 = vmatpush2.bf16.msra.mxu0 0
        %8785 = vmatprep.subr.bf16.mxu0 0
        %8786 = vmatpush2.bf16.msra.mxu0 0
        %8787 = vmatprep.subr.bf16.mxu0 0
        %8788 = vmatpush2.bf16.msra.mxu0 0
        %8789 = vmatprep.subr.bf16.mxu0 0
        %8790 = vmatpush2.bf16.msra.mxu0 0
        %8791 = vmatprep.subr.bf16.mxu0 0
        %8792 = vmatpush2.bf16.msra.mxu0 0
        %8793 = vmatprep.subr.bf16.mxu0 0
        %8794 = vmatpush2.bf16.msra.mxu0 0
        %8795 = vmatprep.mubr.bf16.mxu0 0
        %8796 = vmatmul.mubr.bf16.gmra.mxu0 %v8683
        %v8797 = vpop.f32.mrf.mxu0
        %v8798 = vadd.f32 0.0, %v8797
        %v8799 = vpop.f32.mrf.mxu0
        %v8800 = vpop.f32.mrf.mxu0
        %v8801 = vadd.f32 0.0, %v8800
        %v8802 = vpop.f32.mrf.mxu0
        %8803 = vmatprep.mubr.bf16.mxu0 0
        %8804 = vmatmul.mubr.bf16.gmra.mxu0 %v8684
        %v8805 = vpop.f32.mrf.mxu0
        %v8806 = vadd.f32 0.0, %v8805
        %v8807 = vpop.f32.mrf.mxu0
        %v8808 = vpop.f32.mrf.mxu0
        %v8809 = vadd.f32 0.0, %v8808
        %v8810 = vpop.f32.mrf.mxu0
        %8811 = vmatprep.mubr.bf16.mxu0 0
        %8812 = vmatmul.mubr.bf16.gmra.mxu0 %v8685
        %v8813 = vpop.f32.mrf.mxu0
        %v8814 = vadd.f32 0.0, %v8813
        %v8815 = vpop.f32.mrf.mxu0
        %v8816 = vpop.f32.mrf.mxu0
        %v8817 = vadd.f32 0.0, %v8816
        %v8818 = vpop.f32.mrf.mxu0
        %8819 = vmatprep.mubr.bf16.mxu0 0
        %8820 = vmatmul.mubr.bf16.gmra.mxu0 %v8686
        %v8821 = vpop.f32.mrf.mxu0
        %v8822 = vadd.f32 0.0, %v8821
        %v8823 = vpop.f32.mrf.mxu0
        %v8824 = vpop.f32.mrf.mxu0
        %v8825 = vadd.f32 0.0, %v8824
        %v8826 = vpop.f32.mrf.mxu0
        %8827 = vmatprep.mubr.bf16.mxu0 0
        %8828 = vmatmul.mubr.bf16.gmra.mxu0 %v8687
        %v8829 = vpop.f32.mrf.mxu0
        %v8830 = vadd.f32 0.0, %v8829
        %v8831 = vpop.f32.mrf.mxu0
        %v8832 = vpop.f32.mrf.mxu0
        %v8833 = vadd.f32 0.0, %v8832
        %v8834 = vpop.f32.mrf.mxu0
        %8835 = vmatprep.mubr.bf16.mxu0 0
        %8836 = vmatmul.mubr.bf16.gmra.mxu0 %v8688
        %v8837 = vpop.f32.mrf.mxu0
        %v8838 = vadd.f32 0.0, %v8837
        %v8839 = vpop.f32.mrf.mxu0
        %v8840 = vpop.f32.mrf.mxu0
        %v8841 = vadd.f32 0.0, %v8840
        %v8842 = vpop.f32.mrf.mxu0
        %8843 = vmatprep.mubr.bf16.mxu0 0
        %8844 = vmatmul.mubr.bf16.gmra.mxu0 %v8689
        %v8845 = vpop.f32.mrf.mxu0
        %v8846 = vadd.f32 0.0, %v8845
        %v8847 = vpop.f32.mrf.mxu0
        %v8848 = vpop.f32.mrf.mxu0
        %v8849 = vadd.f32 0.0, %v8848
        %v8850 = vpop.f32.mrf.mxu0
        %8851 = vmatprep.mubr.bf16.mxu0 0
        %8852 = vmatmul.mubr.bf16.gmra.mxu0 %v8690
        %v8853 = vpop.f32.mrf.mxu0
        %v8854 = vadd.f32 0.0, %v8853
        %v8855 = vpop.f32.mrf.mxu0
        %v8856 = vpop.f32.mrf.mxu0
        %v8857 = vadd.f32 0.0, %v8856
        %v8858 = vpop.f32.mrf.mxu0
        %8859 = vmatprep.mubr.bf16.mxu0 0
        %8860 = vmatmul.mubr.bf16.gmra.mxu0 %v8691
        %v8861 = vpop.f32.mrf.mxu0
        %v8862 = vadd.f32 0.0, %v8861
        %v8863 = vpop.f32.mrf.mxu0
        %v8864 = vpop.f32.mrf.mxu0
        %v8865 = vadd.f32 0.0, %v8864
        %v8866 = vpop.f32.mrf.mxu0
        %8867 = vmatprep.mubr.bf16.mxu0 0
        %8868 = vmatmul.mubr.bf16.gmra.mxu0 %v8692
        %v8869 = vpop.f32.mrf.mxu0
        %v8870 = vadd.f32 0.0, %v8869
        %v8871 = vpop.f32.mrf.mxu0
        %v8872 = vpop.f32.mrf.mxu0
        %v8873 = vadd.f32 0.0, %v8872
        %v8874 = vpop.f32.mrf.mxu0
        %8875 = vmatprep.mubr.bf16.mxu0 0
        %8876 = vmatmul.mubr.bf16.gmra.mxu0 %v8693
        %v8877 = vpop.f32.mrf.mxu0
        %v8878 = vadd.f32 0.0, %v8877
        %v8879 = vpop.f32.mrf.mxu0
        %v8880 = vpop.f32.mrf.mxu0
        %v8881 = vadd.f32 0.0, %v8880
        %v8882 = vpop.f32.mrf.mxu0
        %8883 = vmatprep.mubr.bf16.mxu0 0
        %8884 = vmatmul.mubr.bf16.gmra.mxu0 %v8694
        %v8885 = vpop.f32.mrf.mxu0
        %v8886 = vadd.f32 0.0, %v8885
        %v8887 = vpop.f32.mrf.mxu0
        %v8888 = vpop.f32.mrf.mxu0
        %v8889 = vadd.f32 0.0, %v8888
        %v8890 = vpop.f32.mrf.mxu0
        %8891 = vmatprep.mubr.bf16.mxu0 0
        %8892 = vmatmul.mubr.bf16.gmra.mxu0 %v8695
        %v8893 = vpop.f32.mrf.mxu0
        %v8894 = vadd.f32 0.0, %v8893
        %v8895 = vpop.f32.mrf.mxu0
        %v8896 = vpop.f32.mrf.mxu0
        %v8897 = vadd.f32 0.0, %v8896
        %v8898 = vpop.f32.mrf.mxu0
        %8899 = vmatprep.mubr.bf16.mxu0 0
        %8900 = vmatmul.mubr.bf16.gmra.mxu0 %v8696
        %v8901 = vpop.f32.mrf.mxu0
        %v8902 = vadd.f32 0.0, %v8901
        %v8903 = vpop.f32.mrf.mxu0
        %v8904 = vpop.f32.mrf.mxu0
        %v8905 = vadd.f32 0.0, %v8904
        %v8906 = vpop.f32.mrf.mxu0
        %8907 = vmatprep.mubr.bf16.mxu0 0
        %8908 = vmatmul.mubr.bf16.gmra.mxu0 %v8697
        %v8909 = vpop.f32.mrf.mxu0
        %v8910 = vadd.f32 0.0, %v8909
        %v8911 = vpop.f32.mrf.mxu0
        %v8912 = vpop.f32.mrf.mxu0
        %v8913 = vadd.f32 0.0, %v8912
        %v8914 = vpop.f32.mrf.mxu0
        %8915 = vmatprep.mubr.bf16.mxu0 0
        %8916 = vmatmul.mubr.bf16.gmra.mxu0 %v8698
        %v8917 = vpop.f32.mrf.mxu0
        %v8918 = vadd.f32 0.0, %v8917
        %v8919 = vpop.f32.mrf.mxu0
        %v8920 = vpop.f32.mrf.mxu0
        %v8921 = vadd.f32 0.0, %v8920
        %v8922 = vpop.f32.mrf.mxu0
        %8923 = vdwg.mxu0
        %v8924 = vadd.f32 %v8427, %v8798
        %v8925 = vadd.f32 %v8428, %v8801
        %v8926 = vadd.f32 %v8429, %v8806
        %v8927 = vadd.f32 %v8430, %v8809
        %v8928 = vadd.f32 %v8431, %v8814
        %v8929 = vadd.f32 %v8432, %v8817
        %v8930 = vadd.f32 %v8433, %v8822
        %v8931 = vadd.f32 %v8434, %v8825
        %v8932 = vadd.f32 %v8435, %v8830
        %v8933 = vadd.f32 %v8436, %v8833
        %v8934 = vadd.f32 %v8437, %v8838
        %v8935 = vadd.f32 %v8438, %v8841
        %v8936 = vadd.f32 %v8439, %v8846
        %v8937 = vadd.f32 %v8440, %v8849
        %v8938 = vadd.f32 %v8441, %v8854
        %v8939 = vadd.f32 %v8442, %v8857
        %v8940 = vadd.f32 %v8443, %v8862
        %v8941 = vadd.f32 %v8444, %v8865
        %v8942 = vadd.f32 %v8445, %v8870
        %v8943 = vadd.f32 %v8446, %v8873
        %v8944 = vadd.f32 %v8447, %v8878
        %v8945 = vadd.f32 %v8448, %v8881
        %v8946 = vadd.f32 %v8449, %v8886
        %v8947 = vadd.f32 %v8450, %v8889
        %v8948 = vadd.f32 %v8451, %v8894
        %v8949 = vadd.f32 %v8452, %v8897
        %v8950 = vadd.f32 %v8453, %v8902
        %v8951 = vadd.f32 %v8454, %v8905
        %v8952 = vadd.f32 %v8455, %v8910
        %v8953 = vadd.f32 %v8456, %v8913
        %v8954 = vadd.f32 %v8457, %v8918
        %v8955 = vadd.f32 %v8458, %v8921
        %s8956 = scalar_lea.vmem [#allocation2], 24
        %v8957 = vld [vmem:[%s8956] sm:$0xf]
        %v8958 = vld [vmem:[%s8956 + $0x4] sm:$0xf]
        %v8959 = vld [vmem:[%s8956 + $0xc] sm:$0xf]
        %v8960 = vld [vmem:[%s8956 + $0x10] sm:$0xf]
        %v8961 = vld [vmem:[%s8956 + $0x18] sm:$0xf]
        %v8962 = vld [vmem:[%s8956 + $0x1c] sm:$0xf]
        %v8963 = vld [vmem:[%s8956 + $0x24] sm:$0xf]
        %v8964 = vld [vmem:[%s8956 + $0x28] sm:$0xf]
        %v8965 = vld [vmem:[%s8956 + $0x30] sm:$0xf]
        %v8966 = vld [vmem:[%s8956 + $0x34] sm:$0xf]
        %v8967 = vld [vmem:[%s8956 + $0x3c] sm:$0xf]
        %v8968 = vld [vmem:[%s8956 + $0x40] sm:$0xf]
        %v8969 = vld [vmem:[%s8956 + $0x48] sm:$0xf]
        %v8970 = vld [vmem:[%s8956 + $0x4c] sm:$0xf]
        %v8971 = vld [vmem:[%s8956 + $0x54] sm:$0xf]
        %v8972 = vld [vmem:[%s8956 + $0x58] sm:$0xf]
        %v8973 = vld [vmem:[%s8956 + $0x60] sm:$0xf]
        %v8974 = vld [vmem:[%s8956 + $0x64] sm:$0xf]
        %v8975 = vld [vmem:[%s8956 + $0x6c] sm:$0xf]
        %v8976 = vld [vmem:[%s8956 + $0x70] sm:$0xf]
        %v8977 = vld [vmem:[%s8956 + $0x78] sm:$0xf]
        %v8978 = vld [vmem:[%s8956 + $0x7c] sm:$0xf]
        %v8979 = vld [vmem:[%s8956 + $0x84] sm:$0xf]
        %v8980 = vld [vmem:[%s8956 + $0x88] sm:$0xf]
        %v8981 = vld [vmem:[%s8956 + $0x90] sm:$0xf]
        %v8982 = vld [vmem:[%s8956 + $0x94] sm:$0xf]
        %v8983 = vld [vmem:[%s8956 + $0x9c] sm:$0xf]
        %v8984 = vld [vmem:[%s8956 + $0xa0] sm:$0xf]
        %v8985 = vld [vmem:[%s8956 + $0xa8] sm:$0xf]
        %v8986 = vld [vmem:[%s8956 + $0xac] sm:$0xf]
        %v8987 = vld [vmem:[%s8956 + $0xb4] sm:$0xf]
        %v8988 = vld [vmem:[%s8956 + $0xb8] sm:$0xf]
        %v8989 = vld [vmem:[#allocation8 + $0x180] sm:$0xf]
        %v8990 = vld [vmem:[#allocation8 + $0x184] sm:$0xf]
        %v8991 = vld [vmem:[#allocation8 + $0x188] sm:$0xf]
        %v8992 = vld [vmem:[#allocation8 + $0x18c] sm:$0xf]
        %v8993 = vld [vmem:[#allocation8 + $0x190] sm:$0xf]
        %v8994 = vld [vmem:[#allocation8 + $0x194] sm:$0xf]
        %v8995 = vld [vmem:[#allocation8 + $0x198] sm:$0xf]
        %v8996 = vld [vmem:[#allocation8 + $0x19c] sm:$0xf]
        %v8997 = vld [vmem:[#allocation8 + $0x1a0] sm:$0xf]
        %v8998 = vld [vmem:[#allocation8 + $0x1a4] sm:$0xf]
        %v8999 = vld [vmem:[#allocation8 + $0x1a8] sm:$0xf]
        %v9000 = vld [vmem:[#allocation8 + $0x1ac] sm:$0xf]
        %v9001 = vld [vmem:[#allocation8 + $0x1b0] sm:$0xf]
        %v9002 = vld [vmem:[#allocation8 + $0x1b4] sm:$0xf]
        %v9003 = vld [vmem:[#allocation8 + $0x1b8] sm:$0xf]
        %v9004 = vld [vmem:[#allocation8 + $0x1bc] sm:$0xf]
        %v9037 = vunpack.c.l.b16 %v8957
        %v9038 = vunpack.c.l.b16 %v8958
        %v9039 = vunpack.c.l.b16 %v8959
        %v9040 = vunpack.c.l.b16 %v8960
        %v9041 = vunpack.c.l.b16 %v8961
        %v9042 = vunpack.c.l.b16 %v8962
        %v9043 = vunpack.c.l.b16 %v8963
        %v9044 = vunpack.c.l.b16 %v8964
        %v9045 = vunpack.c.l.b16 %v8965
        %v9046 = vunpack.c.l.b16 %v8966
        %v9047 = vunpack.c.l.b16 %v8967
        %v9048 = vunpack.c.l.b16 %v8968
        %v9049 = vunpack.c.l.b16 %v8969
        %v9050 = vunpack.c.l.b16 %v8970
        %v9051 = vunpack.c.l.b16 %v8971
        %v9052 = vunpack.c.l.b16 %v8972
        %v9053 = vunpack.c.l.b16 %v8973
        %v9054 = vunpack.c.l.b16 %v8974
        %v9055 = vunpack.c.l.b16 %v8975
        %v9056 = vunpack.c.l.b16 %v8976
        %v9057 = vunpack.c.l.b16 %v8977
        %v9058 = vunpack.c.l.b16 %v8978
        %v9059 = vunpack.c.l.b16 %v8979
        %v9060 = vunpack.c.l.b16 %v8980
        %v9061 = vunpack.c.l.b16 %v8981
        %v9062 = vunpack.c.l.b16 %v8982
        %v9063 = vunpack.c.l.b16 %v8983
        %v9064 = vunpack.c.l.b16 %v8984
        %v9065 = vunpack.c.l.b16 %v8985
        %v9066 = vunpack.c.l.b16 %v8986
        %v9067 = vunpack.c.l.b16 %v8987
        %v9068 = vunpack.c.l.b16 %v8988
        %v9069 = vpack.c.b16 %v9038, %v9037
        %v9070 = vpack.c.b16 %v9040, %v9039
        %v9071 = vpack.c.b16 %v9042, %v9041
        %v9072 = vpack.c.b16 %v9044, %v9043
        %v9073 = vpack.c.b16 %v9046, %v9045
        %v9074 = vpack.c.b16 %v9048, %v9047
        %v9075 = vpack.c.b16 %v9050, %v9049
        %v9076 = vpack.c.b16 %v9052, %v9051
        %v9077 = vpack.c.b16 %v9054, %v9053
        %v9078 = vpack.c.b16 %v9056, %v9055
        %v9079 = vpack.c.b16 %v9058, %v9057
        %v9080 = vpack.c.b16 %v9060, %v9059
        %v9081 = vpack.c.b16 %v9062, %v9061
        %v9082 = vpack.c.b16 %v9064, %v9063
        %v9083 = vpack.c.b16 %v9066, %v9065
        %v9084 = vpack.c.b16 %v9068, %v9067
        %v9117 = vunpack.c.l.b16 %v8989
        %v9118 = vunpack.c.l.b16 %v8990
        %v9119 = vunpack.c.l.b16 %v8991
        %v9120 = vunpack.c.l.b16 %v8992
        %v9121 = vunpack.c.l.b16 %v8993
        %v9122 = vunpack.c.l.b16 %v8994
        %v9123 = vunpack.c.l.b16 %v8995
        %v9124 = vunpack.c.l.b16 %v8996
        %v9125 = vunpack.c.l.b16 %v8997
        %v9126 = vunpack.c.l.b16 %v8998
        %v9127 = vunpack.c.l.b16 %v8999
        %v9128 = vunpack.c.l.b16 %v9000
        %v9129 = vunpack.c.l.b16 %v9001
        %v9130 = vunpack.c.l.b16 %v9002
        %v9131 = vunpack.c.l.b16 %v9003
        %v9132 = vunpack.c.l.b16 %v9004
        %v9133 = vpack.c.b16 %v9118, %v9117
        %v9134 = vpack.c.b16 %v9120, %v9119
        %v9135 = vpack.c.b16 %v9122, %v9121
        %v9136 = vpack.c.b16 %v9124, %v9123
        %v9137 = vpack.c.b16 %v9126, %v9125
        %v9138 = vpack.c.b16 %v9128, %v9127
        %v9139 = vpack.c.b16 %v9130, %v9129
        %v9140 = vpack.c.b16 %v9132, %v9131
        %9149 = vmatprep.subr.bf16.mxu0 0
        %9150 = vmatpush1.bf16.msra.mxu0 %v9140
        %9151 = vmatprep.subr.bf16.mxu0 0
        %9152 = vmatpush1.bf16.msra.mxu0 %v9139
        %9153 = vmatprep.subr.bf16.mxu0 0
        %9154 = vmatpush1.bf16.msra.mxu0 %v9138
        %9155 = vmatprep.subr.bf16.mxu0 0
        %9156 = vmatpush1.bf16.msra.mxu0 %v9137
        %9157 = vmatprep.subr.bf16.mxu0 0
        %9158 = vmatpush1.bf16.msra.mxu0 %v9136
        %9159 = vmatprep.subr.bf16.mxu0 0
        %9160 = vmatpush1.bf16.msra.mxu0 %v9135
        %9161 = vmatprep.subr.bf16.mxu0 0
        %9162 = vmatpush1.bf16.msra.mxu0 %v9134
        %9163 = vmatprep.subr.bf16.mxu0 0
        %9164 = vmatpush1.bf16.msra.mxu0 %v9133
        %9165 = vmatprep.subr.bf16.mxu0 0
        %9166 = vmatpush2.bf16.msra.mxu0 0
        %9167 = vmatprep.subr.bf16.mxu0 0
        %9168 = vmatpush2.bf16.msra.mxu0 0
        %9169 = vmatprep.subr.bf16.mxu0 0
        %9170 = vmatpush2.bf16.msra.mxu0 0
        %9171 = vmatprep.subr.bf16.mxu0 0
        %9172 = vmatpush2.bf16.msra.mxu0 0
        %9173 = vmatprep.subr.bf16.mxu0 0
        %9174 = vmatpush2.bf16.msra.mxu0 0
        %9175 = vmatprep.subr.bf16.mxu0 0
        %9176 = vmatpush2.bf16.msra.mxu0 0
        %9177 = vmatprep.subr.bf16.mxu0 0
        %9178 = vmatpush2.bf16.msra.mxu0 0
        %9179 = vmatprep.subr.bf16.mxu0 0
        %9180 = vmatpush2.bf16.msra.mxu0 0
        %9181 = vmatprep.mubr.bf16.mxu0 0
        %9182 = vmatmul.mubr.bf16.gmra.mxu0 %v9069
        %v9183 = vpop.f32.mrf.mxu0
        %v9184 = vadd.f32 0.0, %v9183
        %v9185 = vpop.f32.mrf.mxu0
        %v9186 = vpop.f32.mrf.mxu0
        %v9187 = vadd.f32 0.0, %v9186
        %v9188 = vpop.f32.mrf.mxu0
        %9189 = vmatprep.mubr.bf16.mxu0 0
        %9190 = vmatmul.mubr.bf16.gmra.mxu0 %v9070
        %v9191 = vpop.f32.mrf.mxu0
        %v9192 = vadd.f32 0.0, %v9191
        %v9193 = vpop.f32.mrf.mxu0
        %v9194 = vpop.f32.mrf.mxu0
        %v9195 = vadd.f32 0.0, %v9194
        %v9196 = vpop.f32.mrf.mxu0
        %9197 = vmatprep.mubr.bf16.mxu0 0
        %9198 = vmatmul.mubr.bf16.gmra.mxu0 %v9071
        %v9199 = vpop.f32.mrf.mxu0
        %v9200 = vadd.f32 0.0, %v9199
        %v9201 = vpop.f32.mrf.mxu0
        %v9202 = vpop.f32.mrf.mxu0
        %v9203 = vadd.f32 0.0, %v9202
        %v9204 = vpop.f32.mrf.mxu0
        %9205 = vmatprep.mubr.bf16.mxu0 0
        %9206 = vmatmul.mubr.bf16.gmra.mxu0 %v9072
        %v9207 = vpop.f32.mrf.mxu0
        %v9208 = vadd.f32 0.0, %v9207
        %v9209 = vpop.f32.mrf.mxu0
        %v9210 = vpop.f32.mrf.mxu0
        %v9211 = vadd.f32 0.0, %v9210
        %v9212 = vpop.f32.mrf.mxu0
        %9213 = vmatprep.mubr.bf16.mxu0 0
        %9214 = vmatmul.mubr.bf16.gmra.mxu0 %v9073
        %v9215 = vpop.f32.mrf.mxu0
        %v9216 = vadd.f32 0.0, %v9215
        %v9217 = vpop.f32.mrf.mxu0
        %v9218 = vpop.f32.mrf.mxu0
        %v9219 = vadd.f32 0.0, %v9218
        %v9220 = vpop.f32.mrf.mxu0
        %9221 = vmatprep.mubr.bf16.mxu0 0
        %9222 = vmatmul.mubr.bf16.gmra.mxu0 %v9074
        %v9223 = vpop.f32.mrf.mxu0
        %v9224 = vadd.f32 0.0, %v9223
        %v9225 = vpop.f32.mrf.mxu0
        %v9226 = vpop.f32.mrf.mxu0
        %v9227 = vadd.f32 0.0, %v9226
        %v9228 = vpop.f32.mrf.mxu0
        %9229 = vmatprep.mubr.bf16.mxu0 0
        %9230 = vmatmul.mubr.bf16.gmra.mxu0 %v9075
        %v9231 = vpop.f32.mrf.mxu0
        %v9232 = vadd.f32 0.0, %v9231
        %v9233 = vpop.f32.mrf.mxu0
        %v9234 = vpop.f32.mrf.mxu0
        %v9235 = vadd.f32 0.0, %v9234
        %v9236 = vpop.f32.mrf.mxu0
        %9237 = vmatprep.mubr.bf16.mxu0 0
        %9238 = vmatmul.mubr.bf16.gmra.mxu0 %v9076
        %v9239 = vpop.f32.mrf.mxu0
        %v9240 = vadd.f32 0.0, %v9239
        %v9241 = vpop.f32.mrf.mxu0
        %v9242 = vpop.f32.mrf.mxu0
        %v9243 = vadd.f32 0.0, %v9242
        %v9244 = vpop.f32.mrf.mxu0
        %9245 = vmatprep.mubr.bf16.mxu0 0
        %9246 = vmatmul.mubr.bf16.gmra.mxu0 %v9077
        %v9247 = vpop.f32.mrf.mxu0
        %v9248 = vadd.f32 0.0, %v9247
        %v9249 = vpop.f32.mrf.mxu0
        %v9250 = vpop.f32.mrf.mxu0
        %v9251 = vadd.f32 0.0, %v9250
        %v9252 = vpop.f32.mrf.mxu0
        %9253 = vmatprep.mubr.bf16.mxu0 0
        %9254 = vmatmul.mubr.bf16.gmra.mxu0 %v9078
        %v9255 = vpop.f32.mrf.mxu0
        %v9256 = vadd.f32 0.0, %v9255
        %v9257 = vpop.f32.mrf.mxu0
        %v9258 = vpop.f32.mrf.mxu0
        %v9259 = vadd.f32 0.0, %v9258
        %v9260 = vpop.f32.mrf.mxu0
        %9261 = vmatprep.mubr.bf16.mxu0 0
        %9262 = vmatmul.mubr.bf16.gmra.mxu0 %v9079
        %v9263 = vpop.f32.mrf.mxu0
        %v9264 = vadd.f32 0.0, %v9263
        %v9265 = vpop.f32.mrf.mxu0
        %v9266 = vpop.f32.mrf.mxu0
        %v9267 = vadd.f32 0.0, %v9266
        %v9268 = vpop.f32.mrf.mxu0
        %9269 = vmatprep.mubr.bf16.mxu0 0
        %9270 = vmatmul.mubr.bf16.gmra.mxu0 %v9080
        %v9271 = vpop.f32.mrf.mxu0
        %v9272 = vadd.f32 0.0, %v9271
        %v9273 = vpop.f32.mrf.mxu0
        %v9274 = vpop.f32.mrf.mxu0
        %v9275 = vadd.f32 0.0, %v9274
        %v9276 = vpop.f32.mrf.mxu0
        %9277 = vmatprep.mubr.bf16.mxu0 0
        %9278 = vmatmul.mubr.bf16.gmra.mxu0 %v9081
        %v9279 = vpop.f32.mrf.mxu0
        %v9280 = vadd.f32 0.0, %v9279
        %v9281 = vpop.f32.mrf.mxu0
        %v9282 = vpop.f32.mrf.mxu0
        %v9283 = vadd.f32 0.0, %v9282
        %v9284 = vpop.f32.mrf.mxu0
        %9285 = vmatprep.mubr.bf16.mxu0 0
        %9286 = vmatmul.mubr.bf16.gmra.mxu0 %v9082
        %v9287 = vpop.f32.mrf.mxu0
        %v9288 = vadd.f32 0.0, %v9287
        %v9289 = vpop.f32.mrf.mxu0
        %v9290 = vpop.f32.mrf.mxu0
        %v9291 = vadd.f32 0.0, %v9290
        %v9292 = vpop.f32.mrf.mxu0
        %9293 = vmatprep.mubr.bf16.mxu0 0
        %9294 = vmatmul.mubr.bf16.gmra.mxu0 %v9083
        %v9295 = vpop.f32.mrf.mxu0
        %v9296 = vadd.f32 0.0, %v9295
        %v9297 = vpop.f32.mrf.mxu0
        %v9298 = vpop.f32.mrf.mxu0
        %v9299 = vadd.f32 0.0, %v9298
        %v9300 = vpop.f32.mrf.mxu0
        %9301 = vmatprep.mubr.bf16.mxu0 0
        %9302 = vmatmul.mubr.bf16.gmra.mxu0 %v9084
        %v9303 = vpop.f32.mrf.mxu0
        %v9304 = vadd.f32 0.0, %v9303
        %v9305 = vpop.f32.mrf.mxu0
        %v9306 = vpop.f32.mrf.mxu0
        %v9307 = vadd.f32 0.0, %v9306
        %v9308 = vpop.f32.mrf.mxu0
        %9309 = vdwg.mxu0
        %v9310 = vadd.f32 %v8924, %v9184
        %v9311 = vadd.f32 %v8925, %v9187
        %v9312 = vadd.f32 %v8926, %v9192
        %v9313 = vadd.f32 %v8927, %v9195
        %v9314 = vadd.f32 %v8928, %v9200
        %v9315 = vadd.f32 %v8929, %v9203
        %v9316 = vadd.f32 %v8930, %v9208
        %v9317 = vadd.f32 %v8931, %v9211
        %v9318 = vadd.f32 %v8932, %v9216
        %v9319 = vadd.f32 %v8933, %v9219
        %v9320 = vadd.f32 %v8934, %v9224
        %v9321 = vadd.f32 %v8935, %v9227
        %v9322 = vadd.f32 %v8936, %v9232
        %v9323 = vadd.f32 %v8937, %v9235
        %v9324 = vadd.f32 %v8938, %v9240
        %v9325 = vadd.f32 %v8939, %v9243
        %v9326 = vadd.f32 %v8940, %v9248
        %v9327 = vadd.f32 %v8941, %v9251
        %v9328 = vadd.f32 %v8942, %v9256
        %v9329 = vadd.f32 %v8943, %v9259
        %v9330 = vadd.f32 %v8944, %v9264
        %v9331 = vadd.f32 %v8945, %v9267
        %v9332 = vadd.f32 %v8946, %v9272
        %v9333 = vadd.f32 %v8947, %v9275
        %v9334 = vadd.f32 %v8948, %v9280
        %v9335 = vadd.f32 %v8949, %v9283
        %v9336 = vadd.f32 %v8950, %v9288
        %v9337 = vadd.f32 %v8951, %v9291
        %v9338 = vadd.f32 %v8952, %v9296
        %v9339 = vadd.f32 %v8953, %v9299
        %v9340 = vadd.f32 %v8954, %v9304
        %v9341 = vadd.f32 %v8955, %v9307
        %v9342 = vld [vmem:[%s8956] sm:$0xf]
        %v9343 = vld [vmem:[%s8956 + $0x4] sm:$0xf]
        %v9344 = vld [vmem:[%s8956 + $0x8] sm:$0x1]
        %v9345 = vld [vmem:[%s8956 + $0xc] sm:$0xf]
        %v9346 = vld [vmem:[%s8956 + $0x10] sm:$0xf]
        %v9347 = vld [vmem:[%s8956 + $0x14] sm:$0x1]
        %v9348 = vld [vmem:[%s8956 + $0x18] sm:$0xf]
        %v9349 = vld [vmem:[%s8956 + $0x1c] sm:$0xf]
        %v9350 = vld [vmem:[%s8956 + $0x20] sm:$0x1]
        %v9351 = vld [vmem:[%s8956 + $0x24] sm:$0xf]
        %v9352 = vld [vmem:[%s8956 + $0x28] sm:$0xf]
        %v9353 = vld [vmem:[%s8956 + $0x2c] sm:$0x1]
        %v9354 = vld [vmem:[%s8956 + $0x30] sm:$0xf]
        %v9355 = vld [vmem:[%s8956 + $0x34] sm:$0xf]
        %v9356 = vld [vmem:[%s8956 + $0x38] sm:$0x1]
        %v9357 = vld [vmem:[%s8956 + $0x3c] sm:$0xf]
        %v9358 = vld [vmem:[%s8956 + $0x40] sm:$0xf]
        %v9359 = vld [vmem:[%s8956 + $0x44] sm:$0x1]
        %v9360 = vld [vmem:[%s8956 + $0x48] sm:$0xf]
        %v9361 = vld [vmem:[%s8956 + $0x4c] sm:$0xf]
        %v9362 = vld [vmem:[%s8956 + $0x50] sm:$0x1]
        %v9363 = vld [vmem:[%s8956 + $0x54] sm:$0xf]
        %v9364 = vld [vmem:[%s8956 + $0x58] sm:$0xf]
        %v9365 = vld [vmem:[%s8956 + $0x5c] sm:$0x1]
        %v9366 = vld [vmem:[%s8956 + $0x60] sm:$0xf]
        %v9367 = vld [vmem:[%s8956 + $0x64] sm:$0xf]
        %v9368 = vld [vmem:[%s8956 + $0x68] sm:$0x1]
        %v9369 = vld [vmem:[%s8956 + $0x6c] sm:$0xf]
        %v9370 = vld [vmem:[%s8956 + $0x70] sm:$0xf]
        %v9371 = vld [vmem:[%s8956 + $0x74] sm:$0x1]
        %v9372 = vld [vmem:[%s8956 + $0x78] sm:$0xf]
        %v9373 = vld [vmem:[%s8956 + $0x7c] sm:$0xf]
        %v9374 = vld [vmem:[%s8956 + $0x80] sm:$0x1]
        %v9375 = vld [vmem:[%s8956 + $0x84] sm:$0xf]
        %v9376 = vld [vmem:[%s8956 + $0x88] sm:$0xf]
        %v9377 = vld [vmem:[%s8956 + $0x8c] sm:$0x1]
        %v9378 = vld [vmem:[%s8956 + $0x90] sm:$0xf]
        %v9379 = vld [vmem:[%s8956 + $0x94] sm:$0xf]
        %v9380 = vld [vmem:[%s8956 + $0x98] sm:$0x1]
        %v9381 = vld [vmem:[%s8956 + $0x9c] sm:$0xf]
        %v9382 = vld [vmem:[%s8956 + $0xa0] sm:$0xf]
        %v9383 = vld [vmem:[%s8956 + $0xa4] sm:$0x1]
        %v9384 = vld [vmem:[%s8956 + $0xa8] sm:$0xf]
        %v9385 = vld [vmem:[%s8956 + $0xac] sm:$0xf]
        %v9386 = vld [vmem:[%s8956 + $0xb0] sm:$0x1]
        %v9387 = vld [vmem:[%s8956 + $0xb4] sm:$0xf]
        %v9388 = vld [vmem:[%s8956 + $0xb8] sm:$0xf]
        %v9389 = vld [vmem:[%s8956 + $0xbc] sm:$0x1]
        %v9391 = vshrl.u32 %v9342, 16
        %v9393 = vrot.slane %v9391, 4
        %v9394 = vshll.u32 %v9342, 16
        %v9396 = vrot.slane %v9394, 5
        %v9397 = vor.u32 %v9393, %v9396
        %v9398 = vrot.slane %v9397, 4
        %v9400 = vshll.u32 %v9343, 16
        %v9402 = vrot.slane %v9400, 5
        %v9403 = vsel %vm339, %v9398, %v9402
        %v9404 = vshrl.u32 %v9343, 16
        %v9406 = vrot.slane %v9404, 4
        %v9407 = vor.u32 %v9406, %v9402
        %v9408 = vrot.slane %v9407, 4
        %v9410 = vshll.u32 %v9344, 16
        %v9412 = vrot.slane %v9410, 5
        %v9413 = vsel %vm339, %v9408, %v9412
        %v9415 = vshrl.u32 %v9345, 16
        %v9417 = vrot.slane %v9415, 4
        %v9418 = vshll.u32 %v9345, 16
        %v9420 = vrot.slane %v9418, 5
        %v9421 = vor.u32 %v9417, %v9420
        %v9422 = vrot.slane %v9421, 4
        %v9424 = vshll.u32 %v9346, 16
        %v9426 = vrot.slane %v9424, 5
        %v9427 = vsel %vm339, %v9422, %v9426
        %v9428 = vshrl.u32 %v9346, 16
        %v9430 = vrot.slane %v9428, 4
        %v9431 = vor.u32 %v9430, %v9426
        %v9432 = vrot.slane %v9431, 4
        %v9434 = vshll.u32 %v9347, 16
        %v9436 = vrot.slane %v9434, 5
        %v9437 = vsel %vm339, %v9432, %v9436
        %v9439 = vshrl.u32 %v9348, 16
        %v9441 = vrot.slane %v9439, 4
        %v9442 = vshll.u32 %v9348, 16
        %v9444 = vrot.slane %v9442, 5
        %v9445 = vor.u32 %v9441, %v9444
        %v9446 = vrot.slane %v9445, 4
        %v9448 = vshll.u32 %v9349, 16
        %v9450 = vrot.slane %v9448, 5
        %v9451 = vsel %vm339, %v9446, %v9450
        %v9452 = vshrl.u32 %v9349, 16
        %v9454 = vrot.slane %v9452, 4
        %v9455 = vor.u32 %v9454, %v9450
        %v9456 = vrot.slane %v9455, 4
        %v9458 = vshll.u32 %v9350, 16
        %v9460 = vrot.slane %v9458, 5
        %v9461 = vsel %vm339, %v9456, %v9460
        %v9463 = vshrl.u32 %v9351, 16
        %v9465 = vrot.slane %v9463, 4
        %v9466 = vshll.u32 %v9351, 16
        %v9468 = vrot.slane %v9466, 5
        %v9469 = vor.u32 %v9465, %v9468
        %v9470 = vrot.slane %v9469, 4
        %v9472 = vshll.u32 %v9352, 16
        %v9474 = vrot.slane %v9472, 5
        %v9475 = vsel %vm339, %v9470, %v9474
        %v9476 = vshrl.u32 %v9352, 16
        %v9478 = vrot.slane %v9476, 4
        %v9479 = vor.u32 %v9478, %v9474
        %v9480 = vrot.slane %v9479, 4
        %v9482 = vshll.u32 %v9353, 16
        %v9484 = vrot.slane %v9482, 5
        %v9485 = vsel %vm339, %v9480, %v9484
        %v9487 = vshrl.u32 %v9354, 16
        %v9489 = vrot.slane %v9487, 4
        %v9490 = vshll.u32 %v9354, 16
        %v9492 = vrot.slane %v9490, 5
        %v9493 = vor.u32 %v9489, %v9492
        %v9494 = vrot.slane %v9493, 4
        %v9496 = vshll.u32 %v9355, 16
        %v9498 = vrot.slane %v9496, 5
        %v9499 = vsel %vm339, %v9494, %v9498
        %v9500 = vshrl.u32 %v9355, 16
        %v9502 = vrot.slane %v9500, 4
        %v9503 = vor.u32 %v9502, %v9498
        %v9504 = vrot.slane %v9503, 4
        %v9506 = vshll.u32 %v9356, 16
        %v9508 = vrot.slane %v9506, 5
        %v9509 = vsel %vm339, %v9504, %v9508
        %v9511 = vshrl.u32 %v9357, 16
        %v9513 = vrot.slane %v9511, 4
        %v9514 = vshll.u32 %v9357, 16
        %v9516 = vrot.slane %v9514, 5
        %v9517 = vor.u32 %v9513, %v9516
        %v9518 = vrot.slane %v9517, 4
        %v9520 = vshll.u32 %v9358, 16
        %v9522 = vrot.slane %v9520, 5
        %v9523 = vsel %vm339, %v9518, %v9522
        %v9524 = vshrl.u32 %v9358, 16
        %v9526 = vrot.slane %v9524, 4
        %v9527 = vor.u32 %v9526, %v9522
        %v9528 = vrot.slane %v9527, 4
        %v9530 = vshll.u32 %v9359, 16
        %v9532 = vrot.slane %v9530, 5
        %v9533 = vsel %vm339, %v9528, %v9532
        %v9535 = vshrl.u32 %v9360, 16
        %v9537 = vrot.slane %v9535, 4
        %v9538 = vshll.u32 %v9360, 16
        %v9540 = vrot.slane %v9538, 5
        %v9541 = vor.u32 %v9537, %v9540
        %v9542 = vrot.slane %v9541, 4
        %v9544 = vshll.u32 %v9361, 16
        %v9546 = vrot.slane %v9544, 5
        %v9547 = vsel %vm339, %v9542, %v9546
        %v9548 = vshrl.u32 %v9361, 16
        %v9550 = vrot.slane %v9548, 4
        %v9551 = vor.u32 %v9550, %v9546
        %v9552 = vrot.slane %v9551, 4
        %v9554 = vshll.u32 %v9362, 16
        %v9556 = vrot.slane %v9554, 5
        %v9557 = vsel %vm339, %v9552, %v9556
        %v9559 = vshrl.u32 %v9363, 16
        %v9561 = vrot.slane %v9559, 4
        %v9562 = vshll.u32 %v9363, 16
        %v9564 = vrot.slane %v9562, 5
        %v9565 = vor.u32 %v9561, %v9564
        %v9566 = vrot.slane %v9565, 4
        %v9568 = vshll.u32 %v9364, 16
        %v9570 = vrot.slane %v9568, 5
        %v9571 = vsel %vm339, %v9566, %v9570
        %v9572 = vshrl.u32 %v9364, 16
        %v9574 = vrot.slane %v9572, 4
        %v9575 = vor.u32 %v9574, %v9570
        %v9576 = vrot.slane %v9575, 4
        %v9578 = vshll.u32 %v9365, 16
        %v9580 = vrot.slane %v9578, 5
        %v9581 = vsel %vm339, %v9576, %v9580
        %v9583 = vshrl.u32 %v9366, 16
        %v9585 = vrot.slane %v9583, 4
        %v9586 = vshll.u32 %v9366, 16
        %v9588 = vrot.slane %v9586, 5
        %v9589 = vor.u32 %v9585, %v9588
        %v9590 = vrot.slane %v9589, 4
        %v9592 = vshll.u32 %v9367, 16
        %v9594 = vrot.slane %v9592, 5
        %v9595 = vsel %vm339, %v9590, %v9594
        %v9596 = vshrl.u32 %v9367, 16
        %v9598 = vrot.slane %v9596, 4
        %v9599 = vor.u32 %v9598, %v9594
        %v9600 = vrot.slane %v9599, 4
        %v9602 = vshll.u32 %v9368, 16
        %v9604 = vrot.slane %v9602, 5
        %v9605 = vsel %vm339, %v9600, %v9604
        %v9607 = vshrl.u32 %v9369, 16
        %v9609 = vrot.slane %v9607, 4
        %v9610 = vshll.u32 %v9369, 16
        %v9612 = vrot.slane %v9610, 5
        %v9613 = vor.u32 %v9609, %v9612
        %v9614 = vrot.slane %v9613, 4
        %v9616 = vshll.u32 %v9370, 16
        %v9618 = vrot.slane %v9616, 5
        %v9619 = vsel %vm339, %v9614, %v9618
        %v9620 = vshrl.u32 %v9370, 16
        %v9622 = vrot.slane %v9620, 4
        %v9623 = vor.u32 %v9622, %v9618
        %v9624 = vrot.slane %v9623, 4
        %v9626 = vshll.u32 %v9371, 16
        %v9628 = vrot.slane %v9626, 5
        %v9629 = vsel %vm339, %v9624, %v9628
        %v9631 = vshrl.u32 %v9372, 16
        %v9633 = vrot.slane %v9631, 4
        %v9634 = vshll.u32 %v9372, 16
        %v9636 = vrot.slane %v9634, 5
        %v9637 = vor.u32 %v9633, %v9636
        %v9638 = vrot.slane %v9637, 4
        %v9640 = vshll.u32 %v9373, 16
        %v9642 = vrot.slane %v9640, 5
        %v9643 = vsel %vm339, %v9638, %v9642
        %v9644 = vshrl.u32 %v9373, 16
        %v9646 = vrot.slane %v9644, 4
        %v9647 = vor.u32 %v9646, %v9642
        %v9648 = vrot.slane %v9647, 4
        %v9650 = vshll.u32 %v9374, 16
        %v9652 = vrot.slane %v9650, 5
        %v9653 = vsel %vm339, %v9648, %v9652
        %v9655 = vshrl.u32 %v9375, 16
        %v9657 = vrot.slane %v9655, 4
        %v9658 = vshll.u32 %v9375, 16
        %v9660 = vrot.slane %v9658, 5
        %v9661 = vor.u32 %v9657, %v9660
        %v9662 = vrot.slane %v9661, 4
        %v9664 = vshll.u32 %v9376, 16
        %v9666 = vrot.slane %v9664, 5
        %v9667 = vsel %vm339, %v9662, %v9666
        %v9668 = vshrl.u32 %v9376, 16
        %v9670 = vrot.slane %v9668, 4
        %v9671 = vor.u32 %v9670, %v9666
        %v9672 = vrot.slane %v9671, 4
        %v9674 = vshll.u32 %v9377, 16
        %v9676 = vrot.slane %v9674, 5
        %v9677 = vsel %vm339, %v9672, %v9676
        %v9679 = vshrl.u32 %v9378, 16
        %v9681 = vrot.slane %v9679, 4
        %v9682 = vshll.u32 %v9378, 16
        %v9684 = vrot.slane %v9682, 5
        %v9685 = vor.u32 %v9681, %v9684
        %v9686 = vrot.slane %v9685, 4
        %v9688 = vshll.u32 %v9379, 16
        %v9690 = vrot.slane %v9688, 5
        %v9691 = vsel %vm339, %v9686, %v9690
        %v9692 = vshrl.u32 %v9379, 16
        %v9694 = vrot.slane %v9692, 4
        %v9695 = vor.u32 %v9694, %v9690
        %v9696 = vrot.slane %v9695, 4
        %v9698 = vshll.u32 %v9380, 16
        %v9700 = vrot.slane %v9698, 5
        %v9701 = vsel %vm339, %v9696, %v9700
        %v9703 = vshrl.u32 %v9381, 16
        %v9705 = vrot.slane %v9703, 4
        %v9706 = vshll.u32 %v9381, 16
        %v9708 = vrot.slane %v9706, 5
        %v9709 = vor.u32 %v9705, %v9708
        %v9710 = vrot.slane %v9709, 4
        %v9712 = vshll.u32 %v9382, 16
        %v9714 = vrot.slane %v9712, 5
        %v9715 = vsel %vm339, %v9710, %v9714
        %v9716 = vshrl.u32 %v9382, 16
        %v9718 = vrot.slane %v9716, 4
        %v9719 = vor.u32 %v9718, %v9714
        %v9720 = vrot.slane %v9719, 4
        %v9722 = vshll.u32 %v9383, 16
        %v9724 = vrot.slane %v9722, 5
        %v9725 = vsel %vm339, %v9720, %v9724
        %v9727 = vshrl.u32 %v9384, 16
        %v9729 = vrot.slane %v9727, 4
        %v9730 = vshll.u32 %v9384, 16
        %v9732 = vrot.slane %v9730, 5
        %v9733 = vor.u32 %v9729, %v9732
        %v9734 = vrot.slane %v9733, 4
        %v9736 = vshll.u32 %v9385, 16
        %v9738 = vrot.slane %v9736, 5
        %v9739 = vsel %vm339, %v9734, %v9738
        %v9740 = vshrl.u32 %v9385, 16
        %v9742 = vrot.slane %v9740, 4
        %v9743 = vor.u32 %v9742, %v9738
        %v9744 = vrot.slane %v9743, 4
        %v9746 = vshll.u32 %v9386, 16
        %v9748 = vrot.slane %v9746, 5
        %v9749 = vsel %vm339, %v9744, %v9748
        %v9751 = vshrl.u32 %v9387, 16
        %v9753 = vrot.slane %v9751, 4
        %v9754 = vshll.u32 %v9387, 16
        %v9756 = vrot.slane %v9754, 5
        %v9757 = vor.u32 %v9753, %v9756
        %v9758 = vrot.slane %v9757, 4
        %v9760 = vshll.u32 %v9388, 16
        %v9762 = vrot.slane %v9760, 5
        %v9763 = vsel %vm339, %v9758, %v9762
        %v9764 = vshrl.u32 %v9388, 16
        %v9766 = vrot.slane %v9764, 4
        %v9767 = vor.u32 %v9766, %v9762
        %v9768 = vrot.slane %v9767, 4
        %v9770 = vshll.u32 %v9389, 16
        %v9772 = vrot.slane %v9770, 5
        %v9773 = vsel %vm339, %v9768, %v9772
        %v9774 = vld [vmem:[#allocation8 + $0x1c0] sm:$0xf]
        %v9775 = vld [vmem:[#allocation8 + $0x1c4] sm:$0xf]
        %v9776 = vld [vmem:[#allocation8 + $0x1c8] sm:$0xf]
        %v9777 = vld [vmem:[#allocation8 + $0x1cc] sm:$0xf]
        %v9778 = vld [vmem:[#allocation8 + $0x1d0] sm:$0xf]
        %v9779 = vld [vmem:[#allocation8 + $0x1d4] sm:$0xf]
        %v9780 = vld [vmem:[#allocation8 + $0x1d8] sm:$0xf]
        %v9781 = vld [vmem:[#allocation8 + $0x1dc] sm:$0xf]
        %v9782 = vld [vmem:[#allocation8 + $0x1e0] sm:$0xf]
        %v9783 = vld [vmem:[#allocation8 + $0x1e4] sm:$0xf]
        %v9784 = vld [vmem:[#allocation8 + $0x1e8] sm:$0xf]
        %v9785 = vld [vmem:[#allocation8 + $0x1ec] sm:$0xf]
        %v9786 = vld [vmem:[#allocation8 + $0x1f0] sm:$0xf]
        %v9787 = vld [vmem:[#allocation8 + $0x1f4] sm:$0xf]
        %v9788 = vld [vmem:[#allocation8 + $0x1f8] sm:$0xf]
        %v9789 = vld [vmem:[#allocation8 + $0x1fc] sm:$0xf]
        %v9790 = vunpack.c.l.b16 %v9403
        %v9791 = vunpack.c.l.b16 %v9413
        %v9792 = vunpack.c.l.b16 %v9427
        %v9793 = vunpack.c.l.b16 %v9437
        %v9794 = vunpack.c.l.b16 %v9451
        %v9795 = vunpack.c.l.b16 %v9461
        %v9796 = vunpack.c.l.b16 %v9475
        %v9797 = vunpack.c.l.b16 %v9485
        %v9798 = vunpack.c.l.b16 %v9499
        %v9799 = vunpack.c.l.b16 %v9509
        %v9800 = vunpack.c.l.b16 %v9523
        %v9801 = vunpack.c.l.b16 %v9533
        %v9802 = vunpack.c.l.b16 %v9547
        %v9803 = vunpack.c.l.b16 %v9557
        %v9804 = vunpack.c.l.b16 %v9571
        %v9805 = vunpack.c.l.b16 %v9581
        %v9806 = vunpack.c.l.b16 %v9595
        %v9807 = vunpack.c.l.b16 %v9605
        %v9808 = vunpack.c.l.b16 %v9619
        %v9809 = vunpack.c.l.b16 %v9629
        %v9810 = vunpack.c.l.b16 %v9643
        %v9811 = vunpack.c.l.b16 %v9653
        %v9812 = vunpack.c.l.b16 %v9667
        %v9813 = vunpack.c.l.b16 %v9677
        %v9814 = vunpack.c.l.b16 %v9691
        %v9815 = vunpack.c.l.b16 %v9701
        %v9816 = vunpack.c.l.b16 %v9715
        %v9817 = vunpack.c.l.b16 %v9725
        %v9818 = vunpack.c.l.b16 %v9739
        %v9819 = vunpack.c.l.b16 %v9749
        %v9820 = vunpack.c.l.b16 %v9763
        %v9821 = vunpack.c.l.b16 %v9773
        %v9822 = vpack.c.b16 %v9791, %v9790
        %v9823 = vpack.c.b16 %v9793, %v9792
        %v9824 = vpack.c.b16 %v9795, %v9794
        %v9825 = vpack.c.b16 %v9797, %v9796
        %v9826 = vpack.c.b16 %v9799, %v9798
        %v9827 = vpack.c.b16 %v9801, %v9800
        %v9828 = vpack.c.b16 %v9803, %v9802
        %v9829 = vpack.c.b16 %v9805, %v9804
        %v9830 = vpack.c.b16 %v9807, %v9806
        %v9831 = vpack.c.b16 %v9809, %v9808
        %v9832 = vpack.c.b16 %v9811, %v9810
        %v9833 = vpack.c.b16 %v9813, %v9812
        %v9834 = vpack.c.b16 %v9815, %v9814
        %v9835 = vpack.c.b16 %v9817, %v9816
        %v9836 = vpack.c.b16 %v9819, %v9818
        %v9837 = vpack.c.b16 %v9821, %v9820
        %v9870 = vunpack.c.l.b16 %v9774
        %v9871 = vunpack.c.l.b16 %v9775
        %v9872 = vunpack.c.l.b16 %v9776
        %v9873 = vunpack.c.l.b16 %v9777
        %v9874 = vunpack.c.l.b16 %v9778
        %v9875 = vunpack.c.l.b16 %v9779
        %v9876 = vunpack.c.l.b16 %v9780
        %v9877 = vunpack.c.l.b16 %v9781
        %v9878 = vunpack.c.l.b16 %v9782
        %v9879 = vunpack.c.l.b16 %v9783
        %v9880 = vunpack.c.l.b16 %v9784
        %v9881 = vunpack.c.l.b16 %v9785
        %v9882 = vunpack.c.l.b16 %v9786
        %v9883 = vunpack.c.l.b16 %v9787
        %v9884 = vunpack.c.l.b16 %v9788
        %v9885 = vunpack.c.l.b16 %v9789
        %v9886 = vpack.c.b16 %v9871, %v9870
        %v9887 = vpack.c.b16 %v9873, %v9872
        %v9888 = vpack.c.b16 %v9875, %v9874
        %v9889 = vpack.c.b16 %v9877, %v9876
        %v9890 = vpack.c.b16 %v9879, %v9878
        %v9891 = vpack.c.b16 %v9881, %v9880
        %v9892 = vpack.c.b16 %v9883, %v9882
        %v9893 = vpack.c.b16 %v9885, %v9884
        %9902 = vmatprep.subr.bf16.mxu0 0
        %9903 = vmatpush1.bf16.msra.mxu0 %v9893
        %9904 = vmatprep.subr.bf16.mxu0 0
        %9905 = vmatpush1.bf16.msra.mxu0 %v9892
        %9906 = vmatprep.subr.bf16.mxu0 0
        %9907 = vmatpush1.bf16.msra.mxu0 %v9891
        %9908 = vmatprep.subr.bf16.mxu0 0
        %9909 = vmatpush1.bf16.msra.mxu0 %v9890
        %9910 = vmatprep.subr.bf16.mxu0 0
        %9911 = vmatpush1.bf16.msra.mxu0 %v9889
        %9912 = vmatprep.subr.bf16.mxu0 0
        %9913 = vmatpush1.bf16.msra.mxu0 %v9888
        %9914 = vmatprep.subr.bf16.mxu0 0
        %9915 = vmatpush1.bf16.msra.mxu0 %v9887
        %9916 = vmatprep.subr.bf16.mxu0 0
        %9917 = vmatpush1.bf16.msra.mxu0 %v9886
        %9918 = vmatprep.subr.bf16.mxu0 0
        %9919 = vmatpush2.bf16.msra.mxu0 0
        %9920 = vmatprep.subr.bf16.mxu0 0
        %9921 = vmatpush2.bf16.msra.mxu0 0
        %9922 = vmatprep.subr.bf16.mxu0 0
        %9923 = vmatpush2.bf16.msra.mxu0 0
        %9924 = vmatprep.subr.bf16.mxu0 0
        %9925 = vmatpush2.bf16.msra.mxu0 0
        %9926 = vmatprep.subr.bf16.mxu0 0
        %9927 = vmatpush2.bf16.msra.mxu0 0
        %9928 = vmatprep.subr.bf16.mxu0 0
        %9929 = vmatpush2.bf16.msra.mxu0 0
        %9930 = vmatprep.subr.bf16.mxu0 0
        %9931 = vmatpush2.bf16.msra.mxu0 0
        %9932 = vmatprep.subr.bf16.mxu0 0
        %9933 = vmatpush2.bf16.msra.mxu0 0
        %9934 = vmatprep.mubr.bf16.mxu0 0
        %9935 = vmatmul.mubr.bf16.gmra.mxu0 %v9822
        %v9936 = vpop.f32.mrf.mxu0
        %v9937 = vadd.f32 0.0, %v9936
        %v9938 = vpop.f32.mrf.mxu0
        %v9939 = vpop.f32.mrf.mxu0
        %v9940 = vadd.f32 0.0, %v9939
        %v9941 = vpop.f32.mrf.mxu0
        %9942 = vmatprep.mubr.bf16.mxu0 0
        %9943 = vmatmul.mubr.bf16.gmra.mxu0 %v9823
        %v9944 = vpop.f32.mrf.mxu0
        %v9945 = vadd.f32 0.0, %v9944
        %v9946 = vpop.f32.mrf.mxu0
        %v9947 = vpop.f32.mrf.mxu0
        %v9948 = vadd.f32 0.0, %v9947
        %v9949 = vpop.f32.mrf.mxu0
        %9950 = vmatprep.mubr.bf16.mxu0 0
        %9951 = vmatmul.mubr.bf16.gmra.mxu0 %v9824
        %v9952 = vpop.f32.mrf.mxu0
        %v9953 = vadd.f32 0.0, %v9952
        %v9954 = vpop.f32.mrf.mxu0
        %v9955 = vpop.f32.mrf.mxu0
        %v9956 = vadd.f32 0.0, %v9955
        %v9957 = vpop.f32.mrf.mxu0
        %9958 = vmatprep.mubr.bf16.mxu0 0
        %9959 = vmatmul.mubr.bf16.gmra.mxu0 %v9825
        %v9960 = vpop.f32.mrf.mxu0
        %v9961 = vadd.f32 0.0, %v9960
        %v9962 = vpop.f32.mrf.mxu0
        %v9963 = vpop.f32.mrf.mxu0
        %v9964 = vadd.f32 0.0, %v9963
        %v9965 = vpop.f32.mrf.mxu0
        %9966 = vmatprep.mubr.bf16.mxu0 0
        %9967 = vmatmul.mubr.bf16.gmra.mxu0 %v9826
        %v9968 = vpop.f32.mrf.mxu0
        %v9969 = vadd.f32 0.0, %v9968
        %v9970 = vpop.f32.mrf.mxu0
        %v9971 = vpop.f32.mrf.mxu0
        %v9972 = vadd.f32 0.0, %v9971
        %v9973 = vpop.f32.mrf.mxu0
        %9974 = vmatprep.mubr.bf16.mxu0 0
        %9975 = vmatmul.mubr.bf16.gmra.mxu0 %v9827
        %v9976 = vpop.f32.mrf.mxu0
        %v9977 = vadd.f32 0.0, %v9976
        %v9978 = vpop.f32.mrf.mxu0
        %v9979 = vpop.f32.mrf.mxu0
        %v9980 = vadd.f32 0.0, %v9979
        %v9981 = vpop.f32.mrf.mxu0
        %9982 = vmatprep.mubr.bf16.mxu0 0
        %9983 = vmatmul.mubr.bf16.gmra.mxu0 %v9828
        %v9984 = vpop.f32.mrf.mxu0
        %v9985 = vadd.f32 0.0, %v9984
        %v9986 = vpop.f32.mrf.mxu0
        %v9987 = vpop.f32.mrf.mxu0
        %v9988 = vadd.f32 0.0, %v9987
        %v9989 = vpop.f32.mrf.mxu0
        %9990 = vmatprep.mubr.bf16.mxu0 0
        %9991 = vmatmul.mubr.bf16.gmra.mxu0 %v9829
        %v9992 = vpop.f32.mrf.mxu0
        %v9993 = vadd.f32 0.0, %v9992
        %v9994 = vpop.f32.mrf.mxu0
        %v9995 = vpop.f32.mrf.mxu0
        %v9996 = vadd.f32 0.0, %v9995
        %v9997 = vpop.f32.mrf.mxu0
        %9998 = vmatprep.mubr.bf16.mxu0 0
        %9999 = vmatmul.mubr.bf16.gmra.mxu0 %v9830
        %v10000 = vpop.f32.mrf.mxu0
        %v10001 = vadd.f32 0.0, %v10000
        %v10002 = vpop.f32.mrf.mxu0
        %v10003 = vpop.f32.mrf.mxu0
        %v10004 = vadd.f32 0.0, %v10003
        %v10005 = vpop.f32.mrf.mxu0
        %10006 = vmatprep.mubr.bf16.mxu0 0
        %10007 = vmatmul.mubr.bf16.gmra.mxu0 %v9831
        %v10008 = vpop.f32.mrf.mxu0
        %v10009 = vadd.f32 0.0, %v10008
        %v10010 = vpop.f32.mrf.mxu0
        %v10011 = vpop.f32.mrf.mxu0
        %v10012 = vadd.f32 0.0, %v10011
        %v10013 = vpop.f32.mrf.mxu0
        %10014 = vmatprep.mubr.bf16.mxu0 0
        %10015 = vmatmul.mubr.bf16.gmra.mxu0 %v9832
        %v10016 = vpop.f32.mrf.mxu0
        %v10017 = vadd.f32 0.0, %v10016
        %v10018 = vpop.f32.mrf.mxu0
        %v10019 = vpop.f32.mrf.mxu0
        %v10020 = vadd.f32 0.0, %v10019
        %v10021 = vpop.f32.mrf.mxu0
        %10022 = vmatprep.mubr.bf16.mxu0 0
        %10023 = vmatmul.mubr.bf16.gmra.mxu0 %v9833
        %v10024 = vpop.f32.mrf.mxu0
        %v10025 = vadd.f32 0.0, %v10024
        %v10026 = vpop.f32.mrf.mxu0
        %v10027 = vpop.f32.mrf.mxu0
        %v10028 = vadd.f32 0.0, %v10027
        %v10029 = vpop.f32.mrf.mxu0
        %10030 = vmatprep.mubr.bf16.mxu0 0
        %10031 = vmatmul.mubr.bf16.gmra.mxu0 %v9834
        %v10032 = vpop.f32.mrf.mxu0
        %v10033 = vadd.f32 0.0, %v10032
        %v10034 = vpop.f32.mrf.mxu0
        %v10035 = vpop.f32.mrf.mxu0
        %v10036 = vadd.f32 0.0, %v10035
        %v10037 = vpop.f32.mrf.mxu0
        %10038 = vmatprep.mubr.bf16.mxu0 0
        %10039 = vmatmul.mubr.bf16.gmra.mxu0 %v9835
        %v10040 = vpop.f32.mrf.mxu0
        %v10041 = vadd.f32 0.0, %v10040
        %v10042 = vpop.f32.mrf.mxu0
        %v10043 = vpop.f32.mrf.mxu0
        %v10044 = vadd.f32 0.0, %v10043
        %v10045 = vpop.f32.mrf.mxu0
        %10046 = vmatprep.mubr.bf16.mxu0 0
        %10047 = vmatmul.mubr.bf16.gmra.mxu0 %v9836
        %v10048 = vpop.f32.mrf.mxu0
        %v10049 = vadd.f32 0.0, %v10048
        %v10050 = vpop.f32.mrf.mxu0
        %v10051 = vpop.f32.mrf.mxu0
        %v10052 = vadd.f32 0.0, %v10051
        %v10053 = vpop.f32.mrf.mxu0
        %10054 = vmatprep.mubr.bf16.mxu0 0
        %10055 = vmatmul.mubr.bf16.gmra.mxu0 %v9837
        %v10056 = vpop.f32.mrf.mxu0
        %v10057 = vadd.f32 0.0, %v10056
        %v10058 = vpop.f32.mrf.mxu0
        %v10059 = vpop.f32.mrf.mxu0
        %v10060 = vadd.f32 0.0, %v10059
        %v10061 = vpop.f32.mrf.mxu0
        %10062 = vdwg.mxu0
        %v10063 = vadd.f32 %v9310, %v9937
        %v10064 = vadd.f32 %v9311, %v9940
        %v10065 = vadd.f32 %v9312, %v9945
        %v10066 = vadd.f32 %v9313, %v9948
        %v10067 = vadd.f32 %v9314, %v9953
        %v10068 = vadd.f32 %v9315, %v9956
        %v10069 = vadd.f32 %v9316, %v9961
        %v10070 = vadd.f32 %v9317, %v9964
        %v10071 = vadd.f32 %v9318, %v9969
        %v10072 = vadd.f32 %v9319, %v9972
        %v10073 = vadd.f32 %v9320, %v9977
        %v10074 = vadd.f32 %v9321, %v9980
        %v10075 = vadd.f32 %v9322, %v9985
        %v10076 = vadd.f32 %v9323, %v9988
        %v10077 = vadd.f32 %v9324, %v9993
        %v10078 = vadd.f32 %v9325, %v9996
        %v10079 = vadd.f32 %v9326, %v10001
        %v10080 = vadd.f32 %v9327, %v10004
        %v10081 = vadd.f32 %v9328, %v10009
        %v10082 = vadd.f32 %v9329, %v10012
        %v10083 = vadd.f32 %v9330, %v10017
        %v10084 = vadd.f32 %v9331, %v10020
        %v10085 = vadd.f32 %v9332, %v10025
        %v10086 = vadd.f32 %v9333, %v10028
        %v10087 = vadd.f32 %v9334, %v10033
        %v10088 = vadd.f32 %v9335, %v10036
        %v10089 = vadd.f32 %v9336, %v10041
        %v10090 = vadd.f32 %v9337, %v10044
        %v10091 = vadd.f32 %v9338, %v10049
        %v10092 = vadd.f32 %v9339, %v10052
        %v10093 = vadd.f32 %v9340, %v10057
        %v10094 = vadd.f32 %v9341, %v10060
        %v10095 = vld [vmem:[%s8956] sm:$0xe]
        %v10096 = vld [vmem:[%s8956 + $0xc] sm:$0xe]
        %v10097 = vld [vmem:[%s8956 + $0x18] sm:$0xe]
        %v10098 = vld [vmem:[%s8956 + $0x24] sm:$0xe]
        %v10099 = vld [vmem:[%s8956 + $0x30] sm:$0xe]
        %v10100 = vld [vmem:[%s8956 + $0x3c] sm:$0xe]
        %v10101 = vld [vmem:[%s8956 + $0x48] sm:$0xe]
        %v10102 = vld [vmem:[%s8956 + $0x54] sm:$0xe]
        %v10103 = vld [vmem:[%s8956 + $0x60] sm:$0xe]
        %v10104 = vld [vmem:[%s8956 + $0x6c] sm:$0xe]
        %v10105 = vld [vmem:[%s8956 + $0x78] sm:$0xe]
        %v10106 = vld [vmem:[%s8956 + $0x84] sm:$0xe]
        %v10107 = vld [vmem:[%s8956 + $0x90] sm:$0xe]
        %v10108 = vld [vmem:[%s8956 + $0x9c] sm:$0xe]
        %v10109 = vld [vmem:[%s8956 + $0xa8] sm:$0xe]
        %v10110 = vld [vmem:[%s8956 + $0xb4] sm:$0xe]
        %v10159 = vrot.slane %v10095, 5
        %v10160 = vrot.slane %v10159, 4
        %v10161 = vrot.slane %v9343, 5
        %v10162 = vsel %vm1368, %v10160, %v10161
        %v10163 = vrot.slane %v10161, 4
        %v10164 = vrot.slane %v9344, 5
        %v10165 = vsel %vm1368, %v10163, %v10164
        %v10166 = vrot.slane %v10096, 5
        %v10167 = vrot.slane %v10166, 4
        %v10168 = vrot.slane %v9346, 5
        %v10169 = vsel %vm1368, %v10167, %v10168
        %v10170 = vrot.slane %v10168, 4
        %v10171 = vrot.slane %v9347, 5
        %v10172 = vsel %vm1368, %v10170, %v10171
        %v10173 = vrot.slane %v10097, 5
        %v10174 = vrot.slane %v10173, 4
        %v10175 = vrot.slane %v9349, 5
        %v10176 = vsel %vm1368, %v10174, %v10175
        %v10177 = vrot.slane %v10175, 4
        %v10178 = vrot.slane %v9350, 5
        %v10179 = vsel %vm1368, %v10177, %v10178
        %v10180 = vrot.slane %v10098, 5
        %v10181 = vrot.slane %v10180, 4
        %v10182 = vrot.slane %v9352, 5
        %v10183 = vsel %vm1368, %v10181, %v10182
        %v10184 = vrot.slane %v10182, 4
        %v10185 = vrot.slane %v9353, 5
        %v10186 = vsel %vm1368, %v10184, %v10185
        %v10187 = vrot.slane %v10099, 5
        %v10188 = vrot.slane %v10187, 4
        %v10189 = vrot.slane %v9355, 5
        %v10190 = vsel %vm1368, %v10188, %v10189
        %v10191 = vrot.slane %v10189, 4
        %v10192 = vrot.slane %v9356, 5
        %v10193 = vsel %vm1368, %v10191, %v10192
        %v10194 = vrot.slane %v10100, 5
        %v10195 = vrot.slane %v10194, 4
        %v10196 = vrot.slane %v9358, 5
        %v10197 = vsel %vm1368, %v10195, %v10196
        %v10198 = vrot.slane %v10196, 4
        %v10199 = vrot.slane %v9359, 5
        %v10200 = vsel %vm1368, %v10198, %v10199
        %v10201 = vrot.slane %v10101, 5
        %v10202 = vrot.slane %v10201, 4
        %v10203 = vrot.slane %v9361, 5
        %v10204 = vsel %vm1368, %v10202, %v10203
        %v10205 = vrot.slane %v10203, 4
        %v10206 = vrot.slane %v9362, 5
        %v10207 = vsel %vm1368, %v10205, %v10206
        %v10208 = vrot.slane %v10102, 5
        %v10209 = vrot.slane %v10208, 4
        %v10210 = vrot.slane %v9364, 5
        %v10211 = vsel %vm1368, %v10209, %v10210
        %v10212 = vrot.slane %v10210, 4
        %v10213 = vrot.slane %v9365, 5
        %v10214 = vsel %vm1368, %v10212, %v10213
        %v10215 = vrot.slane %v10103, 5
        %v10216 = vrot.slane %v10215, 4
        %v10217 = vrot.slane %v9367, 5
        %v10218 = vsel %vm1368, %v10216, %v10217
        %v10219 = vrot.slane %v10217, 4
        %v10220 = vrot.slane %v9368, 5
        %v10221 = vsel %vm1368, %v10219, %v10220
        %v10222 = vrot.slane %v10104, 5
        %v10223 = vrot.slane %v10222, 4
        %v10224 = vrot.slane %v9370, 5
        %v10225 = vsel %vm1368, %v10223, %v10224
        %v10226 = vrot.slane %v10224, 4
        %v10227 = vrot.slane %v9371, 5
        %v10228 = vsel %vm1368, %v10226, %v10227
        %v10229 = vrot.slane %v10105, 5
        %v10230 = vrot.slane %v10229, 4
        %v10231 = vrot.slane %v9373, 5
        %v10232 = vsel %vm1368, %v10230, %v10231
        %v10233 = vrot.slane %v10231, 4
        %v10234 = vrot.slane %v9374, 5
        %v10235 = vsel %vm1368, %v10233, %v10234
        %v10236 = vrot.slane %v10106, 5
        %v10237 = vrot.slane %v10236, 4
        %v10238 = vrot.slane %v9376, 5
        %v10239 = vsel %vm1368, %v10237, %v10238
        %v10240 = vrot.slane %v10238, 4
        %v10241 = vrot.slane %v9377, 5
        %v10242 = vsel %vm1368, %v10240, %v10241
        %v10243 = vrot.slane %v10107, 5
        %v10244 = vrot.slane %v10243, 4
        %v10245 = vrot.slane %v9379, 5
        %v10246 = vsel %vm1368, %v10244, %v10245
        %v10247 = vrot.slane %v10245, 4
        %v10248 = vrot.slane %v9380, 5
        %v10249 = vsel %vm1368, %v10247, %v10248
        %v10250 = vrot.slane %v10108, 5
        %v10251 = vrot.slane %v10250, 4
        %v10252 = vrot.slane %v9382, 5
        %v10253 = vsel %vm1368, %v10251, %v10252
        %v10254 = vrot.slane %v10252, 4
        %v10255 = vrot.slane %v9383, 5
        %v10256 = vsel %vm1368, %v10254, %v10255
        %v10257 = vrot.slane %v10109, 5
        %v10258 = vrot.slane %v10257, 4
        %v10259 = vrot.slane %v9385, 5
        %v10260 = vsel %vm1368, %v10258, %v10259
        %v10261 = vrot.slane %v10259, 4
        %v10262 = vrot.slane %v9386, 5
        %v10263 = vsel %vm1368, %v10261, %v10262
        %v10264 = vrot.slane %v10110, 5
        %v10265 = vrot.slane %v10264, 4
        %v10266 = vrot.slane %v9388, 5
        %v10267 = vsel %vm1368, %v10265, %v10266
        %v10268 = vrot.slane %v10266, 4
        %v10269 = vrot.slane %v9389, 5
        %v10270 = vsel %vm1368, %v10268, %v10269
        %v10271 = vld [vmem:[#allocation8 + $0x200] sm:$0xf]
        %v10272 = vld [vmem:[#allocation8 + $0x204] sm:$0xf]
        %v10273 = vld [vmem:[#allocation8 + $0x208] sm:$0xf]
        %v10274 = vld [vmem:[#allocation8 + $0x20c] sm:$0xf]
        %v10275 = vld [vmem:[#allocation8 + $0x210] sm:$0xf]
        %v10276 = vld [vmem:[#allocation8 + $0x214] sm:$0xf]
        %v10277 = vld [vmem:[#allocation8 + $0x218] sm:$0xf]
        %v10278 = vld [vmem:[#allocation8 + $0x21c] sm:$0xf]
        %v10279 = vld [vmem:[#allocation8 + $0x220] sm:$0xf]
        %v10280 = vld [vmem:[#allocation8 + $0x224] sm:$0xf]
        %v10281 = vld [vmem:[#allocation8 + $0x228] sm:$0xf]
        %v10282 = vld [vmem:[#allocation8 + $0x22c] sm:$0xf]
        %v10283 = vld [vmem:[#allocation8 + $0x230] sm:$0xf]
        %v10284 = vld [vmem:[#allocation8 + $0x234] sm:$0xf]
        %v10285 = vld [vmem:[#allocation8 + $0x238] sm:$0xf]
        %v10286 = vld [vmem:[#allocation8 + $0x23c] sm:$0xf]
        %v10287 = vunpack.c.l.b16 %v10162
        %v10288 = vunpack.c.l.b16 %v10165
        %v10289 = vunpack.c.l.b16 %v10169
        %v10290 = vunpack.c.l.b16 %v10172
        %v10291 = vunpack.c.l.b16 %v10176
        %v10292 = vunpack.c.l.b16 %v10179
        %v10293 = vunpack.c.l.b16 %v10183
        %v10294 = vunpack.c.l.b16 %v10186
        %v10295 = vunpack.c.l.b16 %v10190
        %v10296 = vunpack.c.l.b16 %v10193
        %v10297 = vunpack.c.l.b16 %v10197
        %v10298 = vunpack.c.l.b16 %v10200
        %v10299 = vunpack.c.l.b16 %v10204
        %v10300 = vunpack.c.l.b16 %v10207
        %v10301 = vunpack.c.l.b16 %v10211
        %v10302 = vunpack.c.l.b16 %v10214
        %v10303 = vunpack.c.l.b16 %v10218
        %v10304 = vunpack.c.l.b16 %v10221
        %v10305 = vunpack.c.l.b16 %v10225
        %v10306 = vunpack.c.l.b16 %v10228
        %v10307 = vunpack.c.l.b16 %v10232
        %v10308 = vunpack.c.l.b16 %v10235
        %v10309 = vunpack.c.l.b16 %v10239
        %v10310 = vunpack.c.l.b16 %v10242
        %v10311 = vunpack.c.l.b16 %v10246
        %v10312 = vunpack.c.l.b16 %v10249
        %v10313 = vunpack.c.l.b16 %v10253
        %v10314 = vunpack.c.l.b16 %v10256
        %v10315 = vunpack.c.l.b16 %v10260
        %v10316 = vunpack.c.l.b16 %v10263
        %v10317 = vunpack.c.l.b16 %v10267
        %v10318 = vunpack.c.l.b16 %v10270
        %v10319 = vpack.c.b16 %v10288, %v10287
        %v10320 = vpack.c.b16 %v10290, %v10289
        %v10321 = vpack.c.b16 %v10292, %v10291
        %v10322 = vpack.c.b16 %v10294, %v10293
        %v10323 = vpack.c.b16 %v10296, %v10295
        %v10324 = vpack.c.b16 %v10298, %v10297
        %v10325 = vpack.c.b16 %v10300, %v10299
        %v10326 = vpack.c.b16 %v10302, %v10301
        %v10327 = vpack.c.b16 %v10304, %v10303
        %v10328 = vpack.c.b16 %v10306, %v10305
        %v10329 = vpack.c.b16 %v10308, %v10307
        %v10330 = vpack.c.b16 %v10310, %v10309
        %v10331 = vpack.c.b16 %v10312, %v10311
        %v10332 = vpack.c.b16 %v10314, %v10313
        %v10333 = vpack.c.b16 %v10316, %v10315
        %v10334 = vpack.c.b16 %v10318, %v10317
        %v10367 = vunpack.c.l.b16 %v10271
        %v10368 = vunpack.c.l.b16 %v10272
        %v10369 = vunpack.c.l.b16 %v10273
        %v10370 = vunpack.c.l.b16 %v10274
        %v10371 = vunpack.c.l.b16 %v10275
        %v10372 = vunpack.c.l.b16 %v10276
        %v10373 = vunpack.c.l.b16 %v10277
        %v10374 = vunpack.c.l.b16 %v10278
        %v10375 = vunpack.c.l.b16 %v10279
        %v10376 = vunpack.c.l.b16 %v10280
        %v10377 = vunpack.c.l.b16 %v10281
        %v10378 = vunpack.c.l.b16 %v10282
        %v10379 = vunpack.c.l.b16 %v10283
        %v10380 = vunpack.c.l.b16 %v10284
        %v10381 = vunpack.c.l.b16 %v10285
        %v10382 = vunpack.c.l.b16 %v10286
        %v10383 = vpack.c.b16 %v10368, %v10367
        %v10384 = vpack.c.b16 %v10370, %v10369
        %v10385 = vpack.c.b16 %v10372, %v10371
        %v10386 = vpack.c.b16 %v10374, %v10373
        %v10387 = vpack.c.b16 %v10376, %v10375
        %v10388 = vpack.c.b16 %v10378, %v10377
        %v10389 = vpack.c.b16 %v10380, %v10379
        %v10390 = vpack.c.b16 %v10382, %v10381
        %10399 = vmatprep.subr.bf16.mxu0 0
        %10400 = vmatpush1.bf16.msra.mxu0 %v10390
        %10401 = vmatprep.subr.bf16.mxu0 0
        %10402 = vmatpush1.bf16.msra.mxu0 %v10389
        %10403 = vmatprep.subr.bf16.mxu0 0
        %10404 = vmatpush1.bf16.msra.mxu0 %v10388
        %10405 = vmatprep.subr.bf16.mxu0 0
        %10406 = vmatpush1.bf16.msra.mxu0 %v10387
        %10407 = vmatprep.subr.bf16.mxu0 0
        %10408 = vmatpush1.bf16.msra.mxu0 %v10386
        %10409 = vmatprep.subr.bf16.mxu0 0
        %10410 = vmatpush1.bf16.msra.mxu0 %v10385
        %10411 = vmatprep.subr.bf16.mxu0 0
        %10412 = vmatpush1.bf16.msra.mxu0 %v10384
        %10413 = vmatprep.subr.bf16.mxu0 0
        %10414 = vmatpush1.bf16.msra.mxu0 %v10383
        %10415 = vmatprep.subr.bf16.mxu0 0
        %10416 = vmatpush2.bf16.msra.mxu0 0
        %10417 = vmatprep.subr.bf16.mxu0 0
        %10418 = vmatpush2.bf16.msra.mxu0 0
        %10419 = vmatprep.subr.bf16.mxu0 0
        %10420 = vmatpush2.bf16.msra.mxu0 0
        %10421 = vmatprep.subr.bf16.mxu0 0
        %10422 = vmatpush2.bf16.msra.mxu0 0
        %10423 = vmatprep.subr.bf16.mxu0 0
        %10424 = vmatpush2.bf16.msra.mxu0 0
        %10425 = vmatprep.subr.bf16.mxu0 0
        %10426 = vmatpush2.bf16.msra.mxu0 0
        %10427 = vmatprep.subr.bf16.mxu0 0
        %10428 = vmatpush2.bf16.msra.mxu0 0
        %10429 = vmatprep.subr.bf16.mxu0 0
        %10430 = vmatpush2.bf16.msra.mxu0 0
        %10431 = vmatprep.mubr.bf16.mxu0 0
        %10432 = vmatmul.mubr.bf16.gmra.mxu0 %v10319
        %v10433 = vpop.f32.mrf.mxu0
        %v10434 = vadd.f32 0.0, %v10433
        %v10435 = vpop.f32.mrf.mxu0
        %v10436 = vpop.f32.mrf.mxu0
        %v10437 = vadd.f32 0.0, %v10436
        %v10438 = vpop.f32.mrf.mxu0
        %10439 = vmatprep.mubr.bf16.mxu0 0
        %10440 = vmatmul.mubr.bf16.gmra.mxu0 %v10320
        %v10441 = vpop.f32.mrf.mxu0
        %v10442 = vadd.f32 0.0, %v10441
        %v10443 = vpop.f32.mrf.mxu0
        %v10444 = vpop.f32.mrf.mxu0
        %v10445 = vadd.f32 0.0, %v10444
        %v10446 = vpop.f32.mrf.mxu0
        %10447 = vmatprep.mubr.bf16.mxu0 0
        %10448 = vmatmul.mubr.bf16.gmra.mxu0 %v10321
        %v10449 = vpop.f32.mrf.mxu0
        %v10450 = vadd.f32 0.0, %v10449
        %v10451 = vpop.f32.mrf.mxu0
        %v10452 = vpop.f32.mrf.mxu0
        %v10453 = vadd.f32 0.0, %v10452
        %v10454 = vpop.f32.mrf.mxu0
        %10455 = vmatprep.mubr.bf16.mxu0 0
        %10456 = vmatmul.mubr.bf16.gmra.mxu0 %v10322
        %v10457 = vpop.f32.mrf.mxu0
        %v10458 = vadd.f32 0.0, %v10457
        %v10459 = vpop.f32.mrf.mxu0
        %v10460 = vpop.f32.mrf.mxu0
        %v10461 = vadd.f32 0.0, %v10460
        %v10462 = vpop.f32.mrf.mxu0
        %10463 = vmatprep.mubr.bf16.mxu0 0
        %10464 = vmatmul.mubr.bf16.gmra.mxu0 %v10323
        %v10465 = vpop.f32.mrf.mxu0
        %v10466 = vadd.f32 0.0, %v10465
        %v10467 = vpop.f32.mrf.mxu0
        %v10468 = vpop.f32.mrf.mxu0
        %v10469 = vadd.f32 0.0, %v10468
        %v10470 = vpop.f32.mrf.mxu0
        %10471 = vmatprep.mubr.bf16.mxu0 0
        %10472 = vmatmul.mubr.bf16.gmra.mxu0 %v10324
        %v10473 = vpop.f32.mrf.mxu0
        %v10474 = vadd.f32 0.0, %v10473
        %v10475 = vpop.f32.mrf.mxu0
        %v10476 = vpop.f32.mrf.mxu0
        %v10477 = vadd.f32 0.0, %v10476
        %v10478 = vpop.f32.mrf.mxu0
        %10479 = vmatprep.mubr.bf16.mxu0 0
        %10480 = vmatmul.mubr.bf16.gmra.mxu0 %v10325
        %v10481 = vpop.f32.mrf.mxu0
        %v10482 = vadd.f32 0.0, %v10481
        %v10483 = vpop.f32.mrf.mxu0
        %v10484 = vpop.f32.mrf.mxu0
        %v10485 = vadd.f32 0.0, %v10484
        %v10486 = vpop.f32.mrf.mxu0
        %10487 = vmatprep.mubr.bf16.mxu0 0
        %10488 = vmatmul.mubr.bf16.gmra.mxu0 %v10326
        %v10489 = vpop.f32.mrf.mxu0
        %v10490 = vadd.f32 0.0, %v10489
        %v10491 = vpop.f32.mrf.mxu0
        %v10492 = vpop.f32.mrf.mxu0
        %v10493 = vadd.f32 0.0, %v10492
        %v10494 = vpop.f32.mrf.mxu0
        %10495 = vmatprep.mubr.bf16.mxu0 0
        %10496 = vmatmul.mubr.bf16.gmra.mxu0 %v10327
        %v10497 = vpop.f32.mrf.mxu0
        %v10498 = vadd.f32 0.0, %v10497
        %v10499 = vpop.f32.mrf.mxu0
        %v10500 = vpop.f32.mrf.mxu0
        %v10501 = vadd.f32 0.0, %v10500
        %v10502 = vpop.f32.mrf.mxu0
        %10503 = vmatprep.mubr.bf16.mxu0 0
        %10504 = vmatmul.mubr.bf16.gmra.mxu0 %v10328
        %v10505 = vpop.f32.mrf.mxu0
        %v10506 = vadd.f32 0.0, %v10505
        %v10507 = vpop.f32.mrf.mxu0
        %v10508 = vpop.f32.mrf.mxu0
        %v10509 = vadd.f32 0.0, %v10508
        %v10510 = vpop.f32.mrf.mxu0
        %10511 = vmatprep.mubr.bf16.mxu0 0
        %10512 = vmatmul.mubr.bf16.gmra.mxu0 %v10329
        %v10513 = vpop.f32.mrf.mxu0
        %v10514 = vadd.f32 0.0, %v10513
        %v10515 = vpop.f32.mrf.mxu0
        %v10516 = vpop.f32.mrf.mxu0
        %v10517 = vadd.f32 0.0, %v10516
        %v10518 = vpop.f32.mrf.mxu0
        %10519 = vmatprep.mubr.bf16.mxu0 0
        %10520 = vmatmul.mubr.bf16.gmra.mxu0 %v10330
        %v10521 = vpop.f32.mrf.mxu0
        %v10522 = vadd.f32 0.0, %v10521
        %v10523 = vpop.f32.mrf.mxu0
        %v10524 = vpop.f32.mrf.mxu0
        %v10525 = vadd.f32 0.0, %v10524
        %v10526 = vpop.f32.mrf.mxu0
        %10527 = vmatprep.mubr.bf16.mxu0 0
        %10528 = vmatmul.mubr.bf16.gmra.mxu0 %v10331
        %v10529 = vpop.f32.mrf.mxu0
        %v10530 = vadd.f32 0.0, %v10529
        %v10531 = vpop.f32.mrf.mxu0
        %v10532 = vpop.f32.mrf.mxu0
        %v10533 = vadd.f32 0.0, %v10532
        %v10534 = vpop.f32.mrf.mxu0
        %10535 = vmatprep.mubr.bf16.mxu0 0
        %10536 = vmatmul.mubr.bf16.gmra.mxu0 %v10332
        %v10537 = vpop.f32.mrf.mxu0
        %v10538 = vadd.f32 0.0, %v10537
        %v10539 = vpop.f32.mrf.mxu0
        %v10540 = vpop.f32.mrf.mxu0
        %v10541 = vadd.f32 0.0, %v10540
        %v10542 = vpop.f32.mrf.mxu0
        %10543 = vmatprep.mubr.bf16.mxu0 0
        %10544 = vmatmul.mubr.bf16.gmra.mxu0 %v10333
        %v10545 = vpop.f32.mrf.mxu0
        %v10546 = vadd.f32 0.0, %v10545
        %v10547 = vpop.f32.mrf.mxu0
        %v10548 = vpop.f32.mrf.mxu0
        %v10549 = vadd.f32 0.0, %v10548
        %v10550 = vpop.f32.mrf.mxu0
        %10551 = vmatprep.mubr.bf16.mxu0 0
        %10552 = vmatmul.mubr.bf16.gmra.mxu0 %v10334
        %v10553 = vpop.f32.mrf.mxu0
        %v10554 = vadd.f32 0.0, %v10553
        %v10555 = vpop.f32.mrf.mxu0
        %v10556 = vpop.f32.mrf.mxu0
        %v10557 = vadd.f32 0.0, %v10556
        %v10558 = vpop.f32.mrf.mxu0
        %10559 = vdwg.mxu0
        %v10560 = vadd.f32 %v10063, %v10434
        %v10561 = vadd.f32 %v10064, %v10437
        %v10562 = vadd.f32 %v10065, %v10442
        %v10563 = vadd.f32 %v10066, %v10445
        %v10564 = vadd.f32 %v10067, %v10450
        %v10565 = vadd.f32 %v10068, %v10453
        %v10566 = vadd.f32 %v10069, %v10458
        %v10567 = vadd.f32 %v10070, %v10461
        %v10568 = vadd.f32 %v10071, %v10466
        %v10569 = vadd.f32 %v10072, %v10469
        %v10570 = vadd.f32 %v10073, %v10474
        %v10571 = vadd.f32 %v10074, %v10477
        %v10572 = vadd.f32 %v10075, %v10482
        %v10573 = vadd.f32 %v10076, %v10485
        %v10574 = vadd.f32 %v10077, %v10490
        %v10575 = vadd.f32 %v10078, %v10493
        %v10576 = vadd.f32 %v10079, %v10498
        %v10577 = vadd.f32 %v10080, %v10501
        %v10578 = vadd.f32 %v10081, %v10506
        %v10579 = vadd.f32 %v10082, %v10509
        %v10580 = vadd.f32 %v10083, %v10514
        %v10581 = vadd.f32 %v10084, %v10517
        %v10582 = vadd.f32 %v10085, %v10522
        %v10583 = vadd.f32 %v10086, %v10525
        %v10584 = vadd.f32 %v10087, %v10530
        %v10585 = vadd.f32 %v10088, %v10533
        %v10586 = vadd.f32 %v10089, %v10538
        %v10587 = vadd.f32 %v10090, %v10541
        %v10588 = vadd.f32 %v10091, %v10546
        %v10589 = vadd.f32 %v10092, %v10549
        %v10590 = vadd.f32 %v10093, %v10554
        %v10591 = vadd.f32 %v10094, %v10557
        %v10592 = vld [vmem:[%s4] sm:$0x1]
        %v10594 = vlaneseq
        %v10595 = vshrl.u32 %v10594, 7
        %v10596 = vsub.s32 0, %v10595
        %v10597 = vrot.slane %v10592, %v10596
        %v10599 = vadd.f32 %v10560, %v10597
        %v10600 = vadd.f32 %v10561, %v10597
        %v10601 = vadd.f32 %v10562, %v10597
        %v10602 = vadd.f32 %v10563, %v10597
        %v10603 = vadd.f32 %v10564, %v10597
        %v10604 = vadd.f32 %v10565, %v10597
        %v10605 = vadd.f32 %v10566, %v10597
        %v10606 = vadd.f32 %v10567, %v10597
        %v10607 = vadd.f32 %v10568, %v10597
        %v10608 = vadd.f32 %v10569, %v10597
        %v10609 = vadd.f32 %v10570, %v10597
        %v10610 = vadd.f32 %v10571, %v10597
        %v10611 = vadd.f32 %v10572, %v10597
        %v10612 = vadd.f32 %v10573, %v10597
        %v10613 = vadd.f32 %v10574, %v10597
        %v10614 = vadd.f32 %v10575, %v10597
        %v10615 = vadd.f32 %v10576, %v10597
        %v10616 = vadd.f32 %v10577, %v10597
        %v10617 = vadd.f32 %v10578, %v10597
        %v10618 = vadd.f32 %v10579, %v10597
        %v10619 = vadd.f32 %v10580, %v10597
        %v10620 = vadd.f32 %v10581, %v10597
        %v10621 = vadd.f32 %v10582, %v10597
        %v10622 = vadd.f32 %v10583, %v10597
        %v10623 = vadd.f32 %v10584, %v10597
        %v10624 = vadd.f32 %v10585, %v10597
        %v10625 = vadd.f32 %v10586, %v10597
        %v10626 = vadd.f32 %v10587, %v10597
        %v10627 = vadd.f32 %v10588, %v10597
        %v10628 = vadd.f32 %v10589, %v10597
        %v10629 = vadd.f32 %v10590, %v10597
        %v10630 = vadd.f32 %v10591, %v10597
        %v10631 = vld [vmem:[%s1802] sm:$0xf]
        %v10632 = vld [vmem:[%s1802 + $0x4] sm:$0xf]
        %v10633 = vld [vmem:[%s1802 + $0x8] sm:$0x1]
        %v10634 = vld [vmem:[%s1802 + $0xc] sm:$0xf]
        %v10635 = vld [vmem:[%s1802 + $0x10] sm:$0xf]
        %v10636 = vld [vmem:[%s1802 + $0x14] sm:$0x1]
        %v10637 = vld [vmem:[%s1802 + $0x18] sm:$0xf]
        %v10638 = vld [vmem:[%s1802 + $0x1c] sm:$0xf]
        %v10639 = vld [vmem:[%s1802 + $0x20] sm:$0x1]
        %v10640 = vld [vmem:[%s1802 + $0x24] sm:$0xf]
        %v10641 = vld [vmem:[%s1802 + $0x28] sm:$0xf]
        %v10642 = vld [vmem:[%s1802 + $0x2c] sm:$0x1]
        %v10643 = vld [vmem:[%s1802 + $0x30] sm:$0xf]
        %v10644 = vld [vmem:[%s1802 + $0x34] sm:$0xf]
        %v10645 = vld [vmem:[%s1802 + $0x38] sm:$0x1]
        %v10646 = vld [vmem:[%s1802 + $0x3c] sm:$0xf]
        %v10647 = vld [vmem:[%s1802 + $0x40] sm:$0xf]
        %v10648 = vld [vmem:[%s1802 + $0x44] sm:$0x1]
        %v10649 = vld [vmem:[%s1802 + $0x48] sm:$0xf]
        %v10650 = vld [vmem:[%s1802 + $0x4c] sm:$0xf]
        %v10651 = vld [vmem:[%s1802 + $0x50] sm:$0x1]
        %v10652 = vld [vmem:[%s1802 + $0x54] sm:$0xf]
        %v10653 = vld [vmem:[%s1802 + $0x58] sm:$0xf]
        %v10654 = vld [vmem:[%s1802 + $0x5c] sm:$0x1]
        %v10655 = vld [vmem:[%s1802 + $0x60] sm:$0xf]
        %v10656 = vld [vmem:[%s1802 + $0x64] sm:$0xf]
        %v10657 = vld [vmem:[%s1802 + $0x68] sm:$0x1]
        %v10658 = vld [vmem:[%s1802 + $0x6c] sm:$0xf]
        %v10659 = vld [vmem:[%s1802 + $0x70] sm:$0xf]
        %v10660 = vld [vmem:[%s1802 + $0x74] sm:$0x1]
        %v10661 = vld [vmem:[%s1802 + $0x78] sm:$0xf]
        %v10662 = vld [vmem:[%s1802 + $0x7c] sm:$0xf]
        %v10663 = vld [vmem:[%s1802 + $0x80] sm:$0x1]
        %v10664 = vld [vmem:[%s1802 + $0x84] sm:$0xf]
        %v10665 = vld [vmem:[%s1802 + $0x88] sm:$0xf]
        %v10666 = vld [vmem:[%s1802 + $0x8c] sm:$0x1]
        %v10667 = vld [vmem:[%s1802 + $0x90] sm:$0xf]
        %v10668 = vld [vmem:[%s1802 + $0x94] sm:$0xf]
        %v10669 = vld [vmem:[%s1802 + $0x98] sm:$0x1]
        %v10670 = vld [vmem:[%s1802 + $0x9c] sm:$0xf]
        %v10671 = vld [vmem:[%s1802 + $0xa0] sm:$0xf]
        %v10672 = vld [vmem:[%s1802 + $0xa4] sm:$0x1]
        %v10673 = vld [vmem:[%s1802 + $0xa8] sm:$0xf]
        %v10674 = vld [vmem:[%s1802 + $0xac] sm:$0xf]
        %v10675 = vld [vmem:[%s1802 + $0xb0] sm:$0x1]
        %v10676 = vld [vmem:[%s1802 + $0xb4] sm:$0xf]
        %v10677 = vld [vmem:[%s1802 + $0xb8] sm:$0xf]
        %v10678 = vld [vmem:[%s1802 + $0xbc] sm:$0x1]
        %v10680 = vshrl.u32 %v10631, 16
        %v10682 = vrot.slane %v10680, 4
        %v10683 = vshll.u32 %v10631, 16
        %v10685 = vrot.slane %v10683, 5
        %v10686 = vor.u32 %v10682, %v10685
        %v10687 = vrot.slane %v10686, 4
        %v10689 = vshll.u32 %v10632, 16
        %v10691 = vrot.slane %v10689, 5
        %v10692 = vsel %vm339, %v10687, %v10691
        %v10693 = vshrl.u32 %v10632, 16
        %v10695 = vrot.slane %v10693, 4
        %v10696 = vor.u32 %v10695, %v10691
        %v10697 = vrot.slane %v10696, 4
        %v10699 = vshll.u32 %v10633, 16
        %v10701 = vrot.slane %v10699, 5
        %v10702 = vsel %vm339, %v10697, %v10701
        %v10704 = vshrl.u32 %v10634, 16
        %v10706 = vrot.slane %v10704, 4
        %v10707 = vshll.u32 %v10634, 16
        %v10709 = vrot.slane %v10707, 5
        %v10710 = vor.u32 %v10706, %v10709
        %v10711 = vrot.slane %v10710, 4
        %v10713 = vshll.u32 %v10635, 16
        %v10715 = vrot.slane %v10713, 5
        %v10716 = vsel %vm339, %v10711, %v10715
        %v10717 = vshrl.u32 %v10635, 16
        %v10719 = vrot.slane %v10717, 4
        %v10720 = vor.u32 %v10719, %v10715
        %v10721 = vrot.slane %v10720, 4
        %v10723 = vshll.u32 %v10636, 16
        %v10725 = vrot.slane %v10723, 5
        %v10726 = vsel %vm339, %v10721, %v10725
        %v10728 = vshrl.u32 %v10637, 16
        %v10730 = vrot.slane %v10728, 4
        %v10731 = vshll.u32 %v10637, 16
        %v10733 = vrot.slane %v10731, 5
        %v10734 = vor.u32 %v10730, %v10733
        %v10735 = vrot.slane %v10734, 4
        %v10737 = vshll.u32 %v10638, 16
        %v10739 = vrot.slane %v10737, 5
        %v10740 = vsel %vm339, %v10735, %v10739
        %v10741 = vshrl.u32 %v10638, 16
        %v10743 = vrot.slane %v10741, 4
        %v10744 = vor.u32 %v10743, %v10739
        %v10745 = vrot.slane %v10744, 4
        %v10747 = vshll.u32 %v10639, 16
        %v10749 = vrot.slane %v10747, 5
        %v10750 = vsel %vm339, %v10745, %v10749
        %v10752 = vshrl.u32 %v10640, 16
        %v10754 = vrot.slane %v10752, 4
        %v10755 = vshll.u32 %v10640, 16
        %v10757 = vrot.slane %v10755, 5
        %v10758 = vor.u32 %v10754, %v10757
        %v10759 = vrot.slane %v10758, 4
        %v10761 = vshll.u32 %v10641, 16
        %v10763 = vrot.slane %v10761, 5
        %v10764 = vsel %vm339, %v10759, %v10763
        %v10765 = vshrl.u32 %v10641, 16
        %v10767 = vrot.slane %v10765, 4
        %v10768 = vor.u32 %v10767, %v10763
        %v10769 = vrot.slane %v10768, 4
        %v10771 = vshll.u32 %v10642, 16
        %v10773 = vrot.slane %v10771, 5
        %v10774 = vsel %vm339, %v10769, %v10773
        %v10776 = vshrl.u32 %v10643, 16
        %v10778 = vrot.slane %v10776, 4
        %v10779 = vshll.u32 %v10643, 16
        %v10781 = vrot.slane %v10779, 5
        %v10782 = vor.u32 %v10778, %v10781
        %v10783 = vrot.slane %v10782, 4
        %v10785 = vshll.u32 %v10644, 16
        %v10787 = vrot.slane %v10785, 5
        %v10788 = vsel %vm339, %v10783, %v10787
        %v10789 = vshrl.u32 %v10644, 16
        %v10791 = vrot.slane %v10789, 4
        %v10792 = vor.u32 %v10791, %v10787
        %v10793 = vrot.slane %v10792, 4
        %v10795 = vshll.u32 %v10645, 16
        %v10797 = vrot.slane %v10795, 5
        %v10798 = vsel %vm339, %v10793, %v10797
        %v10800 = vshrl.u32 %v10646, 16
        %v10802 = vrot.slane %v10800, 4
        %v10803 = vshll.u32 %v10646, 16
        %v10805 = vrot.slane %v10803, 5
        %v10806 = vor.u32 %v10802, %v10805
        %v10807 = vrot.slane %v10806, 4
        %v10809 = vshll.u32 %v10647, 16
        %v10811 = vrot.slane %v10809, 5
        %v10812 = vsel %vm339, %v10807, %v10811
        %v10813 = vshrl.u32 %v10647, 16
        %v10815 = vrot.slane %v10813, 4
        %v10816 = vor.u32 %v10815, %v10811
        %v10817 = vrot.slane %v10816, 4
        %v10819 = vshll.u32 %v10648, 16
        %v10821 = vrot.slane %v10819, 5
        %v10822 = vsel %vm339, %v10817, %v10821
        %v10824 = vshrl.u32 %v10649, 16
        %v10826 = vrot.slane %v10824, 4
        %v10827 = vshll.u32 %v10649, 16
        %v10829 = vrot.slane %v10827, 5
        %v10830 = vor.u32 %v10826, %v10829
        %v10831 = vrot.slane %v10830, 4
        %v10833 = vshll.u32 %v10650, 16
        %v10835 = vrot.slane %v10833, 5
        %v10836 = vsel %vm339, %v10831, %v10835
        %v10837 = vshrl.u32 %v10650, 16
        %v10839 = vrot.slane %v10837, 4
        %v10840 = vor.u32 %v10839, %v10835
        %v10841 = vrot.slane %v10840, 4
        %v10843 = vshll.u32 %v10651, 16
        %v10845 = vrot.slane %v10843, 5
        %v10846 = vsel %vm339, %v10841, %v10845
        %v10848 = vshrl.u32 %v10652, 16
        %v10850 = vrot.slane %v10848, 4
        %v10851 = vshll.u32 %v10652, 16
        %v10853 = vrot.slane %v10851, 5
        %v10854 = vor.u32 %v10850, %v10853
        %v10855 = vrot.slane %v10854, 4
        %v10857 = vshll.u32 %v10653, 16
        %v10859 = vrot.slane %v10857, 5
        %v10860 = vsel %vm339, %v10855, %v10859
        %v10861 = vshrl.u32 %v10653, 16
        %v10863 = vrot.slane %v10861, 4
        %v10864 = vor.u32 %v10863, %v10859
        %v10865 = vrot.slane %v10864, 4
        %v10867 = vshll.u32 %v10654, 16
        %v10869 = vrot.slane %v10867, 5
        %v10870 = vsel %vm339, %v10865, %v10869
        %v10872 = vshrl.u32 %v10655, 16
        %v10874 = vrot.slane %v10872, 4
        %v10875 = vshll.u32 %v10655, 16
        %v10877 = vrot.slane %v10875, 5
        %v10878 = vor.u32 %v10874, %v10877
        %v10879 = vrot.slane %v10878, 4
        %v10881 = vshll.u32 %v10656, 16
        %v10883 = vrot.slane %v10881, 5
        %v10884 = vsel %vm339, %v10879, %v10883
        %v10885 = vshrl.u32 %v10656, 16
        %v10887 = vrot.slane %v10885, 4
        %v10888 = vor.u32 %v10887, %v10883
        %v10889 = vrot.slane %v10888, 4
        %v10891 = vshll.u32 %v10657, 16
        %v10893 = vrot.slane %v10891, 5
        %v10894 = vsel %vm339, %v10889, %v10893
        %v10896 = vshrl.u32 %v10658, 16
        %v10898 = vrot.slane %v10896, 4
        %v10899 = vshll.u32 %v10658, 16
        %v10901 = vrot.slane %v10899, 5
        %v10902 = vor.u32 %v10898, %v10901
        %v10903 = vrot.slane %v10902, 4
        %v10905 = vshll.u32 %v10659, 16
        %v10907 = vrot.slane %v10905, 5
        %v10908 = vsel %vm339, %v10903, %v10907
        %v10909 = vshrl.u32 %v10659, 16
        %v10911 = vrot.slane %v10909, 4
        %v10912 = vor.u32 %v10911, %v10907
        %v10913 = vrot.slane %v10912, 4
        %v10915 = vshll.u32 %v10660, 16
        %v10917 = vrot.slane %v10915, 5
        %v10918 = vsel %vm339, %v10913, %v10917
        %v10920 = vshrl.u32 %v10661, 16
        %v10922 = vrot.slane %v10920, 4
        %v10923 = vshll.u32 %v10661, 16
        %v10925 = vrot.slane %v10923, 5
        %v10926 = vor.u32 %v10922, %v10925
        %v10927 = vrot.slane %v10926, 4
        %v10929 = vshll.u32 %v10662, 16
        %v10931 = vrot.slane %v10929, 5
        %v10932 = vsel %vm339, %v10927, %v10931
        %v10933 = vshrl.u32 %v10662, 16
        %v10935 = vrot.slane %v10933, 4
        %v10936 = vor.u32 %v10935, %v10931
        %v10937 = vrot.slane %v10936, 4
        %v10939 = vshll.u32 %v10663, 16
        %v10941 = vrot.slane %v10939, 5
        %v10942 = vsel %vm339, %v10937, %v10941
        %v10944 = vshrl.u32 %v10664, 16
        %v10946 = vrot.slane %v10944, 4
        %v10947 = vshll.u32 %v10664, 16
        %v10949 = vrot.slane %v10947, 5
        %v10950 = vor.u32 %v10946, %v10949
        %v10951 = vrot.slane %v10950, 4
        %v10953 = vshll.u32 %v10665, 16
        %v10955 = vrot.slane %v10953, 5
        %v10956 = vsel %vm339, %v10951, %v10955
        %v10957 = vshrl.u32 %v10665, 16
        %v10959 = vrot.slane %v10957, 4
        %v10960 = vor.u32 %v10959, %v10955
        %v10961 = vrot.slane %v10960, 4
        %v10963 = vshll.u32 %v10666, 16
        %v10965 = vrot.slane %v10963, 5
        %v10966 = vsel %vm339, %v10961, %v10965
        %v10968 = vshrl.u32 %v10667, 16
        %v10970 = vrot.slane %v10968, 4
        %v10971 = vshll.u32 %v10667, 16
        %v10973 = vrot.slane %v10971, 5
        %v10974 = vor.u32 %v10970, %v10973
        %v10975 = vrot.slane %v10974, 4
        %v10977 = vshll.u32 %v10668, 16
        %v10979 = vrot.slane %v10977, 5
        %v10980 = vsel %vm339, %v10975, %v10979
        %v10981 = vshrl.u32 %v10668, 16
        %v10983 = vrot.slane %v10981, 4
        %v10984 = vor.u32 %v10983, %v10979
        %v10985 = vrot.slane %v10984, 4
        %v10987 = vshll.u32 %v10669, 16
        %v10989 = vrot.slane %v10987, 5
        %v10990 = vsel %vm339, %v10985, %v10989
        %v10992 = vshrl.u32 %v10670, 16
        %v10994 = vrot.slane %v10992, 4
        %v10995 = vshll.u32 %v10670, 16
        %v10997 = vrot.slane %v10995, 5
        %v10998 = vor.u32 %v10994, %v10997
        %v10999 = vrot.slane %v10998, 4
        %v11001 = vshll.u32 %v10671, 16
        %v11003 = vrot.slane %v11001, 5
        %v11004 = vsel %vm339, %v10999, %v11003
        %v11005 = vshrl.u32 %v10671, 16
        %v11007 = vrot.slane %v11005, 4
        %v11008 = vor.u32 %v11007, %v11003
        %v11009 = vrot.slane %v11008, 4
        %v11011 = vshll.u32 %v10672, 16
        %v11013 = vrot.slane %v11011, 5
        %v11014 = vsel %vm339, %v11009, %v11013
        %v11016 = vshrl.u32 %v10673, 16
        %v11018 = vrot.slane %v11016, 4
        %v11019 = vshll.u32 %v10673, 16
        %v11021 = vrot.slane %v11019, 5
        %v11022 = vor.u32 %v11018, %v11021
        %v11023 = vrot.slane %v11022, 4
        %v11025 = vshll.u32 %v10674, 16
        %v11027 = vrot.slane %v11025, 5
        %v11028 = vsel %vm339, %v11023, %v11027
        %v11029 = vshrl.u32 %v10674, 16
        %v11031 = vrot.slane %v11029, 4
        %v11032 = vor.u32 %v11031, %v11027
        %v11033 = vrot.slane %v11032, 4
        %v11035 = vshll.u32 %v10675, 16
        %v11037 = vrot.slane %v11035, 5
        %v11038 = vsel %vm339, %v11033, %v11037
        %v11040 = vshrl.u32 %v10676, 16
        %v11042 = vrot.slane %v11040, 4
        %v11043 = vshll.u32 %v10676, 16
        %v11045 = vrot.slane %v11043, 5
        %v11046 = vor.u32 %v11042, %v11045
        %v11047 = vrot.slane %v11046, 4
        %v11049 = vshll.u32 %v10677, 16
        %v11051 = vrot.slane %v11049, 5
        %v11052 = vsel %vm339, %v11047, %v11051
        %v11053 = vshrl.u32 %v10677, 16
        %v11055 = vrot.slane %v11053, 4
        %v11056 = vor.u32 %v11055, %v11051
        %v11057 = vrot.slane %v11056, 4
        %v11059 = vshll.u32 %v10678, 16
        %v11061 = vrot.slane %v11059, 5
        %v11062 = vsel %vm339, %v11057, %v11061
        %v11095 = vunpack.c.l.bf16 %v10692
        %v11096 = vunpack.c.l.bf16 %v10702
        %v11097 = vunpack.c.l.bf16 %v10716
        %v11098 = vunpack.c.l.bf16 %v10726
        %v11099 = vunpack.c.l.bf16 %v10740
        %v11100 = vunpack.c.l.bf16 %v10750
        %v11101 = vunpack.c.l.bf16 %v10764
        %v11102 = vunpack.c.l.bf16 %v10774
        %v11103 = vunpack.c.l.bf16 %v10788
        %v11104 = vunpack.c.l.bf16 %v10798
        %v11105 = vunpack.c.l.bf16 %v10812
        %v11106 = vunpack.c.l.bf16 %v10822
        %v11107 = vunpack.c.l.bf16 %v10836
        %v11108 = vunpack.c.l.bf16 %v10846
        %v11109 = vunpack.c.l.bf16 %v10860
        %v11110 = vunpack.c.l.bf16 %v10870
        %v11111 = vunpack.c.l.bf16 %v10884
        %v11112 = vunpack.c.l.bf16 %v10894
        %v11113 = vunpack.c.l.bf16 %v10908
        %v11114 = vunpack.c.l.bf16 %v10918
        %v11115 = vunpack.c.l.bf16 %v10932
        %v11116 = vunpack.c.l.bf16 %v10942
        %v11117 = vunpack.c.l.bf16 %v10956
        %v11118 = vunpack.c.l.bf16 %v10966
        %v11119 = vunpack.c.l.bf16 %v10980
        %v11120 = vunpack.c.l.bf16 %v10990
        %v11121 = vunpack.c.l.bf16 %v11004
        %v11122 = vunpack.c.l.bf16 %v11014
        %v11123 = vunpack.c.l.bf16 %v11028
        %v11124 = vunpack.c.l.bf16 %v11038
        %v11125 = vunpack.c.l.bf16 %v11052
        %v11126 = vunpack.c.l.bf16 %v11062
        %v11127 = vadd.f32 %v10599, %v11095
        %v11128 = vadd.f32 %v10600, %v11096
        %v11129 = vadd.f32 %v10601, %v11097
        %v11130 = vadd.f32 %v10602, %v11098
        %v11131 = vadd.f32 %v10603, %v11099
        %v11132 = vadd.f32 %v10604, %v11100
        %v11133 = vadd.f32 %v10605, %v11101
        %v11134 = vadd.f32 %v10606, %v11102
        %v11135 = vadd.f32 %v10607, %v11103
        %v11136 = vadd.f32 %v10608, %v11104
        %v11137 = vadd.f32 %v10609, %v11105
        %v11138 = vadd.f32 %v10610, %v11106
        %v11139 = vadd.f32 %v10611, %v11107
        %v11140 = vadd.f32 %v10612, %v11108
        %v11141 = vadd.f32 %v10613, %v11109
        %v11142 = vadd.f32 %v10614, %v11110
        %v11143 = vadd.f32 %v10615, %v11111
        %v11144 = vadd.f32 %v10616, %v11112
        %v11145 = vadd.f32 %v10617, %v11113
        %v11146 = vadd.f32 %v10618, %v11114
        %v11147 = vadd.f32 %v10619, %v11115
        %v11148 = vadd.f32 %v10620, %v11116
        %v11149 = vadd.f32 %v10621, %v11117
        %v11150 = vadd.f32 %v10622, %v11118
        %v11151 = vadd.f32 %v10623, %v11119
        %v11152 = vadd.f32 %v10624, %v11120
        %v11153 = vadd.f32 %v10625, %v11121
        %v11154 = vadd.f32 %v10626, %v11122
        %v11155 = vadd.f32 %v10627, %v11123
        %v11156 = vadd.f32 %v10628, %v11124
        %v11157 = vadd.f32 %v10629, %v11125
        %v11158 = vadd.f32 %v10630, %v11126
        %v11159 = vmax.f32 %v11127, 0.0
        %v11160 = vmax.f32 %v11128, 0.0
        %v11161 = vmax.f32 %v11129, 0.0
        %v11162 = vmax.f32 %v11130, 0.0
        %v11163 = vmax.f32 %v11131, 0.0
        %v11164 = vmax.f32 %v11132, 0.0
        %v11165 = vmax.f32 %v11133, 0.0
        %v11166 = vmax.f32 %v11134, 0.0
        %v11167 = vmax.f32 %v11135, 0.0
        %v11168 = vmax.f32 %v11136, 0.0
        %v11169 = vmax.f32 %v11137, 0.0
        %v11170 = vmax.f32 %v11138, 0.0
        %v11171 = vmax.f32 %v11139, 0.0
        %v11172 = vmax.f32 %v11140, 0.0
        %v11173 = vmax.f32 %v11141, 0.0
        %v11174 = vmax.f32 %v11142, 0.0
        %v11175 = vmax.f32 %v11143, 0.0
        %v11176 = vmax.f32 %v11144, 0.0
        %v11177 = vmax.f32 %v11145, 0.0
        %v11178 = vmax.f32 %v11146, 0.0
        %v11179 = vmax.f32 %v11147, 0.0
        %v11180 = vmax.f32 %v11148, 0.0
        %v11181 = vmax.f32 %v11149, 0.0
        %v11182 = vmax.f32 %v11150, 0.0
        %v11183 = vmax.f32 %v11151, 0.0
        %v11184 = vmax.f32 %v11152, 0.0
        %v11185 = vmax.f32 %v11153, 0.0
        %v11186 = vmax.f32 %v11154, 0.0
        %v11187 = vmax.f32 %v11155, 0.0
        %v11188 = vmax.f32 %v11156, 0.0
        %v11189 = vmax.f32 %v11157, 0.0
        %v11190 = vmax.f32 %v11158, 0.0
        %11191 = vst [vmem:[%s271] sm:$0xff] %v11159
        %11192 = vst [vmem:[%s271 + $0x8] sm:$0xff] %v11160
        %11193 = vst [vmem:[%s271 + $0x10] sm:$0xff] %v11161
        %11194 = vst [vmem:[%s271 + $0x18] sm:$0xff] %v11162
        %11195 = vst [vmem:[%s271 + $0x20] sm:$0xff] %v11163
        %11196 = vst [vmem:[%s271 + $0x28] sm:$0xff] %v11164
        %11197 = vst [vmem:[%s271 + $0x30] sm:$0xff] %v11165
        %11198 = vst [vmem:[%s271 + $0x38] sm:$0xff] %v11166
        %11199 = vst [vmem:[%s271 + $0x40] sm:$0xff] %v11167
        %11200 = vst [vmem:[%s271 + $0x48] sm:$0xff] %v11168
        %11201 = vst [vmem:[%s271 + $0x50] sm:$0xff] %v11169
        %11202 = vst [vmem:[%s271 + $0x58] sm:$0xff] %v11170
        %11203 = vst [vmem:[%s271 + $0x60] sm:$0xff] %v11171
        %11204 = vst [vmem:[%s271 + $0x68] sm:$0xff] %v11172
        %11205 = vst [vmem:[%s271 + $0x70] sm:$0xff] %v11173
        %11206 = vst [vmem:[%s271 + $0x78] sm:$0xff] %v11174
        %11207 = vst [vmem:[%s271 + $0x80] sm:$0xff] %v11175
        %11208 = vst [vmem:[%s271 + $0x88] sm:$0xff] %v11176
        %11209 = vst [vmem:[%s271 + $0x90] sm:$0xff] %v11177
        %11210 = vst [vmem:[%s271 + $0x98] sm:$0xff] %v11178
        %11211 = vst [vmem:[%s271 + $0xa0] sm:$0xff] %v11179
        %11212 = vst [vmem:[%s271 + $0xa8] sm:$0xff] %v11180
        %11213 = vst [vmem:[%s271 + $0xb0] sm:$0xff] %v11181
        %11214 = vst [vmem:[%s271 + $0xb8] sm:$0xff] %v11182
        %11215 = vst [vmem:[%s271 + $0xc0] sm:$0xff] %v11183
        %11216 = vst [vmem:[%s271 + $0xc8] sm:$0xff] %v11184
        %11217 = vst [vmem:[%s271 + $0xd0] sm:$0xff] %v11185
        %11218 = vst [vmem:[%s271 + $0xd8] sm:$0xff] %v11186
        %11219 = vst [vmem:[%s271 + $0xe0] sm:$0xff] %v11187
        %11220 = vst [vmem:[%s271 + $0xe8] sm:$0xff] %v11188
        %11221 = vst [vmem:[%s271 + $0xf0] sm:$0xff] %v11189
        %11222 = vst [vmem:[%s271 + $0xf8] sm:$0xff] %v11190
        %s11223 = sand.u32 %s141, 1
        %s11224 = scalar_lea.sflag [#allocation5], %s11223
        %s11225 = sand.u32 %s141, 1
        %s11226 = smul.addr %s11225, 256
        %s11227 = scalar_lea.vmem [#allocation9], %s11226
        // Predicated region
        $region53: #{tpu_custom_call.1} parent=39 // pred_check
          %p11228 = pneg %p151
        $region54: #{tpu_custom_call.1} parent=39 // pred_check_branch
          %11230 = sbr.rel (%p11228) target = $region56
        $region55: #{tpu_custom_call.1} parent=39 // pred_region
          %s11232 = ssub.s32 4096, 4096
          %11233 = vsyncadd %s11224, %s11232
          %s11234 = smul.addr %s23, 32
          %s11235 = smul.addr %s11234, 128
          %s11236 = scalar_lea.hbm %s5, %s11235
          %s11237 = sshll.u32 %s11227, 4
          %s11238 = int_to_ptr.vmem [resolvable:$true] %s11237
          %11243 = dma.vmem_to_hbm [thread:$0]  %s11238, 4096, %s11236, %s11224, 128, 128, 8
        $region56: #{tpu_custom_call.1} parent=39 // pred_fallthru
          _
      $region40: #{tpu_custom_call.1} parent=5 // pred_fallthru
        _
      %p11244 = scmp.le.s32.totalorder 2, %s18
      // Predicated region
      $region57: #{tpu_custom_call.1} parent=5 // pred_check
        %p11245 = pneg %p11244
      $region58: #{tpu_custom_call.1} parent=5 // pred_check_branch
        %11247 = sbr.rel (%p11245) target = $region60
      $region59: #{tpu_custom_call.1} parent=5 // pred_region
        %s11248 = ssub.s32 %s18, 2
        // Predicated region
        $region61: #{tpu_custom_call.1} parent=59 // pred_check
          %p11249 = pneg %p157
        $region62: #{tpu_custom_call.1} parent=59 // pred_check_branch
          %11251 = sbr.rel (%p11249) target = $region64
        $region63: #{tpu_custom_call.1} parent=59 // pred_region
          %s11252 = sand.u32 %s142, 1
          %s11253 = scalar_lea.sflag [#allocation5], %s11252
          %s11254 = sand.u32 %s142, 1
          %s11255 = smul.addr %s11254, 256
          %s11256 = scalar_lea.vmem [#allocation9], %s11255
          %11257 = dma.done %s11253, 4096
        $region64: #{tpu_custom_call.1} parent=59 // pred_fallthru
          _
      $region60: #{tpu_custom_call.1} parent=5 // pred_fallthru
        _
    $region6: #{tpu_custom_call.1} parent=1 // loop_footer
      %s22 = sadd.s32 1, %s18
    $region7: #{tpu_custom_call.1} parent=1 // loop_footer_branch
      %17 = sbr.rel target = $region3
    $region8: #{tpu_custom_call.1} parent=1 // loop_exit
      _
    %11258 = vsyncpa [#allocation4], 1
    %s11259 = scalar_lea.sflag [#allocation4], 1
    %11260 = vsyncpa %s11259, 1
    %11261 = vsyncpa [#allocation7], 1
    %11262 = vsyncpa [#allocation5], 1
    %s11263 = scalar_lea.sflag [#allocation5], 1
    %11264 = vsyncpa %s11263, 1

</llo_original>
